<compile_context>
chip_gen: v6e
topology: v6e:2x2x1
jax: 0.10.0
libtpu: 0.0.40
codegen_flags: <defaults>
</compile_context>

<pallas_src>
import functools

import jax
import jax.numpy as jnp
from jax.experimental import pallas as pl
from jax.experimental.pallas import tpu as pltpu


# ------------------------------ fused kernel --------------------------------


def fused_denoiser_kernel(xp_ref, w1_ref, b1_ref, w2_ref, b2_ref, wt_ref, bt_ref,
                          w3_ref, b3_ref, o_ref, h1p_ref, p_ref, ypad_ref,
                          *, H, W, C, CIN1):
    # xp_ref : (1, H+2, W+2, CIN1)  zero-padded input image (channels padded 1->CIN1)
    # w1_ref : (9*CIN1, C)  b1_ref: (1, C)          -- conv1 (im2col layout)
    # w2_ref : (9*C,    C)  b2_ref: (1, C)          -- conv2 (im2col layout)
    # wt_ref : (C,    4*C)  bt_ref: (1, 4*C)        -- convT, cols = (dy*2+dx)*C + cout
    # w3_ref : (9*C,  128)  b3_ref: (1, 128)        -- conv3, only column 0 is real
    # o_ref  : (1, H*W, 128)                        -- rows = (dy*2+dx)*Hh*Wh + i*Wh + j
    # scratch: h1p_ref (H+2, W+2, C)       padded conv1 output
    #          p_ref   (H*W, 9*C)          shared im2col buffer (conv2 / conv3)
    #          ypad_ref(2, Hh+2, Wh+2, 2C) padded convT sub-grids, [dy, i, j, dx*C+c]
    Hh, Wh = H // 2, W // 2
    M = H * W                      # = 4 * Hh * Wh
    Mh = Hh * Wh
    f32 = jnp.float32

    # ---------------- encoder conv1: in-register im2col + one GEMM -------------------
    taps1 = [xp_ref[0, ky:ky + H, kx:kx + W, :].reshape(M, CIN1)
             for ky in range(3) for kx in range(3)]
    patch1 = jnp.concatenate(taps1, axis=1)                     # (M, 9*CIN1), in vregs
    h1 = jnp.dot(patch1, w1_ref[...], preferred_element_type=f32) + b1_ref[...]
    h1 = jnp.maximum(h1, 0.0)                                   # (M, C)

    # padded conv1 output: zero only the two border rows; the zero side-columns are
    # fused into the interior store via a value-level concat (no masked column stores).
    zrow1 = jnp.zeros((1, W + 2, C), f32)
    zcol1 = jnp.zeros((H, 1, C), f32)
    h1p_ref[0:1, :, :] = zrow1
    h1p_ref[H + 1:H + 2, :, :] = zrow1
    h1p_ref[1:H + 1, :, :] = jnp.concatenate(
        [zcol1, h1.reshape(H, W, C), zcol1], axis=1)

    # ------------- encoder conv2 + ReLU + maxpool: two row-tiled im2col GEMMs --------
    # Patch stores for tile t+1 are independent of the GEMM on tile t (disjoint p_ref
    # rows), letting the scheduler hide the vst/XLU work under the MXU.
    TM = M // 2                    # 128 rows per tile
    rows = TM // W                 # pixel rows per tile (even by construction)
    hp_tiles = []
    for tt in range(2):
        r0 = tt * TM
        i0 = tt * rows
        # 128-lane-aligned patch stores: taps written in pairs (2*C = 128 lanes).
        for t in range(4):
            ky0, kx0 = divmod(2 * t, 3)
            ky1, kx1 = divmod(2 * t + 1, 3)
            a = h1p_ref[ky0 + i0:ky0 + i0 + rows, kx0:kx0 + W, :].reshape(TM, C)
            b = h1p_ref[ky1 + i0:ky1 + i0 + rows, kx1:kx1 + W, :].reshape(TM, C)
            p_ref[r0:r0 + TM, 2 * t * C:(2 * t + 2) * C] = jnp.concatenate([a, b], 1)
        p_ref[r0:r0 + TM, 8 * C:9 * C] = (
            h1p_ref[2 + i0:2 + i0 + rows, 2:2 + W, :].reshape(TM, C))
        h2t = jnp.dot(p_ref[r0:r0 + TM, :], w2_ref[...],
                      preferred_element_type=f32) + b2_ref[...]
        h2t = jnp.maximum(h2t, 0.0).reshape(rows, W, C)
        # 2x2 maxpool of this row tile
        hw = jnp.max(h2t.reshape(rows, Wh, 2, C), axis=2)       # pool along W
        hp_tiles.append(jnp.max(hw.reshape(rows // 2, 2, Wh, C), axis=1))
    hp = jnp.concatenate(hp_tiles, axis=0)                      # (Hh, Wh, C)

    # -------------- decoder convT 2x2 / stride 2 + ReLU: one 4C-wide GEMM ------------
    yt = jnp.dot(hp.reshape(Mh, C), wt_ref[...],
                 preferred_element_type=f32) + bt_ref[...]
    yt = jnp.maximum(yt, 0.0)                                   # (Mh, 4*C)
    # sub-grids packed lane-dense: ypad[dy, i, j, dx*C + c]; only border rows are
    # zeroed explicitly, the zero side-columns ride along with the interior store.
    zrowt = jnp.zeros((2, 1, Wh + 2, 2 * C), f32)
    zcolt = jnp.zeros((Hh, 1, 2 * C), f32)
    ypad_ref[:, 0:1, :, :] = zrowt
    ypad_ref[:, Hh + 1:Hh + 2, :, :] = zrowt
    for dy in range(2):
        ypad_ref[dy, 1:Hh + 1, :, :] = jnp.concatenate(
            [zcolt, yt[:, 2 * dy * C:(2 * dy + 2) * C].reshape(Hh, Wh, 2 * C), zcolt],
            axis=1)

    # -------------- decoder conv3 + sigmoid: one im2col GEMM per output parity -------
    # output pixel (2i+dy, 2j+dx), tap (ky,kx) reads sub-grid (ay,ax) shifted by (sy,sx):
    #   u = dy+ky-1 = 2*sy + ay ;  v = dx+kx-1 = 2*sx + ax
    for od in range(4):
        dy, dx = divmod(od, 2)
        r0 = od * Mh

        def tap_src(k, dy=dy, dx=dx):
            ky, kx = divmod(k, 3)
            u = dy + ky - 1
            v = dx + kx - 1
            ay, sy = u % 2, (u - u % 2) // 2
            ax, sx = v % 2, (v - v % 2) // 2
            return ypad_ref[ay, 1 + sy:1 + sy + Hh, 1 + sx:1 + sx + Wh,
                            ax * C:(ax + 1) * C].reshape(Mh, C)

        for t in range(4):                                      # paired, 128-lane stores
            p_ref[r0:r0 + Mh, 2 * t * C:(2 * t + 2) * C] = jnp.concatenate(
                [tap_src(2 * t), tap_src(2 * t + 1)], axis=1)
        p_ref[r0:r0 + Mh, 8 * C:9 * C] = tap_src(8)
        y3 = jnp.dot(p_ref[r0:r0 + Mh, :], w3_ref[...],
                     preferred_element_type=f32) + b3_ref[...]
        # sigmoid (EUP exp + exact reciprocal); columns 1..127 hold sigmoid(b3), unused
        o_ref[0, r0:r0 + Mh, :] = pl.reciprocal(1.0 + jnp.exp(-y3), approx=False)


# ------------------------------ forward wrapper ------------------------------


def denoising_cnn_forward(x_nchw, params):
    # x_nchw: (N, 1, H, W) float32 -> (N, 1, H, W)
    N, cin, H, W = x_nchw.shape
    C = 64
    CIN1 = 8                         # conv1 input channels padded 1 -> 8 (zero weights)
    Hh, Wh = H // 2, W // 2
    M = H * W

    # input: NCHW -> NHWC, spatial pad 1 + channel pad 1->8 in a single pad op
    x = jnp.transpose(x_nchw.astype(jnp.float32), (0, 2, 3, 1))          # (N,H,W,1)
    xp = jnp.pad(x, ((0, 0), (1, 1), (1, 1), (0, CIN1 - 1)))             # (N,H+2,W+2,8)

    # re-pack weights for the in-kernel im2col GEMMs (rows = (ky*3+kx)*Cin + cin)
    w1 = jnp.pad(params["w1"], ((0, 0), (0, CIN1 - 1), (0, 0), (0, 0)))  # (64,8,3,3)
    w1k = jnp.transpose(w1, (2, 3, 1, 0)).reshape(9 * CIN1, C)
    b1k = params["b1"].reshape(1, C)
    w2k = jnp.transpose(params["w2"], (2, 3, 1, 0)).reshape(9 * C, C)
    b2k = params["b2"].reshape(1, C)
    # transposed conv: columns packed as (dy*2+dx)*C + cout
    wtk = jnp.transpose(params["wt"], (0, 2, 3, 1)).reshape(C, 4 * C)
    btk = jnp.tile(params["bt"].reshape(1, C), (1, 4))
    # final conv (Cout=1): pad to 128 zero columns so the HBM store stays lane-dense
    w3k = jnp.transpose(params["w3"], (2, 3, 1, 0)).reshape(9 * C, 1)
    w3k = jnp.pad(w3k, ((0, 0), (0, 127)))
    b3k = jnp.broadcast_to(params["b3"].reshape(1, 1), (1, 128)).astype(jnp.float32)

    kernel = functools.partial(fused_denoiser_kernel, H=H, W=W, C=C, CIN1=CIN1)
    out = pl.pallas_call(
        kernel,
        out_shape=jax.ShapeDtypeStruct((N, M, 128), jnp.float32),
        grid=(N,),
        in_specs=[
            pl.BlockSpec((1, H + 2, W + 2, CIN1), lambda n: (n, 0, 0, 0)),
            pl.BlockSpec((9 * CIN1, C), lambda n: (0, 0)),
            pl.BlockSpec((1, C), lambda n: (0, 0)),
            pl.BlockSpec((9 * C, C), lambda n: (0, 0)),
            pl.BlockSpec((1, C), lambda n: (0, 0)),
            pl.BlockSpec((C, 4 * C), lambda n: (0, 0)),
            pl.BlockSpec((1, 4 * C), lambda n: (0, 0)),
            pl.BlockSpec((9 * C, 128), lambda n: (0, 0)),
            pl.BlockSpec((1, 128), lambda n: (0, 0)),
        ],
        out_specs=pl.BlockSpec((1, M, 128), lambda n: (n, 0, 0)),
        scratch_shapes=[
            pltpu.VMEM((H + 2, W + 2, C), jnp.float32),             # padded conv1 output
            pltpu.VMEM((M, 9 * C), jnp.float32),                    # shared im2col buffer
            pltpu.VMEM((2, Hh + 2, Wh + 2, 2 * C), jnp.float32),    # padded convT sub-grids
        ],
        compiler_params=pltpu.CompilerParams(dimension_semantics=("parallel",)),
    )(xp, w1k, b1k, w2k, b2k, wtk, btk, w3k, b3k)

    # column 0 is the single real output channel; rows decompose as (dy, dx, i, j)
    o = out[:, :, 0].reshape(N, 2, 2, Hh, Wh)
    o = jnp.transpose(o, (0, 3, 1, 4, 2)).reshape(N, H, W)     # (n, 2i+dy, 2j+dx)
    return o[:, None, :, :]                                     # NCHW


# ------------------------------ pure-JAX reference ---------------------------


def reference_forward(x, p):
    def conv3x3_ref(h, w, b):
        N, C, H, W = h.shape
        hp = jnp.pad(h, ((0, 0), (0, 0), (1, 1), (1, 1)))
        out = jnp.zeros((N, w.shape[0], H, W), jnp.float32)
        for ky in range(3):
            for kx in range(3):
                out = out + jnp.einsum(
                    "ncij,oc->noij", hp[:, :, ky:ky + H, kx:kx + W], w[:, :, ky, kx])
        return out + b[None, :, None, None]

    h = jax.nn.relu(conv3x3_ref(x, p["w1"], p["b1"]))
    h = jax.nn.relu(conv3x3_ref(h, p["w2"], p["b2"]))
    N, C, H, W = h.shape
    h = h.reshape(N, C, H // 2, 2, W // 2, 2).max(axis=(3, 5))
    t = jnp.einsum("ncij,coab->noiajb", h, p["wt"])
    N, Co, Hh, _, Wh, _ = t.shape
    h = jax.nn.relu(t.reshape(N, Co, 2 * Hh, 2 * Wh) + p["bt"][None, :, None, None])
    h = conv3x3_ref(h, p["w3"], p["b3"])
    return 1.0 / (1.0 + jnp.exp(-h))


# ---------------------------------- main -------------------------------------


if __name__ == "__main__":
    key = jax.random.PRNGKey(0)
    ks = jax.random.split(key, 9)
    params = {
        "w1": 0.10 * jax.random.normal(ks[0], (64, 1, 3, 3), jnp.float32),
        "b1": 0.01 * jax.random.normal(ks[1], (64,), jnp.float32),
        "w2": 0.05 * jax.random.normal(ks[2], (64, 64, 3, 3), jnp.float32),
        "b2": 0.01 * jax.random.normal(ks[3], (64,), jnp.float32),
        "wt": 0.05 * jax.random.normal(ks[4], (64, 64, 2, 2), jnp.float32),
        "bt": 0.01 * jax.random.normal(ks[5], (64,), jnp.float32),
        "w3": 0.05 * jax.random.normal(ks[6], (1, 64, 3, 3), jnp.float32),
        "b3": 0.01 * jax.random.normal(ks[7], (1,), jnp.float32),
    }
    x = jax.random.normal(ks[8], (2, 1, 16, 16), jnp.float32)

    fwd = jax.jit(denoising_cnn_forward)
    out = jax.block_until_ready(fwd(x, params))
    assert out.shape == (2, 1, 16, 16), out.shape

    ref = reference_forward(x, params)
    max_err = float(jnp.max(jnp.abs(out - ref)))
    assert jnp.allclose(out, ref, atol=1e-4, rtol=1e-4), max_err

    print("KERNEL_OK")
</pallas_src>

<mosaic_0001>
module attributes {stable_mosaic.version = 11 : i64} {
  func.func @fused_denoiser_kernel(%arg0: i32, %arg1: memref<1x18x18x8xf32, #tpu.memory_space<vmem>>, %arg2: memref<72x64xf32, #tpu.memory_space<vmem>>, %arg3: memref<1x64xf32, #tpu.memory_space<vmem>>, %arg4: memref<576x64xf32, #tpu.memory_space<vmem>>, %arg5: memref<1x64xf32, #tpu.memory_space<vmem>>, %arg6: memref<64x256xf32, #tpu.memory_space<vmem>>, %arg7: memref<1x256xf32, #tpu.memory_space<vmem>>, %arg8: memref<576x128xf32, #tpu.memory_space<vmem>>, %arg9: memref<1x128xf32, #tpu.memory_space<vmem>>, %arg10: memref<1x256x128xf32, #tpu.memory_space<vmem>>, %arg11: memref<18x18x64xf32, #tpu.memory_space<vmem>>, %arg12: memref<256x576xf32, #tpu.memory_space<vmem>>, %arg13: memref<2x10x10x128xf32, #tpu.memory_space<vmem>>) attributes {dimension_semantics = [#tpu.dimension_semantics<parallel>], iteration_bounds = array<i64: 2>, scalar_prefetch = 0 : i64, scratch_operands = 3 : i64, tpu.core_type = #tpu.core_type<tc>, window_params = [{transform_indices = @transform_0, window_bounds = array<i64: 1, 18, 18, 8>}, {pipeline_mode = #tpu.pipeline_mode<synchronous>, transform_indices = @transform_1, window_bounds = array<i64: 72, 64>}, {pipeline_mode = #tpu.pipeline_mode<synchronous>, transform_indices = @transform_2, window_bounds = array<i64: 1, 64>}, {pipeline_mode = #tpu.pipeline_mode<synchronous>, transform_indices = @transform_3, window_bounds = array<i64: 576, 64>}, {pipeline_mode = #tpu.pipeline_mode<synchronous>, transform_indices = @transform_4, window_bounds = array<i64: 1, 64>}, {pipeline_mode = #tpu.pipeline_mode<synchronous>, transform_indices = @transform_5, window_bounds = array<i64: 64, 256>}, {pipeline_mode = #tpu.pipeline_mode<synchronous>, transform_indices = @transform_6, window_bounds = array<i64: 1, 256>}, {pipeline_mode = #tpu.pipeline_mode<synchronous>, transform_indices = @transform_7, window_bounds = array<i64: 576, 128>}, {pipeline_mode = #tpu.pipeline_mode<synchronous>, transform_indices = @transform_8, window_bounds = array<i64: 1, 128>}, {transform_indices = @transform_9, window_bounds = array<i64: 1, 256, 128>}]} {
    %c0 = arith.constant 0 : index
    %c0_0 = arith.constant 0 : index
    %c0_1 = arith.constant 0 : index
    %c0_2 = arith.constant 0 : index
    %0 = vector.load %arg1[%c0, %c0_0, %c0_1, %c0_2] : memref<1x18x18x8xf32, #tpu.memory_space<vmem>>, vector<1x16x16x8xf32>
    %1 = vector.shape_cast %0 : vector<1x16x16x8xf32> to vector<16x16x8xf32>
    %2 = vector.shape_cast %1 : vector<16x16x8xf32> to vector<256x8xf32>
    %c0_3 = arith.constant 0 : index
    %c0_4 = arith.constant 0 : index
    %c1 = arith.constant 1 : index
    %c0_5 = arith.constant 0 : index
    %3 = vector.load %arg1[%c0_3, %c0_4, %c1, %c0_5] : memref<1x18x18x8xf32, #tpu.memory_space<vmem>>, vector<1x16x16x8xf32>
    %4 = vector.shape_cast %3 : vector<1x16x16x8xf32> to vector<16x16x8xf32>
    %5 = vector.shape_cast %4 : vector<16x16x8xf32> to vector<256x8xf32>
    %c0_6 = arith.constant 0 : index
    %c0_7 = arith.constant 0 : index
    %c2 = arith.constant 2 : index
    %c0_8 = arith.constant 0 : index
    %6 = vector.load %arg1[%c0_6, %c0_7, %c2, %c0_8] : memref<1x18x18x8xf32, #tpu.memory_space<vmem>>, vector<1x16x16x8xf32>
    %7 = vector.shape_cast %6 : vector<1x16x16x8xf32> to vector<16x16x8xf32>
    %8 = vector.shape_cast %7 : vector<16x16x8xf32> to vector<256x8xf32>
    %c0_9 = arith.constant 0 : index
    %c1_10 = arith.constant 1 : index
    %c0_11 = arith.constant 0 : index
    %c0_12 = arith.constant 0 : index
    %9 = vector.load %arg1[%c0_9, %c1_10, %c0_11, %c0_12] : memref<1x18x18x8xf32, #tpu.memory_space<vmem>>, vector<1x16x16x8xf32>
    %10 = vector.shape_cast %9 : vector<1x16x16x8xf32> to vector<16x16x8xf32>
    %11 = vector.shape_cast %10 : vector<16x16x8xf32> to vector<256x8xf32>
    %c0_13 = arith.constant 0 : index
    %c1_14 = arith.constant 1 : index
    %c1_15 = arith.constant 1 : index
    %c0_16 = arith.constant 0 : index
    %12 = vector.load %arg1[%c0_13, %c1_14, %c1_15, %c0_16] : memref<1x18x18x8xf32, #tpu.memory_space<vmem>>, vector<1x16x16x8xf32>
    %13 = vector.shape_cast %12 : vector<1x16x16x8xf32> to vector<16x16x8xf32>
    %14 = vector.shape_cast %13 : vector<16x16x8xf32> to vector<256x8xf32>
    %c0_17 = arith.constant 0 : index
    %c1_18 = arith.constant 1 : index
    %c2_19 = arith.constant 2 : index
    %c0_20 = arith.constant 0 : index
    %15 = vector.load %arg1[%c0_17, %c1_18, %c2_19, %c0_20] : memref<1x18x18x8xf32, #tpu.memory_space<vmem>>, vector<1x16x16x8xf32>
    %16 = vector.shape_cast %15 : vector<1x16x16x8xf32> to vector<16x16x8xf32>
    %17 = vector.shape_cast %16 : vector<16x16x8xf32> to vector<256x8xf32>
    %c0_21 = arith.constant 0 : index
    %c2_22 = arith.constant 2 : index
    %c0_23 = arith.constant 0 : index
    %c0_24 = arith.constant 0 : index
    %18 = vector.load %arg1[%c0_21, %c2_22, %c0_23, %c0_24] : memref<1x18x18x8xf32, #tpu.memory_space<vmem>>, vector<1x16x16x8xf32>
    %19 = vector.shape_cast %18 : vector<1x16x16x8xf32> to vector<16x16x8xf32>
    %20 = vector.shape_cast %19 : vector<16x16x8xf32> to vector<256x8xf32>
    %c0_25 = arith.constant 0 : index
    %c2_26 = arith.constant 2 : index
    %c1_27 = arith.constant 1 : index
    %c0_28 = arith.constant 0 : index
    %21 = vector.load %arg1[%c0_25, %c2_26, %c1_27, %c0_28] : memref<1x18x18x8xf32, #tpu.memory_space<vmem>>, vector<1x16x16x8xf32>
    %22 = vector.shape_cast %21 : vector<1x16x16x8xf32> to vector<16x16x8xf32>
    %23 = vector.shape_cast %22 : vector<16x16x8xf32> to vector<256x8xf32>
    %c0_29 = arith.constant 0 : index
    %c2_30 = arith.constant 2 : index
    %c2_31 = arith.constant 2 : index
    %c0_32 = arith.constant 0 : index
    %24 = vector.load %arg1[%c0_29, %c2_30, %c2_31, %c0_32] : memref<1x18x18x8xf32, #tpu.memory_space<vmem>>, vector<1x16x16x8xf32>
    %25 = vector.shape_cast %24 : vector<1x16x16x8xf32> to vector<16x16x8xf32>
    %26 = vector.shape_cast %25 : vector<16x16x8xf32> to vector<256x8xf32>
    %27 = tpu.concatenate %2, %5, %8, %11, %14, %17, %20, %23, %26 in 1 : vector<256x8xf32>, vector<256x8xf32>, vector<256x8xf32>, vector<256x8xf32>, vector<256x8xf32>, vector<256x8xf32>, vector<256x8xf32>, vector<256x8xf32>, vector<256x8xf32> -> vector<256x72xf32>
    %c0_33 = arith.constant 0 : index
    %c0_34 = arith.constant 0 : index
    %28 = vector.load %arg2[%c0_33, %c0_34] : memref<72x64xf32, #tpu.memory_space<vmem>>, vector<72x64xf32>
    %cst = arith.constant dense<0.000000e+00> : vector<256x64xf32>
    %29 = tpu.matmul %27, %28, %cst {dimension_numbers = #tpu.dot_dimension_numbers<[1], [0], [0], [1], [0, 0, 1, 1], [], []>} : vector<256x72xf32>, vector<72x64xf32>, vector<256x64xf32> -> vector<256x64xf32>
    %c0_35 = arith.constant 0 : index
    %c0_36 = arith.constant 0 : index
    %30 = vector.load %arg3[%c0_35, %c0_36] : memref<1x64xf32, #tpu.memory_space<vmem>>, vector<1x64xf32>
    %31 = vector.broadcast %30 : vector<1x64xf32> to vector<256x64xf32>
    %32 = arith.addf %29, %31 : vector<256x64xf32>
    %cst_37 = arith.constant 0.000000e+00 : f32
    %33 = vector.broadcast %cst_37 : f32 to vector<256x64xf32>
    %34 = arith.maximumf %32, %33 : vector<256x64xf32>
    %cst_38 = arith.constant 0.000000e+00 : f32
    %35 = vector.broadcast %cst_38 : f32 to vector<1x18x64xf32>
    %cst_39 = arith.constant 0.000000e+00 : f32
    %36 = vector.broadcast %cst_39 : f32 to vector<16x1x64xf32>
    %c0_40 = arith.constant 0 : index
    %c0_41 = arith.constant 0 : index
    %c0_42 = arith.constant 0 : index
    %37 = vector.load %arg11[%c0_40, %c0_41, %c0_42] : memref<18x18x64xf32, #tpu.memory_space<vmem>>, vector<1x18x64xf32>
    tpu.vector_store %arg11[%c0_40, %c0_41, %c0_42], %35 {strides = array<i32>} : memref<18x18x64xf32, #tpu.memory_space<vmem>>, vector<1x18x64xf32>,
    %c17 = arith.constant 17 : index
    %c0_43 = arith.constant 0 : index
    %c0_44 = arith.constant 0 : index
    %38 = vector.load %arg11[%c17, %c0_43, %c0_44] : memref<18x18x64xf32, #tpu.memory_space<vmem>>, vector<1x18x64xf32>
    tpu.vector_store %arg11[%c17, %c0_43, %c0_44], %35 {strides = array<i32>} : memref<18x18x64xf32, #tpu.memory_space<vmem>>, vector<1x18x64xf32>,
    %39 = vector.shape_cast %34 : vector<256x64xf32> to vector<16x16x64xf32>
    %40 = tpu.concatenate %36, %39, %36 in 1 : vector<16x1x64xf32>, vector<16x16x64xf32>, vector<16x1x64xf32> -> vector<16x18x64xf32>
    %c1_45 = arith.constant 1 : index
    %c0_46 = arith.constant 0 : index
    %c0_47 = arith.constant 0 : index
    %41 = vector.load %arg11[%c1_45, %c0_46, %c0_47] : memref<18x18x64xf32, #tpu.memory_space<vmem>>, vector<16x18x64xf32>
    tpu.vector_store %arg11[%c1_45, %c0_46, %c0_47], %40 {strides = array<i32>} : memref<18x18x64xf32, #tpu.memory_space<vmem>>, vector<16x18x64xf32>,
    %c0_48 = arith.constant 0 : index
    %c0_49 = arith.constant 0 : index
    %c0_50 = arith.constant 0 : index
    %42 = vector.load %arg11[%c0_48, %c0_49, %c0_50] : memref<18x18x64xf32, #tpu.memory_space<vmem>>, vector<8x16x64xf32>
    %43 = vector.shape_cast %42 : vector<8x16x64xf32> to vector<128x64xf32>
    %c0_51 = arith.constant 0 : index
    %c1_52 = arith.constant 1 : index
    %c0_53 = arith.constant 0 : index
    %44 = vector.load %arg11[%c0_51, %c1_52, %c0_53] : memref<18x18x64xf32, #tpu.memory_space<vmem>>, vector<8x16x64xf32>
    %45 = vector.shape_cast %44 : vector<8x16x64xf32> to vector<128x64xf32>
    %46 = tpu.concatenate %43, %45 in 1 : vector<128x64xf32>, vector<128x64xf32> -> vector<128x128xf32>
    %c0_54 = arith.constant 0 : index
    %c0_55 = arith.constant 0 : index
    %47 = vector.load %arg12[%c0_54, %c0_55] : memref<256x576xf32, #tpu.memory_space<vmem>>, vector<128x128xf32>
    tpu.vector_store %arg12[%c0_54, %c0_55], %46 {strides = array<i32>} : memref<256x576xf32, #tpu.memory_space<vmem>>, vector<128x128xf32>,
    %c0_56 = arith.constant 0 : index
    %c2_57 = arith.constant 2 : index
    %c0_58 = arith.constant 0 : index
    %48 = vector.load %arg11[%c0_56, %c2_57, %c0_58] : memref<18x18x64xf32, #tpu.memory_space<vmem>>, vector<8x16x64xf32>
    %49 = vector.shape_cast %48 : vector<8x16x64xf32> to vector<128x64xf32>
    %c1_59 = arith.constant 1 : index
    %c0_60 = arith.constant 0 : index
    %c0_61 = arith.constant 0 : index
    %50 = vector.load %arg11[%c1_59, %c0_60, %c0_61] : memref<18x18x64xf32, #tpu.memory_space<vmem>>, vector<8x16x64xf32>
    %51 = vector.shape_cast %50 : vector<8x16x64xf32> to vector<128x64xf32>
    %52 = tpu.concatenate %49, %51 in 1 : vector<128x64xf32>, vector<128x64xf32> -> vector<128x128xf32>
    %c0_62 = arith.constant 0 : index
    %c128 = arith.constant 128 : index
    %53 = vector.load %arg12[%c0_62, %c128] : memref<256x576xf32, #tpu.memory_space<vmem>>, vector<128x128xf32>
    tpu.vector_store %arg12[%c0_62, %c128], %52 {strides = array<i32>} : memref<256x576xf32, #tpu.memory_space<vmem>>, vector<128x128xf32>,
    %c1_63 = arith.constant 1 : index
    %c1_64 = arith.constant 1 : index
    %c0_65 = arith.constant 0 : index
    %54 = vector.load %arg11[%c1_63, %c1_64, %c0_65] : memref<18x18x64xf32, #tpu.memory_space<vmem>>, vector<8x16x64xf32>
    %55 = vector.shape_cast %54 : vector<8x16x64xf32> to vector<128x64xf32>
    %c1_66 = arith.constant 1 : index
    %c2_67 = arith.constant 2 : index
    %c0_68 = arith.constant 0 : index
    %56 = vector.load %arg11[%c1_66, %c2_67, %c0_68] : memref<18x18x64xf32, #tpu.memory_space<vmem>>, vector<8x16x64xf32>
    %57 = vector.shape_cast %56 : vector<8x16x64xf32> to vector<128x64xf32>
    %58 = tpu.concatenate %55, %57 in 1 : vector<128x64xf32>, vector<128x64xf32> -> vector<128x128xf32>
    %c0_69 = arith.constant 0 : index
    %c256 = arith.constant 256 : index
    %59 = vector.load %arg12[%c0_69, %c256] : memref<256x576xf32, #tpu.memory_space<vmem>>, vector<128x128xf32>
    tpu.vector_store %arg12[%c0_69, %c256], %58 {strides = array<i32>} : memref<256x576xf32, #tpu.memory_space<vmem>>, vector<128x128xf32>,
    %c2_70 = arith.constant 2 : index
    %c0_71 = arith.constant 0 : index
    %c0_72 = arith.constant 0 : index
    %60 = vector.load %arg11[%c2_70, %c0_71, %c0_72] : memref<18x18x64xf32, #tpu.memory_space<vmem>>, vector<8x16x64xf32>
    %61 = vector.shape_cast %60 : vector<8x16x64xf32> to vector<128x64xf32>
    %c2_73 = arith.constant 2 : index
    %c1_74 = arith.constant 1 : index
    %c0_75 = arith.constant 0 : index
    %62 = vector.load %arg11[%c2_73, %c1_74, %c0_75] : memref<18x18x64xf32, #tpu.memory_space<vmem>>, vector<8x16x64xf32>
    %63 = vector.shape_cast %62 : vector<8x16x64xf32> to vector<128x64xf32>
    %64 = tpu.concatenate %61, %63 in 1 : vector<128x64xf32>, vector<128x64xf32> -> vector<128x128xf32>
    %c0_76 = arith.constant 0 : index
    %c384 = arith.constant 384 : index
    %65 = vector.load %arg12[%c0_76, %c384] : memref<256x576xf32, #tpu.memory_space<vmem>>, vector<128x128xf32>
    tpu.vector_store %arg12[%c0_76, %c384], %64 {strides = array<i32>} : memref<256x576xf32, #tpu.memory_space<vmem>>, vector<128x128xf32>,
    %c2_77 = arith.constant 2 : index
    %c2_78 = arith.constant 2 : index
    %c0_79 = arith.constant 0 : index
    %66 = vector.load %arg11[%c2_77, %c2_78, %c0_79] : memref<18x18x64xf32, #tpu.memory_space<vmem>>, vector<8x16x64xf32>
    %67 = vector.shape_cast %66 : vector<8x16x64xf32> to vector<128x64xf32>
    %c0_80 = arith.constant 0 : index
    %c512 = arith.constant 512 : index
    %68 = vector.load %arg12[%c0_80, %c512] : memref<256x576xf32, #tpu.memory_space<vmem>>, vector<128x64xf32>
    tpu.vector_store %arg12[%c0_80, %c512], %67 {strides = array<i32>} : memref<256x576xf32, #tpu.memory_space<vmem>>, vector<128x64xf32>,
    %c0_81 = arith.constant 0 : index
    %c0_82 = arith.constant 0 : index
    %69 = vector.load %arg12[%c0_81, %c0_82] : memref<256x576xf32, #tpu.memory_space<vmem>>, vector<128x576xf32>
    %c0_83 = arith.constant 0 : index
    %c0_84 = arith.constant 0 : index
    %70 = vector.load %arg4[%c0_83, %c0_84] : memref<576x64xf32, #tpu.memory_space<vmem>>, vector<576x64xf32>
    %cst_85 = arith.constant dense<0.000000e+00> : vector<128x64xf32>
    %71 = tpu.matmul %69, %70, %cst_85 {dimension_numbers = #tpu.dot_dimension_numbers<[1], [0], [0], [1], [0, 0, 1, 1], [], []>} : vector<128x576xf32>, vector<576x64xf32>, vector<128x64xf32> -> vector<128x64xf32>
    %c0_86 = arith.constant 0 : index
    %c0_87 = arith.constant 0 : index
    %72 = vector.load %arg5[%c0_86, %c0_87] : memref<1x64xf32, #tpu.memory_space<vmem>>, vector<1x64xf32>
    %73 = vector.broadcast %72 : vector<1x64xf32> to vector<128x64xf32>
    %74 = arith.addf %71, %73 : vector<128x64xf32>
    %cst_88 = arith.constant 0.000000e+00 : f32
    %75 = vector.broadcast %cst_88 : f32 to vector<128x64xf32>
    %76 = arith.maximumf %74, %75 : vector<128x64xf32>
    %77 = vector.shape_cast %76 : vector<128x64xf32> to vector<8x16x64xf32>
    %78 = vector.shape_cast %77 : vector<8x16x64xf32> to vector<8x8x2x64xf32>
    %cst_89 = arith.constant dense<0xFF800000> : vector<8x8x64xf32>
    %79 = vector.multi_reduction <maximumf>, %78, %cst_89 [2] : vector<8x8x2x64xf32> to vector<8x8x64xf32>
    %80 = vector.shape_cast %79 : vector<8x8x64xf32> to vector<4x2x8x64xf32>
    %cst_90 = arith.constant dense<0xFF800000> : vector<4x8x64xf32>
    %81 = vector.multi_reduction <maximumf>, %80, %cst_90 [1] : vector<4x2x8x64xf32> to vector<4x8x64xf32>
    %c8 = arith.constant 8 : index
    %c0_91 = arith.constant 0 : index
    %c0_92 = arith.constant 0 : index
    %82 = vector.load %arg11[%c8, %c0_91, %c0_92] : memref<18x18x64xf32, #tpu.memory_space<vmem>>, vector<8x16x64xf32>
    %83 = vector.shape_cast %82 : vector<8x16x64xf32> to vector<128x64xf32>
    %c8_93 = arith.constant 8 : index
    %c1_94 = arith.constant 1 : index
    %c0_95 = arith.constant 0 : index
    %84 = vector.load %arg11[%c8_93, %c1_94, %c0_95] : memref<18x18x64xf32, #tpu.memory_space<vmem>>, vector<8x16x64xf32>
    %85 = vector.shape_cast %84 : vector<8x16x64xf32> to vector<128x64xf32>
    %86 = tpu.concatenate %83, %85 in 1 : vector<128x64xf32>, vector<128x64xf32> -> vector<128x128xf32>
    %c128_96 = arith.constant 128 : index
    %c0_97 = arith.constant 0 : index
    %87 = vector.load %arg12[%c128_96, %c0_97] : memref<256x576xf32, #tpu.memory_space<vmem>>, vector<128x128xf32>
    tpu.vector_store %arg12[%c128_96, %c0_97], %86 {strides = array<i32>} : memref<256x576xf32, #tpu.memory_space<vmem>>, vector<128x128xf32>,
    %c8_98 = arith.constant 8 : index
    %c2_99 = arith.constant 2 : index
    %c0_100 = arith.constant 0 : index
    %88 = vector.load %arg11[%c8_98, %c2_99, %c0_100] : memref<18x18x64xf32, #tpu.memory_space<vmem>>, vector<8x16x64xf32>
    %89 = vector.shape_cast %88 : vector<8x16x64xf32> to vector<128x64xf32>
    %c9 = arith.constant 9 : index
    %c0_101 = arith.constant 0 : index
    %c0_102 = arith.constant 0 : index
    %90 = vector.load %arg11[%c9, %c0_101, %c0_102] : memref<18x18x64xf32, #tpu.memory_space<vmem>>, vector<8x16x64xf32>
    %91 = vector.shape_cast %90 : vector<8x16x64xf32> to vector<128x64xf32>
    %92 = tpu.concatenate %89, %91 in 1 : vector<128x64xf32>, vector<128x64xf32> -> vector<128x128xf32>
    %c128_103 = arith.constant 128 : index
    %c128_104 = arith.constant 128 : index
    %93 = vector.load %arg12[%c128_103, %c128_104] : memref<256x576xf32, #tpu.memory_space<vmem>>, vector<128x128xf32>
    tpu.vector_store %arg12[%c128_103, %c128_104], %92 {strides = array<i32>} : memref<256x576xf32, #tpu.memory_space<vmem>>, vector<128x128xf32>,
    %c9_105 = arith.constant 9 : index
    %c1_106 = arith.constant 1 : index
    %c0_107 = arith.constant 0 : index
    %94 = vector.load %arg11[%c9_105, %c1_106, %c0_107] : memref<18x18x64xf32, #tpu.memory_space<vmem>>, vector<8x16x64xf32>
    %95 = vector.shape_cast %94 : vector<8x16x64xf32> to vector<128x64xf32>
    %c9_108 = arith.constant 9 : index
    %c2_109 = arith.constant 2 : index
    %c0_110 = arith.constant 0 : index
    %96 = vector.load %arg11[%c9_108, %c2_109, %c0_110] : memref<18x18x64xf32, #tpu.memory_space<vmem>>, vector<8x16x64xf32>
    %97 = vector.shape_cast %96 : vector<8x16x64xf32> to vector<128x64xf32>
    %98 = tpu.concatenate %95, %97 in 1 : vector<128x64xf32>, vector<128x64xf32> -> vector<128x128xf32>
    %c128_111 = arith.constant 128 : index
    %c256_112 = arith.constant 256 : index
    %99 = vector.load %arg12[%c128_111, %c256_112] : memref<256x576xf32, #tpu.memory_space<vmem>>, vector<128x128xf32>
    tpu.vector_store %arg12[%c128_111, %c256_112], %98 {strides = array<i32>} : memref<256x576xf32, #tpu.memory_space<vmem>>, vector<128x128xf32>,
    %c10 = arith.constant 10 : index
    %c0_113 = arith.constant 0 : index
    %c0_114 = arith.constant 0 : index
    %100 = vector.load %arg11[%c10, %c0_113, %c0_114] : memref<18x18x64xf32, #tpu.memory_space<vmem>>, vector<8x16x64xf32>
    %101 = vector.shape_cast %100 : vector<8x16x64xf32> to vector<128x64xf32>
    %c10_115 = arith.constant 10 : index
    %c1_116 = arith.constant 1 : index
    %c0_117 = arith.constant 0 : index
    %102 = vector.load %arg11[%c10_115, %c1_116, %c0_117] : memref<18x18x64xf32, #tpu.memory_space<vmem>>, vector<8x16x64xf32>
    %103 = vector.shape_cast %102 : vector<8x16x64xf32> to vector<128x64xf32>
    %104 = tpu.concatenate %101, %103 in 1 : vector<128x64xf32>, vector<128x64xf32> -> vector<128x128xf32>
    %c128_118 = arith.constant 128 : index
    %c384_119 = arith.constant 384 : index
    %105 = vector.load %arg12[%c128_118, %c384_119] : memref<256x576xf32, #tpu.memory_space<vmem>>, vector<128x128xf32>
    tpu.vector_store %arg12[%c128_118, %c384_119], %104 {strides = array<i32>} : memref<256x576xf32, #tpu.memory_space<vmem>>, vector<128x128xf32>,
    %c10_120 = arith.constant 10 : index
    %c2_121 = arith.constant 2 : index
    %c0_122 = arith.constant 0 : index
    %106 = vector.load %arg11[%c10_120, %c2_121, %c0_122] : memref<18x18x64xf32, #tpu.memory_space<vmem>>, vector<8x16x64xf32>
    %107 = vector.shape_cast %106 : vector<8x16x64xf32> to vector<128x64xf32>
    %c128_123 = arith.constant 128 : index
    %c512_124 = arith.constant 512 : index
    %108 = vector.load %arg12[%c128_123, %c512_124] : memref<256x576xf32, #tpu.memory_space<vmem>>, vector<128x64xf32>
    tpu.vector_store %arg12[%c128_123, %c512_124], %107 {strides = array<i32>} : memref<256x576xf32, #tpu.memory_space<vmem>>, vector<128x64xf32>,
    %c128_125 = arith.constant 128 : index
    %c0_126 = arith.constant 0 : index
    %109 = vector.load %arg12[%c128_125, %c0_126] : memref<256x576xf32, #tpu.memory_space<vmem>>, vector<128x576xf32>
    %c0_127 = arith.constant 0 : index
    %c0_128 = arith.constant 0 : index
    %110 = vector.load %arg4[%c0_127, %c0_128] : memref<576x64xf32, #tpu.memory_space<vmem>>, vector<576x64xf32>
    %cst_129 = arith.constant dense<0.000000e+00> : vector<128x64xf32>
    %111 = tpu.matmul %109, %110, %cst_129 {dimension_numbers = #tpu.dot_dimension_numbers<[1], [0], [0], [1], [0, 0, 1, 1], [], []>} : vector<128x576xf32>, vector<576x64xf32>, vector<128x64xf32> -> vector<128x64xf32>
    %c0_130 = arith.constant 0 : index
    %c0_131 = arith.constant 0 : index
    %112 = vector.load %arg5[%c0_130, %c0_131] : memref<1x64xf32, #tpu.memory_space<vmem>>, vector<1x64xf32>
    %113 = vector.broadcast %112 : vector<1x64xf32> to vector<128x64xf32>
    %114 = arith.addf %111, %113 : vector<128x64xf32>
    %cst_132 = arith.constant 0.000000e+00 : f32
    %115 = vector.broadcast %cst_132 : f32 to vector<128x64xf32>
    %116 = arith.maximumf %114, %115 : vector<128x64xf32>
    %117 = vector.shape_cast %116 : vector<128x64xf32> to vector<8x16x64xf32>
    %118 = vector.shape_cast %117 : vector<8x16x64xf32> to vector<8x8x2x64xf32>
    %cst_133 = arith.constant dense<0xFF800000> : vector<8x8x64xf32>
    %119 = vector.multi_reduction <maximumf>, %118, %cst_133 [2] : vector<8x8x2x64xf32> to vector<8x8x64xf32>
    %120 = vector.shape_cast %119 : vector<8x8x64xf32> to vector<4x2x8x64xf32>
    %cst_134 = arith.constant dense<0xFF800000> : vector<4x8x64xf32>
    %121 = vector.multi_reduction <maximumf>, %120, %cst_134 [1] : vector<4x2x8x64xf32> to vector<4x8x64xf32>
    %122 = tpu.concatenate %81, %121 in 0 : vector<4x8x64xf32>, vector<4x8x64xf32> -> vector<8x8x64xf32>
    %123 = vector.shape_cast %122 : vector<8x8x64xf32> to vector<64x64xf32>
    %c0_135 = arith.constant 0 : index
    %c0_136 = arith.constant 0 : index
    %124 = vector.load %arg6[%c0_135, %c0_136] : memref<64x256xf32, #tpu.memory_space<vmem>>, vector<64x256xf32>
    %cst_137 = arith.constant dense<0.000000e+00> : vector<64x256xf32>
    %125 = tpu.matmul %123, %124, %cst_137 {dimension_numbers = #tpu.dot_dimension_numbers<[1], [0], [0], [1], [0, 0, 1, 1], [], []>} : vector<64x64xf32>, vector<64x256xf32>, vector<64x256xf32> -> vector<64x256xf32>
    %c0_138 = arith.constant 0 : index
    %c0_139 = arith.constant 0 : index
    %126 = vector.load %arg7[%c0_138, %c0_139] : memref<1x256xf32, #tpu.memory_space<vmem>>, vector<1x256xf32>
    %127 = vector.broadcast %126 : vector<1x256xf32> to vector<64x256xf32>
    %128 = arith.addf %125, %127 : vector<64x256xf32>
    %cst_140 = arith.constant 0.000000e+00 : f32
    %129 = vector.broadcast %cst_140 : f32 to vector<64x256xf32>
    %130 = arith.maximumf %128, %129 : vector<64x256xf32>
    %cst_141 = arith.constant 0.000000e+00 : f32
    %131 = vector.broadcast %cst_141 : f32 to vector<2x1x10x128xf32>
    %cst_142 = arith.constant 0.000000e+00 : f32
    %132 = vector.broadcast %cst_142 : f32 to vector<8x1x128xf32>
    %c0_143 = arith.constant 0 : index
    %c0_144 = arith.constant 0 : index
    %c0_145 = arith.constant 0 : index
    %c0_146 = arith.constant 0 : index
    %133 = vector.load %arg13[%c0_143, %c0_144, %c0_145, %c0_146] : memref<2x10x10x128xf32, #tpu.memory_space<vmem>>, vector<2x1x10x128xf32>
    tpu.vector_store %arg13[%c0_143, %c0_144, %c0_145, %c0_146], %131 {strides = array<i32>} : memref<2x10x10x128xf32, #tpu.memory_space<vmem>>, vector<2x1x10x128xf32>,
    %c0_147 = arith.constant 0 : index
    %c9_148 = arith.constant 9 : index
    %c0_149 = arith.constant 0 : index
    %c0_150 = arith.constant 0 : index
    %134 = vector.load %arg13[%c0_147, %c9_148, %c0_149, %c0_150] : memref<2x10x10x128xf32, #tpu.memory_space<vmem>>, vector<2x1x10x128xf32>
    tpu.vector_store %arg13[%c0_147, %c9_148, %c0_149, %c0_150], %131 {strides = array<i32>} : memref<2x10x10x128xf32, #tpu.memory_space<vmem>>, vector<2x1x10x128xf32>,
    %135 = vector.extract_strided_slice %130 {offsets = [0, 0], sizes = [64, 128], strides = [1, 1]} : vector<64x256xf32> to vector<64x128xf32>
    %136 = vector.shape_cast %135 : vector<64x128xf32> to vector<8x8x128xf32>
    %137 = tpu.concatenate %132, %136, %132 in 1 : vector<8x1x128xf32>, vector<8x8x128xf32>, vector<8x1x128xf32> -> vector<8x10x128xf32>
    %c0_151 = arith.constant 0 : index
    %c1_152 = arith.constant 1 : index
    %c0_153 = arith.constant 0 : index
    %c0_154 = arith.constant 0 : index
    %138 = vector.load %arg13[%c0_151, %c1_152, %c0_153, %c0_154] : memref<2x10x10x128xf32, #tpu.memory_space<vmem>>, vector<1x8x10x128xf32>
    %139 = vector.shape_cast %138 : vector<1x8x10x128xf32> to vector<8x10x128xf32>
    %140 = vector.shape_cast %137 : vector<8x10x128xf32> to vector<1x8x10x128xf32>
    tpu.vector_store %arg13[%c0_151, %c1_152, %c0_153, %c0_154], %140 {strides = array<i32>} : memref<2x10x10x128xf32, #tpu.memory_space<vmem>>, vector<1x8x10x128xf32>,
    %141 = vector.extract_strided_slice %130 {offsets = [0, 128], sizes = [64, 128], strides = [1, 1]} : vector<64x256xf32> to vector<64x128xf32>
    %142 = vector.shape_cast %141 : vector<64x128xf32> to vector<8x8x128xf32>
    %143 = tpu.concatenate %132, %142, %132 in 1 : vector<8x1x128xf32>, vector<8x8x128xf32>, vector<8x1x128xf32> -> vector<8x10x128xf32>
    %c1_155 = arith.constant 1 : index
    %c1_156 = arith.constant 1 : index
    %c0_157 = arith.constant 0 : index
    %c0_158 = arith.constant 0 : index
    %144 = vector.load %arg13[%c1_155, %c1_156, %c0_157, %c0_158] : memref<2x10x10x128xf32, #tpu.memory_space<vmem>>, vector<1x8x10x128xf32>
    %145 = vector.shape_cast %144 : vector<1x8x10x128xf32> to vector<8x10x128xf32>
    %146 = vector.shape_cast %143 : vector<8x10x128xf32> to vector<1x8x10x128xf32>
    tpu.vector_store %arg13[%c1_155, %c1_156, %c0_157, %c0_158], %146 {strides = array<i32>} : memref<2x10x10x128xf32, #tpu.memory_space<vmem>>, vector<1x8x10x128xf32>,
    %c1_159 = arith.constant 1 : index
    %c0_160 = arith.constant 0 : index
    %c0_161 = arith.constant 0 : index
    %c64 = arith.constant 64 : index
    %147 = vector.load %arg13[%c1_159, %c0_160, %c0_161, %c64] : memref<2x10x10x128xf32, #tpu.memory_space<vmem>>, vector<1x8x8x64xf32>
    %148 = vector.shape_cast %147 : vector<1x8x8x64xf32> to vector<8x8x64xf32>
    %149 = vector.shape_cast %148 : vector<8x8x64xf32> to vector<64x64xf32>
    %c1_162 = arith.constant 1 : index
    %c0_163 = arith.constant 0 : index
    %c1_164 = arith.constant 1 : index
    %c0_165 = arith.constant 0 : index
    %150 = vector.load %arg13[%c1_162, %c0_163, %c1_164, %c0_165] : memref<2x10x10x128xf32, #tpu.memory_space<vmem>>, vector<1x8x8x64xf32>
    %151 = vector.shape_cast %150 : vector<1x8x8x64xf32> to vector<8x8x64xf32>
    %152 = vector.shape_cast %151 : vector<8x8x64xf32> to vector<64x64xf32>
    %153 = tpu.concatenate %149, %152 in 1 : vector<64x64xf32>, vector<64x64xf32> -> vector<64x128xf32>
    %c0_166 = arith.constant 0 : index
    %c0_167 = arith.constant 0 : index
    %154 = vector.load %arg12[%c0_166, %c0_167] : memref<256x576xf32, #tpu.memory_space<vmem>>, vector<64x128xf32>
    tpu.vector_store %arg12[%c0_166, %c0_167], %153 {strides = array<i32>} : memref<256x576xf32, #tpu.memory_space<vmem>>, vector<64x128xf32>,
    %c1_168 = arith.constant 1 : index
    %c0_169 = arith.constant 0 : index
    %c1_170 = arith.constant 1 : index
    %c64_171 = arith.constant 64 : index
    %155 = vector.load %arg13[%c1_168, %c0_169, %c1_170, %c64_171] : memref<2x10x10x128xf32, #tpu.memory_space<vmem>>, vector<1x8x8x64xf32>
    %156 = vector.shape_cast %155 : vector<1x8x8x64xf32> to vector<8x8x64xf32>
    %157 = vector.shape_cast %156 : vector<8x8x64xf32> to vector<64x64xf32>
    %c0_172 = arith.constant 0 : index
    %c1_173 = arith.constant 1 : index
    %c0_174 = arith.constant 0 : index
    %c64_175 = arith.constant 64 : index
    %158 = vector.load %arg13[%c0_172, %c1_173, %c0_174, %c64_175] : memref<2x10x10x128xf32, #tpu.memory_space<vmem>>, vector<1x8x8x64xf32>
    %159 = vector.shape_cast %158 : vector<1x8x8x64xf32> to vector<8x8x64xf32>
    %160 = vector.shape_cast %159 : vector<8x8x64xf32> to vector<64x64xf32>
    %161 = tpu.concatenate %157, %160 in 1 : vector<64x64xf32>, vector<64x64xf32> -> vector<64x128xf32>
    %c0_176 = arith.constant 0 : index
    %c128_177 = arith.constant 128 : index
    %162 = vector.load %arg12[%c0_176, %c128_177] : memref<256x576xf32, #tpu.memory_space<vmem>>, vector<64x128xf32>
    tpu.vector_store %arg12[%c0_176, %c128_177], %161 {strides = array<i32>} : memref<256x576xf32, #tpu.memory_space<vmem>>, vector<64x128xf32>,
    %c0_178 = arith.constant 0 : index
    %c1_179 = arith.constant 1 : index
    %c1_180 = arith.constant 1 : index
    %c0_181 = arith.constant 0 : index
    %163 = vector.load %arg13[%c0_178, %c1_179, %c1_180, %c0_181] : memref<2x10x10x128xf32, #tpu.memory_space<vmem>>, vector<1x8x8x64xf32>
    %164 = vector.shape_cast %163 : vector<1x8x8x64xf32> to vector<8x8x64xf32>
    %165 = vector.shape_cast %164 : vector<8x8x64xf32> to vector<64x64xf32>
    %c0_182 = arith.constant 0 : index
    %c1_183 = arith.constant 1 : index
    %c1_184 = arith.constant 1 : index
    %c64_185 = arith.constant 64 : index
    %166 = vector.load %arg13[%c0_182, %c1_183, %c1_184, %c64_185] : memref<2x10x10x128xf32, #tpu.memory_space<vmem>>, vector<1x8x8x64xf32>
    %167 = vector.shape_cast %166 : vector<1x8x8x64xf32> to vector<8x8x64xf32>
    %168 = vector.shape_cast %167 : vector<8x8x64xf32> to vector<64x64xf32>
    %169 = tpu.concatenate %165, %168 in 1 : vector<64x64xf32>, vector<64x64xf32> -> vector<64x128xf32>
    %c0_186 = arith.constant 0 : index
    %c256_187 = arith.constant 256 : index
    %170 = vector.load %arg12[%c0_186, %c256_187] : memref<256x576xf32, #tpu.memory_space<vmem>>, vector<64x128xf32>
    tpu.vector_store %arg12[%c0_186, %c256_187], %169 {strides = array<i32>} : memref<256x576xf32, #tpu.memory_space<vmem>>, vector<64x128xf32>,
    %c1_188 = arith.constant 1 : index
    %c1_189 = arith.constant 1 : index
    %c0_190 = arith.constant 0 : index
    %c64_191 = arith.constant 64 : index
    %171 = vector.load %arg13[%c1_188, %c1_189, %c0_190, %c64_191] : memref<2x10x10x128xf32, #tpu.memory_space<vmem>>, vector<1x8x8x64xf32>
    %172 = vector.shape_cast %171 : vector<1x8x8x64xf32> to vector<8x8x64xf32>
    %173 = vector.shape_cast %172 : vector<8x8x64xf32> to vector<64x64xf32>
    %c1_192 = arith.constant 1 : index
    %c1_193 = arith.constant 1 : index
    %c1_194 = arith.constant 1 : index
    %c0_195 = arith.constant 0 : index
    %174 = vector.load %arg13[%c1_192, %c1_193, %c1_194, %c0_195] : memref<2x10x10x128xf32, #tpu.memory_space<vmem>>, vector<1x8x8x64xf32>
    %175 = vector.shape_cast %174 : vector<1x8x8x64xf32> to vector<8x8x64xf32>
    %176 = vector.shape_cast %175 : vector<8x8x64xf32> to vector<64x64xf32>
    %177 = tpu.concatenate %173, %176 in 1 : vector<64x64xf32>, vector<64x64xf32> -> vector<64x128xf32>
    %c0_196 = arith.constant 0 : index
    %c384_197 = arith.constant 384 : index
    %178 = vector.load %arg12[%c0_196, %c384_197] : memref<256x576xf32, #tpu.memory_space<vmem>>, vector<64x128xf32>
    tpu.vector_store %arg12[%c0_196, %c384_197], %177 {strides = array<i32>} : memref<256x576xf32, #tpu.memory_space<vmem>>, vector<64x128xf32>,
    %c1_198 = arith.constant 1 : index
    %c1_199 = arith.constant 1 : index
    %c1_200 = arith.constant 1 : index
    %c64_201 = arith.constant 64 : index
    %179 = vector.load %arg13[%c1_198, %c1_199, %c1_200, %c64_201] : memref<2x10x10x128xf32, #tpu.memory_space<vmem>>, vector<1x8x8x64xf32>
    %180 = vector.shape_cast %179 : vector<1x8x8x64xf32> to vector<8x8x64xf32>
    %181 = vector.shape_cast %180 : vector<8x8x64xf32> to vector<64x64xf32>
    %c0_202 = arith.constant 0 : index
    %c512_203 = arith.constant 512 : index
    %182 = vector.load %arg12[%c0_202, %c512_203] : memref<256x576xf32, #tpu.memory_space<vmem>>, vector<64x64xf32>
    tpu.vector_store %arg12[%c0_202, %c512_203], %181 {strides = array<i32>} : memref<256x576xf32, #tpu.memory_space<vmem>>, vector<64x64xf32>,
    %c0_204 = arith.constant 0 : index
    %c0_205 = arith.constant 0 : index
    %183 = vector.load %arg12[%c0_204, %c0_205] : memref<256x576xf32, #tpu.memory_space<vmem>>, vector<64x576xf32>
    %c0_206 = arith.constant 0 : index
    %c0_207 = arith.constant 0 : index
    %184 = vector.load %arg8[%c0_206, %c0_207] : memref<576x128xf32, #tpu.memory_space<vmem>>, vector<576x128xf32>
    %cst_208 = arith.constant dense<0.000000e+00> : vector<64x128xf32>
    %185 = tpu.matmul %183, %184, %cst_208 {dimension_numbers = #tpu.dot_dimension_numbers<[1], [0], [0], [1], [0, 0, 1, 1], [], []>} : vector<64x576xf32>, vector<576x128xf32>, vector<64x128xf32> -> vector<64x128xf32>
    %c0_209 = arith.constant 0 : index
    %c0_210 = arith.constant 0 : index
    %186 = vector.load %arg9[%c0_209, %c0_210] : memref<1x128xf32, #tpu.memory_space<vmem>>, vector<1x128xf32>
    %187 = vector.broadcast %186 : vector<1x128xf32> to vector<64x128xf32>
    %188 = arith.addf %185, %187 : vector<64x128xf32>
    %cst_211 = arith.constant 0.000000e+00 : f32
    %189 = vector.broadcast %cst_211 : f32 to vector<64x128xf32>
    %190 = arith.subf %189, %188 : vector<64x128xf32>
    %191 = math.exp %190 : vector<64x128xf32>
    %cst_212 = arith.constant 1.000000e+00 : f32
    %192 = vector.broadcast %cst_212 : f32 to vector<64x128xf32>
    %193 = arith.addf %192, %191 : vector<64x128xf32>
    %194 = tpu.reciprocal %193 : vector<64x128xf32> -> vector<64x128xf32>
    %c0_213 = arith.constant 0 : index
    %c0_214 = arith.constant 0 : index
    %c0_215 = arith.constant 0 : index
    %195 = vector.load %arg10[%c0_213, %c0_214, %c0_215] : memref<1x256x128xf32, #tpu.memory_space<vmem>>, vector<1x64x128xf32>
    %196 = vector.shape_cast %195 : vector<1x64x128xf32> to vector<64x128xf32>
    %197 = vector.shape_cast %194 : vector<64x128xf32> to vector<1x64x128xf32>
    tpu.vector_store %arg10[%c0_213, %c0_214, %c0_215], %197 {strides = array<i32>} : memref<1x256x128xf32, #tpu.memory_space<vmem>>, vector<1x64x128xf32>,
    %c1_216 = arith.constant 1 : index
    %c0_217 = arith.constant 0 : index
    %c1_218 = arith.constant 1 : index
    %c0_219 = arith.constant 0 : index
    %198 = vector.load %arg13[%c1_216, %c0_217, %c1_218, %c0_219] : memref<2x10x10x128xf32, #tpu.memory_space<vmem>>, vector<1x8x8x64xf32>
    %199 = vector.shape_cast %198 : vector<1x8x8x64xf32> to vector<8x8x64xf32>
    %200 = vector.shape_cast %199 : vector<8x8x64xf32> to vector<64x64xf32>
    %c1_220 = arith.constant 1 : index
    %c0_221 = arith.constant 0 : index
    %c1_222 = arith.constant 1 : index
    %c64_223 = arith.constant 64 : index
    %201 = vector.load %arg13[%c1_220, %c0_221, %c1_222, %c64_223] : memref<2x10x10x128xf32, #tpu.memory_space<vmem>>, vector<1x8x8x64xf32>
    %202 = vector.shape_cast %201 : vector<1x8x8x64xf32> to vector<8x8x64xf32>
    %203 = vector.shape_cast %202 : vector<8x8x64xf32> to vector<64x64xf32>
    %204 = tpu.concatenate %200, %203 in 1 : vector<64x64xf32>, vector<64x64xf32> -> vector<64x128xf32>
    %c64_224 = arith.constant 64 : index
    %c0_225 = arith.constant 0 : index
    %205 = vector.load %arg12[%c64_224, %c0_225] : memref<256x576xf32, #tpu.memory_space<vmem>>, vector<64x128xf32>
    tpu.vector_store %arg12[%c64_224, %c0_225], %204 {strides = array<i32>} : memref<256x576xf32, #tpu.memory_space<vmem>>, vector<64x128xf32>,
    %c1_226 = arith.constant 1 : index
    %c0_227 = arith.constant 0 : index
    %c2_228 = arith.constant 2 : index
    %c0_229 = arith.constant 0 : index
    %206 = vector.load %arg13[%c1_226, %c0_227, %c2_228, %c0_229] : memref<2x10x10x128xf32, #tpu.memory_space<vmem>>, vector<1x8x8x64xf32>
    %207 = vector.shape_cast %206 : vector<1x8x8x64xf32> to vector<8x8x64xf32>
    %208 = vector.shape_cast %207 : vector<8x8x64xf32> to vector<64x64xf32>
    %c0_230 = arith.constant 0 : index
    %c1_231 = arith.constant 1 : index
    %c1_232 = arith.constant 1 : index
    %c0_233 = arith.constant 0 : index
    %209 = vector.load %arg13[%c0_230, %c1_231, %c1_232, %c0_233] : memref<2x10x10x128xf32, #tpu.memory_space<vmem>>, vector<1x8x8x64xf32>
    %210 = vector.shape_cast %209 : vector<1x8x8x64xf32> to vector<8x8x64xf32>
    %211 = vector.shape_cast %210 : vector<8x8x64xf32> to vector<64x64xf32>
    %212 = tpu.concatenate %208, %211 in 1 : vector<64x64xf32>, vector<64x64xf32> -> vector<64x128xf32>
    %c64_234 = arith.constant 64 : index
    %c128_235 = arith.constant 128 : index
    %213 = vector.load %arg12[%c64_234, %c128_235] : memref<256x576xf32, #tpu.memory_space<vmem>>, vector<64x128xf32>
    tpu.vector_store %arg12[%c64_234, %c128_235], %212 {strides = array<i32>} : memref<256x576xf32, #tpu.memory_space<vmem>>, vector<64x128xf32>,
    %c0_236 = arith.constant 0 : index
    %c1_237 = arith.constant 1 : index
    %c1_238 = arith.constant 1 : index
    %c64_239 = arith.constant 64 : index
    %214 = vector.load %arg13[%c0_236, %c1_237, %c1_238, %c64_239] : memref<2x10x10x128xf32, #tpu.memory_space<vmem>>, vector<1x8x8x64xf32>
    %215 = vector.shape_cast %214 : vector<1x8x8x64xf32> to vector<8x8x64xf32>
    %216 = vector.shape_cast %215 : vector<8x8x64xf32> to vector<64x64xf32>
    %c0_240 = arith.constant 0 : index
    %c1_241 = arith.constant 1 : index
    %c2_242 = arith.constant 2 : index
    %c0_243 = arith.constant 0 : index
    %217 = vector.load %arg13[%c0_240, %c1_241, %c2_242, %c0_243] : memref<2x10x10x128xf32, #tpu.memory_space<vmem>>, vector<1x8x8x64xf32>
    %218 = vector.shape_cast %217 : vector<1x8x8x64xf32> to vector<8x8x64xf32>
    %219 = vector.shape_cast %218 : vector<8x8x64xf32> to vector<64x64xf32>
    %220 = tpu.concatenate %216, %219 in 1 : vector<64x64xf32>, vector<64x64xf32> -> vector<64x128xf32>
    %c64_244 = arith.constant 64 : index
    %c256_245 = arith.constant 256 : index
    %221 = vector.load %arg12[%c64_244, %c256_245] : memref<256x576xf32, #tpu.memory_space<vmem>>, vector<64x128xf32>
    tpu.vector_store %arg12[%c64_244, %c256_245], %220 {strides = array<i32>} : memref<256x576xf32, #tpu.memory_space<vmem>>, vector<64x128xf32>,
    %c1_246 = arith.constant 1 : index
    %c1_247 = arith.constant 1 : index
    %c1_248 = arith.constant 1 : index
    %c0_249 = arith.constant 0 : index
    %222 = vector.load %arg13[%c1_246, %c1_247, %c1_248, %c0_249] : memref<2x10x10x128xf32, #tpu.memory_space<vmem>>, vector<1x8x8x64xf32>
    %223 = vector.shape_cast %222 : vector<1x8x8x64xf32> to vector<8x8x64xf32>
    %224 = vector.shape_cast %223 : vector<8x8x64xf32> to vector<64x64xf32>
    %c1_250 = arith.constant 1 : index
    %c1_251 = arith.constant 1 : index
    %c1_252 = arith.constant 1 : index
    %c64_253 = arith.constant 64 : index
    %225 = vector.load %arg13[%c1_250, %c1_251, %c1_252, %c64_253] : memref<2x10x10x128xf32, #tpu.memory_space<vmem>>, vector<1x8x8x64xf32>
    %226 = vector.shape_cast %225 : vector<1x8x8x64xf32> to vector<8x8x64xf32>
    %227 = vector.shape_cast %226 : vector<8x8x64xf32> to vector<64x64xf32>
    %228 = tpu.concatenate %224, %227 in 1 : vector<64x64xf32>, vector<64x64xf32> -> vector<64x128xf32>
    %c64_254 = arith.constant 64 : index
    %c384_255 = arith.constant 384 : index
    %229 = vector.load %arg12[%c64_254, %c384_255] : memref<256x576xf32, #tpu.memory_space<vmem>>, vector<64x128xf32>
    tpu.vector_store %arg12[%c64_254, %c384_255], %228 {strides = array<i32>} : memref<256x576xf32, #tpu.memory_space<vmem>>, vector<64x128xf32>,
    %c1_256 = arith.constant 1 : index
    %c1_257 = arith.constant 1 : index
    %c2_258 = arith.constant 2 : index
    %c0_259 = arith.constant 0 : index
    %230 = vector.load %arg13[%c1_256, %c1_257, %c2_258, %c0_259] : memref<2x10x10x128xf32, #tpu.memory_space<vmem>>, vector<1x8x8x64xf32>
    %231 = vector.shape_cast %230 : vector<1x8x8x64xf32> to vector<8x8x64xf32>
    %232 = vector.shape_cast %231 : vector<8x8x64xf32> to vector<64x64xf32>
    %c64_260 = arith.constant 64 : index
    %c512_261 = arith.constant 512 : index
    %233 = vector.load %arg12[%c64_260, %c512_261] : memref<256x576xf32, #tpu.memory_space<vmem>>, vector<64x64xf32>
    tpu.vector_store %arg12[%c64_260, %c512_261], %232 {strides = array<i32>} : memref<256x576xf32, #tpu.memory_space<vmem>>, vector<64x64xf32>,
    %c64_262 = arith.constant 64 : index
    %c0_263 = arith.constant 0 : index
    %234 = vector.load %arg12[%c64_262, %c0_263] : memref<256x576xf32, #tpu.memory_space<vmem>>, vector<64x576xf32>
    %c0_264 = arith.constant 0 : index
    %c0_265 = arith.constant 0 : index
    %235 = vector.load %arg8[%c0_264, %c0_265] : memref<576x128xf32, #tpu.memory_space<vmem>>, vector<576x128xf32>
    %cst_266 = arith.constant dense<0.000000e+00> : vector<64x128xf32>
    %236 = tpu.matmul %234, %235, %cst_266 {dimension_numbers = #tpu.dot_dimension_numbers<[1], [0], [0], [1], [0, 0, 1, 1], [], []>} : vector<64x576xf32>, vector<576x128xf32>, vector<64x128xf32> -> vector<64x128xf32>
    %c0_267 = arith.constant 0 : index
    %c0_268 = arith.constant 0 : index
    %237 = vector.load %arg9[%c0_267, %c0_268] : memref<1x128xf32, #tpu.memory_space<vmem>>, vector<1x128xf32>
    %238 = vector.broadcast %237 : vector<1x128xf32> to vector<64x128xf32>
    %239 = arith.addf %236, %238 : vector<64x128xf32>
    %cst_269 = arith.constant 0.000000e+00 : f32
    %240 = vector.broadcast %cst_269 : f32 to vector<64x128xf32>
    %241 = arith.subf %240, %239 : vector<64x128xf32>
    %242 = math.exp %241 : vector<64x128xf32>
    %cst_270 = arith.constant 1.000000e+00 : f32
    %243 = vector.broadcast %cst_270 : f32 to vector<64x128xf32>
    %244 = arith.addf %243, %242 : vector<64x128xf32>
    %245 = tpu.reciprocal %244 : vector<64x128xf32> -> vector<64x128xf32>
    %c0_271 = arith.constant 0 : index
    %c64_272 = arith.constant 64 : index
    %c0_273 = arith.constant 0 : index
    %246 = vector.load %arg10[%c0_271, %c64_272, %c0_273] : memref<1x256x128xf32, #tpu.memory_space<vmem>>, vector<1x64x128xf32>
    %247 = vector.shape_cast %246 : vector<1x64x128xf32> to vector<64x128xf32>
    %248 = vector.shape_cast %245 : vector<64x128xf32> to vector<1x64x128xf32>
    tpu.vector_store %arg10[%c0_271, %c64_272, %c0_273], %248 {strides = array<i32>} : memref<1x256x128xf32, #tpu.memory_space<vmem>>, vector<1x64x128xf32>,
    %c0_274 = arith.constant 0 : index
    %c1_275 = arith.constant 1 : index
    %c0_276 = arith.constant 0 : index
    %c64_277 = arith.constant 64 : index
    %249 = vector.load %arg13[%c0_274, %c1_275, %c0_276, %c64_277] : memref<2x10x10x128xf32, #tpu.memory_space<vmem>>, vector<1x8x8x64xf32>
    %250 = vector.shape_cast %249 : vector<1x8x8x64xf32> to vector<8x8x64xf32>
    %251 = vector.shape_cast %250 : vector<8x8x64xf32> to vector<64x64xf32>
    %c0_278 = arith.constant 0 : index
    %c1_279 = arith.constant 1 : index
    %c1_280 = arith.constant 1 : index
    %c0_281 = arith.constant 0 : index
    %252 = vector.load %arg13[%c0_278, %c1_279, %c1_280, %c0_281] : memref<2x10x10x128xf32, #tpu.memory_space<vmem>>, vector<1x8x8x64xf32>
    %253 = vector.shape_cast %252 : vector<1x8x8x64xf32> to vector<8x8x64xf32>
    %254 = vector.shape_cast %253 : vector<8x8x64xf32> to vector<64x64xf32>
    %255 = tpu.concatenate %251, %254 in 1 : vector<64x64xf32>, vector<64x64xf32> -> vector<64x128xf32>
    %c128_282 = arith.constant 128 : index
    %c0_283 = arith.constant 0 : index
    %256 = vector.load %arg12[%c128_282, %c0_283] : memref<256x576xf32, #tpu.memory_space<vmem>>, vector<64x128xf32>
    tpu.vector_store %arg12[%c128_282, %c0_283], %255 {strides = array<i32>} : memref<256x576xf32, #tpu.memory_space<vmem>>, vector<64x128xf32>,
    %c0_284 = arith.constant 0 : index
    %c1_285 = arith.constant 1 : index
    %c1_286 = arith.constant 1 : index
    %c64_287 = arith.constant 64 : index
    %257 = vector.load %arg13[%c0_284, %c1_285, %c1_286, %c64_287] : memref<2x10x10x128xf32, #tpu.memory_space<vmem>>, vector<1x8x8x64xf32>
    %258 = vector.shape_cast %257 : vector<1x8x8x64xf32> to vector<8x8x64xf32>
    %259 = vector.shape_cast %258 : vector<8x8x64xf32> to vector<64x64xf32>
    %c1_288 = arith.constant 1 : index
    %c1_289 = arith.constant 1 : index
    %c0_290 = arith.constant 0 : index
    %c64_291 = arith.constant 64 : index
    %260 = vector.load %arg13[%c1_288, %c1_289, %c0_290, %c64_291] : memref<2x10x10x128xf32, #tpu.memory_space<vmem>>, vector<1x8x8x64xf32>
    %261 = vector.shape_cast %260 : vector<1x8x8x64xf32> to vector<8x8x64xf32>
    %262 = vector.shape_cast %261 : vector<8x8x64xf32> to vector<64x64xf32>
    %263 = tpu.concatenate %259, %262 in 1 : vector<64x64xf32>, vector<64x64xf32> -> vector<64x128xf32>
    %c128_292 = arith.constant 128 : index
    %c128_293 = arith.constant 128 : index
    %264 = vector.load %arg12[%c128_292, %c128_293] : memref<256x576xf32, #tpu.memory_space<vmem>>, vector<64x128xf32>
    tpu.vector_store %arg12[%c128_292, %c128_293], %263 {strides = array<i32>} : memref<256x576xf32, #tpu.memory_space<vmem>>, vector<64x128xf32>,
    %c1_294 = arith.constant 1 : index
    %c1_295 = arith.constant 1 : index
    %c1_296 = arith.constant 1 : index
    %c0_297 = arith.constant 0 : index
    %265 = vector.load %arg13[%c1_294, %c1_295, %c1_296, %c0_297] : memref<2x10x10x128xf32, #tpu.memory_space<vmem>>, vector<1x8x8x64xf32>
    %266 = vector.shape_cast %265 : vector<1x8x8x64xf32> to vector<8x8x64xf32>
    %267 = vector.shape_cast %266 : vector<8x8x64xf32> to vector<64x64xf32>
    %c1_298 = arith.constant 1 : index
    %c1_299 = arith.constant 1 : index
    %c1_300 = arith.constant 1 : index
    %c64_301 = arith.constant 64 : index
    %268 = vector.load %arg13[%c1_298, %c1_299, %c1_300, %c64_301] : memref<2x10x10x128xf32, #tpu.memory_space<vmem>>, vector<1x8x8x64xf32>
    %269 = vector.shape_cast %268 : vector<1x8x8x64xf32> to vector<8x8x64xf32>
    %270 = vector.shape_cast %269 : vector<8x8x64xf32> to vector<64x64xf32>
    %271 = tpu.concatenate %267, %270 in 1 : vector<64x64xf32>, vector<64x64xf32> -> vector<64x128xf32>
    %c128_302 = arith.constant 128 : index
    %c256_303 = arith.constant 256 : index
    %272 = vector.load %arg12[%c128_302, %c256_303] : memref<256x576xf32, #tpu.memory_space<vmem>>, vector<64x128xf32>
    tpu.vector_store %arg12[%c128_302, %c256_303], %271 {strides = array<i32>} : memref<256x576xf32, #tpu.memory_space<vmem>>, vector<64x128xf32>,
    %c0_304 = arith.constant 0 : index
    %c2_305 = arith.constant 2 : index
    %c0_306 = arith.constant 0 : index
    %c64_307 = arith.constant 64 : index
    %273 = vector.load %arg13[%c0_304, %c2_305, %c0_306, %c64_307] : memref<2x10x10x128xf32, #tpu.memory_space<vmem>>, vector<1x8x8x64xf32>
    %274 = vector.shape_cast %273 : vector<1x8x8x64xf32> to vector<8x8x64xf32>
    %275 = vector.shape_cast %274 : vector<8x8x64xf32> to vector<64x64xf32>
    %c0_308 = arith.constant 0 : index
    %c2_309 = arith.constant 2 : index
    %c1_310 = arith.constant 1 : index
    %c0_311 = arith.constant 0 : index
    %276 = vector.load %arg13[%c0_308, %c2_309, %c1_310, %c0_311] : memref<2x10x10x128xf32, #tpu.memory_space<vmem>>, vector<1x8x8x64xf32>
    %277 = vector.shape_cast %276 : vector<1x8x8x64xf32> to vector<8x8x64xf32>
    %278 = vector.shape_cast %277 : vector<8x8x64xf32> to vector<64x64xf32>
    %279 = tpu.concatenate %275, %278 in 1 : vector<64x64xf32>, vector<64x64xf32> -> vector<64x128xf32>
    %c128_312 = arith.constant 128 : index
    %c384_313 = arith.constant 384 : index
    %280 = vector.load %arg12[%c128_312, %c384_313] : memref<256x576xf32, #tpu.memory_space<vmem>>, vector<64x128xf32>
    tpu.vector_store %arg12[%c128_312, %c384_313], %279 {strides = array<i32>} : memref<256x576xf32, #tpu.memory_space<vmem>>, vector<64x128xf32>,
    %c0_314 = arith.constant 0 : index
    %c2_315 = arith.constant 2 : index
    %c1_316 = arith.constant 1 : index
    %c64_317 = arith.constant 64 : index
    %281 = vector.load %arg13[%c0_314, %c2_315, %c1_316, %c64_317] : memref<2x10x10x128xf32, #tpu.memory_space<vmem>>, vector<1x8x8x64xf32>
    %282 = vector.shape_cast %281 : vector<1x8x8x64xf32> to vector<8x8x64xf32>
    %283 = vector.shape_cast %282 : vector<8x8x64xf32> to vector<64x64xf32>
    %c128_318 = arith.constant 128 : index
    %c512_319 = arith.constant 512 : index
    %284 = vector.load %arg12[%c128_318, %c512_319] : memref<256x576xf32, #tpu.memory_space<vmem>>, vector<64x64xf32>
    tpu.vector_store %arg12[%c128_318, %c512_319], %283 {strides = array<i32>} : memref<256x576xf32, #tpu.memory_space<vmem>>, vector<64x64xf32>,
    %c128_320 = arith.constant 128 : index
    %c0_321 = arith.constant 0 : index
    %285 = vector.load %arg12[%c128_320, %c0_321] : memref<256x576xf32, #tpu.memory_space<vmem>>, vector<64x576xf32>
    %c0_322 = arith.constant 0 : index
    %c0_323 = arith.constant 0 : index
    %286 = vector.load %arg8[%c0_322, %c0_323] : memref<576x128xf32, #tpu.memory_space<vmem>>, vector<576x128xf32>
    %cst_324 = arith.constant dense<0.000000e+00> : vector<64x128xf32>
    %287 = tpu.matmul %285, %286, %cst_324 {dimension_numbers = #tpu.dot_dimension_numbers<[1], [0], [0], [1], [0, 0, 1, 1], [], []>} : vector<64x576xf32>, vector<576x128xf32>, vector<64x128xf32> -> vector<64x128xf32>
    %c0_325 = arith.constant 0 : index
    %c0_326 = arith.constant 0 : index
    %288 = vector.load %arg9[%c0_325, %c0_326] : memref<1x128xf32, #tpu.memory_space<vmem>>, vector<1x128xf32>
    %289 = vector.broadcast %288 : vector<1x128xf32> to vector<64x128xf32>
    %290 = arith.addf %287, %289 : vector<64x128xf32>
    %cst_327 = arith.constant 0.000000e+00 : f32
    %291 = vector.broadcast %cst_327 : f32 to vector<64x128xf32>
    %292 = arith.subf %291, %290 : vector<64x128xf32>
    %293 = math.exp %292 : vector<64x128xf32>
    %cst_328 = arith.constant 1.000000e+00 : f32
    %294 = vector.broadcast %cst_328 : f32 to vector<64x128xf32>
    %295 = arith.addf %294, %293 : vector<64x128xf32>
    %296 = tpu.reciprocal %295 : vector<64x128xf32> -> vector<64x128xf32>
    %c0_329 = arith.constant 0 : index
    %c128_330 = arith.constant 128 : index
    %c0_331 = arith.constant 0 : index
    %297 = vector.load %arg10[%c0_329, %c128_330, %c0_331] : memref<1x256x128xf32, #tpu.memory_space<vmem>>, vector<1x64x128xf32>
    %298 = vector.shape_cast %297 : vector<1x64x128xf32> to vector<64x128xf32>
    %299 = vector.shape_cast %296 : vector<64x128xf32> to vector<1x64x128xf32>
    tpu.vector_store %arg10[%c0_329, %c128_330, %c0_331], %299 {strides = array<i32>} : memref<1x256x128xf32, #tpu.memory_space<vmem>>, vector<1x64x128xf32>,
    %c0_332 = arith.constant 0 : index
    %c1_333 = arith.constant 1 : index
    %c1_334 = arith.constant 1 : index
    %c0_335 = arith.constant 0 : index
    %300 = vector.load %arg13[%c0_332, %c1_333, %c1_334, %c0_335] : memref<2x10x10x128xf32, #tpu.memory_space<vmem>>, vector<1x8x8x64xf32>
    %301 = vector.shape_cast %300 : vector<1x8x8x64xf32> to vector<8x8x64xf32>
    %302 = vector.shape_cast %301 : vector<8x8x64xf32> to vector<64x64xf32>
    %c0_336 = arith.constant 0 : index
    %c1_337 = arith.constant 1 : index
    %c1_338 = arith.constant 1 : index
    %c64_339 = arith.constant 64 : index
    %303 = vector.load %arg13[%c0_336, %c1_337, %c1_338, %c64_339] : memref<2x10x10x128xf32, #tpu.memory_space<vmem>>, vector<1x8x8x64xf32>
    %304 = vector.shape_cast %303 : vector<1x8x8x64xf32> to vector<8x8x64xf32>
    %305 = vector.shape_cast %304 : vector<8x8x64xf32> to vector<64x64xf32>
    %306 = tpu.concatenate %302, %305 in 1 : vector<64x64xf32>, vector<64x64xf32> -> vector<64x128xf32>
    %c192 = arith.constant 192 : index
    %c0_340 = arith.constant 0 : index
    %307 = vector.load %arg12[%c192, %c0_340] : memref<256x576xf32, #tpu.memory_space<vmem>>, vector<64x128xf32>
    tpu.vector_store %arg12[%c192, %c0_340], %306 {strides = array<i32>} : memref<256x576xf32, #tpu.memory_space<vmem>>, vector<64x128xf32>,
    %c0_341 = arith.constant 0 : index
    %c1_342 = arith.constant 1 : index
    %c2_343 = arith.constant 2 : index
    %c0_344 = arith.constant 0 : index
    %308 = vector.load %arg13[%c0_341, %c1_342, %c2_343, %c0_344] : memref<2x10x10x128xf32, #tpu.memory_space<vmem>>, vector<1x8x8x64xf32>
    %309 = vector.shape_cast %308 : vector<1x8x8x64xf32> to vector<8x8x64xf32>
    %310 = vector.shape_cast %309 : vector<8x8x64xf32> to vector<64x64xf32>
    %c1_345 = arith.constant 1 : index
    %c1_346 = arith.constant 1 : index
    %c1_347 = arith.constant 1 : index
    %c0_348 = arith.constant 0 : index
    %311 = vector.load %arg13[%c1_345, %c1_346, %c1_347, %c0_348] : memref<2x10x10x128xf32, #tpu.memory_space<vmem>>, vector<1x8x8x64xf32>
    %312 = vector.shape_cast %311 : vector<1x8x8x64xf32> to vector<8x8x64xf32>
    %313 = vector.shape_cast %312 : vector<8x8x64xf32> to vector<64x64xf32>
    %314 = tpu.concatenate %310, %313 in 1 : vector<64x64xf32>, vector<64x64xf32> -> vector<64x128xf32>
    %c192_349 = arith.constant 192 : index
    %c128_350 = arith.constant 128 : index
    %315 = vector.load %arg12[%c192_349, %c128_350] : memref<256x576xf32, #tpu.memory_space<vmem>>, vector<64x128xf32>
    tpu.vector_store %arg12[%c192_349, %c128_350], %314 {strides = array<i32>} : memref<256x576xf32, #tpu.memory_space<vmem>>, vector<64x128xf32>,
    %c1_351 = arith.constant 1 : index
    %c1_352 = arith.constant 1 : index
    %c1_353 = arith.constant 1 : index
    %c64_354 = arith.constant 64 : index
    %316 = vector.load %arg13[%c1_351, %c1_352, %c1_353, %c64_354] : memref<2x10x10x128xf32, #tpu.memory_space<vmem>>, vector<1x8x8x64xf32>
    %317 = vector.shape_cast %316 : vector<1x8x8x64xf32> to vector<8x8x64xf32>
    %318 = vector.shape_cast %317 : vector<8x8x64xf32> to vector<64x64xf32>
    %c1_355 = arith.constant 1 : index
    %c1_356 = arith.constant 1 : index
    %c2_357 = arith.constant 2 : index
    %c0_358 = arith.constant 0 : index
    %319 = vector.load %arg13[%c1_355, %c1_356, %c2_357, %c0_358] : memref<2x10x10x128xf32, #tpu.memory_space<vmem>>, vector<1x8x8x64xf32>
    %320 = vector.shape_cast %319 : vector<1x8x8x64xf32> to vector<8x8x64xf32>
    %321 = vector.shape_cast %320 : vector<8x8x64xf32> to vector<64x64xf32>
    %322 = tpu.concatenate %318, %321 in 1 : vector<64x64xf32>, vector<64x64xf32> -> vector<64x128xf32>
    %c192_359 = arith.constant 192 : index
    %c256_360 = arith.constant 256 : index
    %323 = vector.load %arg12[%c192_359, %c256_360] : memref<256x576xf32, #tpu.memory_space<vmem>>, vector<64x128xf32>
    tpu.vector_store %arg12[%c192_359, %c256_360], %322 {strides = array<i32>} : memref<256x576xf32, #tpu.memory_space<vmem>>, vector<64x128xf32>,
    %c0_361 = arith.constant 0 : index
    %c2_362 = arith.constant 2 : index
    %c1_363 = arith.constant 1 : index
    %c0_364 = arith.constant 0 : index
    %324 = vector.load %arg13[%c0_361, %c2_362, %c1_363, %c0_364] : memref<2x10x10x128xf32, #tpu.memory_space<vmem>>, vector<1x8x8x64xf32>
    %325 = vector.shape_cast %324 : vector<1x8x8x64xf32> to vector<8x8x64xf32>
    %326 = vector.shape_cast %325 : vector<8x8x64xf32> to vector<64x64xf32>
    %c0_365 = arith.constant 0 : index
    %c2_366 = arith.constant 2 : index
    %c1_367 = arith.constant 1 : index
    %c64_368 = arith.constant 64 : index
    %327 = vector.load %arg13[%c0_365, %c2_366, %c1_367, %c64_368] : memref<2x10x10x128xf32, #tpu.memory_space<vmem>>, vector<1x8x8x64xf32>
    %328 = vector.shape_cast %327 : vector<1x8x8x64xf32> to vector<8x8x64xf32>
    %329 = vector.shape_cast %328 : vector<8x8x64xf32> to vector<64x64xf32>
    %330 = tpu.concatenate %326, %329 in 1 : vector<64x64xf32>, vector<64x64xf32> -> vector<64x128xf32>
    %c192_369 = arith.constant 192 : index
    %c384_370 = arith.constant 384 : index
    %331 = vector.load %arg12[%c192_369, %c384_370] : memref<256x576xf32, #tpu.memory_space<vmem>>, vector<64x128xf32>
    tpu.vector_store %arg12[%c192_369, %c384_370], %330 {strides = array<i32>} : memref<256x576xf32, #tpu.memory_space<vmem>>, vector<64x128xf32>,
    %c0_371 = arith.constant 0 : index
    %c2_372 = arith.constant 2 : index
    %c2_373 = arith.constant 2 : index
    %c0_374 = arith.constant 0 : index
    %332 = vector.load %arg13[%c0_371, %c2_372, %c2_373, %c0_374] : memref<2x10x10x128xf32, #tpu.memory_space<vmem>>, vector<1x8x8x64xf32>
    %333 = vector.shape_cast %332 : vector<1x8x8x64xf32> to vector<8x8x64xf32>
    %334 = vector.shape_cast %333 : vector<8x8x64xf32> to vector<64x64xf32>
    %c192_375 = arith.constant 192 : index
    %c512_376 = arith.constant 512 : index
    %335 = vector.load %arg12[%c192_375, %c512_376] : memref<256x576xf32, #tpu.memory_space<vmem>>, vector<64x64xf32>
    tpu.vector_store %arg12[%c192_375, %c512_376], %334 {strides = array<i32>} : memref<256x576xf32, #tpu.memory_space<vmem>>, vector<64x64xf32>,
    %c192_377 = arith.constant 192 : index
    %c0_378 = arith.constant 0 : index
    %336 = vector.load %arg12[%c192_377, %c0_378] : memref<256x576xf32, #tpu.memory_space<vmem>>, vector<64x576xf32>
    %c0_379 = arith.constant 0 : index
    %c0_380 = arith.constant 0 : index
    %337 = vector.load %arg8[%c0_379, %c0_380] : memref<576x128xf32, #tpu.memory_space<vmem>>, vector<576x128xf32>
    %cst_381 = arith.constant dense<0.000000e+00> : vector<64x128xf32>
    %338 = tpu.matmul %336, %337, %cst_381 {dimension_numbers = #tpu.dot_dimension_numbers<[1], [0], [0], [1], [0, 0, 1, 1], [], []>} : vector<64x576xf32>, vector<576x128xf32>, vector<64x128xf32> -> vector<64x128xf32>
    %c0_382 = arith.constant 0 : index
    %c0_383 = arith.constant 0 : index
    %339 = vector.load %arg9[%c0_382, %c0_383] : memref<1x128xf32, #tpu.memory_space<vmem>>, vector<1x128xf32>
    %340 = vector.broadcast %339 : vector<1x128xf32> to vector<64x128xf32>
    %341 = arith.addf %338, %340 : vector<64x128xf32>
    %cst_384 = arith.constant 0.000000e+00 : f32
    %342 = vector.broadcast %cst_384 : f32 to vector<64x128xf32>
    %343 = arith.subf %342, %341 : vector<64x128xf32>
    %344 = math.exp %343 : vector<64x128xf32>
    %cst_385 = arith.constant 1.000000e+00 : f32
    %345 = vector.broadcast %cst_385 : f32 to vector<64x128xf32>
    %346 = arith.addf %345, %344 : vector<64x128xf32>
    %347 = tpu.reciprocal %346 : vector<64x128xf32> -> vector<64x128xf32>
    %c0_386 = arith.constant 0 : index
    %c192_387 = arith.constant 192 : index
    %c0_388 = arith.constant 0 : index
    %348 = vector.load %arg10[%c0_386, %c192_387, %c0_388] : memref<1x256x128xf32, #tpu.memory_space<vmem>>, vector<1x64x128xf32>
    %349 = vector.shape_cast %348 : vector<1x64x128xf32> to vector<64x128xf32>
    %350 = vector.shape_cast %347 : vector<64x128xf32> to vector<1x64x128xf32>
    tpu.vector_store %arg10[%c0_386, %c192_387, %c0_388], %350 {strides = array<i32>} : memref<1x256x128xf32, #tpu.memory_space<vmem>>, vector<1x64x128xf32>,
    return
  }
  func.func @transform_0(%arg0: i32) -> (i32, i32, i32, i32) {
    %c0_i32 = arith.constant 0 : i32
    %c0_i32_0 = arith.constant 0 : i32
    %c0_i32_1 = arith.constant 0 : i32
    %c0_i32_2 = arith.constant 0 : i32
    return %arg0, %c0_i32, %c0_i32_0, %c0_i32_1 : i32, i32, i32, i32
  }
  func.func @transform_1(%arg0: i32) -> (i32, i32) {
    %c0_i32 = arith.constant 0 : i32
    %c0_i32_0 = arith.constant 0 : i32
    %c0_i32_1 = arith.constant 0 : i32
    return %c0_i32, %c0_i32_0 : i32, i32
  }
  func.func @transform_2(%arg0: i32) -> (i32, i32) {
    %c0_i32 = arith.constant 0 : i32
    %c0_i32_0 = arith.constant 0 : i32
    %c0_i32_1 = arith.constant 0 : i32
    return %c0_i32, %c0_i32_0 : i32, i32
  }
  func.func @transform_3(%arg0: i32) -> (i32, i32) {
    %c0_i32 = arith.constant 0 : i32
    %c0_i32_0 = arith.constant 0 : i32
    %c0_i32_1 = arith.constant 0 : i32
    return %c0_i32, %c0_i32_0 : i32, i32
  }
  func.func @transform_4(%arg0: i32) -> (i32, i32) {
    %c0_i32 = arith.constant 0 : i32
    %c0_i32_0 = arith.constant 0 : i32
    %c0_i32_1 = arith.constant 0 : i32
    return %c0_i32, %c0_i32_0 : i32, i32
  }
  func.func @transform_5(%arg0: i32) -> (i32, i32) {
    %c0_i32 = arith.constant 0 : i32
    %c0_i32_0 = arith.constant 0 : i32
    %c0_i32_1 = arith.constant 0 : i32
    return %c0_i32, %c0_i32_0 : i32, i32
  }
  func.func @transform_6(%arg0: i32) -> (i32, i32) {
    %c0_i32 = arith.constant 0 : i32
    %c0_i32_0 = arith.constant 0 : i32
    %c0_i32_1 = arith.constant 0 : i32
    return %c0_i32, %c0_i32_0 : i32, i32
  }
  func.func @transform_7(%arg0: i32) -> (i32, i32) {
    %c0_i32 = arith.constant 0 : i32
    %c0_i32_0 = arith.constant 0 : i32
    %c0_i32_1 = arith.constant 0 : i32
    return %c0_i32, %c0_i32_0 : i32, i32
  }
  func.func @transform_8(%arg0: i32) -> (i32, i32) {
    %c0_i32 = arith.constant 0 : i32
    %c0_i32_0 = arith.constant 0 : i32
    %c0_i32_1 = arith.constant 0 : i32
    return %c0_i32, %c0_i32_0 : i32, i32
  }
  func.func @transform_9(%arg0: i32) -> (i32, i32, i32) {
    %c0_i32 = arith.constant 0 : i32
    %c0_i32_0 = arith.constant 0 : i32
    %c0_i32_1 = arith.constant 0 : i32
    return %arg0, %c0_i32, %c0_i32_0 : i32, i32, i32
  }
}

</mosaic_0001>

<llo_original>
// kernel: squeeze.1
$region0: #{squeeze.1}
  %s0 = inlined_call_operand.vmem [shape: f32[2,256], index: 0, kind: input, shape index: {}]
  %s1 = inlined_call_operand.vmem [shape: f32[2,2,2,8,8], index: 1, kind: output, shape index: {}]
  $region1: #{squeeze.1} parent=0
    #allocation0 [shape = 'u8[8192]{0}', space=vmem, size = 0x2000, scoped, tag = 'scoped mem for input reshape']
    %s3 = sshll.u32 1, 2
    %s4 = ssub.s32 %s3, 1
    %s5 = scalar_lea.vmem %s0, 2
    %v6 = vld [vmem:[%s5] sm:%s4]
    %s7 = scalar_lea.vmem [#allocation0], 8
    %8 = vst [vmem:[%s7] sm:%s4] %v6
    %v9 = vld [vmem:[%s0] sm:%s4]
    %10 = vst [vmem:[#allocation0] sm:%s4] %v9
    %v11 = vld [vmem:[#allocation0] sm:$0x3]
    %vm12 = vcmask 64512
    %13 = vst.msk [vmem:[%s1] sm:$0x1] %vm12, %v11
    %s14 = scalar_lea.vmem %s1, 31
    %15 = vst.msk [vmem:[%s14] sm:$0x2] %vm12, %v11
    %s16 = scalar_lea.vmem [#allocation0], 8
    %v17 = vld [vmem:[%s16] sm:$0x3]
    %vm18 = vcmask 64512
    %s19 = scalar_lea.vmem %s1, 16
    %20 = vst.msk [vmem:[%s19] sm:$0x1] %vm18, %v17
    %s21 = scalar_lea.vmem %s1, 47
    %22 = vst.msk [vmem:[%s21] sm:$0x2] %vm18, %v17
    %v23 = vld.sshfl [vmem:[#allocation0] sm:$0xff pattern:$0x99999180]
    %24 = vrot.lane.b32.xlu0 %v23, 120
    %v25 = vpop.permute.xlu0 %24
    %vm26 = vcmask 64512
    %s27 = scalar_lea.vmem %s1, 1
    %28 = vst.msk [vmem:[%s27] ss:$16 sm:$0x3] %vm26, %v25
    %s29 = scalar_lea.vmem %s1, 1
    %30 = vst.msk [vmem:[%s29] ss:$16 sm:$0xc] %vm26, %v25
    %v31 = vld.sshfl [vmem:[#allocation0] sm:$0xff pattern:$0x99999180]
    %32 = vrot.lane.b32.xlu0 %v31, 112
    %v33 = vpop.permute.xlu0 %32
    %vm34 = vcmask 64512
    %s35 = scalar_lea.vmem %s1, 2
    %36 = vst.msk [vmem:[%s35] ss:$16 sm:$0x3] %vm34, %v33
    %s37 = scalar_lea.vmem %s1, 2
    %38 = vst.msk [vmem:[%s37] ss:$16 sm:$0xc] %vm34, %v33
    %v39 = vld.sshfl [vmem:[#allocation0] sm:$0xff pattern:$0x99999180]
    %40 = vrot.lane.b32.xlu0 %v39, 104
    %v41 = vpop.permute.xlu0 %40
    %vm42 = vcmask 64512
    %s43 = scalar_lea.vmem %s1, 3
    %44 = vst.msk [vmem:[%s43] ss:$16 sm:$0x3] %vm42, %v41
    %s45 = scalar_lea.vmem %s1, 3
    %46 = vst.msk [vmem:[%s45] ss:$16 sm:$0xc] %vm42, %v41
    %v47 = vld.sshfl [vmem:[#allocation0] sm:$0xff pattern:$0x99999180]
    %48 = vrot.lane.b32.xlu0 %v47, 96
    %v49 = vpop.permute.xlu0 %48
    %vm50 = vcmask 64512
    %s51 = scalar_lea.vmem %s1, 4
    %52 = vst.msk [vmem:[%s51] ss:$16 sm:$0x3] %vm50, %v49
    %s53 = scalar_lea.vmem %s1, 4
    %54 = vst.msk [vmem:[%s53] ss:$16 sm:$0xc] %vm50, %v49
    %v55 = vld.sshfl [vmem:[#allocation0] sm:$0xff pattern:$0x99999180]
    %56 = vrot.lane.b32.xlu0 %v55, 88
    %v57 = vpop.permute.xlu0 %56
    %vm58 = vcmask 64512
    %s59 = scalar_lea.vmem %s1, 5
    %60 = vst.msk [vmem:[%s59] ss:$16 sm:$0x3] %vm58, %v57
    %s61 = scalar_lea.vmem %s1, 5
    %62 = vst.msk [vmem:[%s61] ss:$16 sm:$0xc] %vm58, %v57
    %v63 = vld.sshfl [vmem:[#allocation0] sm:$0xff pattern:$0x99999180]
    %64 = vrot.lane.b32.xlu0 %v63, 80
    %v65 = vpop.permute.xlu0 %64
    %vm66 = vcmask 64512
    %s67 = scalar_lea.vmem %s1, 6
    %68 = vst.msk [vmem:[%s67] ss:$16 sm:$0x3] %vm66, %v65
    %s69 = scalar_lea.vmem %s1, 6
    %70 = vst.msk [vmem:[%s69] ss:$16 sm:$0xc] %vm66, %v65
    %v71 = vld.sshfl [vmem:[#allocation0] sm:$0xff pattern:$0x99999180]
    %72 = vrot.lane.b32.xlu0 %v71, 72
    %v73 = vpop.permute.xlu0 %72
    %vm74 = vcmask 64512
    %s75 = scalar_lea.vmem %s1, 7
    %76 = vst.msk [vmem:[%s75] ss:$16 sm:$0x3] %vm74, %v73
    %s77 = scalar_lea.vmem %s1, 7
    %78 = vst.msk [vmem:[%s77] ss:$16 sm:$0xc] %vm74, %v73
    %v79 = vld.sshfl [vmem:[#allocation0] sm:$0xff pattern:$0x99999180]
    %80 = vrot.lane.b32.xlu0 %v79, 64
    %v81 = vpop.permute.xlu0 %80
    %vm82 = vcmask 64512
    %s83 = scalar_lea.vmem %s1, 8
    %84 = vst.msk [vmem:[%s83] ss:$16 sm:$0x3] %vm82, %v81
    %s85 = scalar_lea.vmem %s1, 8
    %86 = vst.msk [vmem:[%s85] ss:$16 sm:$0xc] %vm82, %v81
    %v87 = vld.sshfl [vmem:[#allocation0] sm:$0xff pattern:$0x99999180]
    %88 = vrot.lane.b32.xlu0 %v87, 56
    %v89 = vpop.permute.xlu0 %88
    %vm90 = vcmask 64512
    %s91 = scalar_lea.vmem %s1, 9
    %92 = vst.msk [vmem:[%s91] ss:$16 sm:$0x3] %vm90, %v89
    %s93 = scalar_lea.vmem %s1, 9
    %94 = vst.msk [vmem:[%s93] ss:$16 sm:$0xc] %vm90, %v89
    %v95 = vld.sshfl [vmem:[#allocation0] sm:$0xff pattern:$0x99999180]
    %96 = vrot.lane.b32.xlu0 %v95, 48
    %v97 = vpop.permute.xlu0 %96
    %vm98 = vcmask 64512
    %s99 = scalar_lea.vmem %s1, 10
    %100 = vst.msk [vmem:[%s99] ss:$16 sm:$0x3] %vm98, %v97
    %s101 = scalar_lea.vmem %s1, 10
    %102 = vst.msk [vmem:[%s101] ss:$16 sm:$0xc] %vm98, %v97
    %v103 = vld.sshfl [vmem:[#allocation0] sm:$0xff pattern:$0x99999180]
    %104 = vrot.lane.b32.xlu0 %v103, 40
    %v105 = vpop.permute.xlu0 %104
    %vm106 = vcmask 64512
    %s107 = scalar_lea.vmem %s1, 11
    %108 = vst.msk [vmem:[%s107] ss:$16 sm:$0x3] %vm106, %v105
    %s109 = scalar_lea.vmem %s1, 11
    %110 = vst.msk [vmem:[%s109] ss:$16 sm:$0xc] %vm106, %v105
    %v111 = vld.sshfl [vmem:[#allocation0] sm:$0xff pattern:$0x99999180]
    %112 = vrot.lane.b32.xlu0 %v111, 32
    %v113 = vpop.permute.xlu0 %112
    %vm114 = vcmask 64512
    %s115 = scalar_lea.vmem %s1, 12
    %116 = vst.msk [vmem:[%s115] ss:$16 sm:$0x3] %vm114, %v113
    %s117 = scalar_lea.vmem %s1, 12
    %118 = vst.msk [vmem:[%s117] ss:$16 sm:$0xc] %vm114, %v113
    %v119 = vld.sshfl [vmem:[#allocation0] sm:$0xff pattern:$0x99999180]
    %120 = vrot.lane.b32.xlu0 %v119, 24
    %v121 = vpop.permute.xlu0 %120
    %vm122 = vcmask 64512
    %s123 = scalar_lea.vmem %s1, 13
    %124 = vst.msk [vmem:[%s123] ss:$16 sm:$0x3] %vm122, %v121
    %s125 = scalar_lea.vmem %s1, 13
    %126 = vst.msk [vmem:[%s125] ss:$16 sm:$0xc] %vm122, %v121
    %v127 = vld.sshfl [vmem:[#allocation0] sm:$0xff pattern:$0x99999180]
    %128 = vrot.lane.b32.xlu0 %v127, 16
    %v129 = vpop.permute.xlu0 %128
    %vm130 = vcmask 64512
    %s131 = scalar_lea.vmem %s1, 14
    %132 = vst.msk [vmem:[%s131] ss:$16 sm:$0x3] %vm130, %v129
    %s133 = scalar_lea.vmem %s1, 14
    %134 = vst.msk [vmem:[%s133] ss:$16 sm:$0xc] %vm130, %v129
    %v135 = vld.sshfl [vmem:[#allocation0] sm:$0xff pattern:$0x99999180]
    %136 = vrot.lane.b32.xlu0 %v135, 8
    %v137 = vpop.permute.xlu0 %136
    %vm138 = vcmask 64512
    %s139 = scalar_lea.vmem %s1, 15
    %140 = vst.msk [vmem:[%s139] ss:$16 sm:$0x3] %vm138, %v137
    %s141 = scalar_lea.vmem %s1, 15
    %142 = vst.msk [vmem:[%s141] ss:$16 sm:$0xc] %vm138, %v137

// kernel: denoising_cnn_forward.1
$region0: #{denoising_cnn_forward.1}
  #allocation0 [shape = 'u32[]', space=smem, size = 0x4, offset = 0x4, fixed_abs, tag = 'smem constant byte address 0x4 - core index']
  #allocation1 [shape = 'u32[144,128]{1,0:T(1,128)}', space=vmem, size = 0x12000, scoped, tag = 'internal scratch']
  #allocation2 [shape = 'f32[18,18,64]{2,1,0:T(8,128)}', space=vmem, size = 0x36000, scoped, tag = 'scratch operand']
  #allocation3 [shape = 'f32[256,576]{1,0:T(8,128)}', space=vmem, size = 0xa0000, scoped, tag = 'scratch operand']
  #allocation4 [shape = 'f32[2,10,10,128]{3,2,1,0:T(8,128)}', space=vmem, size = 0x28000, scoped, tag = 'scratch operand']
  %s0 = inlined_call_operand.vmem [shape: f32[2,18,18,8], index: 0, kind: input, shape index: {}]
  %s1 = inlined_call_operand.vmem [shape: f32[72,64], index: 1, kind: input, shape index: {}]
  %s2 = inlined_call_operand.vmem [shape: f32[1,64], index: 2, kind: input, shape index: {}]
  %s3 = inlined_call_operand.vmem [shape: f32[576,64], index: 3, kind: input, shape index: {}]
  %s4 = inlined_call_operand.vmem [shape: f32[1,64], index: 4, kind: input, shape index: {}]
  %s5 = inlined_call_operand.vmem [shape: f32[64,256], index: 5, kind: input, shape index: {}]
  %s6 = inlined_call_operand.vmem [shape: f32[1,256], index: 6, kind: input, shape index: {}]
  %s7 = inlined_call_operand.vmem [shape: f32[576,128], index: 7, kind: input, shape index: {}]
  %s8 = inlined_call_operand.vmem [shape: f32[1,128], index: 8, kind: input, shape index: {}]
  %s9 = inlined_call_operand.vmem [shape: f32[2,256,128], index: 9, kind: output, shape index: {}]
  %s10 = sld [smem:[#allocation0]]
  $region69: #{denoising_cnn_forward.1} parent=0
    _
  %s12 = ssub.s32 1, %s10
  %s13 = scalar_select 0, %s12, %s10
  loop: start=0, step=1, limit=4
  $region2: #{denoising_cnn_forward.1} parent=0 // loop_pre_header
    _
  $region3: #{denoising_cnn_forward.1} parent=0 // loop_header
    %s15 = sphi 0, %s19
    %p16 = scmp.ge.s32.totalorder %s15, 4
    %s25 = sphi 0, %s27
    %s28 = sphi 0, %s25
    %s29 = sphi 0, %s28
    %s45 = sphi 0, %s29
    %s49 = sphi 0, %s49
    %s51 = sphi 0, %s49
    %s52 = sphi 0, %s51
    %s66 = sphi 0, %s52
    %s70 = sphi 0, %s70
    %s72 = sphi 0, %s70
    %s73 = sphi 0, %s72
    %s87 = sphi 0, %s73
    %s91 = sphi 0, %s91
    %s93 = sphi 0, %s91
    %s94 = sphi 0, %s93
    %s108 = sphi 0, %s94
    %s112 = sphi 0, %s112
    %s114 = sphi 0, %s112
    %s115 = sphi 0, %s114
    %s129 = sphi 0, %s115
    %s133 = sphi 0, %s133
    %s135 = sphi 0, %s133
    %s136 = sphi 0, %s135
    %s150 = sphi 0, %s136
    %s154 = sphi 0, %s154
    %s156 = sphi 0, %s154
    %s157 = sphi 0, %s156
    %s171 = sphi 0, %s157
    %s175 = sphi 0, %s175
    %s177 = sphi 0, %s175
    %s178 = sphi 0, %s177
    %s192 = sphi 0, %s178
    %s196 = sphi 0, %s196
    %s198 = sphi 0, %s196
    %s199 = sphi 0, %s198
    %s213 = sphi 0, %s199
    %s219 = sphi 0, %s221
    %s222 = sphi 0, %s219
    %s223 = sphi 0, %s222
    %s239 = sphi 0, %s223
  $region4: #{denoising_cnn_forward.1} parent=0 // loop_header_branch
    %18 = sbr.rel (%p16) target = $region8
  $region5: #{denoising_cnn_forward.1} parent=0 // loop_body
    %s20 = ssub.s32 %s15, 1
    %s21 = ssub.s32 %s15, 2
    %s22 = sadd.s32 %s15, 1
    %s23 = ssub.s32 %s15, %s22
    %p24 = scmp.eq.s32.totalorder %s23, 0
    %s26 = sadd.s32 %s25, 1
    %s27 = scalar_select %p24, %s25, %s26
    %p30 = pneg %p24
    %p31 = scmp.eq.s32.totalorder %s15, 1
    %p32 = por %p30, %p31
    %p33 = scmp.ne.s32.totalorder %s25, %s28
    %p34 = scmp.eq.s32.totalorder %s15, 0
    %p35 = por %p33, %p34
    %p36 = scmp.ne.s32.totalorder %s25, %s28
    %p37 = scmp.eq.s32.totalorder %s20, 1
    %p38 = por %p36, %p37
    %p39 = scmp.ne.s32.totalorder %s28, %s29
    %p40 = scmp.eq.s32.totalorder %s20, 0
    %p41 = por %p39, %p40
    %p42 = scmp.ne.s32.totalorder %s28, %s29
    %p43 = scmp.eq.s32.totalorder %s21, 1
    %p44 = por %p42, %p43
    %p46 = scmp.ne.s32.totalorder %s29, %s45
    %p47 = scmp.eq.s32.totalorder %s21, 0
    %p48 = por %p46, %p47
    %s50 = sadd.s32 %s49, 1
    %p53 = scmp.eq.s32.totalorder %s15, 1
    %p54 = scmp.ne.s32.totalorder %s49, %s51
    %p55 = scmp.eq.s32.totalorder %s15, 0
    %p56 = por %p54, %p55
    %p57 = scmp.ne.s32.totalorder %s49, %s51
    %p58 = scmp.eq.s32.totalorder %s20, 1
    %p59 = por %p57, %p58
    %p60 = scmp.ne.s32.totalorder %s51, %s52
    %p61 = scmp.eq.s32.totalorder %s20, 0
    %p62 = por %p60, %p61
    %p63 = scmp.ne.s32.totalorder %s51, %s52
    %p64 = scmp.eq.s32.totalorder %s21, 1
    %p65 = por %p63, %p64
    %p67 = scmp.ne.s32.totalorder %s52, %s66
    %p68 = scmp.eq.s32.totalorder %s21, 0
    %p69 = por %p67, %p68
    %s71 = sadd.s32 %s70, 1
    %p74 = scmp.eq.s32.totalorder %s15, 1
    %p75 = scmp.ne.s32.totalorder %s70, %s72
    %p76 = scmp.eq.s32.totalorder %s15, 0
    %p77 = por %p75, %p76
    %p78 = scmp.ne.s32.totalorder %s70, %s72
    %p79 = scmp.eq.s32.totalorder %s20, 1
    %p80 = por %p78, %p79
    %p81 = scmp.ne.s32.totalorder %s72, %s73
    %p82 = scmp.eq.s32.totalorder %s20, 0
    %p83 = por %p81, %p82
    %p84 = scmp.ne.s32.totalorder %s72, %s73
    %p85 = scmp.eq.s32.totalorder %s21, 1
    %p86 = por %p84, %p85
    %p88 = scmp.ne.s32.totalorder %s73, %s87
    %p89 = scmp.eq.s32.totalorder %s21, 0
    %p90 = por %p88, %p89
    %s92 = sadd.s32 %s91, 1
    %p95 = scmp.eq.s32.totalorder %s15, 1
    %p96 = scmp.ne.s32.totalorder %s91, %s93
    %p97 = scmp.eq.s32.totalorder %s15, 0
    %p98 = por %p96, %p97
    %p99 = scmp.ne.s32.totalorder %s91, %s93
    %p100 = scmp.eq.s32.totalorder %s20, 1
    %p101 = por %p99, %p100
    %p102 = scmp.ne.s32.totalorder %s93, %s94
    %p103 = scmp.eq.s32.totalorder %s20, 0
    %p104 = por %p102, %p103
    %p105 = scmp.ne.s32.totalorder %s93, %s94
    %p106 = scmp.eq.s32.totalorder %s21, 1
    %p107 = por %p105, %p106
    %p109 = scmp.ne.s32.totalorder %s94, %s108
    %p110 = scmp.eq.s32.totalorder %s21, 0
    %p111 = por %p109, %p110
    %s113 = sadd.s32 %s112, 1
    %p116 = scmp.eq.s32.totalorder %s15, 1
    %p117 = scmp.ne.s32.totalorder %s112, %s114
    %p118 = scmp.eq.s32.totalorder %s15, 0
    %p119 = por %p117, %p118
    %p120 = scmp.ne.s32.totalorder %s112, %s114
    %p121 = scmp.eq.s32.totalorder %s20, 1
    %p122 = por %p120, %p121
    %p123 = scmp.ne.s32.totalorder %s114, %s115
    %p124 = scmp.eq.s32.totalorder %s20, 0
    %p125 = por %p123, %p124
    %p126 = scmp.ne.s32.totalorder %s114, %s115
    %p127 = scmp.eq.s32.totalorder %s21, 1
    %p128 = por %p126, %p127
    %p130 = scmp.ne.s32.totalorder %s115, %s129
    %p131 = scmp.eq.s32.totalorder %s21, 0
    %p132 = por %p130, %p131
    %s134 = sadd.s32 %s133, 1
    %p137 = scmp.eq.s32.totalorder %s15, 1
    %p138 = scmp.ne.s32.totalorder %s133, %s135
    %p139 = scmp.eq.s32.totalorder %s15, 0
    %p140 = por %p138, %p139
    %p141 = scmp.ne.s32.totalorder %s133, %s135
    %p142 = scmp.eq.s32.totalorder %s20, 1
    %p143 = por %p141, %p142
    %p144 = scmp.ne.s32.totalorder %s135, %s136
    %p145 = scmp.eq.s32.totalorder %s20, 0
    %p146 = por %p144, %p145
    %p147 = scmp.ne.s32.totalorder %s135, %s136
    %p148 = scmp.eq.s32.totalorder %s21, 1
    %p149 = por %p147, %p148
    %p151 = scmp.ne.s32.totalorder %s136, %s150
    %p152 = scmp.eq.s32.totalorder %s21, 0
    %p153 = por %p151, %p152
    %s155 = sadd.s32 %s154, 1
    %p158 = scmp.eq.s32.totalorder %s15, 1
    %p159 = scmp.ne.s32.totalorder %s154, %s156
    %p160 = scmp.eq.s32.totalorder %s15, 0
    %p161 = por %p159, %p160
    %p162 = scmp.ne.s32.totalorder %s154, %s156
    %p163 = scmp.eq.s32.totalorder %s20, 1
    %p164 = por %p162, %p163
    %p165 = scmp.ne.s32.totalorder %s156, %s157
    %p166 = scmp.eq.s32.totalorder %s20, 0
    %p167 = por %p165, %p166
    %p168 = scmp.ne.s32.totalorder %s156, %s157
    %p169 = scmp.eq.s32.totalorder %s21, 1
    %p170 = por %p168, %p169
    %p172 = scmp.ne.s32.totalorder %s157, %s171
    %p173 = scmp.eq.s32.totalorder %s21, 0
    %p174 = por %p172, %p173
    %s176 = sadd.s32 %s175, 1
    %p179 = scmp.eq.s32.totalorder %s15, 1
    %p180 = scmp.ne.s32.totalorder %s175, %s177
    %p181 = scmp.eq.s32.totalorder %s15, 0
    %p182 = por %p180, %p181
    %p183 = scmp.ne.s32.totalorder %s175, %s177
    %p184 = scmp.eq.s32.totalorder %s20, 1
    %p185 = por %p183, %p184
    %p186 = scmp.ne.s32.totalorder %s177, %s178
    %p187 = scmp.eq.s32.totalorder %s20, 0
    %p188 = por %p186, %p187
    %p189 = scmp.ne.s32.totalorder %s177, %s178
    %p190 = scmp.eq.s32.totalorder %s21, 1
    %p191 = por %p189, %p190
    %p193 = scmp.ne.s32.totalorder %s178, %s192
    %p194 = scmp.eq.s32.totalorder %s21, 0
    %p195 = por %p193, %p194
    %s197 = sadd.s32 %s196, 1
    %p200 = scmp.eq.s32.totalorder %s15, 1
    %p201 = scmp.ne.s32.totalorder %s196, %s198
    %p202 = scmp.eq.s32.totalorder %s15, 0
    %p203 = por %p201, %p202
    %p204 = scmp.ne.s32.totalorder %s196, %s198
    %p205 = scmp.eq.s32.totalorder %s20, 1
    %p206 = por %p204, %p205
    %p207 = scmp.ne.s32.totalorder %s198, %s199
    %p208 = scmp.eq.s32.totalorder %s20, 0
    %p209 = por %p207, %p208
    %p210 = scmp.ne.s32.totalorder %s198, %s199
    %p211 = scmp.eq.s32.totalorder %s21, 1
    %p212 = por %p210, %p211
    %p214 = scmp.ne.s32.totalorder %s199, %s213
    %p215 = scmp.eq.s32.totalorder %s21, 0
    %p216 = por %p214, %p215
    %s217 = ssub.s32 %s15, %s22
    %p218 = scmp.eq.s32.totalorder %s217, 0
    %s220 = sadd.s32 %s219, 1
    %s221 = scalar_select %p218, %s219, %s220
    %p224 = pneg %p218
    %p225 = scmp.eq.s32.totalorder %s15, 1
    %p226 = por %p224, %p225
    %p227 = scmp.ne.s32.totalorder %s219, %s222
    %p228 = scmp.eq.s32.totalorder %s15, 0
    %p229 = por %p227, %p228
    %p230 = scmp.ne.s32.totalorder %s219, %s222
    %p231 = scmp.eq.s32.totalorder %s20, 1
    %p232 = por %p230, %p231
    %p233 = scmp.ne.s32.totalorder %s222, %s223
    %p234 = scmp.eq.s32.totalorder %s20, 0
    %p235 = por %p233, %p234
    %p236 = scmp.ne.s32.totalorder %s222, %s223
    %p237 = scmp.eq.s32.totalorder %s21, 1
    %p238 = por %p236, %p237
    %p240 = scmp.ne.s32.totalorder %s223, %s239
    %p241 = scmp.eq.s32.totalorder %s21, 0
    %p242 = por %p240, %p241
    %p243 = scmp.le.s32.totalorder 1, %s15
    %p244 = scmp.lt.s32.totalorder %s15, 3
    %p245 = pnand %p243, %p244
    %p246 = pneg %p245
    // Predicated region
    $region9: #{denoising_cnn_forward.1} parent=5 // pred_check
      _
    $region10: #{denoising_cnn_forward.1} parent=5 // pred_check_branch
      %248 = sbr.rel (%p245) target = $region12
    $region11: #{denoising_cnn_forward.1} parent=5 // pred_region
      %s249 = ssub.s32 %s15, 1
      // Predicated region
      $region13: #{denoising_cnn_forward.1} parent=11 // pred_check
        %p250 = pneg %p62
      $region14: #{denoising_cnn_forward.1} parent=11 // pred_check_branch
        %252 = sbr.rel (%p250) target = $region16
      $region15: #{denoising_cnn_forward.1} parent=11 // pred_region
        _
      $region16: #{denoising_cnn_forward.1} parent=11 // pred_fallthru
        _
      // Predicated region
      $region17: #{denoising_cnn_forward.1} parent=11 // pred_check
        %p253 = pneg %p83
      $region18: #{denoising_cnn_forward.1} parent=11 // pred_check_branch
        %255 = sbr.rel (%p253) target = $region20
      $region19: #{denoising_cnn_forward.1} parent=11 // pred_region
        _
      $region20: #{denoising_cnn_forward.1} parent=11 // pred_fallthru
        _
      // Predicated region
      $region21: #{denoising_cnn_forward.1} parent=11 // pred_check
        %p256 = pneg %p104
      $region22: #{denoising_cnn_forward.1} parent=11 // pred_check_branch
        %258 = sbr.rel (%p256) target = $region24
      $region23: #{denoising_cnn_forward.1} parent=11 // pred_region
        _
      $region24: #{denoising_cnn_forward.1} parent=11 // pred_fallthru
        _
      // Predicated region
      $region25: #{denoising_cnn_forward.1} parent=11 // pred_check
        %p259 = pneg %p125
      $region26: #{denoising_cnn_forward.1} parent=11 // pred_check_branch
        %261 = sbr.rel (%p259) target = $region28
      $region27: #{denoising_cnn_forward.1} parent=11 // pred_region
        _
      $region28: #{denoising_cnn_forward.1} parent=11 // pred_fallthru
        _
      // Predicated region
      $region29: #{denoising_cnn_forward.1} parent=11 // pred_check
        %p262 = pneg %p146
      $region30: #{denoising_cnn_forward.1} parent=11 // pred_check_branch
        %264 = sbr.rel (%p262) target = $region32
      $region31: #{denoising_cnn_forward.1} parent=11 // pred_region
        _
      $region32: #{denoising_cnn_forward.1} parent=11 // pred_fallthru
        _
      // Predicated region
      $region33: #{denoising_cnn_forward.1} parent=11 // pred_check
        %p265 = pneg %p167
      $region34: #{denoising_cnn_forward.1} parent=11 // pred_check_branch
        %267 = sbr.rel (%p265) target = $region36
      $region35: #{denoising_cnn_forward.1} parent=11 // pred_region
        _
      $region36: #{denoising_cnn_forward.1} parent=11 // pred_fallthru
        _
      // Predicated region
      $region37: #{denoising_cnn_forward.1} parent=11 // pred_check
        %p268 = pneg %p188
      $region38: #{denoising_cnn_forward.1} parent=11 // pred_check_branch
        %270 = sbr.rel (%p268) target = $region40
      $region39: #{denoising_cnn_forward.1} parent=11 // pred_region
        _
      $region40: #{denoising_cnn_forward.1} parent=11 // pred_fallthru
        _
      // Predicated region
      $region41: #{denoising_cnn_forward.1} parent=11 // pred_check
        %p271 = pneg %p209
      $region42: #{denoising_cnn_forward.1} parent=11 // pred_check_branch
        %273 = sbr.rel (%p271) target = $region44
      $region43: #{denoising_cnn_forward.1} parent=11 // pred_region
        _
      $region44: #{denoising_cnn_forward.1} parent=11 // pred_fallthru
        _
    $region12: #{denoising_cnn_forward.1} parent=5 // pred_fallthru
      _
    %p274 = scmp.lt.s32.totalorder %s15, 2
    // Predicated region
    $region45: #{denoising_cnn_forward.1} parent=5 // pred_check
      %p275 = pneg %p274
    $region46: #{denoising_cnn_forward.1} parent=5 // pred_check_branch
      %277 = sbr.rel (%p275) target = $region48
    $region47: #{denoising_cnn_forward.1} parent=5 // pred_region
      // Predicated region
      $region49: #{denoising_cnn_forward.1} parent=47 // pred_check
        %p278 = pneg %p35
      $region50: #{denoising_cnn_forward.1} parent=47 // pred_check_branch
        %280 = sbr.rel (%p278) target = $region52
      $region51: #{denoising_cnn_forward.1} parent=47 // pred_region
        %p281 = scmp.lt.s32.totalorder %s15, 1
        %s282 = scalar_select %p281, %s15, 1
        %s283 = smul.addr %s282, 54
        %s284 = smul.addr %s283, 8
        %s285 = scalar_lea.vmem %s0, %s284
      $region52: #{denoising_cnn_forward.1} parent=47 // pred_fallthru
        _
    $region48: #{denoising_cnn_forward.1} parent=5 // pred_fallthru
      _
    %p286 = scmp.le.s32.totalorder 1, %s15
    %p287 = scmp.lt.s32.totalorder %s15, 3
    %p288 = pnand %p286, %p287
    %p289 = pneg %p288
    // Predicated region
    $region53: #{denoising_cnn_forward.1} parent=5 // pred_check
      _
    $region54: #{denoising_cnn_forward.1} parent=5 // pred_check_branch
      %291 = sbr.rel (%p288) target = $region56
    $region55: #{denoising_cnn_forward.1} parent=5 // pred_region
      %s292 = ssub.s32 %s15, 1
      %p293 = scmp.lt.s32.totalorder %s20, 1
      %s294 = scalar_select %p293, %s20, 1
      %s295 = smul.addr %s294, 54
      %s296 = smul.addr %s295, 8
      %s297 = scalar_lea.vmem %s0, %s296
      %p298 = pneg %p41
      %p299 = pneg %p38
      %p300 = pneg %p62
      %p301 = pneg %p59
      %p302 = pneg %p83
      %p303 = pneg %p80
      %p304 = pneg %p104
      %p305 = pneg %p101
      %p306 = pneg %p125
      %p307 = pneg %p122
      %p308 = pneg %p146
      %p309 = pneg %p143
      %p310 = pneg %p167
      %p311 = pneg %p164
      %p312 = pneg %p188
      %p313 = pneg %p185
      %p314 = pneg %p209
      %p315 = pneg %p206
      %p316 = pneg %p235
      %p317 = pneg %p232
      %p318 = scmp.lt.s32.totalorder %s20, 1
      %s319 = scalar_select %p318, %s20, 1
      %s320 = smul.addr %s319, 32
      %s321 = smul.addr %s320, 8
      %s322 = scalar_lea.vmem %s9, %s321
      %p323 = scmp.lt.s32.totalorder %s20, 1
      %s324 = scalar_select %p323, %s20, 1
      %s325 = smul.addr %s324, 54
      %s326 = smul.addr %s325, 8
      %s327 = scalar_lea.vmem %s0, %s326
      %p328 = scmp.lt.s32.totalorder %s20, 1
      %s329 = scalar_select %p328, %s20, 1
      %s330 = smul.addr %s329, 32
      %s331 = smul.addr %s330, 8
      %s332 = scalar_lea.vmem %s9, %s331
      %v333 = vld [vmem:[%s327] sm:$0xff]
      %v334 = vld [vmem:[%s327 + $0x8] sm:$0xff]
      %v335 = vld [vmem:[%s327 + $0x18] sm:$0xff]
      %v336 = vld [vmem:[%s327 + $0x20] sm:$0xff]
      %v337 = vld [vmem:[%s327 + $0x30] sm:$0xff]
      %v338 = vld [vmem:[%s327 + $0x38] sm:$0xff]
      %v339 = vld [vmem:[%s327 + $0x48] sm:$0xff]
      %v340 = vld [vmem:[%s327 + $0x50] sm:$0xff]
      %v341 = vld [vmem:[%s327 + $0x60] sm:$0xff]
      %v342 = vld [vmem:[%s327 + $0x68] sm:$0xff]
      %v343 = vld [vmem:[%s327 + $0x78] sm:$0xff]
      %v344 = vld [vmem:[%s327 + $0x80] sm:$0xff]
      %v345 = vld [vmem:[%s327 + $0x90] sm:$0xff]
      %v346 = vld [vmem:[%s327 + $0x98] sm:$0xff]
      %v347 = vld [vmem:[%s327 + $0xa8] sm:$0xff]
      %v348 = vld [vmem:[%s327 + $0xb0] sm:$0xff]
      %v349 = vld [vmem:[%s327 + $0xc0] sm:$0xff]
      %v350 = vld [vmem:[%s327 + $0xc8] sm:$0xff]
      %v351 = vld [vmem:[%s327 + $0xd8] sm:$0xff]
      %v352 = vld [vmem:[%s327 + $0xe0] sm:$0xff]
      %v353 = vld [vmem:[%s327 + $0xf0] sm:$0xff]
      %v354 = vld [vmem:[%s327 + $0xf8] sm:$0xff]
      %v355 = vld [vmem:[%s327 + $0x108] sm:$0xff]
      %v356 = vld [vmem:[%s327 + $0x110] sm:$0xff]
      %v357 = vld [vmem:[%s327 + $0x120] sm:$0xff]
      %v358 = vld [vmem:[%s327 + $0x128] sm:$0xff]
      %v359 = vld [vmem:[%s327 + $0x138] sm:$0xff]
      %v360 = vld [vmem:[%s327 + $0x140] sm:$0xff]
      %v361 = vld [vmem:[%s327 + $0x150] sm:$0xff]
      %v362 = vld [vmem:[%s327 + $0x158] sm:$0xff]
      %v363 = vld [vmem:[%s327 + $0x168] sm:$0xff]
      %v364 = vld [vmem:[%s327 + $0x170] sm:$0xff]
      %v365 = vld [vmem:[%s327 + $0x1] sm:$0xff]
      %v366 = vld [vmem:[%s327 + $0x9] sm:$0xff]
      %v367 = vld [vmem:[%s327 + $0x19] sm:$0xff]
      %v368 = vld [vmem:[%s327 + $0x21] sm:$0xff]
      %v369 = vld [vmem:[%s327 + $0x31] sm:$0xff]
      %v370 = vld [vmem:[%s327 + $0x39] sm:$0xff]
      %v371 = vld [vmem:[%s327 + $0x49] sm:$0xff]
      %v372 = vld [vmem:[%s327 + $0x51] sm:$0xff]
      %v373 = vld [vmem:[%s327 + $0x61] sm:$0xff]
      %v374 = vld [vmem:[%s327 + $0x69] sm:$0xff]
      %v375 = vld [vmem:[%s327 + $0x79] sm:$0xff]
      %v376 = vld [vmem:[%s327 + $0x81] sm:$0xff]
      %v377 = vld [vmem:[%s327 + $0x91] sm:$0xff]
      %v378 = vld [vmem:[%s327 + $0x99] sm:$0xff]
      %v379 = vld [vmem:[%s327 + $0xa9] sm:$0xff]
      %v380 = vld [vmem:[%s327 + $0xb1] sm:$0xff]
      %v381 = vld [vmem:[%s327 + $0xc1] sm:$0xff]
      %v382 = vld [vmem:[%s327 + $0xc9] sm:$0xff]
      %v383 = vld [vmem:[%s327 + $0xd9] sm:$0xff]
      %v384 = vld [vmem:[%s327 + $0xe1] sm:$0xff]
      %v385 = vld [vmem:[%s327 + $0xf1] sm:$0xff]
      %v386 = vld [vmem:[%s327 + $0xf9] sm:$0xff]
      %v387 = vld [vmem:[%s327 + $0x109] sm:$0xff]
      %v388 = vld [vmem:[%s327 + $0x111] sm:$0xff]
      %v389 = vld [vmem:[%s327 + $0x121] sm:$0xff]
      %v390 = vld [vmem:[%s327 + $0x129] sm:$0xff]
      %v391 = vld [vmem:[%s327 + $0x139] sm:$0xff]
      %v392 = vld [vmem:[%s327 + $0x141] sm:$0xff]
      %v393 = vld [vmem:[%s327 + $0x151] sm:$0xff]
      %v394 = vld [vmem:[%s327 + $0x159] sm:$0xff]
      %v395 = vld [vmem:[%s327 + $0x169] sm:$0xff]
      %v396 = vld [vmem:[%s327 + $0x171] sm:$0xff]
      %v397 = vld [vmem:[%s327 + $0x2] sm:$0xff]
      %v398 = vld [vmem:[%s327 + $0xa] sm:$0xff]
      %v399 = vld [vmem:[%s327 + $0x1a] sm:$0xff]
      %v400 = vld [vmem:[%s327 + $0x22] sm:$0xff]
      %v401 = vld [vmem:[%s327 + $0x32] sm:$0xff]
      %v402 = vld [vmem:[%s327 + $0x3a] sm:$0xff]
      %v403 = vld [vmem:[%s327 + $0x4a] sm:$0xff]
      %v404 = vld [vmem:[%s327 + $0x52] sm:$0xff]
      %v405 = vld [vmem:[%s327 + $0x62] sm:$0xff]
      %v406 = vld [vmem:[%s327 + $0x6a] sm:$0xff]
      %v407 = vld [vmem:[%s327 + $0x7a] sm:$0xff]
      %v408 = vld [vmem:[%s327 + $0x82] sm:$0xff]
      %v409 = vld [vmem:[%s327 + $0x92] sm:$0xff]
      %v410 = vld [vmem:[%s327 + $0x9a] sm:$0xff]
      %v411 = vld [vmem:[%s327 + $0xaa] sm:$0xff]
      %v412 = vld [vmem:[%s327 + $0xb2] sm:$0xff]
      %v413 = vld [vmem:[%s327 + $0xc2] sm:$0xff]
      %v414 = vld [vmem:[%s327 + $0xca] sm:$0xff]
      %v415 = vld [vmem:[%s327 + $0xda] sm:$0xff]
      %v416 = vld [vmem:[%s327 + $0xe2] sm:$0xff]
      %v417 = vld [vmem:[%s327 + $0xf2] sm:$0xff]
      %v418 = vld [vmem:[%s327 + $0xfa] sm:$0xff]
      %v419 = vld [vmem:[%s327 + $0x10a] sm:$0xff]
      %v420 = vld [vmem:[%s327 + $0x112] sm:$0xff]
      %v421 = vld [vmem:[%s327 + $0x122] sm:$0xff]
      %v422 = vld [vmem:[%s327 + $0x12a] sm:$0xff]
      %v423 = vld [vmem:[%s327 + $0x13a] sm:$0xff]
      %v424 = vld [vmem:[%s327 + $0x142] sm:$0xff]
      %v425 = vld [vmem:[%s327 + $0x152] sm:$0xff]
      %v426 = vld [vmem:[%s327 + $0x15a] sm:$0xff]
      %v427 = vld [vmem:[%s327 + $0x16a] sm:$0xff]
      %v428 = vld [vmem:[%s327 + $0x172] sm:$0xff]
      %s429 = scalar_lea.vmem %s327, 24
      %v430 = vld [vmem:[%s429] sm:$0xff]
      %v431 = vld [vmem:[%s429 + $0x8] sm:$0xff]
      %v432 = vld [vmem:[%s429 + $0x18] sm:$0xff]
      %v433 = vld [vmem:[%s429 + $0x20] sm:$0xff]
      %v434 = vld [vmem:[%s429 + $0x30] sm:$0xff]
      %v435 = vld [vmem:[%s429 + $0x38] sm:$0xff]
      %v436 = vld [vmem:[%s429 + $0x48] sm:$0xff]
      %v437 = vld [vmem:[%s429 + $0x50] sm:$0xff]
      %v438 = vld [vmem:[%s429 + $0x60] sm:$0xff]
      %v439 = vld [vmem:[%s429 + $0x68] sm:$0xff]
      %v440 = vld [vmem:[%s429 + $0x78] sm:$0xff]
      %v441 = vld [vmem:[%s429 + $0x80] sm:$0xff]
      %v442 = vld [vmem:[%s429 + $0x90] sm:$0xff]
      %v443 = vld [vmem:[%s429 + $0x98] sm:$0xff]
      %v444 = vld [vmem:[%s429 + $0xa8] sm:$0xff]
      %v445 = vld [vmem:[%s429 + $0xb0] sm:$0xff]
      %v446 = vld [vmem:[%s429 + $0xc0] sm:$0xff]
      %v447 = vld [vmem:[%s429 + $0xc8] sm:$0xff]
      %v448 = vld [vmem:[%s429 + $0xd8] sm:$0xff]
      %v449 = vld [vmem:[%s429 + $0xe0] sm:$0xff]
      %v450 = vld [vmem:[%s429 + $0xf0] sm:$0xff]
      %v451 = vld [vmem:[%s429 + $0xf8] sm:$0xff]
      %v452 = vld [vmem:[%s429 + $0x108] sm:$0xff]
      %v453 = vld [vmem:[%s429 + $0x110] sm:$0xff]
      %v454 = vld [vmem:[%s429 + $0x120] sm:$0xff]
      %v455 = vld [vmem:[%s429 + $0x128] sm:$0xff]
      %v456 = vld [vmem:[%s429 + $0x138] sm:$0xff]
      %v457 = vld [vmem:[%s429 + $0x140] sm:$0xff]
      %v458 = vld [vmem:[%s429 + $0x150] sm:$0xff]
      %v459 = vld [vmem:[%s429 + $0x158] sm:$0xff]
      %v460 = vld [vmem:[%s429 + $0x168] sm:$0xff]
      %v461 = vld [vmem:[%s429 + $0x170] sm:$0xff]
      %v462 = vld [vmem:[%s429 + $0x1] sm:$0xff]
      %v463 = vld [vmem:[%s429 + $0x9] sm:$0xff]
      %v464 = vld [vmem:[%s429 + $0x19] sm:$0xff]
      %v465 = vld [vmem:[%s429 + $0x21] sm:$0xff]
      %v466 = vld [vmem:[%s429 + $0x31] sm:$0xff]
      %v467 = vld [vmem:[%s429 + $0x39] sm:$0xff]
      %v468 = vld [vmem:[%s429 + $0x49] sm:$0xff]
      %v469 = vld [vmem:[%s429 + $0x51] sm:$0xff]
      %v470 = vld [vmem:[%s429 + $0x61] sm:$0xff]
      %v471 = vld [vmem:[%s429 + $0x69] sm:$0xff]
      %v472 = vld [vmem:[%s429 + $0x79] sm:$0xff]
      %v473 = vld [vmem:[%s429 + $0x81] sm:$0xff]
      %v474 = vld [vmem:[%s429 + $0x91] sm:$0xff]
      %v475 = vld [vmem:[%s429 + $0x99] sm:$0xff]
      %v476 = vld [vmem:[%s429 + $0xa9] sm:$0xff]
      %v477 = vld [vmem:[%s429 + $0xb1] sm:$0xff]
      %v478 = vld [vmem:[%s429 + $0xc1] sm:$0xff]
      %v479 = vld [vmem:[%s429 + $0xc9] sm:$0xff]
      %v480 = vld [vmem:[%s429 + $0xd9] sm:$0xff]
      %v481 = vld [vmem:[%s429 + $0xe1] sm:$0xff]
      %v482 = vld [vmem:[%s429 + $0xf1] sm:$0xff]
      %v483 = vld [vmem:[%s429 + $0xf9] sm:$0xff]
      %v484 = vld [vmem:[%s429 + $0x109] sm:$0xff]
      %v485 = vld [vmem:[%s429 + $0x111] sm:$0xff]
      %v486 = vld [vmem:[%s429 + $0x121] sm:$0xff]
      %v487 = vld [vmem:[%s429 + $0x129] sm:$0xff]
      %v488 = vld [vmem:[%s429 + $0x139] sm:$0xff]
      %v489 = vld [vmem:[%s429 + $0x141] sm:$0xff]
      %v490 = vld [vmem:[%s429 + $0x151] sm:$0xff]
      %v491 = vld [vmem:[%s429 + $0x159] sm:$0xff]
      %v492 = vld [vmem:[%s429 + $0x169] sm:$0xff]
      %v493 = vld [vmem:[%s429 + $0x171] sm:$0xff]
      %v494 = vld [vmem:[%s429 + $0x2] sm:$0xff]
      %v495 = vld [vmem:[%s429 + $0xa] sm:$0xff]
      %v496 = vld [vmem:[%s429 + $0x1a] sm:$0xff]
      %v497 = vld [vmem:[%s429 + $0x22] sm:$0xff]
      %v498 = vld [vmem:[%s429 + $0x32] sm:$0xff]
      %v499 = vld [vmem:[%s429 + $0x3a] sm:$0xff]
      %v500 = vld [vmem:[%s429 + $0x4a] sm:$0xff]
      %v501 = vld [vmem:[%s429 + $0x52] sm:$0xff]
      %v502 = vld [vmem:[%s429 + $0x62] sm:$0xff]
      %v503 = vld [vmem:[%s429 + $0x6a] sm:$0xff]
      %v504 = vld [vmem:[%s429 + $0x7a] sm:$0xff]
      %v505 = vld [vmem:[%s429 + $0x82] sm:$0xff]
      %v506 = vld [vmem:[%s429 + $0x92] sm:$0xff]
      %v507 = vld [vmem:[%s429 + $0x9a] sm:$0xff]
      %v508 = vld [vmem:[%s429 + $0xaa] sm:$0xff]
      %v509 = vld [vmem:[%s429 + $0xb2] sm:$0xff]
      %v510 = vld [vmem:[%s429 + $0xc2] sm:$0xff]
      %v511 = vld [vmem:[%s429 + $0xca] sm:$0xff]
      %v512 = vld [vmem:[%s429 + $0xda] sm:$0xff]
      %v513 = vld [vmem:[%s429 + $0xe2] sm:$0xff]
      %v514 = vld [vmem:[%s429 + $0xf2] sm:$0xff]
      %v515 = vld [vmem:[%s429 + $0xfa] sm:$0xff]
      %v516 = vld [vmem:[%s429 + $0x10a] sm:$0xff]
      %v517 = vld [vmem:[%s429 + $0x112] sm:$0xff]
      %v518 = vld [vmem:[%s429 + $0x122] sm:$0xff]
      %v519 = vld [vmem:[%s429 + $0x12a] sm:$0xff]
      %v520 = vld [vmem:[%s429 + $0x13a] sm:$0xff]
      %v521 = vld [vmem:[%s429 + $0x142] sm:$0xff]
      %v522 = vld [vmem:[%s429 + $0x152] sm:$0xff]
      %v523 = vld [vmem:[%s429 + $0x15a] sm:$0xff]
      %v524 = vld [vmem:[%s429 + $0x16a] sm:$0xff]
      %v525 = vld [vmem:[%s429 + $0x172] sm:$0xff]
      %s526 = scalar_lea.vmem %s327, 48
      %v527 = vld [vmem:[%s526] sm:$0xff]
      %v528 = vld [vmem:[%s526 + $0x8] sm:$0xff]
      %v529 = vld [vmem:[%s526 + $0x18] sm:$0xff]
      %v530 = vld [vmem:[%s526 + $0x20] sm:$0xff]
      %v531 = vld [vmem:[%s526 + $0x30] sm:$0xff]
      %v532 = vld [vmem:[%s526 + $0x38] sm:$0xff]
      %v533 = vld [vmem:[%s526 + $0x48] sm:$0xff]
      %v534 = vld [vmem:[%s526 + $0x50] sm:$0xff]
      %v535 = vld [vmem:[%s526 + $0x60] sm:$0xff]
      %v536 = vld [vmem:[%s526 + $0x68] sm:$0xff]
      %v537 = vld [vmem:[%s526 + $0x78] sm:$0xff]
      %v538 = vld [vmem:[%s526 + $0x80] sm:$0xff]
      %v539 = vld [vmem:[%s526 + $0x90] sm:$0xff]
      %v540 = vld [vmem:[%s526 + $0x98] sm:$0xff]
      %v541 = vld [vmem:[%s526 + $0xa8] sm:$0xff]
      %v542 = vld [vmem:[%s526 + $0xb0] sm:$0xff]
      %v543 = vld [vmem:[%s526 + $0xc0] sm:$0xff]
      %v544 = vld [vmem:[%s526 + $0xc8] sm:$0xff]
      %v545 = vld [vmem:[%s526 + $0xd8] sm:$0xff]
      %v546 = vld [vmem:[%s526 + $0xe0] sm:$0xff]
      %v547 = vld [vmem:[%s526 + $0xf0] sm:$0xff]
      %v548 = vld [vmem:[%s526 + $0xf8] sm:$0xff]
      %v549 = vld [vmem:[%s526 + $0x108] sm:$0xff]
      %v550 = vld [vmem:[%s526 + $0x110] sm:$0xff]
      %v551 = vld [vmem:[%s526 + $0x120] sm:$0xff]
      %v552 = vld [vmem:[%s526 + $0x128] sm:$0xff]
      %v553 = vld [vmem:[%s526 + $0x138] sm:$0xff]
      %v554 = vld [vmem:[%s526 + $0x140] sm:$0xff]
      %v555 = vld [vmem:[%s526 + $0x150] sm:$0xff]
      %v556 = vld [vmem:[%s526 + $0x158] sm:$0xff]
      %v557 = vld [vmem:[%s526 + $0x168] sm:$0xff]
      %v558 = vld [vmem:[%s526 + $0x170] sm:$0xff]
      %v559 = vld [vmem:[%s526 + $0x1] sm:$0xff]
      %v560 = vld [vmem:[%s526 + $0x9] sm:$0xff]
      %v561 = vld [vmem:[%s526 + $0x19] sm:$0xff]
      %v562 = vld [vmem:[%s526 + $0x21] sm:$0xff]
      %v563 = vld [vmem:[%s526 + $0x31] sm:$0xff]
      %v564 = vld [vmem:[%s526 + $0x39] sm:$0xff]
      %v565 = vld [vmem:[%s526 + $0x49] sm:$0xff]
      %v566 = vld [vmem:[%s526 + $0x51] sm:$0xff]
      %v567 = vld [vmem:[%s526 + $0x61] sm:$0xff]
      %v568 = vld [vmem:[%s526 + $0x69] sm:$0xff]
      %v569 = vld [vmem:[%s526 + $0x79] sm:$0xff]
      %v570 = vld [vmem:[%s526 + $0x81] sm:$0xff]
      %v571 = vld [vmem:[%s526 + $0x91] sm:$0xff]
      %v572 = vld [vmem:[%s526 + $0x99] sm:$0xff]
      %v573 = vld [vmem:[%s526 + $0xa9] sm:$0xff]
      %v574 = vld [vmem:[%s526 + $0xb1] sm:$0xff]
      %v575 = vld [vmem:[%s526 + $0xc1] sm:$0xff]
      %v576 = vld [vmem:[%s526 + $0xc9] sm:$0xff]
      %v577 = vld [vmem:[%s526 + $0xd9] sm:$0xff]
      %v578 = vld [vmem:[%s526 + $0xe1] sm:$0xff]
      %v579 = vld [vmem:[%s526 + $0xf1] sm:$0xff]
      %v580 = vld [vmem:[%s526 + $0xf9] sm:$0xff]
      %v581 = vld [vmem:[%s526 + $0x109] sm:$0xff]
      %v582 = vld [vmem:[%s526 + $0x111] sm:$0xff]
      %v583 = vld [vmem:[%s526 + $0x121] sm:$0xff]
      %v584 = vld [vmem:[%s526 + $0x129] sm:$0xff]
      %v585 = vld [vmem:[%s526 + $0x139] sm:$0xff]
      %v586 = vld [vmem:[%s526 + $0x141] sm:$0xff]
      %v587 = vld [vmem:[%s526 + $0x151] sm:$0xff]
      %v588 = vld [vmem:[%s526 + $0x159] sm:$0xff]
      %v589 = vld [vmem:[%s526 + $0x169] sm:$0xff]
      %v590 = vld [vmem:[%s526 + $0x171] sm:$0xff]
      %v591 = vld [vmem:[%s526 + $0x2] sm:$0xff]
      %v592 = vld [vmem:[%s526 + $0xa] sm:$0xff]
      %v593 = vld [vmem:[%s526 + $0x1a] sm:$0xff]
      %v594 = vld [vmem:[%s526 + $0x22] sm:$0xff]
      %v595 = vld [vmem:[%s526 + $0x32] sm:$0xff]
      %v596 = vld [vmem:[%s526 + $0x3a] sm:$0xff]
      %v597 = vld [vmem:[%s526 + $0x4a] sm:$0xff]
      %v598 = vld [vmem:[%s526 + $0x52] sm:$0xff]
      %v599 = vld [vmem:[%s526 + $0x62] sm:$0xff]
      %v600 = vld [vmem:[%s526 + $0x6a] sm:$0xff]
      %v601 = vld [vmem:[%s526 + $0x7a] sm:$0xff]
      %v602 = vld [vmem:[%s526 + $0x82] sm:$0xff]
      %v603 = vld [vmem:[%s526 + $0x92] sm:$0xff]
      %v604 = vld [vmem:[%s526 + $0x9a] sm:$0xff]
      %v605 = vld [vmem:[%s526 + $0xaa] sm:$0xff]
      %v606 = vld [vmem:[%s526 + $0xb2] sm:$0xff]
      %v607 = vld [vmem:[%s526 + $0xc2] sm:$0xff]
      %v608 = vld [vmem:[%s526 + $0xca] sm:$0xff]
      %v609 = vld [vmem:[%s526 + $0xda] sm:$0xff]
      %v610 = vld [vmem:[%s526 + $0xe2] sm:$0xff]
      %v611 = vld [vmem:[%s526 + $0xf2] sm:$0xff]
      %v612 = vld [vmem:[%s526 + $0xfa] sm:$0xff]
      %v613 = vld [vmem:[%s526 + $0x10a] sm:$0xff]
      %v614 = vld [vmem:[%s526 + $0x112] sm:$0xff]
      %v615 = vld [vmem:[%s526 + $0x122] sm:$0xff]
      %v616 = vld [vmem:[%s526 + $0x12a] sm:$0xff]
      %v617 = vld [vmem:[%s526 + $0x13a] sm:$0xff]
      %v618 = vld [vmem:[%s526 + $0x142] sm:$0xff]
      %v619 = vld [vmem:[%s526 + $0x152] sm:$0xff]
      %v620 = vld [vmem:[%s526 + $0x15a] sm:$0xff]
      %v621 = vld [vmem:[%s526 + $0x16a] sm:$0xff]
      %v622 = vld [vmem:[%s526 + $0x172] sm:$0xff]
      %655 = vrot.lane.b32.xlu0 %v365, 8
      %v656 = vpop.permute.xlu0 %655
      %657 = vrot.lane.b32.xlu0 %v366, 8
      %v658 = vpop.permute.xlu0 %657
      %659 = vrot.lane.b32.xlu0 %v367, 8
      %v660 = vpop.permute.xlu0 %659
      %661 = vrot.lane.b32.xlu0 %v368, 8
      %v662 = vpop.permute.xlu0 %661
      %663 = vrot.lane.b32.xlu0 %v369, 8
      %v664 = vpop.permute.xlu0 %663
      %665 = vrot.lane.b32.xlu0 %v370, 8
      %v666 = vpop.permute.xlu0 %665
      %667 = vrot.lane.b32.xlu0 %v371, 8
      %v668 = vpop.permute.xlu0 %667
      %669 = vrot.lane.b32.xlu0 %v372, 8
      %v670 = vpop.permute.xlu0 %669
      %671 = vrot.lane.b32.xlu0 %v373, 8
      %v672 = vpop.permute.xlu0 %671
      %673 = vrot.lane.b32.xlu0 %v374, 8
      %v674 = vpop.permute.xlu0 %673
      %675 = vrot.lane.b32.xlu0 %v375, 8
      %v676 = vpop.permute.xlu0 %675
      %677 = vrot.lane.b32.xlu0 %v376, 8
      %v678 = vpop.permute.xlu0 %677
      %679 = vrot.lane.b32.xlu0 %v377, 8
      %v680 = vpop.permute.xlu0 %679
      %681 = vrot.lane.b32.xlu0 %v378, 8
      %v682 = vpop.permute.xlu0 %681
      %683 = vrot.lane.b32.xlu0 %v379, 8
      %v684 = vpop.permute.xlu0 %683
      %685 = vrot.lane.b32.xlu0 %v380, 8
      %v686 = vpop.permute.xlu0 %685
      %687 = vrot.lane.b32.xlu0 %v381, 8
      %v688 = vpop.permute.xlu0 %687
      %689 = vrot.lane.b32.xlu0 %v382, 8
      %v690 = vpop.permute.xlu0 %689
      %691 = vrot.lane.b32.xlu0 %v383, 8
      %v692 = vpop.permute.xlu0 %691
      %693 = vrot.lane.b32.xlu0 %v384, 8
      %v694 = vpop.permute.xlu0 %693
      %695 = vrot.lane.b32.xlu0 %v385, 8
      %v696 = vpop.permute.xlu0 %695
      %697 = vrot.lane.b32.xlu0 %v386, 8
      %v698 = vpop.permute.xlu0 %697
      %699 = vrot.lane.b32.xlu0 %v387, 8
      %v700 = vpop.permute.xlu0 %699
      %701 = vrot.lane.b32.xlu0 %v388, 8
      %v702 = vpop.permute.xlu0 %701
      %703 = vrot.lane.b32.xlu0 %v389, 8
      %v704 = vpop.permute.xlu0 %703
      %705 = vrot.lane.b32.xlu0 %v390, 8
      %v706 = vpop.permute.xlu0 %705
      %707 = vrot.lane.b32.xlu0 %v391, 8
      %v708 = vpop.permute.xlu0 %707
      %709 = vrot.lane.b32.xlu0 %v392, 8
      %v710 = vpop.permute.xlu0 %709
      %711 = vrot.lane.b32.xlu0 %v393, 8
      %v712 = vpop.permute.xlu0 %711
      %713 = vrot.lane.b32.xlu0 %v394, 8
      %v714 = vpop.permute.xlu0 %713
      %715 = vrot.lane.b32.xlu0 %v395, 8
      %v716 = vpop.permute.xlu0 %715
      %717 = vrot.lane.b32.xlu0 %v396, 8
      %v718 = vpop.permute.xlu0 %717
      %783 = vrot.lane.b32.xlu0 %v397, 16
      %v784 = vpop.permute.xlu0 %783
      %785 = vrot.lane.b32.xlu0 %v398, 16
      %v786 = vpop.permute.xlu0 %785
      %787 = vrot.lane.b32.xlu0 %v399, 16
      %v788 = vpop.permute.xlu0 %787
      %789 = vrot.lane.b32.xlu0 %v400, 16
      %v790 = vpop.permute.xlu0 %789
      %791 = vrot.lane.b32.xlu0 %v401, 16
      %v792 = vpop.permute.xlu0 %791
      %793 = vrot.lane.b32.xlu0 %v402, 16
      %v794 = vpop.permute.xlu0 %793
      %795 = vrot.lane.b32.xlu0 %v403, 16
      %v796 = vpop.permute.xlu0 %795
      %797 = vrot.lane.b32.xlu0 %v404, 16
      %v798 = vpop.permute.xlu0 %797
      %799 = vrot.lane.b32.xlu0 %v405, 16
      %v800 = vpop.permute.xlu0 %799
      %801 = vrot.lane.b32.xlu0 %v406, 16
      %v802 = vpop.permute.xlu0 %801
      %803 = vrot.lane.b32.xlu0 %v407, 16
      %v804 = vpop.permute.xlu0 %803
      %805 = vrot.lane.b32.xlu0 %v408, 16
      %v806 = vpop.permute.xlu0 %805
      %807 = vrot.lane.b32.xlu0 %v409, 16
      %v808 = vpop.permute.xlu0 %807
      %809 = vrot.lane.b32.xlu0 %v410, 16
      %v810 = vpop.permute.xlu0 %809
      %811 = vrot.lane.b32.xlu0 %v411, 16
      %v812 = vpop.permute.xlu0 %811
      %813 = vrot.lane.b32.xlu0 %v412, 16
      %v814 = vpop.permute.xlu0 %813
      %815 = vrot.lane.b32.xlu0 %v413, 16
      %v816 = vpop.permute.xlu0 %815
      %817 = vrot.lane.b32.xlu0 %v414, 16
      %v818 = vpop.permute.xlu0 %817
      %819 = vrot.lane.b32.xlu0 %v415, 16
      %v820 = vpop.permute.xlu0 %819
      %821 = vrot.lane.b32.xlu0 %v416, 16
      %v822 = vpop.permute.xlu0 %821
      %823 = vrot.lane.b32.xlu0 %v417, 16
      %v824 = vpop.permute.xlu0 %823
      %825 = vrot.lane.b32.xlu0 %v418, 16
      %v826 = vpop.permute.xlu0 %825
      %827 = vrot.lane.b32.xlu0 %v419, 16
      %v828 = vpop.permute.xlu0 %827
      %829 = vrot.lane.b32.xlu0 %v420, 16
      %v830 = vpop.permute.xlu0 %829
      %831 = vrot.lane.b32.xlu0 %v421, 16
      %v832 = vpop.permute.xlu0 %831
      %833 = vrot.lane.b32.xlu0 %v422, 16
      %v834 = vpop.permute.xlu0 %833
      %835 = vrot.lane.b32.xlu0 %v423, 16
      %v836 = vpop.permute.xlu0 %835
      %837 = vrot.lane.b32.xlu0 %v424, 16
      %v838 = vpop.permute.xlu0 %837
      %839 = vrot.lane.b32.xlu0 %v425, 16
      %v840 = vpop.permute.xlu0 %839
      %841 = vrot.lane.b32.xlu0 %v426, 16
      %v842 = vpop.permute.xlu0 %841
      %843 = vrot.lane.b32.xlu0 %v427, 16
      %v844 = vpop.permute.xlu0 %843
      %845 = vrot.lane.b32.xlu0 %v428, 16
      %v846 = vpop.permute.xlu0 %845
      %911 = vrot.lane.b32.xlu0 %v430, 24
      %v912 = vpop.permute.xlu0 %911
      %913 = vrot.lane.b32.xlu0 %v431, 24
      %v914 = vpop.permute.xlu0 %913
      %915 = vrot.lane.b32.xlu0 %v432, 24
      %v916 = vpop.permute.xlu0 %915
      %917 = vrot.lane.b32.xlu0 %v433, 24
      %v918 = vpop.permute.xlu0 %917
      %919 = vrot.lane.b32.xlu0 %v434, 24
      %v920 = vpop.permute.xlu0 %919
      %921 = vrot.lane.b32.xlu0 %v435, 24
      %v922 = vpop.permute.xlu0 %921
      %923 = vrot.lane.b32.xlu0 %v436, 24
      %v924 = vpop.permute.xlu0 %923
      %925 = vrot.lane.b32.xlu0 %v437, 24
      %v926 = vpop.permute.xlu0 %925
      %927 = vrot.lane.b32.xlu0 %v438, 24
      %v928 = vpop.permute.xlu0 %927
      %929 = vrot.lane.b32.xlu0 %v439, 24
      %v930 = vpop.permute.xlu0 %929
      %931 = vrot.lane.b32.xlu0 %v440, 24
      %v932 = vpop.permute.xlu0 %931
      %933 = vrot.lane.b32.xlu0 %v441, 24
      %v934 = vpop.permute.xlu0 %933
      %935 = vrot.lane.b32.xlu0 %v442, 24
      %v936 = vpop.permute.xlu0 %935
      %937 = vrot.lane.b32.xlu0 %v443, 24
      %v938 = vpop.permute.xlu0 %937
      %939 = vrot.lane.b32.xlu0 %v444, 24
      %v940 = vpop.permute.xlu0 %939
      %941 = vrot.lane.b32.xlu0 %v445, 24
      %v942 = vpop.permute.xlu0 %941
      %943 = vrot.lane.b32.xlu0 %v446, 24
      %v944 = vpop.permute.xlu0 %943
      %945 = vrot.lane.b32.xlu0 %v447, 24
      %v946 = vpop.permute.xlu0 %945
      %947 = vrot.lane.b32.xlu0 %v448, 24
      %v948 = vpop.permute.xlu0 %947
      %949 = vrot.lane.b32.xlu0 %v449, 24
      %v950 = vpop.permute.xlu0 %949
      %951 = vrot.lane.b32.xlu0 %v450, 24
      %v952 = vpop.permute.xlu0 %951
      %953 = vrot.lane.b32.xlu0 %v451, 24
      %v954 = vpop.permute.xlu0 %953
      %955 = vrot.lane.b32.xlu0 %v452, 24
      %v956 = vpop.permute.xlu0 %955
      %957 = vrot.lane.b32.xlu0 %v453, 24
      %v958 = vpop.permute.xlu0 %957
      %959 = vrot.lane.b32.xlu0 %v454, 24
      %v960 = vpop.permute.xlu0 %959
      %961 = vrot.lane.b32.xlu0 %v455, 24
      %v962 = vpop.permute.xlu0 %961
      %963 = vrot.lane.b32.xlu0 %v456, 24
      %v964 = vpop.permute.xlu0 %963
      %965 = vrot.lane.b32.xlu0 %v457, 24
      %v966 = vpop.permute.xlu0 %965
      %967 = vrot.lane.b32.xlu0 %v458, 24
      %v968 = vpop.permute.xlu0 %967
      %969 = vrot.lane.b32.xlu0 %v459, 24
      %v970 = vpop.permute.xlu0 %969
      %971 = vrot.lane.b32.xlu0 %v460, 24
      %v972 = vpop.permute.xlu0 %971
      %973 = vrot.lane.b32.xlu0 %v461, 24
      %v974 = vpop.permute.xlu0 %973
      %1039 = vrot.lane.b32.xlu0 %v462, 32
      %v1040 = vpop.permute.xlu0 %1039
      %1041 = vrot.lane.b32.xlu0 %v463, 32
      %v1042 = vpop.permute.xlu0 %1041
      %1043 = vrot.lane.b32.xlu0 %v464, 32
      %v1044 = vpop.permute.xlu0 %1043
      %1045 = vrot.lane.b32.xlu0 %v465, 32
      %v1046 = vpop.permute.xlu0 %1045
      %1047 = vrot.lane.b32.xlu0 %v466, 32
      %v1048 = vpop.permute.xlu0 %1047
      %1049 = vrot.lane.b32.xlu0 %v467, 32
      %v1050 = vpop.permute.xlu0 %1049
      %1051 = vrot.lane.b32.xlu0 %v468, 32
      %v1052 = vpop.permute.xlu0 %1051
      %1053 = vrot.lane.b32.xlu0 %v469, 32
      %v1054 = vpop.permute.xlu0 %1053
      %1055 = vrot.lane.b32.xlu0 %v470, 32
      %v1056 = vpop.permute.xlu0 %1055
      %1057 = vrot.lane.b32.xlu0 %v471, 32
      %v1058 = vpop.permute.xlu0 %1057
      %1059 = vrot.lane.b32.xlu0 %v472, 32
      %v1060 = vpop.permute.xlu0 %1059
      %1061 = vrot.lane.b32.xlu0 %v473, 32
      %v1062 = vpop.permute.xlu0 %1061
      %1063 = vrot.lane.b32.xlu0 %v474, 32
      %v1064 = vpop.permute.xlu0 %1063
      %1065 = vrot.lane.b32.xlu0 %v475, 32
      %v1066 = vpop.permute.xlu0 %1065
      %1067 = vrot.lane.b32.xlu0 %v476, 32
      %v1068 = vpop.permute.xlu0 %1067
      %1069 = vrot.lane.b32.xlu0 %v477, 32
      %v1070 = vpop.permute.xlu0 %1069
      %1071 = vrot.lane.b32.xlu0 %v478, 32
      %v1072 = vpop.permute.xlu0 %1071
      %1073 = vrot.lane.b32.xlu0 %v479, 32
      %v1074 = vpop.permute.xlu0 %1073
      %1075 = vrot.lane.b32.xlu0 %v480, 32
      %v1076 = vpop.permute.xlu0 %1075
      %1077 = vrot.lane.b32.xlu0 %v481, 32
      %v1078 = vpop.permute.xlu0 %1077
      %1079 = vrot.lane.b32.xlu0 %v482, 32
      %v1080 = vpop.permute.xlu0 %1079
      %1081 = vrot.lane.b32.xlu0 %v483, 32
      %v1082 = vpop.permute.xlu0 %1081
      %1083 = vrot.lane.b32.xlu0 %v484, 32
      %v1084 = vpop.permute.xlu0 %1083
      %1085 = vrot.lane.b32.xlu0 %v485, 32
      %v1086 = vpop.permute.xlu0 %1085
      %1087 = vrot.lane.b32.xlu0 %v486, 32
      %v1088 = vpop.permute.xlu0 %1087
      %1089 = vrot.lane.b32.xlu0 %v487, 32
      %v1090 = vpop.permute.xlu0 %1089
      %1091 = vrot.lane.b32.xlu0 %v488, 32
      %v1092 = vpop.permute.xlu0 %1091
      %1093 = vrot.lane.b32.xlu0 %v489, 32
      %v1094 = vpop.permute.xlu0 %1093
      %1095 = vrot.lane.b32.xlu0 %v490, 32
      %v1096 = vpop.permute.xlu0 %1095
      %1097 = vrot.lane.b32.xlu0 %v491, 32
      %v1098 = vpop.permute.xlu0 %1097
      %1099 = vrot.lane.b32.xlu0 %v492, 32
      %v1100 = vpop.permute.xlu0 %1099
      %1101 = vrot.lane.b32.xlu0 %v493, 32
      %v1102 = vpop.permute.xlu0 %1101
      %1167 = vrot.lane.b32.xlu0 %v494, 40
      %v1168 = vpop.permute.xlu0 %1167
      %1169 = vrot.lane.b32.xlu0 %v495, 40
      %v1170 = vpop.permute.xlu0 %1169
      %1171 = vrot.lane.b32.xlu0 %v496, 40
      %v1172 = vpop.permute.xlu0 %1171
      %1173 = vrot.lane.b32.xlu0 %v497, 40
      %v1174 = vpop.permute.xlu0 %1173
      %1175 = vrot.lane.b32.xlu0 %v498, 40
      %v1176 = vpop.permute.xlu0 %1175
      %1177 = vrot.lane.b32.xlu0 %v499, 40
      %v1178 = vpop.permute.xlu0 %1177
      %1179 = vrot.lane.b32.xlu0 %v500, 40
      %v1180 = vpop.permute.xlu0 %1179
      %1181 = vrot.lane.b32.xlu0 %v501, 40
      %v1182 = vpop.permute.xlu0 %1181
      %1183 = vrot.lane.b32.xlu0 %v502, 40
      %v1184 = vpop.permute.xlu0 %1183
      %1185 = vrot.lane.b32.xlu0 %v503, 40
      %v1186 = vpop.permute.xlu0 %1185
      %1187 = vrot.lane.b32.xlu0 %v504, 40
      %v1188 = vpop.permute.xlu0 %1187
      %1189 = vrot.lane.b32.xlu0 %v505, 40
      %v1190 = vpop.permute.xlu0 %1189
      %1191 = vrot.lane.b32.xlu0 %v506, 40
      %v1192 = vpop.permute.xlu0 %1191
      %1193 = vrot.lane.b32.xlu0 %v507, 40
      %v1194 = vpop.permute.xlu0 %1193
      %1195 = vrot.lane.b32.xlu0 %v508, 40
      %v1196 = vpop.permute.xlu0 %1195
      %1197 = vrot.lane.b32.xlu0 %v509, 40
      %v1198 = vpop.permute.xlu0 %1197
      %1199 = vrot.lane.b32.xlu0 %v510, 40
      %v1200 = vpop.permute.xlu0 %1199
      %1201 = vrot.lane.b32.xlu0 %v511, 40
      %v1202 = vpop.permute.xlu0 %1201
      %1203 = vrot.lane.b32.xlu0 %v512, 40
      %v1204 = vpop.permute.xlu0 %1203
      %1205 = vrot.lane.b32.xlu0 %v513, 40
      %v1206 = vpop.permute.xlu0 %1205
      %1207 = vrot.lane.b32.xlu0 %v514, 40
      %v1208 = vpop.permute.xlu0 %1207
      %1209 = vrot.lane.b32.xlu0 %v515, 40
      %v1210 = vpop.permute.xlu0 %1209
      %1211 = vrot.lane.b32.xlu0 %v516, 40
      %v1212 = vpop.permute.xlu0 %1211
      %1213 = vrot.lane.b32.xlu0 %v517, 40
      %v1214 = vpop.permute.xlu0 %1213
      %1215 = vrot.lane.b32.xlu0 %v518, 40
      %v1216 = vpop.permute.xlu0 %1215
      %1217 = vrot.lane.b32.xlu0 %v519, 40
      %v1218 = vpop.permute.xlu0 %1217
      %1219 = vrot.lane.b32.xlu0 %v520, 40
      %v1220 = vpop.permute.xlu0 %1219
      %1221 = vrot.lane.b32.xlu0 %v521, 40
      %v1222 = vpop.permute.xlu0 %1221
      %1223 = vrot.lane.b32.xlu0 %v522, 40
      %v1224 = vpop.permute.xlu0 %1223
      %1225 = vrot.lane.b32.xlu0 %v523, 40
      %v1226 = vpop.permute.xlu0 %1225
      %1227 = vrot.lane.b32.xlu0 %v524, 40
      %v1228 = vpop.permute.xlu0 %1227
      %1229 = vrot.lane.b32.xlu0 %v525, 40
      %v1230 = vpop.permute.xlu0 %1229
      %1295 = vrot.lane.b32.xlu0 %v527, 48
      %v1296 = vpop.permute.xlu0 %1295
      %1297 = vrot.lane.b32.xlu0 %v528, 48
      %v1298 = vpop.permute.xlu0 %1297
      %1299 = vrot.lane.b32.xlu0 %v529, 48
      %v1300 = vpop.permute.xlu0 %1299
      %1301 = vrot.lane.b32.xlu0 %v530, 48
      %v1302 = vpop.permute.xlu0 %1301
      %1303 = vrot.lane.b32.xlu0 %v531, 48
      %v1304 = vpop.permute.xlu0 %1303
      %1305 = vrot.lane.b32.xlu0 %v532, 48
      %v1306 = vpop.permute.xlu0 %1305
      %1307 = vrot.lane.b32.xlu0 %v533, 48
      %v1308 = vpop.permute.xlu0 %1307
      %1309 = vrot.lane.b32.xlu0 %v534, 48
      %v1310 = vpop.permute.xlu0 %1309
      %1311 = vrot.lane.b32.xlu0 %v535, 48
      %v1312 = vpop.permute.xlu0 %1311
      %1313 = vrot.lane.b32.xlu0 %v536, 48
      %v1314 = vpop.permute.xlu0 %1313
      %1315 = vrot.lane.b32.xlu0 %v537, 48
      %v1316 = vpop.permute.xlu0 %1315
      %1317 = vrot.lane.b32.xlu0 %v538, 48
      %v1318 = vpop.permute.xlu0 %1317
      %1319 = vrot.lane.b32.xlu0 %v539, 48
      %v1320 = vpop.permute.xlu0 %1319
      %1321 = vrot.lane.b32.xlu0 %v540, 48
      %v1322 = vpop.permute.xlu0 %1321
      %1323 = vrot.lane.b32.xlu0 %v541, 48
      %v1324 = vpop.permute.xlu0 %1323
      %1325 = vrot.lane.b32.xlu0 %v542, 48
      %v1326 = vpop.permute.xlu0 %1325
      %1327 = vrot.lane.b32.xlu0 %v543, 48
      %v1328 = vpop.permute.xlu0 %1327
      %1329 = vrot.lane.b32.xlu0 %v544, 48
      %v1330 = vpop.permute.xlu0 %1329
      %1331 = vrot.lane.b32.xlu0 %v545, 48
      %v1332 = vpop.permute.xlu0 %1331
      %1333 = vrot.lane.b32.xlu0 %v546, 48
      %v1334 = vpop.permute.xlu0 %1333
      %1335 = vrot.lane.b32.xlu0 %v547, 48
      %v1336 = vpop.permute.xlu0 %1335
      %1337 = vrot.lane.b32.xlu0 %v548, 48
      %v1338 = vpop.permute.xlu0 %1337
      %1339 = vrot.lane.b32.xlu0 %v549, 48
      %v1340 = vpop.permute.xlu0 %1339
      %1341 = vrot.lane.b32.xlu0 %v550, 48
      %v1342 = vpop.permute.xlu0 %1341
      %1343 = vrot.lane.b32.xlu0 %v551, 48
      %v1344 = vpop.permute.xlu0 %1343
      %1345 = vrot.lane.b32.xlu0 %v552, 48
      %v1346 = vpop.permute.xlu0 %1345
      %1347 = vrot.lane.b32.xlu0 %v553, 48
      %v1348 = vpop.permute.xlu0 %1347
      %1349 = vrot.lane.b32.xlu0 %v554, 48
      %v1350 = vpop.permute.xlu0 %1349
      %1351 = vrot.lane.b32.xlu0 %v555, 48
      %v1352 = vpop.permute.xlu0 %1351
      %1353 = vrot.lane.b32.xlu0 %v556, 48
      %v1354 = vpop.permute.xlu0 %1353
      %1355 = vrot.lane.b32.xlu0 %v557, 48
      %v1356 = vpop.permute.xlu0 %1355
      %1357 = vrot.lane.b32.xlu0 %v558, 48
      %v1358 = vpop.permute.xlu0 %1357
      %1423 = vrot.lane.b32.xlu0 %v559, 56
      %v1424 = vpop.permute.xlu0 %1423
      %1425 = vrot.lane.b32.xlu0 %v560, 56
      %v1426 = vpop.permute.xlu0 %1425
      %1427 = vrot.lane.b32.xlu0 %v561, 56
      %v1428 = vpop.permute.xlu0 %1427
      %1429 = vrot.lane.b32.xlu0 %v562, 56
      %v1430 = vpop.permute.xlu0 %1429
      %1431 = vrot.lane.b32.xlu0 %v563, 56
      %v1432 = vpop.permute.xlu0 %1431
      %1433 = vrot.lane.b32.xlu0 %v564, 56
      %v1434 = vpop.permute.xlu0 %1433
      %1435 = vrot.lane.b32.xlu0 %v565, 56
      %v1436 = vpop.permute.xlu0 %1435
      %1437 = vrot.lane.b32.xlu0 %v566, 56
      %v1438 = vpop.permute.xlu0 %1437
      %1439 = vrot.lane.b32.xlu0 %v567, 56
      %v1440 = vpop.permute.xlu0 %1439
      %1441 = vrot.lane.b32.xlu0 %v568, 56
      %v1442 = vpop.permute.xlu0 %1441
      %1443 = vrot.lane.b32.xlu0 %v569, 56
      %v1444 = vpop.permute.xlu0 %1443
      %1445 = vrot.lane.b32.xlu0 %v570, 56
      %v1446 = vpop.permute.xlu0 %1445
      %1447 = vrot.lane.b32.xlu0 %v571, 56
      %v1448 = vpop.permute.xlu0 %1447
      %1449 = vrot.lane.b32.xlu0 %v572, 56
      %v1450 = vpop.permute.xlu0 %1449
      %1451 = vrot.lane.b32.xlu0 %v573, 56
      %v1452 = vpop.permute.xlu0 %1451
      %1453 = vrot.lane.b32.xlu0 %v574, 56
      %v1454 = vpop.permute.xlu0 %1453
      %1455 = vrot.lane.b32.xlu0 %v575, 56
      %v1456 = vpop.permute.xlu0 %1455
      %1457 = vrot.lane.b32.xlu0 %v576, 56
      %v1458 = vpop.permute.xlu0 %1457
      %1459 = vrot.lane.b32.xlu0 %v577, 56
      %v1460 = vpop.permute.xlu0 %1459
      %1461 = vrot.lane.b32.xlu0 %v578, 56
      %v1462 = vpop.permute.xlu0 %1461
      %1463 = vrot.lane.b32.xlu0 %v579, 56
      %v1464 = vpop.permute.xlu0 %1463
      %1465 = vrot.lane.b32.xlu0 %v580, 56
      %v1466 = vpop.permute.xlu0 %1465
      %1467 = vrot.lane.b32.xlu0 %v581, 56
      %v1468 = vpop.permute.xlu0 %1467
      %1469 = vrot.lane.b32.xlu0 %v582, 56
      %v1470 = vpop.permute.xlu0 %1469
      %1471 = vrot.lane.b32.xlu0 %v583, 56
      %v1472 = vpop.permute.xlu0 %1471
      %1473 = vrot.lane.b32.xlu0 %v584, 56
      %v1474 = vpop.permute.xlu0 %1473
      %1475 = vrot.lane.b32.xlu0 %v585, 56
      %v1476 = vpop.permute.xlu0 %1475
      %1477 = vrot.lane.b32.xlu0 %v586, 56
      %v1478 = vpop.permute.xlu0 %1477
      %1479 = vrot.lane.b32.xlu0 %v587, 56
      %v1480 = vpop.permute.xlu0 %1479
      %1481 = vrot.lane.b32.xlu0 %v588, 56
      %v1482 = vpop.permute.xlu0 %1481
      %1483 = vrot.lane.b32.xlu0 %v589, 56
      %v1484 = vpop.permute.xlu0 %1483
      %1485 = vrot.lane.b32.xlu0 %v590, 56
      %v1486 = vpop.permute.xlu0 %1485
      %1551 = vrot.lane.b32.xlu0 %v591, 64
      %v1552 = vpop.permute.xlu0 %1551
      %1553 = vrot.lane.b32.xlu0 %v592, 64
      %v1554 = vpop.permute.xlu0 %1553
      %1555 = vrot.lane.b32.xlu0 %v593, 64
      %v1556 = vpop.permute.xlu0 %1555
      %1557 = vrot.lane.b32.xlu0 %v594, 64
      %v1558 = vpop.permute.xlu0 %1557
      %1559 = vrot.lane.b32.xlu0 %v595, 64
      %v1560 = vpop.permute.xlu0 %1559
      %1561 = vrot.lane.b32.xlu0 %v596, 64
      %v1562 = vpop.permute.xlu0 %1561
      %1563 = vrot.lane.b32.xlu0 %v597, 64
      %v1564 = vpop.permute.xlu0 %1563
      %1565 = vrot.lane.b32.xlu0 %v598, 64
      %v1566 = vpop.permute.xlu0 %1565
      %1567 = vrot.lane.b32.xlu0 %v599, 64
      %v1568 = vpop.permute.xlu0 %1567
      %1569 = vrot.lane.b32.xlu0 %v600, 64
      %v1570 = vpop.permute.xlu0 %1569
      %1571 = vrot.lane.b32.xlu0 %v601, 64
      %v1572 = vpop.permute.xlu0 %1571
      %1573 = vrot.lane.b32.xlu0 %v602, 64
      %v1574 = vpop.permute.xlu0 %1573
      %1575 = vrot.lane.b32.xlu0 %v603, 64
      %v1576 = vpop.permute.xlu0 %1575
      %1577 = vrot.lane.b32.xlu0 %v604, 64
      %v1578 = vpop.permute.xlu0 %1577
      %1579 = vrot.lane.b32.xlu0 %v605, 64
      %v1580 = vpop.permute.xlu0 %1579
      %1581 = vrot.lane.b32.xlu0 %v606, 64
      %v1582 = vpop.permute.xlu0 %1581
      %1583 = vrot.lane.b32.xlu0 %v607, 64
      %v1584 = vpop.permute.xlu0 %1583
      %1585 = vrot.lane.b32.xlu0 %v608, 64
      %v1586 = vpop.permute.xlu0 %1585
      %1587 = vrot.lane.b32.xlu0 %v609, 64
      %v1588 = vpop.permute.xlu0 %1587
      %1589 = vrot.lane.b32.xlu0 %v610, 64
      %v1590 = vpop.permute.xlu0 %1589
      %1591 = vrot.lane.b32.xlu0 %v611, 64
      %v1592 = vpop.permute.xlu0 %1591
      %1593 = vrot.lane.b32.xlu0 %v612, 64
      %v1594 = vpop.permute.xlu0 %1593
      %1595 = vrot.lane.b32.xlu0 %v613, 64
      %v1596 = vpop.permute.xlu0 %1595
      %1597 = vrot.lane.b32.xlu0 %v614, 64
      %v1598 = vpop.permute.xlu0 %1597
      %1599 = vrot.lane.b32.xlu0 %v615, 64
      %v1600 = vpop.permute.xlu0 %1599
      %1601 = vrot.lane.b32.xlu0 %v616, 64
      %v1602 = vpop.permute.xlu0 %1601
      %1603 = vrot.lane.b32.xlu0 %v617, 64
      %v1604 = vpop.permute.xlu0 %1603
      %1605 = vrot.lane.b32.xlu0 %v618, 64
      %v1606 = vpop.permute.xlu0 %1605
      %1607 = vrot.lane.b32.xlu0 %v619, 64
      %v1608 = vpop.permute.xlu0 %1607
      %1609 = vrot.lane.b32.xlu0 %v620, 64
      %v1610 = vpop.permute.xlu0 %1609
      %1611 = vrot.lane.b32.xlu0 %v621, 64
      %v1612 = vpop.permute.xlu0 %1611
      %1613 = vrot.lane.b32.xlu0 %v622, 64
      %v1614 = vpop.permute.xlu0 %1613
      %vm1647 = vcmask 64512
      %v1648 = vsel %vm1647, %v333, %v656
      %v1649 = vsel %vm1647, %v334, %v658
      %v1650 = vsel %vm1647, %v335, %v660
      %v1651 = vsel %vm1647, %v336, %v662
      %v1652 = vsel %vm1647, %v337, %v664
      %v1653 = vsel %vm1647, %v338, %v666
      %v1654 = vsel %vm1647, %v339, %v668
      %v1655 = vsel %vm1647, %v340, %v670
      %v1656 = vsel %vm1647, %v341, %v672
      %v1657 = vsel %vm1647, %v342, %v674
      %v1658 = vsel %vm1647, %v343, %v676
      %v1659 = vsel %vm1647, %v344, %v678
      %v1660 = vsel %vm1647, %v345, %v680
      %v1661 = vsel %vm1647, %v346, %v682
      %v1662 = vsel %vm1647, %v347, %v684
      %v1663 = vsel %vm1647, %v348, %v686
      %v1664 = vsel %vm1647, %v349, %v688
      %v1665 = vsel %vm1647, %v350, %v690
      %v1666 = vsel %vm1647, %v351, %v692
      %v1667 = vsel %vm1647, %v352, %v694
      %v1668 = vsel %vm1647, %v353, %v696
      %v1669 = vsel %vm1647, %v354, %v698
      %v1670 = vsel %vm1647, %v355, %v700
      %v1671 = vsel %vm1647, %v356, %v702
      %v1672 = vsel %vm1647, %v357, %v704
      %v1673 = vsel %vm1647, %v358, %v706
      %v1674 = vsel %vm1647, %v359, %v708
      %v1675 = vsel %vm1647, %v360, %v710
      %v1676 = vsel %vm1647, %v361, %v712
      %v1677 = vsel %vm1647, %v362, %v714
      %v1678 = vsel %vm1647, %v363, %v716
      %v1679 = vsel %vm1647, %v364, %v718
      %vm1680 = vcmask 130048
      %v1681 = vsel %vm1680, %v1648, %v784
      %v1682 = vsel %vm1680, %v1649, %v786
      %v1683 = vsel %vm1680, %v1650, %v788
      %v1684 = vsel %vm1680, %v1651, %v790
      %v1685 = vsel %vm1680, %v1652, %v792
      %v1686 = vsel %vm1680, %v1653, %v794
      %v1687 = vsel %vm1680, %v1654, %v796
      %v1688 = vsel %vm1680, %v1655, %v798
      %v1689 = vsel %vm1680, %v1656, %v800
      %v1690 = vsel %vm1680, %v1657, %v802
      %v1691 = vsel %vm1680, %v1658, %v804
      %v1692 = vsel %vm1680, %v1659, %v806
      %v1693 = vsel %vm1680, %v1660, %v808
      %v1694 = vsel %vm1680, %v1661, %v810
      %v1695 = vsel %vm1680, %v1662, %v812
      %v1696 = vsel %vm1680, %v1663, %v814
      %v1697 = vsel %vm1680, %v1664, %v816
      %v1698 = vsel %vm1680, %v1665, %v818
      %v1699 = vsel %vm1680, %v1666, %v820
      %v1700 = vsel %vm1680, %v1667, %v822
      %v1701 = vsel %vm1680, %v1668, %v824
      %v1702 = vsel %vm1680, %v1669, %v826
      %v1703 = vsel %vm1680, %v1670, %v828
      %v1704 = vsel %vm1680, %v1671, %v830
      %v1705 = vsel %vm1680, %v1672, %v832
      %v1706 = vsel %vm1680, %v1673, %v834
      %v1707 = vsel %vm1680, %v1674, %v836
      %v1708 = vsel %vm1680, %v1675, %v838
      %v1709 = vsel %vm1680, %v1676, %v840
      %v1710 = vsel %vm1680, %v1677, %v842
      %v1711 = vsel %vm1680, %v1678, %v844
      %v1712 = vsel %vm1680, %v1679, %v846
      %vm1713 = vcmask 195584
      %v1714 = vsel %vm1713, %v1681, %v912
      %v1715 = vsel %vm1713, %v1682, %v914
      %v1716 = vsel %vm1713, %v1683, %v916
      %v1717 = vsel %vm1713, %v1684, %v918
      %v1718 = vsel %vm1713, %v1685, %v920
      %v1719 = vsel %vm1713, %v1686, %v922
      %v1720 = vsel %vm1713, %v1687, %v924
      %v1721 = vsel %vm1713, %v1688, %v926
      %v1722 = vsel %vm1713, %v1689, %v928
      %v1723 = vsel %vm1713, %v1690, %v930
      %v1724 = vsel %vm1713, %v1691, %v932
      %v1725 = vsel %vm1713, %v1692, %v934
      %v1726 = vsel %vm1713, %v1693, %v936
      %v1727 = vsel %vm1713, %v1694, %v938
      %v1728 = vsel %vm1713, %v1695, %v940
      %v1729 = vsel %vm1713, %v1696, %v942
      %v1730 = vsel %vm1713, %v1697, %v944
      %v1731 = vsel %vm1713, %v1698, %v946
      %v1732 = vsel %vm1713, %v1699, %v948
      %v1733 = vsel %vm1713, %v1700, %v950
      %v1734 = vsel %vm1713, %v1701, %v952
      %v1735 = vsel %vm1713, %v1702, %v954
      %v1736 = vsel %vm1713, %v1703, %v956
      %v1737 = vsel %vm1713, %v1704, %v958
      %v1738 = vsel %vm1713, %v1705, %v960
      %v1739 = vsel %vm1713, %v1706, %v962
      %v1740 = vsel %vm1713, %v1707, %v964
      %v1741 = vsel %vm1713, %v1708, %v966
      %v1742 = vsel %vm1713, %v1709, %v968
      %v1743 = vsel %vm1713, %v1710, %v970
      %v1744 = vsel %vm1713, %v1711, %v972
      %v1745 = vsel %vm1713, %v1712, %v974
      %vm1746 = vcmask 261120
      %v1747 = vsel %vm1746, %v1714, %v1040
      %v1748 = vsel %vm1746, %v1715, %v1042
      %v1749 = vsel %vm1746, %v1716, %v1044
      %v1750 = vsel %vm1746, %v1717, %v1046
      %v1751 = vsel %vm1746, %v1718, %v1048
      %v1752 = vsel %vm1746, %v1719, %v1050
      %v1753 = vsel %vm1746, %v1720, %v1052
      %v1754 = vsel %vm1746, %v1721, %v1054
      %v1755 = vsel %vm1746, %v1722, %v1056
      %v1756 = vsel %vm1746, %v1723, %v1058
      %v1757 = vsel %vm1746, %v1724, %v1060
      %v1758 = vsel %vm1746, %v1725, %v1062
      %v1759 = vsel %vm1746, %v1726, %v1064
      %v1760 = vsel %vm1746, %v1727, %v1066
      %v1761 = vsel %vm1746, %v1728, %v1068
      %v1762 = vsel %vm1746, %v1729, %v1070
      %v1763 = vsel %vm1746, %v1730, %v1072
      %v1764 = vsel %vm1746, %v1731, %v1074
      %v1765 = vsel %vm1746, %v1732, %v1076
      %v1766 = vsel %vm1746, %v1733, %v1078
      %v1767 = vsel %vm1746, %v1734, %v1080
      %v1768 = vsel %vm1746, %v1735, %v1082
      %v1769 = vsel %vm1746, %v1736, %v1084
      %v1770 = vsel %vm1746, %v1737, %v1086
      %v1771 = vsel %vm1746, %v1738, %v1088
      %v1772 = vsel %vm1746, %v1739, %v1090
      %v1773 = vsel %vm1746, %v1740, %v1092
      %v1774 = vsel %vm1746, %v1741, %v1094
      %v1775 = vsel %vm1746, %v1742, %v1096
      %v1776 = vsel %vm1746, %v1743, %v1098
      %v1777 = vsel %vm1746, %v1744, %v1100
      %v1778 = vsel %vm1746, %v1745, %v1102
      %vm1779 = vcmask 326656
      %v1780 = vsel %vm1779, %v1747, %v1168
      %v1781 = vsel %vm1779, %v1748, %v1170
      %v1782 = vsel %vm1779, %v1749, %v1172
      %v1783 = vsel %vm1779, %v1750, %v1174
      %v1784 = vsel %vm1779, %v1751, %v1176
      %v1785 = vsel %vm1779, %v1752, %v1178
      %v1786 = vsel %vm1779, %v1753, %v1180
      %v1787 = vsel %vm1779, %v1754, %v1182
      %v1788 = vsel %vm1779, %v1755, %v1184
      %v1789 = vsel %vm1779, %v1756, %v1186
      %v1790 = vsel %vm1779, %v1757, %v1188
      %v1791 = vsel %vm1779, %v1758, %v1190
      %v1792 = vsel %vm1779, %v1759, %v1192
      %v1793 = vsel %vm1779, %v1760, %v1194
      %v1794 = vsel %vm1779, %v1761, %v1196
      %v1795 = vsel %vm1779, %v1762, %v1198
      %v1796 = vsel %vm1779, %v1763, %v1200
      %v1797 = vsel %vm1779, %v1764, %v1202
      %v1798 = vsel %vm1779, %v1765, %v1204
      %v1799 = vsel %vm1779, %v1766, %v1206
      %v1800 = vsel %vm1779, %v1767, %v1208
      %v1801 = vsel %vm1779, %v1768, %v1210
      %v1802 = vsel %vm1779, %v1769, %v1212
      %v1803 = vsel %vm1779, %v1770, %v1214
      %v1804 = vsel %vm1779, %v1771, %v1216
      %v1805 = vsel %vm1779, %v1772, %v1218
      %v1806 = vsel %vm1779, %v1773, %v1220
      %v1807 = vsel %vm1779, %v1774, %v1222
      %v1808 = vsel %vm1779, %v1775, %v1224
      %v1809 = vsel %vm1779, %v1776, %v1226
      %v1810 = vsel %vm1779, %v1777, %v1228
      %v1811 = vsel %vm1779, %v1778, %v1230
      %vm1812 = vcmask 392192
      %v1813 = vsel %vm1812, %v1780, %v1296
      %v1814 = vsel %vm1812, %v1781, %v1298
      %v1815 = vsel %vm1812, %v1782, %v1300
      %v1816 = vsel %vm1812, %v1783, %v1302
      %v1817 = vsel %vm1812, %v1784, %v1304
      %v1818 = vsel %vm1812, %v1785, %v1306
      %v1819 = vsel %vm1812, %v1786, %v1308
      %v1820 = vsel %vm1812, %v1787, %v1310
      %v1821 = vsel %vm1812, %v1788, %v1312
      %v1822 = vsel %vm1812, %v1789, %v1314
      %v1823 = vsel %vm1812, %v1790, %v1316
      %v1824 = vsel %vm1812, %v1791, %v1318
      %v1825 = vsel %vm1812, %v1792, %v1320
      %v1826 = vsel %vm1812, %v1793, %v1322
      %v1827 = vsel %vm1812, %v1794, %v1324
      %v1828 = vsel %vm1812, %v1795, %v1326
      %v1829 = vsel %vm1812, %v1796, %v1328
      %v1830 = vsel %vm1812, %v1797, %v1330
      %v1831 = vsel %vm1812, %v1798, %v1332
      %v1832 = vsel %vm1812, %v1799, %v1334
      %v1833 = vsel %vm1812, %v1800, %v1336
      %v1834 = vsel %vm1812, %v1801, %v1338
      %v1835 = vsel %vm1812, %v1802, %v1340
      %v1836 = vsel %vm1812, %v1803, %v1342
      %v1837 = vsel %vm1812, %v1804, %v1344
      %v1838 = vsel %vm1812, %v1805, %v1346
      %v1839 = vsel %vm1812, %v1806, %v1348
      %v1840 = vsel %vm1812, %v1807, %v1350
      %v1841 = vsel %vm1812, %v1808, %v1352
      %v1842 = vsel %vm1812, %v1809, %v1354
      %v1843 = vsel %vm1812, %v1810, %v1356
      %v1844 = vsel %vm1812, %v1811, %v1358
      %vm1845 = vcmask 457728
      %v1846 = vsel %vm1845, %v1813, %v1424
      %v1847 = vsel %vm1845, %v1814, %v1426
      %v1848 = vsel %vm1845, %v1815, %v1428
      %v1849 = vsel %vm1845, %v1816, %v1430
      %v1850 = vsel %vm1845, %v1817, %v1432
      %v1851 = vsel %vm1845, %v1818, %v1434
      %v1852 = vsel %vm1845, %v1819, %v1436
      %v1853 = vsel %vm1845, %v1820, %v1438
      %v1854 = vsel %vm1845, %v1821, %v1440
      %v1855 = vsel %vm1845, %v1822, %v1442
      %v1856 = vsel %vm1845, %v1823, %v1444
      %v1857 = vsel %vm1845, %v1824, %v1446
      %v1858 = vsel %vm1845, %v1825, %v1448
      %v1859 = vsel %vm1845, %v1826, %v1450
      %v1860 = vsel %vm1845, %v1827, %v1452
      %v1861 = vsel %vm1845, %v1828, %v1454
      %v1862 = vsel %vm1845, %v1829, %v1456
      %v1863 = vsel %vm1845, %v1830, %v1458
      %v1864 = vsel %vm1845, %v1831, %v1460
      %v1865 = vsel %vm1845, %v1832, %v1462
      %v1866 = vsel %vm1845, %v1833, %v1464
      %v1867 = vsel %vm1845, %v1834, %v1466
      %v1868 = vsel %vm1845, %v1835, %v1468
      %v1869 = vsel %vm1845, %v1836, %v1470
      %v1870 = vsel %vm1845, %v1837, %v1472
      %v1871 = vsel %vm1845, %v1838, %v1474
      %v1872 = vsel %vm1845, %v1839, %v1476
      %v1873 = vsel %vm1845, %v1840, %v1478
      %v1874 = vsel %vm1845, %v1841, %v1480
      %v1875 = vsel %vm1845, %v1842, %v1482
      %v1876 = vsel %vm1845, %v1843, %v1484
      %v1877 = vsel %vm1845, %v1844, %v1486
      %vm1878 = vcmask 523264
      %v1879 = vsel %vm1878, %v1846, %v1552
      %v1880 = vsel %vm1878, %v1847, %v1554
      %v1881 = vsel %vm1878, %v1848, %v1556
      %v1882 = vsel %vm1878, %v1849, %v1558
      %v1883 = vsel %vm1878, %v1850, %v1560
      %v1884 = vsel %vm1878, %v1851, %v1562
      %v1885 = vsel %vm1878, %v1852, %v1564
      %v1886 = vsel %vm1878, %v1853, %v1566
      %v1887 = vsel %vm1878, %v1854, %v1568
      %v1888 = vsel %vm1878, %v1855, %v1570
      %v1889 = vsel %vm1878, %v1856, %v1572
      %v1890 = vsel %vm1878, %v1857, %v1574
      %v1891 = vsel %vm1878, %v1858, %v1576
      %v1892 = vsel %vm1878, %v1859, %v1578
      %v1893 = vsel %vm1878, %v1860, %v1580
      %v1894 = vsel %vm1878, %v1861, %v1582
      %v1895 = vsel %vm1878, %v1862, %v1584
      %v1896 = vsel %vm1878, %v1863, %v1586
      %v1897 = vsel %vm1878, %v1864, %v1588
      %v1898 = vsel %vm1878, %v1865, %v1590
      %v1899 = vsel %vm1878, %v1866, %v1592
      %v1900 = vsel %vm1878, %v1867, %v1594
      %v1901 = vsel %vm1878, %v1868, %v1596
      %v1902 = vsel %vm1878, %v1869, %v1598
      %v1903 = vsel %vm1878, %v1870, %v1600
      %v1904 = vsel %vm1878, %v1871, %v1602
      %v1905 = vsel %vm1878, %v1872, %v1604
      %v1906 = vsel %vm1878, %v1873, %v1606
      %v1907 = vsel %vm1878, %v1874, %v1608
      %v1908 = vsel %vm1878, %v1875, %v1610
      %v1909 = vsel %vm1878, %v1876, %v1612
      %v1910 = vsel %vm1878, %v1877, %v1614
      %v1911 = vld [vmem:[%s1] sm:$0xff]
      %v1912 = vld [vmem:[%s1 + $0x8] sm:$0xff]
      %v1913 = vld [vmem:[%s1 + $0x10] sm:$0xff]
      %v1914 = vld [vmem:[%s1 + $0x18] sm:$0xff]
      %v1915 = vld [vmem:[%s1 + $0x20] sm:$0xff]
      %v1916 = vld [vmem:[%s1 + $0x28] sm:$0xff]
      %v1917 = vld [vmem:[%s1 + $0x30] sm:$0xff]
      %v1918 = vld [vmem:[%s1 + $0x38] sm:$0xff]
      %v1919 = vld [vmem:[%s1 + $0x40] sm:$0xff]
      %v1920 = vld [vmem:[%s2] sm:$0x1]
      %v1922 = vlaneseq
      %v1923 = vshrl.u32 %v1922, 7
      %v1924 = vsub.s32 0, %v1923
      %v1925 = vrot.slane %v1920, %v1924
      %vm1927 = vcmask 588800
      %v1929 = vsel %vm1927, %v1879, 0
      %v1932 = vsel %vm1927, %v1880, 0
      %v1935 = vsel %vm1927, %v1881, 0
      %v1938 = vsel %vm1927, %v1882, 0
      %v1941 = vsel %vm1927, %v1883, 0
      %v1944 = vsel %vm1927, %v1884, 0
      %v1947 = vsel %vm1927, %v1885, 0
      %v1950 = vsel %vm1927, %v1886, 0
      %v1953 = vsel %vm1927, %v1887, 0
      %v1956 = vsel %vm1927, %v1888, 0
      %v1959 = vsel %vm1927, %v1889, 0
      %v1962 = vsel %vm1927, %v1890, 0
      %v1965 = vsel %vm1927, %v1891, 0
      %v1968 = vsel %vm1927, %v1892, 0
      %v1971 = vsel %vm1927, %v1893, 0
      %v1974 = vsel %vm1927, %v1894, 0
      %v1977 = vsel %vm1927, %v1895, 0
      %v1980 = vsel %vm1927, %v1896, 0
      %v1983 = vsel %vm1927, %v1897, 0
      %v1986 = vsel %vm1927, %v1898, 0
      %v1989 = vsel %vm1927, %v1899, 0
      %v1992 = vsel %vm1927, %v1900, 0
      %v1995 = vsel %vm1927, %v1901, 0
      %v1998 = vsel %vm1927, %v1902, 0
      %v2001 = vsel %vm1927, %v1903, 0
      %v2004 = vsel %vm1927, %v1904, 0
      %v2007 = vsel %vm1927, %v1905, 0
      %v2010 = vsel %vm1927, %v1906, 0
      %v2013 = vsel %vm1927, %v1907, 0
      %v2016 = vsel %vm1927, %v1908, 0
      %v2019 = vsel %vm1927, %v1909, 0
      %v2022 = vsel %vm1927, %v1910, 0
      %2024 = vmatprep.subr.mxu0 0.0
      %2025 = vmatpush1.msra.mxu0 0.0
      %2026 = vmatprep.subr.mxu0 0.0
      %2027 = vmatpush1.msra.mxu0 0.0
      %2028 = vmatprep.subr.mxu0 0.0
      %2029 = vmatpush1.msra.mxu0 0.0
      %2030 = vmatprep.subr.mxu0 0.0
      %2031 = vmatpush1.msra.mxu0 0.0
      %2032 = vmatprep.subr.mxu0 0.0
      %2033 = vmatpush1.msra.mxu0 0.0
      %2034 = vmatprep.subr.mxu0 0.0
      %2035 = vmatpush1.msra.mxu0 0.0
      %2036 = vmatprep.subr.mxu0 0.0
      %2037 = vmatpush1.msra.mxu0 0.0
      %2038 = vmatprep.subr.mxu0 0.0
      %2039 = vmatpush1.msra.mxu0 %v1919
      %2040 = vmatprep.subr.mxu0 0.0
      %2041 = vmatpush1.msra.mxu0 %v1918
      %2042 = vmatprep.subr.mxu0 0.0
      %2043 = vmatpush1.msra.mxu0 %v1917
      %2044 = vmatprep.subr.mxu0 0.0
      %2045 = vmatpush1.msra.mxu0 %v1916
      %2046 = vmatprep.subr.mxu0 0.0
      %2047 = vmatpush1.msra.mxu0 %v1915
      %2048 = vmatprep.subr.mxu0 0.0
      %2049 = vmatpush1.msra.mxu0 %v1914
      %2050 = vmatprep.subr.mxu0 0.0
      %2051 = vmatpush1.msra.mxu0 %v1913
      %2052 = vmatprep.subr.mxu0 0.0
      %2053 = vmatpush1.msra.mxu0 %v1912
      %2054 = vmatprep.subr.mxu0 0.0
      %2055 = vmatpush1.msra.mxu0 %v1911
      %2056 = vmatprep.subr.mxu0 0.0
      %2057 = vmatpush2.msra.mxu0 0.0
      %2058 = vmatprep.subr.mxu0 0.0
      %2059 = vmatpush2.msra.mxu0 0.0
      %2060 = vmatprep.subr.mxu0 0.0
      %2061 = vmatpush2.msra.mxu0 0.0
      %2062 = vmatprep.subr.mxu0 0.0
      %2063 = vmatpush2.msra.mxu0 0.0
      %2064 = vmatprep.subr.mxu0 0.0
      %2065 = vmatpush2.msra.mxu0 0.0
      %2066 = vmatprep.subr.mxu0 0.0
      %2067 = vmatpush2.msra.mxu0 0.0
      %2068 = vmatprep.subr.mxu0 0.0
      %2069 = vmatpush2.msra.mxu0 0.0
      %2070 = vmatprep.subr.mxu0 0.0
      %2071 = vmatpush2.msra.mxu0 0.0
      %2072 = vmatprep.subr.mxu0 0.0
      %2073 = vmatpush2.msra.mxu0 0.0
      %2074 = vmatprep.subr.mxu0 0.0
      %2075 = vmatpush2.msra.mxu0 0.0
      %2076 = vmatprep.subr.mxu0 0.0
      %2077 = vmatpush2.msra.mxu0 0.0
      %2078 = vmatprep.subr.mxu0 0.0
      %2079 = vmatpush2.msra.mxu0 0.0
      %2080 = vmatprep.subr.mxu0 0.0
      %2081 = vmatpush2.msra.mxu0 0.0
      %2082 = vmatprep.subr.mxu0 0.0
      %2083 = vmatpush2.msra.mxu0 0.0
      %2084 = vmatprep.subr.mxu0 0.0
      %2085 = vmatpush2.msra.mxu0 0.0
      %2086 = vmatprep.subr.mxu0 0.0
      %2087 = vmatpush2.msra.mxu0 0.0
      %2088 = vmatprep.mubr.f32.mxu0 0.0
      %2089 = vmatmul.mubr.f32.gmra.mxu0 %v1929
      %v2090 = vpop.f32.mrf.mxu0
      %v2091 = vadd.f32 %v1925, %v2090
      %v2092 = vpop.f32.mrf.mxu0
      %2093 = vmatprep.mubr.f32.mxu0 0.0
      %2094 = vmatmul.mubr.f32.gmra.mxu0 %v1932
      %v2095 = vpop.f32.mrf.mxu0
      %v2096 = vadd.f32 %v1925, %v2095
      %v2097 = vpop.f32.mrf.mxu0
      %2098 = vmatprep.mubr.f32.mxu0 0.0
      %2099 = vmatmul.mubr.f32.gmra.mxu0 %v1935
      %v2100 = vpop.f32.mrf.mxu0
      %v2101 = vadd.f32 %v1925, %v2100
      %v2102 = vpop.f32.mrf.mxu0
      %2103 = vmatprep.mubr.f32.mxu0 0.0
      %2104 = vmatmul.mubr.f32.gmra.mxu0 %v1938
      %v2105 = vpop.f32.mrf.mxu0
      %v2106 = vadd.f32 %v1925, %v2105
      %v2107 = vpop.f32.mrf.mxu0
      %2108 = vmatprep.mubr.f32.mxu0 0.0
      %2109 = vmatmul.mubr.f32.gmra.mxu0 %v1941
      %v2110 = vpop.f32.mrf.mxu0
      %v2111 = vadd.f32 %v1925, %v2110
      %v2112 = vpop.f32.mrf.mxu0
      %2113 = vmatprep.mubr.f32.mxu0 0.0
      %2114 = vmatmul.mubr.f32.gmra.mxu0 %v1944
      %v2115 = vpop.f32.mrf.mxu0
      %v2116 = vadd.f32 %v1925, %v2115
      %v2117 = vpop.f32.mrf.mxu0
      %2118 = vmatprep.mubr.f32.mxu0 0.0
      %2119 = vmatmul.mubr.f32.gmra.mxu0 %v1947
      %v2120 = vpop.f32.mrf.mxu0
      %v2121 = vadd.f32 %v1925, %v2120
      %v2122 = vpop.f32.mrf.mxu0
      %2123 = vmatprep.mubr.f32.mxu0 0.0
      %2124 = vmatmul.mubr.f32.gmra.mxu0 %v1950
      %v2125 = vpop.f32.mrf.mxu0
      %v2126 = vadd.f32 %v1925, %v2125
      %v2127 = vpop.f32.mrf.mxu0
      %2128 = vmatprep.mubr.f32.mxu0 0.0
      %2129 = vmatmul.mubr.f32.gmra.mxu0 %v1953
      %v2130 = vpop.f32.mrf.mxu0
      %v2131 = vadd.f32 %v1925, %v2130
      %v2132 = vpop.f32.mrf.mxu0
      %2133 = vmatprep.mubr.f32.mxu0 0.0
      %2134 = vmatmul.mubr.f32.gmra.mxu0 %v1956
      %v2135 = vpop.f32.mrf.mxu0
      %v2136 = vadd.f32 %v1925, %v2135
      %v2137 = vpop.f32.mrf.mxu0
      %2138 = vmatprep.mubr.f32.mxu0 0.0
      %2139 = vmatmul.mubr.f32.gmra.mxu0 %v1959
      %v2140 = vpop.f32.mrf.mxu0
      %v2141 = vadd.f32 %v1925, %v2140
      %v2142 = vpop.f32.mrf.mxu0
      %2143 = vmatprep.mubr.f32.mxu0 0.0
      %2144 = vmatmul.mubr.f32.gmra.mxu0 %v1962
      %v2145 = vpop.f32.mrf.mxu0
      %v2146 = vadd.f32 %v1925, %v2145
      %v2147 = vpop.f32.mrf.mxu0
      %2148 = vmatprep.mubr.f32.mxu0 0.0
      %2149 = vmatmul.mubr.f32.gmra.mxu0 %v1965
      %v2150 = vpop.f32.mrf.mxu0
      %v2151 = vadd.f32 %v1925, %v2150
      %v2152 = vpop.f32.mrf.mxu0
      %2153 = vmatprep.mubr.f32.mxu0 0.0
      %2154 = vmatmul.mubr.f32.gmra.mxu0 %v1968
      %v2155 = vpop.f32.mrf.mxu0
      %v2156 = vadd.f32 %v1925, %v2155
      %v2157 = vpop.f32.mrf.mxu0
      %2158 = vmatprep.mubr.f32.mxu0 0.0
      %2159 = vmatmul.mubr.f32.gmra.mxu0 %v1971
      %v2160 = vpop.f32.mrf.mxu0
      %v2161 = vadd.f32 %v1925, %v2160
      %v2162 = vpop.f32.mrf.mxu0
      %2163 = vmatprep.mubr.f32.mxu0 0.0
      %2164 = vmatmul.mubr.f32.gmra.mxu0 %v1974
      %v2165 = vpop.f32.mrf.mxu0
      %v2166 = vadd.f32 %v1925, %v2165
      %v2167 = vpop.f32.mrf.mxu0
      %2168 = vmatprep.mubr.f32.mxu0 0.0
      %2169 = vmatmul.mubr.f32.gmra.mxu0 %v1977
      %v2170 = vpop.f32.mrf.mxu0
      %v2171 = vadd.f32 %v1925, %v2170
      %v2172 = vpop.f32.mrf.mxu0
      %2173 = vmatprep.mubr.f32.mxu0 0.0
      %2174 = vmatmul.mubr.f32.gmra.mxu0 %v1980
      %v2175 = vpop.f32.mrf.mxu0
      %v2176 = vadd.f32 %v1925, %v2175
      %v2177 = vpop.f32.mrf.mxu0
      %2178 = vmatprep.mubr.f32.mxu0 0.0
      %2179 = vmatmul.mubr.f32.gmra.mxu0 %v1983
      %v2180 = vpop.f32.mrf.mxu0
      %v2181 = vadd.f32 %v1925, %v2180
      %v2182 = vpop.f32.mrf.mxu0
      %2183 = vmatprep.mubr.f32.mxu0 0.0
      %2184 = vmatmul.mubr.f32.gmra.mxu0 %v1986
      %v2185 = vpop.f32.mrf.mxu0
      %v2186 = vadd.f32 %v1925, %v2185
      %v2187 = vpop.f32.mrf.mxu0
      %2188 = vmatprep.mubr.f32.mxu0 0.0
      %2189 = vmatmul.mubr.f32.gmra.mxu0 %v1989
      %v2190 = vpop.f32.mrf.mxu0
      %v2191 = vadd.f32 %v1925, %v2190
      %v2192 = vpop.f32.mrf.mxu0
      %2193 = vmatprep.mubr.f32.mxu0 0.0
      %2194 = vmatmul.mubr.f32.gmra.mxu0 %v1992
      %v2195 = vpop.f32.mrf.mxu0
      %v2196 = vadd.f32 %v1925, %v2195
      %v2197 = vpop.f32.mrf.mxu0
      %2198 = vmatprep.mubr.f32.mxu0 0.0
      %2199 = vmatmul.mubr.f32.gmra.mxu0 %v1995
      %v2200 = vpop.f32.mrf.mxu0
      %v2201 = vadd.f32 %v1925, %v2200
      %v2202 = vpop.f32.mrf.mxu0
      %2203 = vmatprep.mubr.f32.mxu0 0.0
      %2204 = vmatmul.mubr.f32.gmra.mxu0 %v1998
      %v2205 = vpop.f32.mrf.mxu0
      %v2206 = vadd.f32 %v1925, %v2205
      %v2207 = vpop.f32.mrf.mxu0
      %2208 = vmatprep.mubr.f32.mxu0 0.0
      %2209 = vmatmul.mubr.f32.gmra.mxu0 %v2001
      %v2210 = vpop.f32.mrf.mxu0
      %v2211 = vadd.f32 %v1925, %v2210
      %v2212 = vpop.f32.mrf.mxu0
      %2213 = vmatprep.mubr.f32.mxu0 0.0
      %2214 = vmatmul.mubr.f32.gmra.mxu0 %v2004
      %v2215 = vpop.f32.mrf.mxu0
      %v2216 = vadd.f32 %v1925, %v2215
      %v2217 = vpop.f32.mrf.mxu0
      %2218 = vmatprep.mubr.f32.mxu0 0.0
      %2219 = vmatmul.mubr.f32.gmra.mxu0 %v2007
      %v2220 = vpop.f32.mrf.mxu0
      %v2221 = vadd.f32 %v1925, %v2220
      %v2222 = vpop.f32.mrf.mxu0
      %2223 = vmatprep.mubr.f32.mxu0 0.0
      %2224 = vmatmul.mubr.f32.gmra.mxu0 %v2010
      %v2225 = vpop.f32.mrf.mxu0
      %v2226 = vadd.f32 %v1925, %v2225
      %v2227 = vpop.f32.mrf.mxu0
      %2228 = vmatprep.mubr.f32.mxu0 0.0
      %2229 = vmatmul.mubr.f32.gmra.mxu0 %v2013
      %v2230 = vpop.f32.mrf.mxu0
      %v2231 = vadd.f32 %v1925, %v2230
      %v2232 = vpop.f32.mrf.mxu0
      %2233 = vmatprep.mubr.f32.mxu0 0.0
      %2234 = vmatmul.mubr.f32.gmra.mxu0 %v2016
      %v2235 = vpop.f32.mrf.mxu0
      %v2236 = vadd.f32 %v1925, %v2235
      %v2237 = vpop.f32.mrf.mxu0
      %2238 = vmatprep.mubr.f32.mxu0 0.0
      %2239 = vmatmul.mubr.f32.gmra.mxu0 %v2019
      %v2240 = vpop.f32.mrf.mxu0
      %v2241 = vadd.f32 %v1925, %v2240
      %v2242 = vpop.f32.mrf.mxu0
      %2243 = vmatprep.mubr.f32.mxu0 0.0
      %2244 = vmatmul.mubr.f32.gmra.mxu0 %v2022
      %v2245 = vpop.f32.mrf.mxu0
      %v2246 = vadd.f32 %v1925, %v2245
      %v2247 = vpop.f32.mrf.mxu0
      %2248 = vdwg.mxu0
      %v2249 = vmax.f32 %v2091, 0.0
      %v2250 = vmax.f32 %v2096, 0.0
      %v2251 = vmax.f32 %v2101, 0.0
      %v2252 = vmax.f32 %v2106, 0.0
      %v2253 = vmax.f32 %v2111, 0.0
      %v2254 = vmax.f32 %v2116, 0.0
      %v2255 = vmax.f32 %v2121, 0.0
      %v2256 = vmax.f32 %v2126, 0.0
      %v2257 = vmax.f32 %v2131, 0.0
      %v2258 = vmax.f32 %v2136, 0.0
      %v2259 = vmax.f32 %v2141, 0.0
      %v2260 = vmax.f32 %v2146, 0.0
      %v2261 = vmax.f32 %v2151, 0.0
      %v2262 = vmax.f32 %v2156, 0.0
      %v2263 = vmax.f32 %v2161, 0.0
      %v2264 = vmax.f32 %v2166, 0.0
      %v2265 = vmax.f32 %v2171, 0.0
      %v2266 = vmax.f32 %v2176, 0.0
      %v2267 = vmax.f32 %v2181, 0.0
      %v2268 = vmax.f32 %v2186, 0.0
      %v2269 = vmax.f32 %v2191, 0.0
      %v2270 = vmax.f32 %v2196, 0.0
      %v2271 = vmax.f32 %v2201, 0.0
      %v2272 = vmax.f32 %v2206, 0.0
      %v2273 = vmax.f32 %v2211, 0.0
      %v2274 = vmax.f32 %v2216, 0.0
      %v2275 = vmax.f32 %v2221, 0.0
      %v2276 = vmax.f32 %v2226, 0.0
      %v2277 = vmax.f32 %v2231, 0.0
      %v2278 = vmax.f32 %v2236, 0.0
      %v2279 = vmax.f32 %v2241, 0.0
      %v2280 = vmax.f32 %v2246, 0.0
      %2281 = vst.msk [vmem:[#allocation2] sm:$0xff] %vm1878, 0.0
      %2282 = vst.msk [vmem:[#allocation2 + $0x8] sm:$0xff] %vm1878, 0.0
      %vm2283 = vcmask 517120
      %2284 = vst.msk [vmem:[#allocation2 + $0x10] sm:$0x3] %vm2283, 0.0
      %s2285 = scalar_lea.vmem [#allocation2], 408
      %2286 = vst.msk [vmem:[%s2285] sm:$0xff] %vm1878, 0.0
      %2287 = vst.msk [vmem:[%s2285 + $0x8] sm:$0xff] %vm1878, 0.0
      %2288 = vst.msk [vmem:[%s2285 + $0x10] sm:$0x3] %vm2283, 0.0
      %vm2321 = vcmask 1040384
      %v2322 = vrot.slane %v2249, 7
      %v2323 = vrot.slane %v2250, 7
      %v2324 = vsel %vm2321, %v2322, %v2323
      %v2325 = vrot.slane %v2251, 7
      %v2326 = vrot.slane %v2252, 7
      %v2327 = vsel %vm2321, %v2325, %v2326
      %v2328 = vrot.slane %v2253, 7
      %v2329 = vrot.slane %v2254, 7
      %v2330 = vsel %vm2321, %v2328, %v2329
      %v2331 = vrot.slane %v2255, 7
      %v2332 = vrot.slane %v2256, 7
      %v2333 = vsel %vm2321, %v2331, %v2332
      %v2334 = vrot.slane %v2257, 7
      %v2335 = vrot.slane %v2258, 7
      %v2336 = vsel %vm2321, %v2334, %v2335
      %v2337 = vrot.slane %v2259, 7
      %v2338 = vrot.slane %v2260, 7
      %v2339 = vsel %vm2321, %v2337, %v2338
      %v2340 = vrot.slane %v2261, 7
      %v2341 = vrot.slane %v2262, 7
      %v2342 = vsel %vm2321, %v2340, %v2341
      %v2343 = vrot.slane %v2263, 7
      %v2344 = vrot.slane %v2264, 7
      %v2345 = vsel %vm2321, %v2343, %v2344
      %v2346 = vrot.slane %v2265, 7
      %v2347 = vrot.slane %v2266, 7
      %v2348 = vsel %vm2321, %v2346, %v2347
      %v2349 = vrot.slane %v2267, 7
      %v2350 = vrot.slane %v2268, 7
      %v2351 = vsel %vm2321, %v2349, %v2350
      %v2352 = vrot.slane %v2269, 7
      %v2353 = vrot.slane %v2270, 7
      %v2354 = vsel %vm2321, %v2352, %v2353
      %v2355 = vrot.slane %v2271, 7
      %v2356 = vrot.slane %v2272, 7
      %v2357 = vsel %vm2321, %v2355, %v2356
      %v2358 = vrot.slane %v2273, 7
      %v2359 = vrot.slane %v2274, 7
      %v2360 = vsel %vm2321, %v2358, %v2359
      %v2361 = vrot.slane %v2275, 7
      %v2362 = vrot.slane %v2276, 7
      %v2363 = vsel %vm2321, %v2361, %v2362
      %v2364 = vrot.slane %v2277, 7
      %v2365 = vrot.slane %v2278, 7
      %v2366 = vsel %vm2321, %v2364, %v2365
      %v2367 = vrot.slane %v2279, 7
      %v2368 = vrot.slane %v2280, 7
      %v2369 = vsel %vm2321, %v2367, %v2368
      %v2418 = vsel %vm2321, 0.0, %v2322
      %v2419 = vsel %vm2321, 0.0, %v2325
      %v2420 = vsel %vm2321, 0.0, %v2328
      %v2421 = vsel %vm2321, 0.0, %v2331
      %v2422 = vsel %vm2321, 0.0, %v2334
      %v2423 = vsel %vm2321, 0.0, %v2337
      %v2424 = vsel %vm2321, 0.0, %v2340
      %v2425 = vsel %vm2321, 0.0, %v2343
      %v2426 = vsel %vm2321, 0.0, %v2346
      %v2427 = vsel %vm2321, 0.0, %v2349
      %v2428 = vsel %vm2321, 0.0, %v2352
      %v2429 = vsel %vm2321, 0.0, %v2355
      %v2430 = vsel %vm2321, 0.0, %v2358
      %v2431 = vsel %vm2321, 0.0, %v2361
      %v2432 = vsel %vm2321, 0.0, %v2364
      %v2433 = vsel %vm2321, 0.0, %v2367
      %v2434 = vsel %vm2321, %v2323, 0.0
      %v2435 = vsel %vm2321, %v2326, 0.0
      %v2436 = vsel %vm2321, %v2329, 0.0
      %v2437 = vsel %vm2321, %v2332, 0.0
      %v2438 = vsel %vm2321, %v2335, 0.0
      %v2439 = vsel %vm2321, %v2338, 0.0
      %v2440 = vsel %vm2321, %v2341, 0.0
      %v2441 = vsel %vm2321, %v2344, 0.0
      %v2442 = vsel %vm2321, %v2347, 0.0
      %v2443 = vsel %vm2321, %v2350, 0.0
      %v2444 = vsel %vm2321, %v2353, 0.0
      %v2445 = vsel %vm2321, %v2356, 0.0
      %v2446 = vsel %vm2321, %v2359, 0.0
      %v2447 = vsel %vm2321, %v2362, 0.0
      %v2448 = vsel %vm2321, %v2365, 0.0
      %v2449 = vsel %vm2321, %v2368, 0.0
      %s2450 = scalar_lea.vmem [#allocation2], 24
      %2451 = vst.msk [vmem:[%s2450] sm:$0xff] %vm1878, %v2418
      %2452 = vst.msk [vmem:[%s2450 + $0x8] sm:$0xff] %vm1878, %v2324
      %2453 = vst.msk [vmem:[%s2450 + $0x10] sm:$0x3] %vm2283, %v2434
      %2454 = vst.msk [vmem:[%s2450 + $0x18] sm:$0xff] %vm1878, %v2419
      %2455 = vst.msk [vmem:[%s2450 + $0x20] sm:$0xff] %vm1878, %v2327
      %2456 = vst.msk [vmem:[%s2450 + $0x28] sm:$0x3] %vm2283, %v2435
      %2457 = vst.msk [vmem:[%s2450 + $0x30] sm:$0xff] %vm1878, %v2420
      %2458 = vst.msk [vmem:[%s2450 + $0x38] sm:$0xff] %vm1878, %v2330
      %2459 = vst.msk [vmem:[%s2450 + $0x40] sm:$0x3] %vm2283, %v2436
      %2460 = vst.msk [vmem:[%s2450 + $0x48] sm:$0xff] %vm1878, %v2421
      %2461 = vst.msk [vmem:[%s2450 + $0x50] sm:$0xff] %vm1878, %v2333
      %2462 = vst.msk [vmem:[%s2450 + $0x58] sm:$0x3] %vm2283, %v2437
      %2463 = vst.msk [vmem:[%s2450 + $0x60] sm:$0xff] %vm1878, %v2422
      %2464 = vst.msk [vmem:[%s2450 + $0x68] sm:$0xff] %vm1878, %v2336
      %2465 = vst.msk [vmem:[%s2450 + $0x70] sm:$0x3] %vm2283, %v2438
      %2466 = vst.msk [vmem:[%s2450 + $0x78] sm:$0xff] %vm1878, %v2423
      %2467 = vst.msk [vmem:[%s2450 + $0x80] sm:$0xff] %vm1878, %v2339
      %2468 = vst.msk [vmem:[%s2450 + $0x88] sm:$0x3] %vm2283, %v2439
      %2469 = vst.msk [vmem:[%s2450 + $0x90] sm:$0xff] %vm1878, %v2424
      %2470 = vst.msk [vmem:[%s2450 + $0x98] sm:$0xff] %vm1878, %v2342
      %2471 = vst.msk [vmem:[%s2450 + $0xa0] sm:$0x3] %vm2283, %v2440
      %2472 = vst.msk [vmem:[%s2450 + $0xa8] sm:$0xff] %vm1878, %v2425
      %2473 = vst.msk [vmem:[%s2450 + $0xb0] sm:$0xff] %vm1878, %v2345
      %2474 = vst.msk [vmem:[%s2450 + $0xb8] sm:$0x3] %vm2283, %v2441
      %2475 = vst.msk [vmem:[%s2450 + $0xc0] sm:$0xff] %vm1878, %v2426
      %2476 = vst.msk [vmem:[%s2450 + $0xc8] sm:$0xff] %vm1878, %v2348
      %2477 = vst.msk [vmem:[%s2450 + $0xd0] sm:$0x3] %vm2283, %v2442
      %2478 = vst.msk [vmem:[%s2450 + $0xd8] sm:$0xff] %vm1878, %v2427
      %2479 = vst.msk [vmem:[%s2450 + $0xe0] sm:$0xff] %vm1878, %v2351
      %2480 = vst.msk [vmem:[%s2450 + $0xe8] sm:$0x3] %vm2283, %v2443
      %2481 = vst.msk [vmem:[%s2450 + $0xf0] sm:$0xff] %vm1878, %v2428
      %2482 = vst.msk [vmem:[%s2450 + $0xf8] sm:$0xff] %vm1878, %v2354
      %2483 = vst.msk [vmem:[%s2450 + $0x100] sm:$0x3] %vm2283, %v2444
      %2484 = vst.msk [vmem:[%s2450 + $0x108] sm:$0xff] %vm1878, %v2429
      %2485 = vst.msk [vmem:[%s2450 + $0x110] sm:$0xff] %vm1878, %v2357
      %2486 = vst.msk [vmem:[%s2450 + $0x118] sm:$0x3] %vm2283, %v2445
      %2487 = vst.msk [vmem:[%s2450 + $0x120] sm:$0xff] %vm1878, %v2430
      %2488 = vst.msk [vmem:[%s2450 + $0x128] sm:$0xff] %vm1878, %v2360
      %2489 = vst.msk [vmem:[%s2450 + $0x130] sm:$0x3] %vm2283, %v2446
      %2490 = vst.msk [vmem:[%s2450 + $0x138] sm:$0xff] %vm1878, %v2431
      %2491 = vst.msk [vmem:[%s2450 + $0x140] sm:$0xff] %vm1878, %v2363
      %2492 = vst.msk [vmem:[%s2450 + $0x148] sm:$0x3] %vm2283, %v2447
      %2493 = vst.msk [vmem:[%s2450 + $0x150] sm:$0xff] %vm1878, %v2432
      %2494 = vst.msk [vmem:[%s2450 + $0x158] sm:$0xff] %vm1878, %v2366
      %2495 = vst.msk [vmem:[%s2450 + $0x160] sm:$0x3] %vm2283, %v2448
      %2496 = vst.msk [vmem:[%s2450 + $0x168] sm:$0xff] %vm1878, %v2433
      %2497 = vst.msk [vmem:[%s2450 + $0x170] sm:$0xff] %vm1878, %v2369
      %2498 = vst.msk [vmem:[%s2450 + $0x178] sm:$0x3] %vm2283, %v2449
      %v2499 = vld [vmem:[#allocation2] sm:$0xff]
      %v2500 = vld [vmem:[#allocation2 + $0x8] sm:$0xff]
      %v2501 = vld [vmem:[#allocation2 + $0x18] sm:$0xff]
      %v2502 = vld [vmem:[#allocation2 + $0x20] sm:$0xff]
      %v2503 = vld [vmem:[#allocation2 + $0x30] sm:$0xff]
      %v2504 = vld [vmem:[#allocation2 + $0x38] sm:$0xff]
      %v2505 = vld [vmem:[#allocation2 + $0x48] sm:$0xff]
      %v2506 = vld [vmem:[#allocation2 + $0x50] sm:$0xff]
      %v2507 = vld [vmem:[#allocation2 + $0x60] sm:$0xff]
      %v2508 = vld [vmem:[#allocation2 + $0x68] sm:$0xff]
      %v2509 = vld [vmem:[#allocation2 + $0x78] sm:$0xff]
      %v2510 = vld [vmem:[#allocation2 + $0x80] sm:$0xff]
      %v2511 = vld [vmem:[#allocation2 + $0x90] sm:$0xff]
      %v2512 = vld [vmem:[#allocation2 + $0x98] sm:$0xff]
      %v2513 = vld [vmem:[#allocation2 + $0xa8] sm:$0xff]
      %v2514 = vld [vmem:[#allocation2 + $0xb0] sm:$0xff]
      %v2515 = vld [vmem:[#allocation2 + $0x1] sm:$0xff]
      %v2516 = vld [vmem:[#allocation2 + $0x9] sm:$0xff]
      %v2517 = vld [vmem:[#allocation2 + $0x19] sm:$0xff]
      %v2518 = vld [vmem:[#allocation2 + $0x21] sm:$0xff]
      %v2519 = vld [vmem:[#allocation2 + $0x31] sm:$0xff]
      %v2520 = vld [vmem:[#allocation2 + $0x39] sm:$0xff]
      %v2521 = vld [vmem:[#allocation2 + $0x49] sm:$0xff]
      %v2522 = vld [vmem:[#allocation2 + $0x51] sm:$0xff]
      %v2523 = vld [vmem:[#allocation2 + $0x61] sm:$0xff]
      %v2524 = vld [vmem:[#allocation2 + $0x69] sm:$0xff]
      %v2525 = vld [vmem:[#allocation2 + $0x79] sm:$0xff]
      %v2526 = vld [vmem:[#allocation2 + $0x81] sm:$0xff]
      %v2527 = vld [vmem:[#allocation2 + $0x91] sm:$0xff]
      %v2528 = vld [vmem:[#allocation2 + $0x99] sm:$0xff]
      %v2529 = vld [vmem:[#allocation2 + $0xa9] sm:$0xff]
      %v2530 = vld [vmem:[#allocation2 + $0xb1] sm:$0xff]
      %2547 = vrot.lane.b32.xlu0 %v2515, 64
      %v2548 = vpop.permute.xlu0 %2547
      %2549 = vrot.lane.b32.xlu0 %v2516, 64
      %v2550 = vpop.permute.xlu0 %2549
      %2551 = vrot.lane.b32.xlu0 %v2517, 64
      %v2552 = vpop.permute.xlu0 %2551
      %2553 = vrot.lane.b32.xlu0 %v2518, 64
      %v2554 = vpop.permute.xlu0 %2553
      %2555 = vrot.lane.b32.xlu0 %v2519, 64
      %v2556 = vpop.permute.xlu0 %2555
      %2557 = vrot.lane.b32.xlu0 %v2520, 64
      %v2558 = vpop.permute.xlu0 %2557
      %2559 = vrot.lane.b32.xlu0 %v2521, 64
      %v2560 = vpop.permute.xlu0 %2559
      %2561 = vrot.lane.b32.xlu0 %v2522, 64
      %v2562 = vpop.permute.xlu0 %2561
      %2563 = vrot.lane.b32.xlu0 %v2523, 64
      %v2564 = vpop.permute.xlu0 %2563
      %2565 = vrot.lane.b32.xlu0 %v2524, 64
      %v2566 = vpop.permute.xlu0 %2565
      %2567 = vrot.lane.b32.xlu0 %v2525, 64
      %v2568 = vpop.permute.xlu0 %2567
      %2569 = vrot.lane.b32.xlu0 %v2526, 64
      %v2570 = vpop.permute.xlu0 %2569
      %2571 = vrot.lane.b32.xlu0 %v2527, 64
      %v2572 = vpop.permute.xlu0 %2571
      %2573 = vrot.lane.b32.xlu0 %v2528, 64
      %v2574 = vpop.permute.xlu0 %2573
      %2575 = vrot.lane.b32.xlu0 %v2529, 64
      %v2576 = vpop.permute.xlu0 %2575
      %2577 = vrot.lane.b32.xlu0 %v2530, 64
      %v2578 = vpop.permute.xlu0 %2577
      %v2595 = vsel %vm1878, %v2499, %v2548
      %v2596 = vsel %vm1878, %v2500, %v2550
      %v2597 = vsel %vm1878, %v2501, %v2552
      %v2598 = vsel %vm1878, %v2502, %v2554
      %v2599 = vsel %vm1878, %v2503, %v2556
      %v2600 = vsel %vm1878, %v2504, %v2558
      %v2601 = vsel %vm1878, %v2505, %v2560
      %v2602 = vsel %vm1878, %v2506, %v2562
      %v2603 = vsel %vm1878, %v2507, %v2564
      %v2604 = vsel %vm1878, %v2508, %v2566
      %v2605 = vsel %vm1878, %v2509, %v2568
      %v2606 = vsel %vm1878, %v2510, %v2570
      %v2607 = vsel %vm1878, %v2511, %v2572
      %v2608 = vsel %vm1878, %v2512, %v2574
      %v2609 = vsel %vm1878, %v2513, %v2576
      %v2610 = vsel %vm1878, %v2514, %v2578
      %2611 = vst [vmem:[#allocation3] sm:$0xff] %v2595
      %2612 = vst [vmem:[#allocation3 + $0x28] sm:$0xff] %v2596
      %2613 = vst [vmem:[#allocation3 + $0x50] sm:$0xff] %v2597
      %2614 = vst [vmem:[#allocation3 + $0x78] sm:$0xff] %v2598
      %2615 = vst [vmem:[#allocation3 + $0xa0] sm:$0xff] %v2599
      %2616 = vst [vmem:[#allocation3 + $0xc8] sm:$0xff] %v2600
      %2617 = vst [vmem:[#allocation3 + $0xf0] sm:$0xff] %v2601
      %2618 = vst [vmem:[#allocation3 + $0x118] sm:$0xff] %v2602
      %2619 = vst [vmem:[#allocation3 + $0x140] sm:$0xff] %v2603
      %2620 = vst [vmem:[#allocation3 + $0x168] sm:$0xff] %v2604
      %2621 = vst [vmem:[#allocation3 + $0x190] sm:$0xff] %v2605
      %2622 = vst [vmem:[#allocation3 + $0x1b8] sm:$0xff] %v2606
      %2623 = vst [vmem:[#allocation3 + $0x1e0] sm:$0xff] %v2607
      %2624 = vst [vmem:[#allocation3 + $0x208] sm:$0xff] %v2608
      %2625 = vst [vmem:[#allocation3 + $0x230] sm:$0xff] %v2609
      %2626 = vst [vmem:[#allocation3 + $0x258] sm:$0xff] %v2610
      %v2627 = vld [vmem:[#allocation2 + $0x2] sm:$0xff]
      %v2628 = vld [vmem:[#allocation2 + $0xa] sm:$0xff]
      %v2629 = vld [vmem:[#allocation2 + $0x1a] sm:$0xff]
      %v2630 = vld [vmem:[#allocation2 + $0x22] sm:$0xff]
      %v2631 = vld [vmem:[#allocation2 + $0x32] sm:$0xff]
      %v2632 = vld [vmem:[#allocation2 + $0x3a] sm:$0xff]
      %v2633 = vld [vmem:[#allocation2 + $0x4a] sm:$0xff]
      %v2634 = vld [vmem:[#allocation2 + $0x52] sm:$0xff]
      %v2635 = vld [vmem:[#allocation2 + $0x62] sm:$0xff]
      %v2636 = vld [vmem:[#allocation2 + $0x6a] sm:$0xff]
      %v2637 = vld [vmem:[#allocation2 + $0x7a] sm:$0xff]
      %v2638 = vld [vmem:[#allocation2 + $0x82] sm:$0xff]
      %v2639 = vld [vmem:[#allocation2 + $0x92] sm:$0xff]
      %v2640 = vld [vmem:[#allocation2 + $0x9a] sm:$0xff]
      %v2641 = vld [vmem:[#allocation2 + $0xaa] sm:$0xff]
      %v2642 = vld [vmem:[#allocation2 + $0xb2] sm:$0xff]
      %v2643 = vld [vmem:[%s2450] sm:$0xff]
      %v2644 = vld [vmem:[%s2450 + $0x8] sm:$0xff]
      %v2645 = vld [vmem:[%s2450 + $0x18] sm:$0xff]
      %v2646 = vld [vmem:[%s2450 + $0x20] sm:$0xff]
      %v2647 = vld [vmem:[%s2450 + $0x30] sm:$0xff]
      %v2648 = vld [vmem:[%s2450 + $0x38] sm:$0xff]
      %v2649 = vld [vmem:[%s2450 + $0x48] sm:$0xff]
      %v2650 = vld [vmem:[%s2450 + $0x50] sm:$0xff]
      %v2651 = vld [vmem:[%s2450 + $0x60] sm:$0xff]
      %v2652 = vld [vmem:[%s2450 + $0x68] sm:$0xff]
      %v2653 = vld [vmem:[%s2450 + $0x78] sm:$0xff]
      %v2654 = vld [vmem:[%s2450 + $0x80] sm:$0xff]
      %v2655 = vld [vmem:[%s2450 + $0x90] sm:$0xff]
      %v2656 = vld [vmem:[%s2450 + $0x98] sm:$0xff]
      %v2657 = vld [vmem:[%s2450 + $0xa8] sm:$0xff]
      %v2658 = vld [vmem:[%s2450 + $0xb0] sm:$0xff]
      %2675 = vrot.lane.b32.xlu0 %v2643, 64
      %v2676 = vpop.permute.xlu0 %2675
      %2677 = vrot.lane.b32.xlu0 %v2644, 64
      %v2678 = vpop.permute.xlu0 %2677
      %2679 = vrot.lane.b32.xlu0 %v2645, 64
      %v2680 = vpop.permute.xlu0 %2679
      %2681 = vrot.lane.b32.xlu0 %v2646, 64
      %v2682 = vpop.permute.xlu0 %2681
      %2683 = vrot.lane.b32.xlu0 %v2647, 64
      %v2684 = vpop.permute.xlu0 %2683
      %2685 = vrot.lane.b32.xlu0 %v2648, 64
      %v2686 = vpop.permute.xlu0 %2685
      %2687 = vrot.lane.b32.xlu0 %v2649, 64
      %v2688 = vpop.permute.xlu0 %2687
      %2689 = vrot.lane.b32.xlu0 %v2650, 64
      %v2690 = vpop.permute.xlu0 %2689
      %2691 = vrot.lane.b32.xlu0 %v2651, 64
      %v2692 = vpop.permute.xlu0 %2691
      %2693 = vrot.lane.b32.xlu0 %v2652, 64
      %v2694 = vpop.permute.xlu0 %2693
      %2695 = vrot.lane.b32.xlu0 %v2653, 64
      %v2696 = vpop.permute.xlu0 %2695
      %2697 = vrot.lane.b32.xlu0 %v2654, 64
      %v2698 = vpop.permute.xlu0 %2697
      %2699 = vrot.lane.b32.xlu0 %v2655, 64
      %v2700 = vpop.permute.xlu0 %2699
      %2701 = vrot.lane.b32.xlu0 %v2656, 64
      %v2702 = vpop.permute.xlu0 %2701
      %2703 = vrot.lane.b32.xlu0 %v2657, 64
      %v2704 = vpop.permute.xlu0 %2703
      %2705 = vrot.lane.b32.xlu0 %v2658, 64
      %v2706 = vpop.permute.xlu0 %2705
      %v2723 = vsel %vm1878, %v2627, %v2676
      %v2724 = vsel %vm1878, %v2628, %v2678
      %v2725 = vsel %vm1878, %v2629, %v2680
      %v2726 = vsel %vm1878, %v2630, %v2682
      %v2727 = vsel %vm1878, %v2631, %v2684
      %v2728 = vsel %vm1878, %v2632, %v2686
      %v2729 = vsel %vm1878, %v2633, %v2688
      %v2730 = vsel %vm1878, %v2634, %v2690
      %v2731 = vsel %vm1878, %v2635, %v2692
      %v2732 = vsel %vm1878, %v2636, %v2694
      %v2733 = vsel %vm1878, %v2637, %v2696
      %v2734 = vsel %vm1878, %v2638, %v2698
      %v2735 = vsel %vm1878, %v2639, %v2700
      %v2736 = vsel %vm1878, %v2640, %v2702
      %v2737 = vsel %vm1878, %v2641, %v2704
      %v2738 = vsel %vm1878, %v2642, %v2706
      %2739 = vst [vmem:[#allocation3 + $0x8] sm:$0xff] %v2723
      %2740 = vst [vmem:[#allocation3 + $0x30] sm:$0xff] %v2724
      %2741 = vst [vmem:[#allocation3 + $0x58] sm:$0xff] %v2725
      %2742 = vst [vmem:[#allocation3 + $0x80] sm:$0xff] %v2726
      %2743 = vst [vmem:[#allocation3 + $0xa8] sm:$0xff] %v2727
      %2744 = vst [vmem:[#allocation3 + $0xd0] sm:$0xff] %v2728
      %2745 = vst [vmem:[#allocation3 + $0xf8] sm:$0xff] %v2729
      %2746 = vst [vmem:[#allocation3 + $0x120] sm:$0xff] %v2730
      %2747 = vst [vmem:[#allocation3 + $0x148] sm:$0xff] %v2731
      %2748 = vst [vmem:[#allocation3 + $0x170] sm:$0xff] %v2732
      %2749 = vst [vmem:[#allocation3 + $0x198] sm:$0xff] %v2733
      %2750 = vst [vmem:[#allocation3 + $0x1c0] sm:$0xff] %v2734
      %2751 = vst [vmem:[#allocation3 + $0x1e8] sm:$0xff] %v2735
      %2752 = vst [vmem:[#allocation3 + $0x210] sm:$0xff] %v2736
      %2753 = vst [vmem:[#allocation3 + $0x238] sm:$0xff] %v2737
      %2754 = vst [vmem:[#allocation3 + $0x260] sm:$0xff] %v2738
      %v2755 = vld [vmem:[%s2450 + $0x1] sm:$0xff]
      %v2756 = vld [vmem:[%s2450 + $0x9] sm:$0xff]
      %v2757 = vld [vmem:[%s2450 + $0x19] sm:$0xff]
      %v2758 = vld [vmem:[%s2450 + $0x21] sm:$0xff]
      %v2759 = vld [vmem:[%s2450 + $0x31] sm:$0xff]
      %v2760 = vld [vmem:[%s2450 + $0x39] sm:$0xff]
      %v2761 = vld [vmem:[%s2450 + $0x49] sm:$0xff]
      %v2762 = vld [vmem:[%s2450 + $0x51] sm:$0xff]
      %v2763 = vld [vmem:[%s2450 + $0x61] sm:$0xff]
      %v2764 = vld [vmem:[%s2450 + $0x69] sm:$0xff]
      %v2765 = vld [vmem:[%s2450 + $0x79] sm:$0xff]
      %v2766 = vld [vmem:[%s2450 + $0x81] sm:$0xff]
      %v2767 = vld [vmem:[%s2450 + $0x91] sm:$0xff]
      %v2768 = vld [vmem:[%s2450 + $0x99] sm:$0xff]
      %v2769 = vld [vmem:[%s2450 + $0xa9] sm:$0xff]
      %v2770 = vld [vmem:[%s2450 + $0xb1] sm:$0xff]
      %v2771 = vld [vmem:[%s2450 + $0x2] sm:$0xff]
      %v2772 = vld [vmem:[%s2450 + $0xa] sm:$0xff]
      %v2773 = vld [vmem:[%s2450 + $0x1a] sm:$0xff]
      %v2774 = vld [vmem:[%s2450 + $0x22] sm:$0xff]
      %v2775 = vld [vmem:[%s2450 + $0x32] sm:$0xff]
      %v2776 = vld [vmem:[%s2450 + $0x3a] sm:$0xff]
      %v2777 = vld [vmem:[%s2450 + $0x4a] sm:$0xff]
      %v2778 = vld [vmem:[%s2450 + $0x52] sm:$0xff]
      %v2779 = vld [vmem:[%s2450 + $0x62] sm:$0xff]
      %v2780 = vld [vmem:[%s2450 + $0x6a] sm:$0xff]
      %v2781 = vld [vmem:[%s2450 + $0x7a] sm:$0xff]
      %v2782 = vld [vmem:[%s2450 + $0x82] sm:$0xff]
      %v2783 = vld [vmem:[%s2450 + $0x92] sm:$0xff]
      %v2784 = vld [vmem:[%s2450 + $0x9a] sm:$0xff]
      %v2785 = vld [vmem:[%s2450 + $0xaa] sm:$0xff]
      %v2786 = vld [vmem:[%s2450 + $0xb2] sm:$0xff]
      %2803 = vrot.lane.b32.xlu0 %v2771, 64
      %v2804 = vpop.permute.xlu0 %2803
      %2805 = vrot.lane.b32.xlu0 %v2772, 64
      %v2806 = vpop.permute.xlu0 %2805
      %2807 = vrot.lane.b32.xlu0 %v2773, 64
      %v2808 = vpop.permute.xlu0 %2807
      %2809 = vrot.lane.b32.xlu0 %v2774, 64
      %v2810 = vpop.permute.xlu0 %2809
      %2811 = vrot.lane.b32.xlu0 %v2775, 64
      %v2812 = vpop.permute.xlu0 %2811
      %2813 = vrot.lane.b32.xlu0 %v2776, 64
      %v2814 = vpop.permute.xlu0 %2813
      %2815 = vrot.lane.b32.xlu0 %v2777, 64
      %v2816 = vpop.permute.xlu0 %2815
      %2817 = vrot.lane.b32.xlu0 %v2778, 64
      %v2818 = vpop.permute.xlu0 %2817
      %2819 = vrot.lane.b32.xlu0 %v2779, 64
      %v2820 = vpop.permute.xlu0 %2819
      %2821 = vrot.lane.b32.xlu0 %v2780, 64
      %v2822 = vpop.permute.xlu0 %2821
      %2823 = vrot.lane.b32.xlu0 %v2781, 64
      %v2824 = vpop.permute.xlu0 %2823
      %2825 = vrot.lane.b32.xlu0 %v2782, 64
      %v2826 = vpop.permute.xlu0 %2825
      %2827 = vrot.lane.b32.xlu0 %v2783, 64
      %v2828 = vpop.permute.xlu0 %2827
      %2829 = vrot.lane.b32.xlu0 %v2784, 64
      %v2830 = vpop.permute.xlu0 %2829
      %2831 = vrot.lane.b32.xlu0 %v2785, 64
      %v2832 = vpop.permute.xlu0 %2831
      %2833 = vrot.lane.b32.xlu0 %v2786, 64
      %v2834 = vpop.permute.xlu0 %2833
      %v2851 = vsel %vm1878, %v2755, %v2804
      %v2852 = vsel %vm1878, %v2756, %v2806
      %v2853 = vsel %vm1878, %v2757, %v2808
      %v2854 = vsel %vm1878, %v2758, %v2810
      %v2855 = vsel %vm1878, %v2759, %v2812
      %v2856 = vsel %vm1878, %v2760, %v2814
      %v2857 = vsel %vm1878, %v2761, %v2816
      %v2858 = vsel %vm1878, %v2762, %v2818
      %v2859 = vsel %vm1878, %v2763, %v2820
      %v2860 = vsel %vm1878, %v2764, %v2822
      %v2861 = vsel %vm1878, %v2765, %v2824
      %v2862 = vsel %vm1878, %v2766, %v2826
      %v2863 = vsel %vm1878, %v2767, %v2828
      %v2864 = vsel %vm1878, %v2768, %v2830
      %v2865 = vsel %vm1878, %v2769, %v2832
      %v2866 = vsel %vm1878, %v2770, %v2834
      %2867 = vst [vmem:[#allocation3 + $0x10] sm:$0xff] %v2851
      %2868 = vst [vmem:[#allocation3 + $0x38] sm:$0xff] %v2852
      %2869 = vst [vmem:[#allocation3 + $0x60] sm:$0xff] %v2853
      %2870 = vst [vmem:[#allocation3 + $0x88] sm:$0xff] %v2854
      %2871 = vst [vmem:[#allocation3 + $0xb0] sm:$0xff] %v2855
      %2872 = vst [vmem:[#allocation3 + $0xd8] sm:$0xff] %v2856
      %2873 = vst [vmem:[#allocation3 + $0x100] sm:$0xff] %v2857
      %2874 = vst [vmem:[#allocation3 + $0x128] sm:$0xff] %v2858
      %2875 = vst [vmem:[#allocation3 + $0x150] sm:$0xff] %v2859
      %2876 = vst [vmem:[#allocation3 + $0x178] sm:$0xff] %v2860
      %2877 = vst [vmem:[#allocation3 + $0x1a0] sm:$0xff] %v2861
      %2878 = vst [vmem:[#allocation3 + $0x1c8] sm:$0xff] %v2862
      %2879 = vst [vmem:[#allocation3 + $0x1f0] sm:$0xff] %v2863
      %2880 = vst [vmem:[#allocation3 + $0x218] sm:$0xff] %v2864
      %2881 = vst [vmem:[#allocation3 + $0x240] sm:$0xff] %v2865
      %2882 = vst [vmem:[#allocation3 + $0x268] sm:$0xff] %v2866
      %s2883 = scalar_lea.vmem [#allocation2], 48
      %v2884 = vld [vmem:[%s2883] sm:$0xff]
      %v2885 = vld [vmem:[%s2883 + $0x8] sm:$0xff]
      %v2886 = vld [vmem:[%s2883 + $0x18] sm:$0xff]
      %v2887 = vld [vmem:[%s2883 + $0x20] sm:$0xff]
      %v2888 = vld [vmem:[%s2883 + $0x30] sm:$0xff]
      %v2889 = vld [vmem:[%s2883 + $0x38] sm:$0xff]
      %v2890 = vld [vmem:[%s2883 + $0x48] sm:$0xff]
      %v2891 = vld [vmem:[%s2883 + $0x50] sm:$0xff]
      %v2892 = vld [vmem:[%s2883 + $0x60] sm:$0xff]
      %v2893 = vld [vmem:[%s2883 + $0x68] sm:$0xff]
      %v2894 = vld [vmem:[%s2883 + $0x78] sm:$0xff]
      %v2895 = vld [vmem:[%s2883 + $0x80] sm:$0xff]
      %v2896 = vld [vmem:[%s2883 + $0x90] sm:$0xff]
      %v2897 = vld [vmem:[%s2883 + $0x98] sm:$0xff]
      %v2898 = vld [vmem:[%s2883 + $0xa8] sm:$0xff]
      %v2899 = vld [vmem:[%s2883 + $0xb0] sm:$0xff]
      %v2900 = vld [vmem:[%s2883 + $0x1] sm:$0xff]
      %v2901 = vld [vmem:[%s2883 + $0x9] sm:$0xff]
      %v2902 = vld [vmem:[%s2883 + $0x19] sm:$0xff]
      %v2903 = vld [vmem:[%s2883 + $0x21] sm:$0xff]
      %v2904 = vld [vmem:[%s2883 + $0x31] sm:$0xff]
      %v2905 = vld [vmem:[%s2883 + $0x39] sm:$0xff]
      %v2906 = vld [vmem:[%s2883 + $0x49] sm:$0xff]
      %v2907 = vld [vmem:[%s2883 + $0x51] sm:$0xff]
      %v2908 = vld [vmem:[%s2883 + $0x61] sm:$0xff]
      %v2909 = vld [vmem:[%s2883 + $0x69] sm:$0xff]
      %v2910 = vld [vmem:[%s2883 + $0x79] sm:$0xff]
      %v2911 = vld [vmem:[%s2883 + $0x81] sm:$0xff]
      %v2912 = vld [vmem:[%s2883 + $0x91] sm:$0xff]
      %v2913 = vld [vmem:[%s2883 + $0x99] sm:$0xff]
      %v2914 = vld [vmem:[%s2883 + $0xa9] sm:$0xff]
      %v2915 = vld [vmem:[%s2883 + $0xb1] sm:$0xff]
      %2932 = vrot.lane.b32.xlu0 %v2900, 64
      %v2933 = vpop.permute.xlu0 %2932
      %2934 = vrot.lane.b32.xlu0 %v2901, 64
      %v2935 = vpop.permute.xlu0 %2934
      %2936 = vrot.lane.b32.xlu0 %v2902, 64
      %v2937 = vpop.permute.xlu0 %2936
      %2938 = vrot.lane.b32.xlu0 %v2903, 64
      %v2939 = vpop.permute.xlu0 %2938
      %2940 = vrot.lane.b32.xlu0 %v2904, 64
      %v2941 = vpop.permute.xlu0 %2940
      %2942 = vrot.lane.b32.xlu0 %v2905, 64
      %v2943 = vpop.permute.xlu0 %2942
      %2944 = vrot.lane.b32.xlu0 %v2906, 64
      %v2945 = vpop.permute.xlu0 %2944
      %2946 = vrot.lane.b32.xlu0 %v2907, 64
      %v2947 = vpop.permute.xlu0 %2946
      %2948 = vrot.lane.b32.xlu0 %v2908, 64
      %v2949 = vpop.permute.xlu0 %2948
      %2950 = vrot.lane.b32.xlu0 %v2909, 64
      %v2951 = vpop.permute.xlu0 %2950
      %2952 = vrot.lane.b32.xlu0 %v2910, 64
      %v2953 = vpop.permute.xlu0 %2952
      %2954 = vrot.lane.b32.xlu0 %v2911, 64
      %v2955 = vpop.permute.xlu0 %2954
      %2956 = vrot.lane.b32.xlu0 %v2912, 64
      %v2957 = vpop.permute.xlu0 %2956
      %2958 = vrot.lane.b32.xlu0 %v2913, 64
      %v2959 = vpop.permute.xlu0 %2958
      %2960 = vrot.lane.b32.xlu0 %v2914, 64
      %v2961 = vpop.permute.xlu0 %2960
      %2962 = vrot.lane.b32.xlu0 %v2915, 64
      %v2963 = vpop.permute.xlu0 %2962
      %v2980 = vsel %vm1878, %v2884, %v2933
      %v2981 = vsel %vm1878, %v2885, %v2935
      %v2982 = vsel %vm1878, %v2886, %v2937
      %v2983 = vsel %vm1878, %v2887, %v2939
      %v2984 = vsel %vm1878, %v2888, %v2941
      %v2985 = vsel %vm1878, %v2889, %v2943
      %v2986 = vsel %vm1878, %v2890, %v2945
      %v2987 = vsel %vm1878, %v2891, %v2947
      %v2988 = vsel %vm1878, %v2892, %v2949
      %v2989 = vsel %vm1878, %v2893, %v2951
      %v2990 = vsel %vm1878, %v2894, %v2953
      %v2991 = vsel %vm1878, %v2895, %v2955
      %v2992 = vsel %vm1878, %v2896, %v2957
      %v2993 = vsel %vm1878, %v2897, %v2959
      %v2994 = vsel %vm1878, %v2898, %v2961
      %v2995 = vsel %vm1878, %v2899, %v2963
      %2996 = vst [vmem:[#allocation3 + $0x18] sm:$0xff] %v2980
      %2997 = vst [vmem:[#allocation3 + $0x40] sm:$0xff] %v2981
      %2998 = vst [vmem:[#allocation3 + $0x68] sm:$0xff] %v2982
      %2999 = vst [vmem:[#allocation3 + $0x90] sm:$0xff] %v2983
      %3000 = vst [vmem:[#allocation3 + $0xb8] sm:$0xff] %v2984
      %3001 = vst [vmem:[#allocation3 + $0xe0] sm:$0xff] %v2985
      %3002 = vst [vmem:[#allocation3 + $0x108] sm:$0xff] %v2986
      %3003 = vst [vmem:[#allocation3 + $0x130] sm:$0xff] %v2987
      %3004 = vst [vmem:[#allocation3 + $0x158] sm:$0xff] %v2988
      %3005 = vst [vmem:[#allocation3 + $0x180] sm:$0xff] %v2989
      %3006 = vst [vmem:[#allocation3 + $0x1a8] sm:$0xff] %v2990
      %3007 = vst [vmem:[#allocation3 + $0x1d0] sm:$0xff] %v2991
      %3008 = vst [vmem:[#allocation3 + $0x1f8] sm:$0xff] %v2992
      %3009 = vst [vmem:[#allocation3 + $0x220] sm:$0xff] %v2993
      %3010 = vst [vmem:[#allocation3 + $0x248] sm:$0xff] %v2994
      %3011 = vst [vmem:[#allocation3 + $0x270] sm:$0xff] %v2995
      %v3012 = vld [vmem:[%s2883 + $0x2] sm:$0xff]
      %v3013 = vld [vmem:[%s2883 + $0xa] sm:$0xff]
      %v3014 = vld [vmem:[%s2883 + $0x1a] sm:$0xff]
      %v3015 = vld [vmem:[%s2883 + $0x22] sm:$0xff]
      %v3016 = vld [vmem:[%s2883 + $0x32] sm:$0xff]
      %v3017 = vld [vmem:[%s2883 + $0x3a] sm:$0xff]
      %v3018 = vld [vmem:[%s2883 + $0x4a] sm:$0xff]
      %v3019 = vld [vmem:[%s2883 + $0x52] sm:$0xff]
      %v3020 = vld [vmem:[%s2883 + $0x62] sm:$0xff]
      %v3021 = vld [vmem:[%s2883 + $0x6a] sm:$0xff]
      %v3022 = vld [vmem:[%s2883 + $0x7a] sm:$0xff]
      %v3023 = vld [vmem:[%s2883 + $0x82] sm:$0xff]
      %v3024 = vld [vmem:[%s2883 + $0x92] sm:$0xff]
      %v3025 = vld [vmem:[%s2883 + $0x9a] sm:$0xff]
      %v3026 = vld [vmem:[%s2883 + $0xaa] sm:$0xff]
      %v3027 = vld [vmem:[%s2883 + $0xb2] sm:$0xff]
      %3028 = vst.msk [vmem:[#allocation3 + $0x20] sm:$0xff] %vm1878, %v3012
      %3029 = vst.msk [vmem:[#allocation3 + $0x48] sm:$0xff] %vm1878, %v3013
      %3030 = vst.msk [vmem:[#allocation3 + $0x70] sm:$0xff] %vm1878, %v3014
      %3031 = vst.msk [vmem:[#allocation3 + $0x98] sm:$0xff] %vm1878, %v3015
      %3032 = vst.msk [vmem:[#allocation3 + $0xc0] sm:$0xff] %vm1878, %v3016
      %3033 = vst.msk [vmem:[#allocation3 + $0xe8] sm:$0xff] %vm1878, %v3017
      %3034 = vst.msk [vmem:[#allocation3 + $0x110] sm:$0xff] %vm1878, %v3018
      %3035 = vst.msk [vmem:[#allocation3 + $0x138] sm:$0xff] %vm1878, %v3019
      %3036 = vst.msk [vmem:[#allocation3 + $0x160] sm:$0xff] %vm1878, %v3020
      %3037 = vst.msk [vmem:[#allocation3 + $0x188] sm:$0xff] %vm1878, %v3021
      %3038 = vst.msk [vmem:[#allocation3 + $0x1b0] sm:$0xff] %vm1878, %v3022
      %3039 = vst.msk [vmem:[#allocation3 + $0x1d8] sm:$0xff] %vm1878, %v3023
      %3040 = vst.msk [vmem:[#allocation3 + $0x200] sm:$0xff] %vm1878, %v3024
      %3041 = vst.msk [vmem:[#allocation3 + $0x228] sm:$0xff] %vm1878, %v3025
      %3042 = vst.msk [vmem:[#allocation3 + $0x250] sm:$0xff] %vm1878, %v3026
      %3043 = vst.msk [vmem:[#allocation3 + $0x278] sm:$0xff] %vm1878, %v3027
      %v3044 = vld [vmem:[#allocation3] sm:$0xff]
      %v3045 = vld [vmem:[#allocation3 + $0x8] sm:$0xff]
      %v3046 = vld [vmem:[#allocation3 + $0x10] sm:$0xff]
      %v3047 = vld [vmem:[#allocation3 + $0x18] sm:$0xff]
      %v3048 = vld [vmem:[#allocation3 + $0x20] sm:$0xff]
      %v3049 = vld [vmem:[#allocation3 + $0x28] sm:$0xff]
      %v3050 = vld [vmem:[#allocation3 + $0x30] sm:$0xff]
      %v3051 = vld [vmem:[#allocation3 + $0x38] sm:$0xff]
      %v3052 = vld [vmem:[#allocation3 + $0x40] sm:$0xff]
      %v3053 = vld [vmem:[#allocation3 + $0x48] sm:$0xff]
      %v3054 = vld [vmem:[#allocation3 + $0x50] sm:$0xff]
      %v3055 = vld [vmem:[#allocation3 + $0x58] sm:$0xff]
      %v3056 = vld [vmem:[#allocation3 + $0x60] sm:$0xff]
      %v3057 = vld [vmem:[#allocation3 + $0x68] sm:$0xff]
      %v3058 = vld [vmem:[#allocation3 + $0x70] sm:$0xff]
      %v3059 = vld [vmem:[#allocation3 + $0x78] sm:$0xff]
      %v3060 = vld [vmem:[#allocation3 + $0x80] sm:$0xff]
      %v3061 = vld [vmem:[#allocation3 + $0x88] sm:$0xff]
      %v3062 = vld [vmem:[#allocation3 + $0x90] sm:$0xff]
      %v3063 = vld [vmem:[#allocation3 + $0x98] sm:$0xff]
      %v3064 = vld [vmem:[#allocation3 + $0xa0] sm:$0xff]
      %v3065 = vld [vmem:[#allocation3 + $0xa8] sm:$0xff]
      %v3066 = vld [vmem:[#allocation3 + $0xb0] sm:$0xff]
      %v3067 = vld [vmem:[#allocation3 + $0xb8] sm:$0xff]
      %v3068 = vld [vmem:[#allocation3 + $0xc0] sm:$0xff]
      %v3069 = vld [vmem:[#allocation3 + $0xc8] sm:$0xff]
      %v3070 = vld [vmem:[#allocation3 + $0xd0] sm:$0xff]
      %v3071 = vld [vmem:[#allocation3 + $0xd8] sm:$0xff]
      %v3072 = vld [vmem:[#allocation3 + $0xe0] sm:$0xff]
      %v3073 = vld [vmem:[#allocation3 + $0xe8] sm:$0xff]
      %v3074 = vld [vmem:[#allocation3 + $0xf0] sm:$0xff]
      %v3075 = vld [vmem:[#allocation3 + $0xf8] sm:$0xff]
      %v3076 = vld [vmem:[#allocation3 + $0x100] sm:$0xff]
      %v3077 = vld [vmem:[#allocation3 + $0x108] sm:$0xff]
      %v3078 = vld [vmem:[#allocation3 + $0x110] sm:$0xff]
      %v3079 = vld [vmem:[#allocation3 + $0x118] sm:$0xff]
      %v3080 = vld [vmem:[#allocation3 + $0x120] sm:$0xff]
      %v3081 = vld [vmem:[#allocation3 + $0x128] sm:$0xff]
      %v3082 = vld [vmem:[#allocation3 + $0x130] sm:$0xff]
      %v3083 = vld [vmem:[#allocation3 + $0x138] sm:$0xff]
      %v3084 = vld [vmem:[#allocation3 + $0x140] sm:$0xff]
      %v3085 = vld [vmem:[#allocation3 + $0x148] sm:$0xff]
      %v3086 = vld [vmem:[#allocation3 + $0x150] sm:$0xff]
      %v3087 = vld [vmem:[#allocation3 + $0x158] sm:$0xff]
      %v3088 = vld [vmem:[#allocation3 + $0x160] sm:$0xff]
      %v3089 = vld [vmem:[#allocation3 + $0x168] sm:$0xff]
      %v3090 = vld [vmem:[#allocation3 + $0x170] sm:$0xff]
      %v3091 = vld [vmem:[#allocation3 + $0x178] sm:$0xff]
      %v3092 = vld [vmem:[#allocation3 + $0x180] sm:$0xff]
      %v3093 = vld [vmem:[#allocation3 + $0x188] sm:$0xff]
      %v3094 = vld [vmem:[#allocation3 + $0x190] sm:$0xff]
      %v3095 = vld [vmem:[#allocation3 + $0x198] sm:$0xff]
      %v3096 = vld [vmem:[#allocation3 + $0x1a0] sm:$0xff]
      %v3097 = vld [vmem:[#allocation3 + $0x1a8] sm:$0xff]
      %v3098 = vld [vmem:[#allocation3 + $0x1b0] sm:$0xff]
      %v3099 = vld [vmem:[#allocation3 + $0x1b8] sm:$0xff]
      %v3100 = vld [vmem:[#allocation3 + $0x1c0] sm:$0xff]
      %v3101 = vld [vmem:[#allocation3 + $0x1c8] sm:$0xff]
      %v3102 = vld [vmem:[#allocation3 + $0x1d0] sm:$0xff]
      %v3103 = vld [vmem:[#allocation3 + $0x1d8] sm:$0xff]
      %v3104 = vld [vmem:[#allocation3 + $0x1e0] sm:$0xff]
      %v3105 = vld [vmem:[#allocation3 + $0x1e8] sm:$0xff]
      %v3106 = vld [vmem:[#allocation3 + $0x1f0] sm:$0xff]
      %v3107 = vld [vmem:[#allocation3 + $0x1f8] sm:$0xff]
      %v3108 = vld [vmem:[#allocation3 + $0x200] sm:$0xff]
      %v3109 = vld [vmem:[#allocation3 + $0x208] sm:$0xff]
      %v3110 = vld [vmem:[#allocation3 + $0x210] sm:$0xff]
      %v3111 = vld [vmem:[#allocation3 + $0x218] sm:$0xff]
      %v3112 = vld [vmem:[#allocation3 + $0x220] sm:$0xff]
      %v3113 = vld [vmem:[#allocation3 + $0x228] sm:$0xff]
      %v3114 = vld [vmem:[#allocation3 + $0x230] sm:$0xff]
      %v3115 = vld [vmem:[#allocation3 + $0x238] sm:$0xff]
      %v3116 = vld [vmem:[#allocation3 + $0x240] sm:$0xff]
      %v3117 = vld [vmem:[#allocation3 + $0x248] sm:$0xff]
      %v3118 = vld [vmem:[#allocation3 + $0x250] sm:$0xff]
      %v3119 = vld [vmem:[#allocation3 + $0x258] sm:$0xff]
      %v3120 = vld [vmem:[#allocation3 + $0x260] sm:$0xff]
      %v3121 = vld [vmem:[#allocation3 + $0x268] sm:$0xff]
      %v3122 = vld [vmem:[#allocation3 + $0x270] sm:$0xff]
      %v3123 = vld [vmem:[#allocation3 + $0x278] sm:$0xff]
      %v3124 = vld [vmem:[%s3] sm:$0xff]
      %v3125 = vld [vmem:[%s3 + $0x8] sm:$0xff]
      %v3126 = vld [vmem:[%s3 + $0x10] sm:$0xff]
      %v3127 = vld [vmem:[%s3 + $0x18] sm:$0xff]
      %v3128 = vld [vmem:[%s3 + $0x20] sm:$0xff]
      %v3129 = vld [vmem:[%s3 + $0x28] sm:$0xff]
      %v3130 = vld [vmem:[%s3 + $0x30] sm:$0xff]
      %v3131 = vld [vmem:[%s3 + $0x38] sm:$0xff]
      %v3132 = vld [vmem:[%s3 + $0x40] sm:$0xff]
      %v3133 = vld [vmem:[%s3 + $0x48] sm:$0xff]
      %v3134 = vld [vmem:[%s3 + $0x50] sm:$0xff]
      %v3135 = vld [vmem:[%s3 + $0x58] sm:$0xff]
      %v3136 = vld [vmem:[%s3 + $0x60] sm:$0xff]
      %v3137 = vld [vmem:[%s3 + $0x68] sm:$0xff]
      %v3138 = vld [vmem:[%s3 + $0x70] sm:$0xff]
      %v3139 = vld [vmem:[%s3 + $0x78] sm:$0xff]
      %v3140 = vld [vmem:[%s3 + $0x80] sm:$0xff]
      %v3141 = vld [vmem:[%s3 + $0x88] sm:$0xff]
      %v3142 = vld [vmem:[%s3 + $0x90] sm:$0xff]
      %v3143 = vld [vmem:[%s3 + $0x98] sm:$0xff]
      %v3144 = vld [vmem:[%s3 + $0xa0] sm:$0xff]
      %v3145 = vld [vmem:[%s3 + $0xa8] sm:$0xff]
      %v3146 = vld [vmem:[%s3 + $0xb0] sm:$0xff]
      %v3147 = vld [vmem:[%s3 + $0xb8] sm:$0xff]
      %v3148 = vld [vmem:[%s3 + $0xc0] sm:$0xff]
      %v3149 = vld [vmem:[%s3 + $0xc8] sm:$0xff]
      %v3150 = vld [vmem:[%s3 + $0xd0] sm:$0xff]
      %v3151 = vld [vmem:[%s3 + $0xd8] sm:$0xff]
      %v3152 = vld [vmem:[%s3 + $0xe0] sm:$0xff]
      %v3153 = vld [vmem:[%s3 + $0xe8] sm:$0xff]
      %v3154 = vld [vmem:[%s3 + $0xf0] sm:$0xff]
      %v3155 = vld [vmem:[%s3 + $0xf8] sm:$0xff]
      %v3156 = vld [vmem:[%s3 + $0x100] sm:$0xff]
      %v3157 = vld [vmem:[%s3 + $0x108] sm:$0xff]
      %v3158 = vld [vmem:[%s3 + $0x110] sm:$0xff]
      %v3159 = vld [vmem:[%s3 + $0x118] sm:$0xff]
      %v3160 = vld [vmem:[%s3 + $0x120] sm:$0xff]
      %v3161 = vld [vmem:[%s3 + $0x128] sm:$0xff]
      %v3162 = vld [vmem:[%s3 + $0x130] sm:$0xff]
      %v3163 = vld [vmem:[%s3 + $0x138] sm:$0xff]
      %v3164 = vld [vmem:[%s3 + $0x140] sm:$0xff]
      %v3165 = vld [vmem:[%s3 + $0x148] sm:$0xff]
      %v3166 = vld [vmem:[%s3 + $0x150] sm:$0xff]
      %v3167 = vld [vmem:[%s3 + $0x158] sm:$0xff]
      %v3168 = vld [vmem:[%s3 + $0x160] sm:$0xff]
      %v3169 = vld [vmem:[%s3 + $0x168] sm:$0xff]
      %v3170 = vld [vmem:[%s3 + $0x170] sm:$0xff]
      %v3171 = vld [vmem:[%s3 + $0x178] sm:$0xff]
      %v3172 = vld [vmem:[%s3 + $0x180] sm:$0xff]
      %v3173 = vld [vmem:[%s3 + $0x188] sm:$0xff]
      %v3174 = vld [vmem:[%s3 + $0x190] sm:$0xff]
      %v3175 = vld [vmem:[%s3 + $0x198] sm:$0xff]
      %v3176 = vld [vmem:[%s3 + $0x1a0] sm:$0xff]
      %v3177 = vld [vmem:[%s3 + $0x1a8] sm:$0xff]
      %v3178 = vld [vmem:[%s3 + $0x1b0] sm:$0xff]
      %v3179 = vld [vmem:[%s3 + $0x1b8] sm:$0xff]
      %v3180 = vld [vmem:[%s3 + $0x1c0] sm:$0xff]
      %v3181 = vld [vmem:[%s3 + $0x1c8] sm:$0xff]
      %v3182 = vld [vmem:[%s3 + $0x1d0] sm:$0xff]
      %v3183 = vld [vmem:[%s3 + $0x1d8] sm:$0xff]
      %v3184 = vld [vmem:[%s3 + $0x1e0] sm:$0xff]
      %v3185 = vld [vmem:[%s3 + $0x1e8] sm:$0xff]
      %v3186 = vld [vmem:[%s3 + $0x1f0] sm:$0xff]
      %v3187 = vld [vmem:[%s3 + $0x1f8] sm:$0xff]
      %v3188 = vld [vmem:[%s3 + $0x200] sm:$0xff]
      %v3189 = vld [vmem:[%s3 + $0x208] sm:$0xff]
      %v3190 = vld [vmem:[%s3 + $0x210] sm:$0xff]
      %v3191 = vld [vmem:[%s3 + $0x218] sm:$0xff]
      %v3192 = vld [vmem:[%s3 + $0x220] sm:$0xff]
      %v3193 = vld [vmem:[%s3 + $0x228] sm:$0xff]
      %v3194 = vld [vmem:[%s3 + $0x230] sm:$0xff]
      %v3195 = vld [vmem:[%s3 + $0x238] sm:$0xff]
      %v3196 = vld [vmem:[%s4] sm:$0x1]
      %v3198 = vlaneseq
      %v3199 = vshrl.u32 %v3198, 7
      %v3200 = vsub.s32 0, %v3199
      %v3201 = vrot.slane %v3196, %v3200
      %v3204 = vsel %vm1878, %v3048, 0
      %v3207 = vsel %vm1878, %v3053, 0
      %v3210 = vsel %vm1878, %v3058, 0
      %v3213 = vsel %vm1878, %v3063, 0
      %v3216 = vsel %vm1878, %v3068, 0
      %v3219 = vsel %vm1878, %v3073, 0
      %v3222 = vsel %vm1878, %v3078, 0
      %v3225 = vsel %vm1878, %v3083, 0
      %v3228 = vsel %vm1878, %v3088, 0
      %v3231 = vsel %vm1878, %v3093, 0
      %v3234 = vsel %vm1878, %v3098, 0
      %v3237 = vsel %vm1878, %v3103, 0
      %v3240 = vsel %vm1878, %v3108, 0
      %v3243 = vsel %vm1878, %v3113, 0
      %v3246 = vsel %vm1878, %v3118, 0
      %v3249 = vsel %vm1878, %v3123, 0
      %3251 = vmatprep.subr.mxu0 0.0
      %3252 = vmatpush1.msra.mxu0 %v3139
      %3253 = vmatprep.subr.mxu0 0.0
      %3254 = vmatpush1.msra.mxu0 %v3138
      %3255 = vmatprep.subr.mxu0 0.0
      %3256 = vmatpush1.msra.mxu0 %v3137
      %3257 = vmatprep.subr.mxu0 0.0
      %3258 = vmatpush1.msra.mxu0 %v3136
      %3259 = vmatprep.subr.mxu0 0.0
      %3260 = vmatpush1.msra.mxu0 %v3135
      %3261 = vmatprep.subr.mxu0 0.0
      %3262 = vmatpush1.msra.mxu0 %v3134
      %3263 = vmatprep.subr.mxu0 0.0
      %3264 = vmatpush1.msra.mxu0 %v3133
      %3265 = vmatprep.subr.mxu0 0.0
      %3266 = vmatpush1.msra.mxu0 %v3132
      %3267 = vmatprep.subr.mxu0 0.0
      %3268 = vmatpush1.msra.mxu0 %v3131
      %3269 = vmatprep.subr.mxu0 0.0
      %3270 = vmatpush1.msra.mxu0 %v3130
      %3271 = vmatprep.subr.mxu0 0.0
      %3272 = vmatpush1.msra.mxu0 %v3129
      %3273 = vmatprep.subr.mxu0 0.0
      %3274 = vmatpush1.msra.mxu0 %v3128
      %3275 = vmatprep.subr.mxu0 0.0
      %3276 = vmatpush1.msra.mxu0 %v3127
      %3277 = vmatprep.subr.mxu0 0.0
      %3278 = vmatpush1.msra.mxu0 %v3126
      %3279 = vmatprep.subr.mxu0 0.0
      %3280 = vmatpush1.msra.mxu0 %v3125
      %3281 = vmatprep.subr.mxu0 0.0
      %3282 = vmatpush1.msra.mxu0 %v3124
      %3283 = vmatprep.subr.mxu0 0.0
      %3284 = vmatpush2.msra.mxu0 %v3155
      %3285 = vmatprep.subr.mxu0 0.0
      %3286 = vmatpush2.msra.mxu0 %v3154
      %3287 = vmatprep.subr.mxu0 0.0
      %3288 = vmatpush2.msra.mxu0 %v3153
      %3289 = vmatprep.subr.mxu0 0.0
      %3290 = vmatpush2.msra.mxu0 %v3152
      %3291 = vmatprep.subr.mxu0 0.0
      %3292 = vmatpush2.msra.mxu0 %v3151
      %3293 = vmatprep.subr.mxu0 0.0
      %3294 = vmatpush2.msra.mxu0 %v3150
      %3295 = vmatprep.subr.mxu0 0.0
      %3296 = vmatpush2.msra.mxu0 %v3149
      %3297 = vmatprep.subr.mxu0 0.0
      %3298 = vmatpush2.msra.mxu0 %v3148
      %3299 = vmatprep.subr.mxu0 0.0
      %3300 = vmatpush2.msra.mxu0 %v3147
      %3301 = vmatprep.subr.mxu0 0.0
      %3302 = vmatpush2.msra.mxu0 %v3146
      %3303 = vmatprep.subr.mxu0 0.0
      %3304 = vmatpush2.msra.mxu0 %v3145
      %3305 = vmatprep.subr.mxu0 0.0
      %3306 = vmatpush2.msra.mxu0 %v3144
      %3307 = vmatprep.subr.mxu0 0.0
      %3308 = vmatpush2.msra.mxu0 %v3143
      %3309 = vmatprep.subr.mxu0 0.0
      %3310 = vmatpush2.msra.mxu0 %v3142
      %3311 = vmatprep.subr.mxu0 0.0
      %3312 = vmatpush2.msra.mxu0 %v3141
      %3313 = vmatprep.subr.mxu0 0.0
      %3314 = vmatpush2.msra.mxu0 %v3140
      %3315 = vmatprep.mubr.f32.mxu0 %v3045
      %3316 = vmatmul.mubr.f32.gmra.mxu0 %v3044
      %v3317 = vpop.f32.mrf.mxu0
      %v3318 = vadd.f32 %v3201, %v3317
      %v3319 = vpop.f32.mrf.mxu0
      %3320 = vmatprep.mubr.f32.mxu0 %v3050
      %3321 = vmatmul.mubr.f32.gmra.mxu0 %v3049
      %v3322 = vpop.f32.mrf.mxu0
      %v3323 = vadd.f32 %v3201, %v3322
      %v3324 = vpop.f32.mrf.mxu0
      %3325 = vmatprep.mubr.f32.mxu0 %v3055
      %3326 = vmatmul.mubr.f32.gmra.mxu0 %v3054
      %v3327 = vpop.f32.mrf.mxu0
      %v3328 = vadd.f32 %v3201, %v3327
      %v3329 = vpop.f32.mrf.mxu0
      %3330 = vmatprep.mubr.f32.mxu0 %v3060
      %3331 = vmatmul.mubr.f32.gmra.mxu0 %v3059
      %v3332 = vpop.f32.mrf.mxu0
      %v3333 = vadd.f32 %v3201, %v3332
      %v3334 = vpop.f32.mrf.mxu0
      %3335 = vmatprep.mubr.f32.mxu0 %v3065
      %3336 = vmatmul.mubr.f32.gmra.mxu0 %v3064
      %v3337 = vpop.f32.mrf.mxu0
      %v3338 = vadd.f32 %v3201, %v3337
      %v3339 = vpop.f32.mrf.mxu0
      %3340 = vmatprep.mubr.f32.mxu0 %v3070
      %3341 = vmatmul.mubr.f32.gmra.mxu0 %v3069
      %v3342 = vpop.f32.mrf.mxu0
      %v3343 = vadd.f32 %v3201, %v3342
      %v3344 = vpop.f32.mrf.mxu0
      %3345 = vmatprep.mubr.f32.mxu0 %v3075
      %3346 = vmatmul.mubr.f32.gmra.mxu0 %v3074
      %v3347 = vpop.f32.mrf.mxu0
      %v3348 = vadd.f32 %v3201, %v3347
      %v3349 = vpop.f32.mrf.mxu0
      %3350 = vmatprep.mubr.f32.mxu0 %v3080
      %3351 = vmatmul.mubr.f32.gmra.mxu0 %v3079
      %v3352 = vpop.f32.mrf.mxu0
      %v3353 = vadd.f32 %v3201, %v3352
      %v3354 = vpop.f32.mrf.mxu0
      %3355 = vmatprep.mubr.f32.mxu0 %v3085
      %3356 = vmatmul.mubr.f32.gmra.mxu0 %v3084
      %v3357 = vpop.f32.mrf.mxu0
      %v3358 = vadd.f32 %v3201, %v3357
      %v3359 = vpop.f32.mrf.mxu0
      %3360 = vmatprep.mubr.f32.mxu0 %v3090
      %3361 = vmatmul.mubr.f32.gmra.mxu0 %v3089
      %v3362 = vpop.f32.mrf.mxu0
      %v3363 = vadd.f32 %v3201, %v3362
      %v3364 = vpop.f32.mrf.mxu0
      %3365 = vmatprep.mubr.f32.mxu0 %v3095
      %3366 = vmatmul.mubr.f32.gmra.mxu0 %v3094
      %v3367 = vpop.f32.mrf.mxu0
      %v3368 = vadd.f32 %v3201, %v3367
      %v3369 = vpop.f32.mrf.mxu0
      %3370 = vmatprep.mubr.f32.mxu0 %v3100
      %3371 = vmatmul.mubr.f32.gmra.mxu0 %v3099
      %v3372 = vpop.f32.mrf.mxu0
      %v3373 = vadd.f32 %v3201, %v3372
      %v3374 = vpop.f32.mrf.mxu0
      %3375 = vmatprep.mubr.f32.mxu0 %v3105
      %3376 = vmatmul.mubr.f32.gmra.mxu0 %v3104
      %v3377 = vpop.f32.mrf.mxu0
      %v3378 = vadd.f32 %v3201, %v3377
      %v3379 = vpop.f32.mrf.mxu0
      %3380 = vmatprep.mubr.f32.mxu0 %v3110
      %3381 = vmatmul.mubr.f32.gmra.mxu0 %v3109
      %v3382 = vpop.f32.mrf.mxu0
      %v3383 = vadd.f32 %v3201, %v3382
      %v3384 = vpop.f32.mrf.mxu0
      %3385 = vmatprep.mubr.f32.mxu0 %v3115
      %3386 = vmatmul.mubr.f32.gmra.mxu0 %v3114
      %v3387 = vpop.f32.mrf.mxu0
      %v3388 = vadd.f32 %v3201, %v3387
      %v3389 = vpop.f32.mrf.mxu0
      %3390 = vmatprep.mubr.f32.mxu0 %v3120
      %3391 = vmatmul.mubr.f32.gmra.mxu0 %v3119
      %v3392 = vpop.f32.mrf.mxu0
      %v3393 = vadd.f32 %v3201, %v3392
      %v3394 = vpop.f32.mrf.mxu0
      %3395 = vdwg.mxu0
      %3396 = vmatprep.subr.mxu0 0.0
      %3397 = vmatpush1.msra.mxu0 %v3171
      %3398 = vmatprep.subr.mxu0 0.0
      %3399 = vmatpush1.msra.mxu0 %v3170
      %3400 = vmatprep.subr.mxu0 0.0
      %3401 = vmatpush1.msra.mxu0 %v3169
      %3402 = vmatprep.subr.mxu0 0.0
      %3403 = vmatpush1.msra.mxu0 %v3168
      %3404 = vmatprep.subr.mxu0 0.0
      %3405 = vmatpush1.msra.mxu0 %v3167
      %3406 = vmatprep.subr.mxu0 0.0
      %3407 = vmatpush1.msra.mxu0 %v3166
      %3408 = vmatprep.subr.mxu0 0.0
      %3409 = vmatpush1.msra.mxu0 %v3165
      %3410 = vmatprep.subr.mxu0 0.0
      %3411 = vmatpush1.msra.mxu0 %v3164
      %3412 = vmatprep.subr.mxu0 0.0
      %3413 = vmatpush1.msra.mxu0 %v3163
      %3414 = vmatprep.subr.mxu0 0.0
      %3415 = vmatpush1.msra.mxu0 %v3162
      %3416 = vmatprep.subr.mxu0 0.0
      %3417 = vmatpush1.msra.mxu0 %v3161
      %3418 = vmatprep.subr.mxu0 0.0
      %3419 = vmatpush1.msra.mxu0 %v3160
      %3420 = vmatprep.subr.mxu0 0.0
      %3421 = vmatpush1.msra.mxu0 %v3159
      %3422 = vmatprep.subr.mxu0 0.0
      %3423 = vmatpush1.msra.mxu0 %v3158
      %3424 = vmatprep.subr.mxu0 0.0
      %3425 = vmatpush1.msra.mxu0 %v3157
      %3426 = vmatprep.subr.mxu0 0.0
      %3427 = vmatpush1.msra.mxu0 %v3156
      %3428 = vmatprep.subr.mxu0 0.0
      %3429 = vmatpush2.msra.mxu0 %v3187
      %3430 = vmatprep.subr.mxu0 0.0
      %3431 = vmatpush2.msra.mxu0 %v3186
      %3432 = vmatprep.subr.mxu0 0.0
      %3433 = vmatpush2.msra.mxu0 %v3185
      %3434 = vmatprep.subr.mxu0 0.0
      %3435 = vmatpush2.msra.mxu0 %v3184
      %3436 = vmatprep.subr.mxu0 0.0
      %3437 = vmatpush2.msra.mxu0 %v3183
      %3438 = vmatprep.subr.mxu0 0.0
      %3439 = vmatpush2.msra.mxu0 %v3182
      %3440 = vmatprep.subr.mxu0 0.0
      %3441 = vmatpush2.msra.mxu0 %v3181
      %3442 = vmatprep.subr.mxu0 0.0
      %3443 = vmatpush2.msra.mxu0 %v3180
      %3444 = vmatprep.subr.mxu0 0.0
      %3445 = vmatpush2.msra.mxu0 %v3179
      %3446 = vmatprep.subr.mxu0 0.0
      %3447 = vmatpush2.msra.mxu0 %v3178
      %3448 = vmatprep.subr.mxu0 0.0
      %3449 = vmatpush2.msra.mxu0 %v3177
      %3450 = vmatprep.subr.mxu0 0.0
      %3451 = vmatpush2.msra.mxu0 %v3176
      %3452 = vmatprep.subr.mxu0 0.0
      %3453 = vmatpush2.msra.mxu0 %v3175
      %3454 = vmatprep.subr.mxu0 0.0
      %3455 = vmatpush2.msra.mxu0 %v3174
      %3456 = vmatprep.subr.mxu0 0.0
      %3457 = vmatpush2.msra.mxu0 %v3173
      %3458 = vmatprep.subr.mxu0 0.0
      %3459 = vmatpush2.msra.mxu0 %v3172
      %3460 = vmatprep.mubr.f32.mxu0 %v3047
      %3461 = vmatmul.mubr.f32.gmra.mxu0 %v3046
      %v3462 = vpop.f32.mrf.mxu0
      %v3463 = vadd.f32 %v3318, %v3462
      %v3464 = vpop.f32.mrf.mxu0
      %3465 = vmatprep.mubr.f32.mxu0 %v3052
      %3466 = vmatmul.mubr.f32.gmra.mxu0 %v3051
      %v3467 = vpop.f32.mrf.mxu0
      %v3468 = vadd.f32 %v3323, %v3467
      %v3469 = vpop.f32.mrf.mxu0
      %3470 = vmatprep.mubr.f32.mxu0 %v3057
      %3471 = vmatmul.mubr.f32.gmra.mxu0 %v3056
      %v3472 = vpop.f32.mrf.mxu0
      %v3473 = vadd.f32 %v3328, %v3472
      %v3474 = vpop.f32.mrf.mxu0
      %3475 = vmatprep.mubr.f32.mxu0 %v3062
      %3476 = vmatmul.mubr.f32.gmra.mxu0 %v3061
      %v3477 = vpop.f32.mrf.mxu0
      %v3478 = vadd.f32 %v3333, %v3477
      %v3479 = vpop.f32.mrf.mxu0
      %3480 = vmatprep.mubr.f32.mxu0 %v3067
      %3481 = vmatmul.mubr.f32.gmra.mxu0 %v3066
      %v3482 = vpop.f32.mrf.mxu0
      %v3483 = vadd.f32 %v3338, %v3482
      %v3484 = vpop.f32.mrf.mxu0
      %3485 = vmatprep.mubr.f32.mxu0 %v3072
      %3486 = vmatmul.mubr.f32.gmra.mxu0 %v3071
      %v3487 = vpop.f32.mrf.mxu0
      %v3488 = vadd.f32 %v3343, %v3487
      %v3489 = vpop.f32.mrf.mxu0
      %3490 = vmatprep.mubr.f32.mxu0 %v3077
      %3491 = vmatmul.mubr.f32.gmra.mxu0 %v3076
      %v3492 = vpop.f32.mrf.mxu0
      %v3493 = vadd.f32 %v3348, %v3492
      %v3494 = vpop.f32.mrf.mxu0
      %3495 = vmatprep.mubr.f32.mxu0 %v3082
      %3496 = vmatmul.mubr.f32.gmra.mxu0 %v3081
      %v3497 = vpop.f32.mrf.mxu0
      %v3498 = vadd.f32 %v3353, %v3497
      %v3499 = vpop.f32.mrf.mxu0
      %3500 = vmatprep.mubr.f32.mxu0 %v3087
      %3501 = vmatmul.mubr.f32.gmra.mxu0 %v3086
      %v3502 = vpop.f32.mrf.mxu0
      %v3503 = vadd.f32 %v3358, %v3502
      %v3504 = vpop.f32.mrf.mxu0
      %3505 = vmatprep.mubr.f32.mxu0 %v3092
      %3506 = vmatmul.mubr.f32.gmra.mxu0 %v3091
      %v3507 = vpop.f32.mrf.mxu0
      %v3508 = vadd.f32 %v3363, %v3507
      %v3509 = vpop.f32.mrf.mxu0
      %3510 = vmatprep.mubr.f32.mxu0 %v3097
      %3511 = vmatmul.mubr.f32.gmra.mxu0 %v3096
      %v3512 = vpop.f32.mrf.mxu0
      %v3513 = vadd.f32 %v3368, %v3512
      %v3514 = vpop.f32.mrf.mxu0
      %3515 = vmatprep.mubr.f32.mxu0 %v3102
      %3516 = vmatmul.mubr.f32.gmra.mxu0 %v3101
      %v3517 = vpop.f32.mrf.mxu0
      %v3518 = vadd.f32 %v3373, %v3517
      %v3519 = vpop.f32.mrf.mxu0
      %3520 = vmatprep.mubr.f32.mxu0 %v3107
      %3521 = vmatmul.mubr.f32.gmra.mxu0 %v3106
      %v3522 = vpop.f32.mrf.mxu0
      %v3523 = vadd.f32 %v3378, %v3522
      %v3524 = vpop.f32.mrf.mxu0
      %3525 = vmatprep.mubr.f32.mxu0 %v3112
      %3526 = vmatmul.mubr.f32.gmra.mxu0 %v3111
      %v3527 = vpop.f32.mrf.mxu0
      %v3528 = vadd.f32 %v3383, %v3527
      %v3529 = vpop.f32.mrf.mxu0
      %3530 = vmatprep.mubr.f32.mxu0 %v3117
      %3531 = vmatmul.mubr.f32.gmra.mxu0 %v3116
      %v3532 = vpop.f32.mrf.mxu0
      %v3533 = vadd.f32 %v3388, %v3532
      %v3534 = vpop.f32.mrf.mxu0
      %3535 = vmatprep.mubr.f32.mxu0 %v3122
      %3536 = vmatmul.mubr.f32.gmra.mxu0 %v3121
      %v3537 = vpop.f32.mrf.mxu0
      %v3538 = vadd.f32 %v3393, %v3537
      %v3539 = vpop.f32.mrf.mxu0
      %3540 = vdwg.mxu0
      %3541 = vmatprep.subr.mxu0 0.0
      %3542 = vmatpush1.msra.mxu0 0.0
      %3543 = vmatprep.subr.mxu0 0.0
      %3544 = vmatpush1.msra.mxu0 0.0
      %3545 = vmatprep.subr.mxu0 0.0
      %3546 = vmatpush1.msra.mxu0 0.0
      %3547 = vmatprep.subr.mxu0 0.0
      %3548 = vmatpush1.msra.mxu0 0.0
      %3549 = vmatprep.subr.mxu0 0.0
      %3550 = vmatpush1.msra.mxu0 0.0
      %3551 = vmatprep.subr.mxu0 0.0
      %3552 = vmatpush1.msra.mxu0 0.0
      %3553 = vmatprep.subr.mxu0 0.0
      %3554 = vmatpush1.msra.mxu0 0.0
      %3555 = vmatprep.subr.mxu0 0.0
      %3556 = vmatpush1.msra.mxu0 0.0
      %3557 = vmatprep.subr.mxu0 0.0
      %3558 = vmatpush1.msra.mxu0 %v3195
      %3559 = vmatprep.subr.mxu0 0.0
      %3560 = vmatpush1.msra.mxu0 %v3194
      %3561 = vmatprep.subr.mxu0 0.0
      %3562 = vmatpush1.msra.mxu0 %v3193
      %3563 = vmatprep.subr.mxu0 0.0
      %3564 = vmatpush1.msra.mxu0 %v3192
      %3565 = vmatprep.subr.mxu0 0.0
      %3566 = vmatpush1.msra.mxu0 %v3191
      %3567 = vmatprep.subr.mxu0 0.0
      %3568 = vmatpush1.msra.mxu0 %v3190
      %3569 = vmatprep.subr.mxu0 0.0
      %3570 = vmatpush1.msra.mxu0 %v3189
      %3571 = vmatprep.subr.mxu0 0.0
      %3572 = vmatpush1.msra.mxu0 %v3188
      %3573 = vmatprep.subr.mxu0 0.0
      %3574 = vmatpush2.msra.mxu0 0.0
      %3575 = vmatprep.subr.mxu0 0.0
      %3576 = vmatpush2.msra.mxu0 0.0
      %3577 = vmatprep.subr.mxu0 0.0
      %3578 = vmatpush2.msra.mxu0 0.0
      %3579 = vmatprep.subr.mxu0 0.0
      %3580 = vmatpush2.msra.mxu0 0.0
      %3581 = vmatprep.subr.mxu0 0.0
      %3582 = vmatpush2.msra.mxu0 0.0
      %3583 = vmatprep.subr.mxu0 0.0
      %3584 = vmatpush2.msra.mxu0 0.0
      %3585 = vmatprep.subr.mxu0 0.0
      %3586 = vmatpush2.msra.mxu0 0.0
      %3587 = vmatprep.subr.mxu0 0.0
      %3588 = vmatpush2.msra.mxu0 0.0
      %3589 = vmatprep.subr.mxu0 0.0
      %3590 = vmatpush2.msra.mxu0 0.0
      %3591 = vmatprep.subr.mxu0 0.0
      %3592 = vmatpush2.msra.mxu0 0.0
      %3593 = vmatprep.subr.mxu0 0.0
      %3594 = vmatpush2.msra.mxu0 0.0
      %3595 = vmatprep.subr.mxu0 0.0
      %3596 = vmatpush2.msra.mxu0 0.0
      %3597 = vmatprep.subr.mxu0 0.0
      %3598 = vmatpush2.msra.mxu0 0.0
      %3599 = vmatprep.subr.mxu0 0.0
      %3600 = vmatpush2.msra.mxu0 0.0
      %3601 = vmatprep.subr.mxu0 0.0
      %3602 = vmatpush2.msra.mxu0 0.0
      %3603 = vmatprep.subr.mxu0 0.0
      %3604 = vmatpush2.msra.mxu0 0.0
      %3605 = vmatprep.mubr.f32.mxu0 0.0
      %3606 = vmatmul.mubr.f32.gmra.mxu0 %v3204
      %v3607 = vpop.f32.mrf.mxu0
      %v3608 = vadd.f32 %v3463, %v3607
      %v3609 = vpop.f32.mrf.mxu0
      %3610 = vmatprep.mubr.f32.mxu0 0.0
      %3611 = vmatmul.mubr.f32.gmra.mxu0 %v3207
      %v3612 = vpop.f32.mrf.mxu0
      %v3613 = vadd.f32 %v3468, %v3612
      %v3614 = vpop.f32.mrf.mxu0
      %3615 = vmatprep.mubr.f32.mxu0 0.0
      %3616 = vmatmul.mubr.f32.gmra.mxu0 %v3210
      %v3617 = vpop.f32.mrf.mxu0
      %v3618 = vadd.f32 %v3473, %v3617
      %v3619 = vpop.f32.mrf.mxu0
      %3620 = vmatprep.mubr.f32.mxu0 0.0
      %3621 = vmatmul.mubr.f32.gmra.mxu0 %v3213
      %v3622 = vpop.f32.mrf.mxu0
      %v3623 = vadd.f32 %v3478, %v3622
      %v3624 = vpop.f32.mrf.mxu0
      %3625 = vmatprep.mubr.f32.mxu0 0.0
      %3626 = vmatmul.mubr.f32.gmra.mxu0 %v3216
      %v3627 = vpop.f32.mrf.mxu0
      %v3628 = vadd.f32 %v3483, %v3627
      %v3629 = vpop.f32.mrf.mxu0
      %3630 = vmatprep.mubr.f32.mxu0 0.0
      %3631 = vmatmul.mubr.f32.gmra.mxu0 %v3219
      %v3632 = vpop.f32.mrf.mxu0
      %v3633 = vadd.f32 %v3488, %v3632
      %v3634 = vpop.f32.mrf.mxu0
      %3635 = vmatprep.mubr.f32.mxu0 0.0
      %3636 = vmatmul.mubr.f32.gmra.mxu0 %v3222
      %v3637 = vpop.f32.mrf.mxu0
      %v3638 = vadd.f32 %v3493, %v3637
      %v3639 = vpop.f32.mrf.mxu0
      %3640 = vmatprep.mubr.f32.mxu0 0.0
      %3641 = vmatmul.mubr.f32.gmra.mxu0 %v3225
      %v3642 = vpop.f32.mrf.mxu0
      %v3643 = vadd.f32 %v3498, %v3642
      %v3644 = vpop.f32.mrf.mxu0
      %3645 = vmatprep.mubr.f32.mxu0 0.0
      %3646 = vmatmul.mubr.f32.gmra.mxu0 %v3228
      %v3647 = vpop.f32.mrf.mxu0
      %v3648 = vadd.f32 %v3503, %v3647
      %v3649 = vpop.f32.mrf.mxu0
      %3650 = vmatprep.mubr.f32.mxu0 0.0
      %3651 = vmatmul.mubr.f32.gmra.mxu0 %v3231
      %v3652 = vpop.f32.mrf.mxu0
      %v3653 = vadd.f32 %v3508, %v3652
      %v3654 = vpop.f32.mrf.mxu0
      %3655 = vmatprep.mubr.f32.mxu0 0.0
      %3656 = vmatmul.mubr.f32.gmra.mxu0 %v3234
      %v3657 = vpop.f32.mrf.mxu0
      %v3658 = vadd.f32 %v3513, %v3657
      %v3659 = vpop.f32.mrf.mxu0
      %3660 = vmatprep.mubr.f32.mxu0 0.0
      %3661 = vmatmul.mubr.f32.gmra.mxu0 %v3237
      %v3662 = vpop.f32.mrf.mxu0
      %v3663 = vadd.f32 %v3518, %v3662
      %v3664 = vpop.f32.mrf.mxu0
      %3665 = vmatprep.mubr.f32.mxu0 0.0
      %3666 = vmatmul.mubr.f32.gmra.mxu0 %v3240
      %v3667 = vpop.f32.mrf.mxu0
      %v3668 = vadd.f32 %v3523, %v3667
      %v3669 = vpop.f32.mrf.mxu0
      %3670 = vmatprep.mubr.f32.mxu0 0.0
      %3671 = vmatmul.mubr.f32.gmra.mxu0 %v3243
      %v3672 = vpop.f32.mrf.mxu0
      %v3673 = vadd.f32 %v3528, %v3672
      %v3674 = vpop.f32.mrf.mxu0
      %3675 = vmatprep.mubr.f32.mxu0 0.0
      %3676 = vmatmul.mubr.f32.gmra.mxu0 %v3246
      %v3677 = vpop.f32.mrf.mxu0
      %v3678 = vadd.f32 %v3533, %v3677
      %v3679 = vpop.f32.mrf.mxu0
      %3680 = vmatprep.mubr.f32.mxu0 0.0
      %3681 = vmatmul.mubr.f32.gmra.mxu0 %v3249
      %v3682 = vpop.f32.mrf.mxu0
      %v3683 = vadd.f32 %v3538, %v3682
      %v3684 = vpop.f32.mrf.mxu0
      %3685 = vdwg.mxu0
      %v3686 = vmax.f32 %v3608, 0.0
      %v3687 = vmax.f32 %v3613, 0.0
      %v3688 = vmax.f32 %v3618, 0.0
      %v3689 = vmax.f32 %v3623, 0.0
      %v3690 = vmax.f32 %v3628, 0.0
      %v3691 = vmax.f32 %v3633, 0.0
      %v3692 = vmax.f32 %v3638, 0.0
      %v3693 = vmax.f32 %v3643, 0.0
      %v3694 = vmax.f32 %v3648, 0.0
      %v3695 = vmax.f32 %v3653, 0.0
      %v3696 = vmax.f32 %v3658, 0.0
      %v3697 = vmax.f32 %v3663, 0.0
      %v3698 = vmax.f32 %v3668, 0.0
      %v3699 = vmax.f32 %v3673, 0.0
      %v3700 = vmax.f32 %v3678, 0.0
      %v3701 = vmax.f32 %v3683, 0.0
      %v3718 = vcombine.high %v3686, %v3686
      %v3720 = vunpack.c.l.s4 1983009808
      %v3721 = vunpack.c.0.s8 %v3720
      %v3722 = vlaneseq
      %v3723 = vshrl.u32 %v3722, 7
      %v3724 = vsub.s32 %v3721, %v3723
      %v3725 = vrot.slane %v3686, %v3724
      %v3727 = vunpack.c.l.s4 1983009808
      %v3728 = vunpack.c.0.s8 %v3727
      %v3729 = vlaneseq
      %v3730 = vshrl.u32 %v3729, 7
      %v3731 = vsub.s32 %v3728, %v3730
      %v3732 = vrot.slane %v3718, %v3731
      %v3733 = vcombine.high %v3725, %v3725
      %v3734 = vcombine.high %v3732, %v3732
      %v3735 = vcombine.high %v3687, %v3687
      %v3737 = vunpack.c.l.s4 1983009808
      %v3738 = vunpack.c.0.s8 %v3737
      %v3739 = vlaneseq
      %v3740 = vshrl.u32 %v3739, 7
      %v3741 = vsub.s32 %v3738, %v3740
      %v3742 = vrot.slane %v3687, %v3741
      %v3744 = vunpack.c.l.s4 1983009808
      %v3745 = vunpack.c.0.s8 %v3744
      %v3746 = vlaneseq
      %v3747 = vshrl.u32 %v3746, 7
      %v3748 = vsub.s32 %v3745, %v3747
      %v3749 = vrot.slane %v3735, %v3748
      %v3750 = vcombine.high %v3742, %v3742
      %v3751 = vcombine.high %v3749, %v3749
      %v3752 = vcombine.high %v3688, %v3688
      %v3754 = vunpack.c.l.s4 1983009808
      %v3755 = vunpack.c.0.s8 %v3754
      %v3756 = vlaneseq
      %v3757 = vshrl.u32 %v3756, 7
      %v3758 = vsub.s32 %v3755, %v3757
      %v3759 = vrot.slane %v3688, %v3758
      %v3761 = vunpack.c.l.s4 1983009808
      %v3762 = vunpack.c.0.s8 %v3761
      %v3763 = vlaneseq
      %v3764 = vshrl.u32 %v3763, 7
      %v3765 = vsub.s32 %v3762, %v3764
      %v3766 = vrot.slane %v3752, %v3765
      %v3767 = vcombine.high %v3759, %v3759
      %v3768 = vcombine.high %v3766, %v3766
      %v3769 = vcombine.high %v3689, %v3689
      %v3771 = vunpack.c.l.s4 1983009808
      %v3772 = vunpack.c.0.s8 %v3771
      %v3773 = vlaneseq
      %v3774 = vshrl.u32 %v3773, 7
      %v3775 = vsub.s32 %v3772, %v3774
      %v3776 = vrot.slane %v3689, %v3775
      %v3778 = vunpack.c.l.s4 1983009808
      %v3779 = vunpack.c.0.s8 %v3778
      %v3780 = vlaneseq
      %v3781 = vshrl.u32 %v3780, 7
      %v3782 = vsub.s32 %v3779, %v3781
      %v3783 = vrot.slane %v3769, %v3782
      %v3784 = vcombine.high %v3776, %v3776
      %v3785 = vcombine.high %v3783, %v3783
      %v3786 = vcombine.high %v3690, %v3690
      %v3788 = vunpack.c.l.s4 1983009808
      %v3789 = vunpack.c.0.s8 %v3788
      %v3790 = vlaneseq
      %v3791 = vshrl.u32 %v3790, 7
      %v3792 = vsub.s32 %v3789, %v3791
      %v3793 = vrot.slane %v3690, %v3792
      %v3795 = vunpack.c.l.s4 1983009808
      %v3796 = vunpack.c.0.s8 %v3795
      %v3797 = vlaneseq
      %v3798 = vshrl.u32 %v3797, 7
      %v3799 = vsub.s32 %v3796, %v3798
      %v3800 = vrot.slane %v3786, %v3799
      %v3801 = vcombine.high %v3793, %v3793
      %v3802 = vcombine.high %v3800, %v3800
      %v3803 = vcombine.high %v3691, %v3691
      %v3805 = vunpack.c.l.s4 1983009808
      %v3806 = vunpack.c.0.s8 %v3805
      %v3807 = vlaneseq
      %v3808 = vshrl.u32 %v3807, 7
      %v3809 = vsub.s32 %v3806, %v3808
      %v3810 = vrot.slane %v3691, %v3809
      %v3812 = vunpack.c.l.s4 1983009808
      %v3813 = vunpack.c.0.s8 %v3812
      %v3814 = vlaneseq
      %v3815 = vshrl.u32 %v3814, 7
      %v3816 = vsub.s32 %v3813, %v3815
      %v3817 = vrot.slane %v3803, %v3816
      %v3818 = vcombine.high %v3810, %v3810
      %v3819 = vcombine.high %v3817, %v3817
      %v3820 = vcombine.high %v3692, %v3692
      %v3822 = vunpack.c.l.s4 1983009808
      %v3823 = vunpack.c.0.s8 %v3822
      %v3824 = vlaneseq
      %v3825 = vshrl.u32 %v3824, 7
      %v3826 = vsub.s32 %v3823, %v3825
      %v3827 = vrot.slane %v3692, %v3826
      %v3829 = vunpack.c.l.s4 1983009808
      %v3830 = vunpack.c.0.s8 %v3829
      %v3831 = vlaneseq
      %v3832 = vshrl.u32 %v3831, 7
      %v3833 = vsub.s32 %v3830, %v3832
      %v3834 = vrot.slane %v3820, %v3833
      %v3835 = vcombine.high %v3827, %v3827
      %v3836 = vcombine.high %v3834, %v3834
      %v3837 = vcombine.high %v3693, %v3693
      %v3839 = vunpack.c.l.s4 1983009808
      %v3840 = vunpack.c.0.s8 %v3839
      %v3841 = vlaneseq
      %v3842 = vshrl.u32 %v3841, 7
      %v3843 = vsub.s32 %v3840, %v3842
      %v3844 = vrot.slane %v3693, %v3843
      %v3846 = vunpack.c.l.s4 1983009808
      %v3847 = vunpack.c.0.s8 %v3846
      %v3848 = vlaneseq
      %v3849 = vshrl.u32 %v3848, 7
      %v3850 = vsub.s32 %v3847, %v3849
      %v3851 = vrot.slane %v3837, %v3850
      %v3852 = vcombine.high %v3844, %v3844
      %v3853 = vcombine.high %v3851, %v3851
      %v3854 = vcombine.high %v3694, %v3694
      %v3856 = vunpack.c.l.s4 1983009808
      %v3857 = vunpack.c.0.s8 %v3856
      %v3858 = vlaneseq
      %v3859 = vshrl.u32 %v3858, 7
      %v3860 = vsub.s32 %v3857, %v3859
      %v3861 = vrot.slane %v3694, %v3860
      %v3863 = vunpack.c.l.s4 1983009808
      %v3864 = vunpack.c.0.s8 %v3863
      %v3865 = vlaneseq
      %v3866 = vshrl.u32 %v3865, 7
      %v3867 = vsub.s32 %v3864, %v3866
      %v3868 = vrot.slane %v3854, %v3867
      %v3869 = vcombine.high %v3861, %v3861
      %v3870 = vcombine.high %v3868, %v3868
      %v3871 = vcombine.high %v3695, %v3695
      %v3873 = vunpack.c.l.s4 1983009808
      %v3874 = vunpack.c.0.s8 %v3873
      %v3875 = vlaneseq
      %v3876 = vshrl.u32 %v3875, 7
      %v3877 = vsub.s32 %v3874, %v3876
      %v3878 = vrot.slane %v3695, %v3877
      %v3880 = vunpack.c.l.s4 1983009808
      %v3881 = vunpack.c.0.s8 %v3880
      %v3882 = vlaneseq
      %v3883 = vshrl.u32 %v3882, 7
      %v3884 = vsub.s32 %v3881, %v3883
      %v3885 = vrot.slane %v3871, %v3884
      %v3886 = vcombine.high %v3878, %v3878
      %v3887 = vcombine.high %v3885, %v3885
      %v3888 = vcombine.high %v3696, %v3696
      %v3890 = vunpack.c.l.s4 1983009808
      %v3891 = vunpack.c.0.s8 %v3890
      %v3892 = vlaneseq
      %v3893 = vshrl.u32 %v3892, 7
      %v3894 = vsub.s32 %v3891, %v3893
      %v3895 = vrot.slane %v3696, %v3894
      %v3897 = vunpack.c.l.s4 1983009808
      %v3898 = vunpack.c.0.s8 %v3897
      %v3899 = vlaneseq
      %v3900 = vshrl.u32 %v3899, 7
      %v3901 = vsub.s32 %v3898, %v3900
      %v3902 = vrot.slane %v3888, %v3901
      %v3903 = vcombine.high %v3895, %v3895
      %v3904 = vcombine.high %v3902, %v3902
      %v3905 = vcombine.high %v3697, %v3697
      %v3907 = vunpack.c.l.s4 1983009808
      %v3908 = vunpack.c.0.s8 %v3907
      %v3909 = vlaneseq
      %v3910 = vshrl.u32 %v3909, 7
      %v3911 = vsub.s32 %v3908, %v3910
      %v3912 = vrot.slane %v3697, %v3911
      %v3914 = vunpack.c.l.s4 1983009808
      %v3915 = vunpack.c.0.s8 %v3914
      %v3916 = vlaneseq
      %v3917 = vshrl.u32 %v3916, 7
      %v3918 = vsub.s32 %v3915, %v3917
      %v3919 = vrot.slane %v3905, %v3918
      %v3920 = vcombine.high %v3912, %v3912
      %v3921 = vcombine.high %v3919, %v3919
      %v3922 = vcombine.high %v3698, %v3698
      %v3924 = vunpack.c.l.s4 1983009808
      %v3925 = vunpack.c.0.s8 %v3924
      %v3926 = vlaneseq
      %v3927 = vshrl.u32 %v3926, 7
      %v3928 = vsub.s32 %v3925, %v3927
      %v3929 = vrot.slane %v3698, %v3928
      %v3931 = vunpack.c.l.s4 1983009808
      %v3932 = vunpack.c.0.s8 %v3931
      %v3933 = vlaneseq
      %v3934 = vshrl.u32 %v3933, 7
      %v3935 = vsub.s32 %v3932, %v3934
      %v3936 = vrot.slane %v3922, %v3935
      %v3937 = vcombine.high %v3929, %v3929
      %v3938 = vcombine.high %v3936, %v3936
      %v3939 = vcombine.high %v3699, %v3699
      %v3941 = vunpack.c.l.s4 1983009808
      %v3942 = vunpack.c.0.s8 %v3941
      %v3943 = vlaneseq
      %v3944 = vshrl.u32 %v3943, 7
      %v3945 = vsub.s32 %v3942, %v3944
      %v3946 = vrot.slane %v3699, %v3945
      %v3948 = vunpack.c.l.s4 1983009808
      %v3949 = vunpack.c.0.s8 %v3948
      %v3950 = vlaneseq
      %v3951 = vshrl.u32 %v3950, 7
      %v3952 = vsub.s32 %v3949, %v3951
      %v3953 = vrot.slane %v3939, %v3952
      %v3954 = vcombine.high %v3946, %v3946
      %v3955 = vcombine.high %v3953, %v3953
      %v3956 = vcombine.high %v3700, %v3700
      %v3958 = vunpack.c.l.s4 1983009808
      %v3959 = vunpack.c.0.s8 %v3958
      %v3960 = vlaneseq
      %v3961 = vshrl.u32 %v3960, 7
      %v3962 = vsub.s32 %v3959, %v3961
      %v3963 = vrot.slane %v3700, %v3962
      %v3965 = vunpack.c.l.s4 1983009808
      %v3966 = vunpack.c.0.s8 %v3965
      %v3967 = vlaneseq
      %v3968 = vshrl.u32 %v3967, 7
      %v3969 = vsub.s32 %v3966, %v3968
      %v3970 = vrot.slane %v3956, %v3969
      %v3971 = vcombine.high %v3963, %v3963
      %v3972 = vcombine.high %v3970, %v3970
      %v3973 = vcombine.high %v3701, %v3701
      %v3975 = vunpack.c.l.s4 1983009808
      %v3976 = vunpack.c.0.s8 %v3975
      %v3977 = vlaneseq
      %v3978 = vshrl.u32 %v3977, 7
      %v3979 = vsub.s32 %v3976, %v3978
      %v3980 = vrot.slane %v3701, %v3979
      %v3982 = vunpack.c.l.s4 1983009808
      %v3983 = vunpack.c.0.s8 %v3982
      %v3984 = vlaneseq
      %v3985 = vshrl.u32 %v3984, 7
      %v3986 = vsub.s32 %v3983, %v3985
      %v3987 = vrot.slane %v3973, %v3986
      %v3988 = vcombine.high %v3980, %v3980
      %v3989 = vcombine.high %v3987, %v3987
      %v4054 = vsel %vm2283, %v3725, -inf
      %v4055 = vrot.slane %v4054, 4
      %v4056 = vmax.f32 %v4054, %v4055
      %v4057 = vrot.slane %v4056, 2
      %v4058 = vmax.f32 %v4056, %v4057
      %v4059 = vrot.slane %v4058, 1
      %v4060 = vmax.f32 %v4058, %v4059
      %v4061 = vsel %vm2283, %v3733, -inf
      %v4062 = vrot.slane %v4061, 4
      %v4063 = vmax.f32 %v4061, %v4062
      %v4064 = vrot.slane %v4063, 2
      %v4065 = vmax.f32 %v4063, %v4064
      %v4066 = vrot.slane %v4065, 1
      %v4067 = vmax.f32 %v4065, %v4066
      %v4068 = vsel %vm2283, %v3732, -inf
      %v4069 = vrot.slane %v4068, 4
      %v4070 = vmax.f32 %v4068, %v4069
      %v4071 = vrot.slane %v4070, 2
      %v4072 = vmax.f32 %v4070, %v4071
      %v4073 = vrot.slane %v4072, 1
      %v4074 = vmax.f32 %v4072, %v4073
      %v4075 = vsel %vm2283, %v3734, -inf
      %v4076 = vrot.slane %v4075, 4
      %v4077 = vmax.f32 %v4075, %v4076
      %v4078 = vrot.slane %v4077, 2
      %v4079 = vmax.f32 %v4077, %v4078
      %v4080 = vrot.slane %v4079, 1
      %v4081 = vmax.f32 %v4079, %v4080
      %v4082 = vsel %vm2283, %v3742, -inf
      %v4083 = vrot.slane %v4082, 4
      %v4084 = vmax.f32 %v4082, %v4083
      %v4085 = vrot.slane %v4084, 2
      %v4086 = vmax.f32 %v4084, %v4085
      %v4087 = vrot.slane %v4086, 1
      %v4088 = vmax.f32 %v4086, %v4087
      %v4089 = vsel %vm2283, %v3750, -inf
      %v4090 = vrot.slane %v4089, 4
      %v4091 = vmax.f32 %v4089, %v4090
      %v4092 = vrot.slane %v4091, 2
      %v4093 = vmax.f32 %v4091, %v4092
      %v4094 = vrot.slane %v4093, 1
      %v4095 = vmax.f32 %v4093, %v4094
      %v4096 = vsel %vm2283, %v3749, -inf
      %v4097 = vrot.slane %v4096, 4
      %v4098 = vmax.f32 %v4096, %v4097
      %v4099 = vrot.slane %v4098, 2
      %v4100 = vmax.f32 %v4098, %v4099
      %v4101 = vrot.slane %v4100, 1
      %v4102 = vmax.f32 %v4100, %v4101
      %v4103 = vsel %vm2283, %v3751, -inf
      %v4104 = vrot.slane %v4103, 4
      %v4105 = vmax.f32 %v4103, %v4104
      %v4106 = vrot.slane %v4105, 2
      %v4107 = vmax.f32 %v4105, %v4106
      %v4108 = vrot.slane %v4107, 1
      %v4109 = vmax.f32 %v4107, %v4108
      %v4110 = vsel %vm2283, %v3759, -inf
      %v4111 = vrot.slane %v4110, 4
      %v4112 = vmax.f32 %v4110, %v4111
      %v4113 = vrot.slane %v4112, 2
      %v4114 = vmax.f32 %v4112, %v4113
      %v4115 = vrot.slane %v4114, 1
      %v4116 = vmax.f32 %v4114, %v4115
      %v4117 = vsel %vm2283, %v3767, -inf
      %v4118 = vrot.slane %v4117, 4
      %v4119 = vmax.f32 %v4117, %v4118
      %v4120 = vrot.slane %v4119, 2
      %v4121 = vmax.f32 %v4119, %v4120
      %v4122 = vrot.slane %v4121, 1
      %v4123 = vmax.f32 %v4121, %v4122
      %v4124 = vsel %vm2283, %v3766, -inf
      %v4125 = vrot.slane %v4124, 4
      %v4126 = vmax.f32 %v4124, %v4125
      %v4127 = vrot.slane %v4126, 2
      %v4128 = vmax.f32 %v4126, %v4127
      %v4129 = vrot.slane %v4128, 1
      %v4130 = vmax.f32 %v4128, %v4129
      %v4131 = vsel %vm2283, %v3768, -inf
      %v4132 = vrot.slane %v4131, 4
      %v4133 = vmax.f32 %v4131, %v4132
      %v4134 = vrot.slane %v4133, 2
      %v4135 = vmax.f32 %v4133, %v4134
      %v4136 = vrot.slane %v4135, 1
      %v4137 = vmax.f32 %v4135, %v4136
      %v4138 = vsel %vm2283, %v3776, -inf
      %v4139 = vrot.slane %v4138, 4
      %v4140 = vmax.f32 %v4138, %v4139
      %v4141 = vrot.slane %v4140, 2
      %v4142 = vmax.f32 %v4140, %v4141
      %v4143 = vrot.slane %v4142, 1
      %v4144 = vmax.f32 %v4142, %v4143
      %v4145 = vsel %vm2283, %v3784, -inf
      %v4146 = vrot.slane %v4145, 4
      %v4147 = vmax.f32 %v4145, %v4146
      %v4148 = vrot.slane %v4147, 2
      %v4149 = vmax.f32 %v4147, %v4148
      %v4150 = vrot.slane %v4149, 1
      %v4151 = vmax.f32 %v4149, %v4150
      %v4152 = vsel %vm2283, %v3783, -inf
      %v4153 = vrot.slane %v4152, 4
      %v4154 = vmax.f32 %v4152, %v4153
      %v4155 = vrot.slane %v4154, 2
      %v4156 = vmax.f32 %v4154, %v4155
      %v4157 = vrot.slane %v4156, 1
      %v4158 = vmax.f32 %v4156, %v4157
      %v4159 = vsel %vm2283, %v3785, -inf
      %v4160 = vrot.slane %v4159, 4
      %v4161 = vmax.f32 %v4159, %v4160
      %v4162 = vrot.slane %v4161, 2
      %v4163 = vmax.f32 %v4161, %v4162
      %v4164 = vrot.slane %v4163, 1
      %v4165 = vmax.f32 %v4163, %v4164
      %v4166 = vsel %vm2283, %v3793, -inf
      %v4167 = vrot.slane %v4166, 4
      %v4168 = vmax.f32 %v4166, %v4167
      %v4169 = vrot.slane %v4168, 2
      %v4170 = vmax.f32 %v4168, %v4169
      %v4171 = vrot.slane %v4170, 1
      %v4172 = vmax.f32 %v4170, %v4171
      %v4173 = vsel %vm2283, %v3801, -inf
      %v4174 = vrot.slane %v4173, 4
      %v4175 = vmax.f32 %v4173, %v4174
      %v4176 = vrot.slane %v4175, 2
      %v4177 = vmax.f32 %v4175, %v4176
      %v4178 = vrot.slane %v4177, 1
      %v4179 = vmax.f32 %v4177, %v4178
      %v4180 = vsel %vm2283, %v3800, -inf
      %v4181 = vrot.slane %v4180, 4
      %v4182 = vmax.f32 %v4180, %v4181
      %v4183 = vrot.slane %v4182, 2
      %v4184 = vmax.f32 %v4182, %v4183
      %v4185 = vrot.slane %v4184, 1
      %v4186 = vmax.f32 %v4184, %v4185
      %v4187 = vsel %vm2283, %v3802, -inf
      %v4188 = vrot.slane %v4187, 4
      %v4189 = vmax.f32 %v4187, %v4188
      %v4190 = vrot.slane %v4189, 2
      %v4191 = vmax.f32 %v4189, %v4190
      %v4192 = vrot.slane %v4191, 1
      %v4193 = vmax.f32 %v4191, %v4192
      %v4194 = vsel %vm2283, %v3810, -inf
      %v4195 = vrot.slane %v4194, 4
      %v4196 = vmax.f32 %v4194, %v4195
      %v4197 = vrot.slane %v4196, 2
      %v4198 = vmax.f32 %v4196, %v4197
      %v4199 = vrot.slane %v4198, 1
      %v4200 = vmax.f32 %v4198, %v4199
      %v4201 = vsel %vm2283, %v3818, -inf
      %v4202 = vrot.slane %v4201, 4
      %v4203 = vmax.f32 %v4201, %v4202
      %v4204 = vrot.slane %v4203, 2
      %v4205 = vmax.f32 %v4203, %v4204
      %v4206 = vrot.slane %v4205, 1
      %v4207 = vmax.f32 %v4205, %v4206
      %v4208 = vsel %vm2283, %v3817, -inf
      %v4209 = vrot.slane %v4208, 4
      %v4210 = vmax.f32 %v4208, %v4209
      %v4211 = vrot.slane %v4210, 2
      %v4212 = vmax.f32 %v4210, %v4211
      %v4213 = vrot.slane %v4212, 1
      %v4214 = vmax.f32 %v4212, %v4213
      %v4215 = vsel %vm2283, %v3819, -inf
      %v4216 = vrot.slane %v4215, 4
      %v4217 = vmax.f32 %v4215, %v4216
      %v4218 = vrot.slane %v4217, 2
      %v4219 = vmax.f32 %v4217, %v4218
      %v4220 = vrot.slane %v4219, 1
      %v4221 = vmax.f32 %v4219, %v4220
      %v4222 = vsel %vm2283, %v3827, -inf
      %v4223 = vrot.slane %v4222, 4
      %v4224 = vmax.f32 %v4222, %v4223
      %v4225 = vrot.slane %v4224, 2
      %v4226 = vmax.f32 %v4224, %v4225
      %v4227 = vrot.slane %v4226, 1
      %v4228 = vmax.f32 %v4226, %v4227
      %v4229 = vsel %vm2283, %v3835, -inf
      %v4230 = vrot.slane %v4229, 4
      %v4231 = vmax.f32 %v4229, %v4230
      %v4232 = vrot.slane %v4231, 2
      %v4233 = vmax.f32 %v4231, %v4232
      %v4234 = vrot.slane %v4233, 1
      %v4235 = vmax.f32 %v4233, %v4234
      %v4236 = vsel %vm2283, %v3834, -inf
      %v4237 = vrot.slane %v4236, 4
      %v4238 = vmax.f32 %v4236, %v4237
      %v4239 = vrot.slane %v4238, 2
      %v4240 = vmax.f32 %v4238, %v4239
      %v4241 = vrot.slane %v4240, 1
      %v4242 = vmax.f32 %v4240, %v4241
      %v4243 = vsel %vm2283, %v3836, -inf
      %v4244 = vrot.slane %v4243, 4
      %v4245 = vmax.f32 %v4243, %v4244
      %v4246 = vrot.slane %v4245, 2
      %v4247 = vmax.f32 %v4245, %v4246
      %v4248 = vrot.slane %v4247, 1
      %v4249 = vmax.f32 %v4247, %v4248
      %v4250 = vsel %vm2283, %v3844, -inf
      %v4251 = vrot.slane %v4250, 4
      %v4252 = vmax.f32 %v4250, %v4251
      %v4253 = vrot.slane %v4252, 2
      %v4254 = vmax.f32 %v4252, %v4253
      %v4255 = vrot.slane %v4254, 1
      %v4256 = vmax.f32 %v4254, %v4255
      %v4257 = vsel %vm2283, %v3852, -inf
      %v4258 = vrot.slane %v4257, 4
      %v4259 = vmax.f32 %v4257, %v4258
      %v4260 = vrot.slane %v4259, 2
      %v4261 = vmax.f32 %v4259, %v4260
      %v4262 = vrot.slane %v4261, 1
      %v4263 = vmax.f32 %v4261, %v4262
      %v4264 = vsel %vm2283, %v3851, -inf
      %v4265 = vrot.slane %v4264, 4
      %v4266 = vmax.f32 %v4264, %v4265
      %v4267 = vrot.slane %v4266, 2
      %v4268 = vmax.f32 %v4266, %v4267
      %v4269 = vrot.slane %v4268, 1
      %v4270 = vmax.f32 %v4268, %v4269
      %v4271 = vsel %vm2283, %v3853, -inf
      %v4272 = vrot.slane %v4271, 4
      %v4273 = vmax.f32 %v4271, %v4272
      %v4274 = vrot.slane %v4273, 2
      %v4275 = vmax.f32 %v4273, %v4274
      %v4276 = vrot.slane %v4275, 1
      %v4277 = vmax.f32 %v4275, %v4276
      %v4278 = vsel %vm2283, %v3861, -inf
      %v4279 = vrot.slane %v4278, 4
      %v4280 = vmax.f32 %v4278, %v4279
      %v4281 = vrot.slane %v4280, 2
      %v4282 = vmax.f32 %v4280, %v4281
      %v4283 = vrot.slane %v4282, 1
      %v4284 = vmax.f32 %v4282, %v4283
      %v4285 = vsel %vm2283, %v3869, -inf
      %v4286 = vrot.slane %v4285, 4
      %v4287 = vmax.f32 %v4285, %v4286
      %v4288 = vrot.slane %v4287, 2
      %v4289 = vmax.f32 %v4287, %v4288
      %v4290 = vrot.slane %v4289, 1
      %v4291 = vmax.f32 %v4289, %v4290
      %v4292 = vsel %vm2283, %v3868, -inf
      %v4293 = vrot.slane %v4292, 4
      %v4294 = vmax.f32 %v4292, %v4293
      %v4295 = vrot.slane %v4294, 2
      %v4296 = vmax.f32 %v4294, %v4295
      %v4297 = vrot.slane %v4296, 1
      %v4298 = vmax.f32 %v4296, %v4297
      %v4299 = vsel %vm2283, %v3870, -inf
      %v4300 = vrot.slane %v4299, 4
      %v4301 = vmax.f32 %v4299, %v4300
      %v4302 = vrot.slane %v4301, 2
      %v4303 = vmax.f32 %v4301, %v4302
      %v4304 = vrot.slane %v4303, 1
      %v4305 = vmax.f32 %v4303, %v4304
      %v4306 = vsel %vm2283, %v3878, -inf
      %v4307 = vrot.slane %v4306, 4
      %v4308 = vmax.f32 %v4306, %v4307
      %v4309 = vrot.slane %v4308, 2
      %v4310 = vmax.f32 %v4308, %v4309
      %v4311 = vrot.slane %v4310, 1
      %v4312 = vmax.f32 %v4310, %v4311
      %v4313 = vsel %vm2283, %v3886, -inf
      %v4314 = vrot.slane %v4313, 4
      %v4315 = vmax.f32 %v4313, %v4314
      %v4316 = vrot.slane %v4315, 2
      %v4317 = vmax.f32 %v4315, %v4316
      %v4318 = vrot.slane %v4317, 1
      %v4319 = vmax.f32 %v4317, %v4318
      %v4320 = vsel %vm2283, %v3885, -inf
      %v4321 = vrot.slane %v4320, 4
      %v4322 = vmax.f32 %v4320, %v4321
      %v4323 = vrot.slane %v4322, 2
      %v4324 = vmax.f32 %v4322, %v4323
      %v4325 = vrot.slane %v4324, 1
      %v4326 = vmax.f32 %v4324, %v4325
      %v4327 = vsel %vm2283, %v3887, -inf
      %v4328 = vrot.slane %v4327, 4
      %v4329 = vmax.f32 %v4327, %v4328
      %v4330 = vrot.slane %v4329, 2
      %v4331 = vmax.f32 %v4329, %v4330
      %v4332 = vrot.slane %v4331, 1
      %v4333 = vmax.f32 %v4331, %v4332
      %v4334 = vsel %vm2283, %v3895, -inf
      %v4335 = vrot.slane %v4334, 4
      %v4336 = vmax.f32 %v4334, %v4335
      %v4337 = vrot.slane %v4336, 2
      %v4338 = vmax.f32 %v4336, %v4337
      %v4339 = vrot.slane %v4338, 1
      %v4340 = vmax.f32 %v4338, %v4339
      %v4341 = vsel %vm2283, %v3903, -inf
      %v4342 = vrot.slane %v4341, 4
      %v4343 = vmax.f32 %v4341, %v4342
      %v4344 = vrot.slane %v4343, 2
      %v4345 = vmax.f32 %v4343, %v4344
      %v4346 = vrot.slane %v4345, 1
      %v4347 = vmax.f32 %v4345, %v4346
      %v4348 = vsel %vm2283, %v3902, -inf
      %v4349 = vrot.slane %v4348, 4
      %v4350 = vmax.f32 %v4348, %v4349
      %v4351 = vrot.slane %v4350, 2
      %v4352 = vmax.f32 %v4350, %v4351
      %v4353 = vrot.slane %v4352, 1
      %v4354 = vmax.f32 %v4352, %v4353
      %v4355 = vsel %vm2283, %v3904, -inf
      %v4356 = vrot.slane %v4355, 4
      %v4357 = vmax.f32 %v4355, %v4356
      %v4358 = vrot.slane %v4357, 2
      %v4359 = vmax.f32 %v4357, %v4358
      %v4360 = vrot.slane %v4359, 1
      %v4361 = vmax.f32 %v4359, %v4360
      %v4362 = vsel %vm2283, %v3912, -inf
      %v4363 = vrot.slane %v4362, 4
      %v4364 = vmax.f32 %v4362, %v4363
      %v4365 = vrot.slane %v4364, 2
      %v4366 = vmax.f32 %v4364, %v4365
      %v4367 = vrot.slane %v4366, 1
      %v4368 = vmax.f32 %v4366, %v4367
      %v4369 = vsel %vm2283, %v3920, -inf
      %v4370 = vrot.slane %v4369, 4
      %v4371 = vmax.f32 %v4369, %v4370
      %v4372 = vrot.slane %v4371, 2
      %v4373 = vmax.f32 %v4371, %v4372
      %v4374 = vrot.slane %v4373, 1
      %v4375 = vmax.f32 %v4373, %v4374
      %v4376 = vsel %vm2283, %v3919, -inf
      %v4377 = vrot.slane %v4376, 4
      %v4378 = vmax.f32 %v4376, %v4377
      %v4379 = vrot.slane %v4378, 2
      %v4380 = vmax.f32 %v4378, %v4379
      %v4381 = vrot.slane %v4380, 1
      %v4382 = vmax.f32 %v4380, %v4381
      %v4383 = vsel %vm2283, %v3921, -inf
      %v4384 = vrot.slane %v4383, 4
      %v4385 = vmax.f32 %v4383, %v4384
      %v4386 = vrot.slane %v4385, 2
      %v4387 = vmax.f32 %v4385, %v4386
      %v4388 = vrot.slane %v4387, 1
      %v4389 = vmax.f32 %v4387, %v4388
      %v4390 = vsel %vm2283, %v3929, -inf
      %v4391 = vrot.slane %v4390, 4
      %v4392 = vmax.f32 %v4390, %v4391
      %v4393 = vrot.slane %v4392, 2
      %v4394 = vmax.f32 %v4392, %v4393
      %v4395 = vrot.slane %v4394, 1
      %v4396 = vmax.f32 %v4394, %v4395
      %v4397 = vsel %vm2283, %v3937, -inf
      %v4398 = vrot.slane %v4397, 4
      %v4399 = vmax.f32 %v4397, %v4398
      %v4400 = vrot.slane %v4399, 2
      %v4401 = vmax.f32 %v4399, %v4400
      %v4402 = vrot.slane %v4401, 1
      %v4403 = vmax.f32 %v4401, %v4402
      %v4404 = vsel %vm2283, %v3936, -inf
      %v4405 = vrot.slane %v4404, 4
      %v4406 = vmax.f32 %v4404, %v4405
      %v4407 = vrot.slane %v4406, 2
      %v4408 = vmax.f32 %v4406, %v4407
      %v4409 = vrot.slane %v4408, 1
      %v4410 = vmax.f32 %v4408, %v4409
      %v4411 = vsel %vm2283, %v3938, -inf
      %v4412 = vrot.slane %v4411, 4
      %v4413 = vmax.f32 %v4411, %v4412
      %v4414 = vrot.slane %v4413, 2
      %v4415 = vmax.f32 %v4413, %v4414
      %v4416 = vrot.slane %v4415, 1
      %v4417 = vmax.f32 %v4415, %v4416
      %v4418 = vsel %vm2283, %v3946, -inf
      %v4419 = vrot.slane %v4418, 4
      %v4420 = vmax.f32 %v4418, %v4419
      %v4421 = vrot.slane %v4420, 2
      %v4422 = vmax.f32 %v4420, %v4421
      %v4423 = vrot.slane %v4422, 1
      %v4424 = vmax.f32 %v4422, %v4423
      %v4425 = vsel %vm2283, %v3954, -inf
      %v4426 = vrot.slane %v4425, 4
      %v4427 = vmax.f32 %v4425, %v4426
      %v4428 = vrot.slane %v4427, 2
      %v4429 = vmax.f32 %v4427, %v4428
      %v4430 = vrot.slane %v4429, 1
      %v4431 = vmax.f32 %v4429, %v4430
      %v4432 = vsel %vm2283, %v3953, -inf
      %v4433 = vrot.slane %v4432, 4
      %v4434 = vmax.f32 %v4432, %v4433
      %v4435 = vrot.slane %v4434, 2
      %v4436 = vmax.f32 %v4434, %v4435
      %v4437 = vrot.slane %v4436, 1
      %v4438 = vmax.f32 %v4436, %v4437
      %v4439 = vsel %vm2283, %v3955, -inf
      %v4440 = vrot.slane %v4439, 4
      %v4441 = vmax.f32 %v4439, %v4440
      %v4442 = vrot.slane %v4441, 2
      %v4443 = vmax.f32 %v4441, %v4442
      %v4444 = vrot.slane %v4443, 1
      %v4445 = vmax.f32 %v4443, %v4444
      %v4446 = vsel %vm2283, %v3963, -inf
      %v4447 = vrot.slane %v4446, 4
      %v4448 = vmax.f32 %v4446, %v4447
      %v4449 = vrot.slane %v4448, 2
      %v4450 = vmax.f32 %v4448, %v4449
      %v4451 = vrot.slane %v4450, 1
      %v4452 = vmax.f32 %v4450, %v4451
      %v4453 = vsel %vm2283, %v3971, -inf
      %v4454 = vrot.slane %v4453, 4
      %v4455 = vmax.f32 %v4453, %v4454
      %v4456 = vrot.slane %v4455, 2
      %v4457 = vmax.f32 %v4455, %v4456
      %v4458 = vrot.slane %v4457, 1
      %v4459 = vmax.f32 %v4457, %v4458
      %v4460 = vsel %vm2283, %v3970, -inf
      %v4461 = vrot.slane %v4460, 4
      %v4462 = vmax.f32 %v4460, %v4461
      %v4463 = vrot.slane %v4462, 2
      %v4464 = vmax.f32 %v4462, %v4463
      %v4465 = vrot.slane %v4464, 1
      %v4466 = vmax.f32 %v4464, %v4465
      %v4467 = vsel %vm2283, %v3972, -inf
      %v4468 = vrot.slane %v4467, 4
      %v4469 = vmax.f32 %v4467, %v4468
      %v4470 = vrot.slane %v4469, 2
      %v4471 = vmax.f32 %v4469, %v4470
      %v4472 = vrot.slane %v4471, 1
      %v4473 = vmax.f32 %v4471, %v4472
      %v4474 = vsel %vm2283, %v3980, -inf
      %v4475 = vrot.slane %v4474, 4
      %v4476 = vmax.f32 %v4474, %v4475
      %v4477 = vrot.slane %v4476, 2
      %v4478 = vmax.f32 %v4476, %v4477
      %v4479 = vrot.slane %v4478, 1
      %v4480 = vmax.f32 %v4478, %v4479
      %v4481 = vsel %vm2283, %v3988, -inf
      %v4482 = vrot.slane %v4481, 4
      %v4483 = vmax.f32 %v4481, %v4482
      %v4484 = vrot.slane %v4483, 2
      %v4485 = vmax.f32 %v4483, %v4484
      %v4486 = vrot.slane %v4485, 1
      %v4487 = vmax.f32 %v4485, %v4486
      %v4488 = vsel %vm2283, %v3987, -inf
      %v4489 = vrot.slane %v4488, 4
      %v4490 = vmax.f32 %v4488, %v4489
      %v4491 = vrot.slane %v4490, 2
      %v4492 = vmax.f32 %v4490, %v4491
      %v4493 = vrot.slane %v4492, 1
      %v4494 = vmax.f32 %v4492, %v4493
      %v4495 = vsel %vm2283, %v3989, -inf
      %v4496 = vrot.slane %v4495, 4
      %v4497 = vmax.f32 %v4495, %v4496
      %v4498 = vrot.slane %v4497, 2
      %v4499 = vmax.f32 %v4497, %v4498
      %v4500 = vrot.slane %v4499, 1
      %v4501 = vmax.f32 %v4499, %v4500
      %v4502 = vsel %vm1878, %v4060, -inf
      %v4503 = vsel %vm1878, %v4116, -inf
      %v4504 = vmax.f32 %v4502, %v4503
      %v4505 = vsel %vm1878, %v4067, -inf
      %v4506 = vsel %vm1878, %v4123, -inf
      %v4507 = vmax.f32 %v4505, %v4506
      %v4508 = vsel %vm1878, %v4074, -inf
      %v4509 = vsel %vm1878, %v4130, -inf
      %v4510 = vmax.f32 %v4508, %v4509
      %v4511 = vsel %vm1878, %v4081, -inf
      %v4512 = vsel %vm1878, %v4137, -inf
      %v4513 = vmax.f32 %v4511, %v4512
      %v4514 = vsel %vm1878, %v4088, -inf
      %v4515 = vsel %vm1878, %v4144, -inf
      %v4516 = vmax.f32 %v4514, %v4515
      %v4517 = vsel %vm1878, %v4095, -inf
      %v4518 = vsel %vm1878, %v4151, -inf
      %v4519 = vmax.f32 %v4517, %v4518
      %v4520 = vsel %vm1878, %v4102, -inf
      %v4521 = vsel %vm1878, %v4158, -inf
      %v4522 = vmax.f32 %v4520, %v4521
      %v4523 = vsel %vm1878, %v4109, -inf
      %v4524 = vsel %vm1878, %v4165, -inf
      %v4525 = vmax.f32 %v4523, %v4524
      %v4526 = vsel %vm1878, %v4172, -inf
      %v4527 = vsel %vm1878, %v4228, -inf
      %v4528 = vmax.f32 %v4526, %v4527
      %v4529 = vsel %vm1878, %v4179, -inf
      %v4530 = vsel %vm1878, %v4235, -inf
      %v4531 = vmax.f32 %v4529, %v4530
      %v4532 = vsel %vm1878, %v4186, -inf
      %v4533 = vsel %vm1878, %v4242, -inf
      %v4534 = vmax.f32 %v4532, %v4533
      %v4535 = vsel %vm1878, %v4193, -inf
      %v4536 = vsel %vm1878, %v4249, -inf
      %v4537 = vmax.f32 %v4535, %v4536
      %v4538 = vsel %vm1878, %v4200, -inf
      %v4539 = vsel %vm1878, %v4256, -inf
      %v4540 = vmax.f32 %v4538, %v4539
      %v4541 = vsel %vm1878, %v4207, -inf
      %v4542 = vsel %vm1878, %v4263, -inf
      %v4543 = vmax.f32 %v4541, %v4542
      %v4544 = vsel %vm1878, %v4214, -inf
      %v4545 = vsel %vm1878, %v4270, -inf
      %v4546 = vmax.f32 %v4544, %v4545
      %v4547 = vsel %vm1878, %v4221, -inf
      %v4548 = vsel %vm1878, %v4277, -inf
      %v4549 = vmax.f32 %v4547, %v4548
      %v4550 = vsel %vm1878, %v4284, -inf
      %v4551 = vsel %vm1878, %v4340, -inf
      %v4552 = vmax.f32 %v4550, %v4551
      %v4553 = vsel %vm1878, %v4291, -inf
      %v4554 = vsel %vm1878, %v4347, -inf
      %v4555 = vmax.f32 %v4553, %v4554
      %v4556 = vsel %vm1878, %v4298, -inf
      %v4557 = vsel %vm1878, %v4354, -inf
      %v4558 = vmax.f32 %v4556, %v4557
      %v4559 = vsel %vm1878, %v4305, -inf
      %v4560 = vsel %vm1878, %v4361, -inf
      %v4561 = vmax.f32 %v4559, %v4560
      %v4562 = vsel %vm1878, %v4312, -inf
      %v4563 = vsel %vm1878, %v4368, -inf
      %v4564 = vmax.f32 %v4562, %v4563
      %v4565 = vsel %vm1878, %v4319, -inf
      %v4566 = vsel %vm1878, %v4375, -inf
      %v4567 = vmax.f32 %v4565, %v4566
      %v4568 = vsel %vm1878, %v4326, -inf
      %v4569 = vsel %vm1878, %v4382, -inf
      %v4570 = vmax.f32 %v4568, %v4569
      %v4571 = vsel %vm1878, %v4333, -inf
      %v4572 = vsel %vm1878, %v4389, -inf
      %v4573 = vmax.f32 %v4571, %v4572
      %v4574 = vsel %vm1878, %v4396, -inf
      %v4575 = vsel %vm1878, %v4452, -inf
      %v4576 = vmax.f32 %v4574, %v4575
      %v4577 = vsel %vm1878, %v4403, -inf
      %v4578 = vsel %vm1878, %v4459, -inf
      %v4579 = vmax.f32 %v4577, %v4578
      %v4580 = vsel %vm1878, %v4410, -inf
      %v4581 = vsel %vm1878, %v4466, -inf
      %v4582 = vmax.f32 %v4580, %v4581
      %v4583 = vsel %vm1878, %v4417, -inf
      %v4584 = vsel %vm1878, %v4473, -inf
      %v4585 = vmax.f32 %v4583, %v4584
      %v4586 = vsel %vm1878, %v4424, -inf
      %v4587 = vsel %vm1878, %v4480, -inf
      %v4588 = vmax.f32 %v4586, %v4587
      %v4589 = vsel %vm1878, %v4431, -inf
      %v4590 = vsel %vm1878, %v4487, -inf
      %v4591 = vmax.f32 %v4589, %v4590
      %v4592 = vsel %vm1878, %v4438, -inf
      %v4593 = vsel %vm1878, %v4494, -inf
      %v4594 = vmax.f32 %v4592, %v4593
      %v4595 = vsel %vm1878, %v4445, -inf
      %v4596 = vsel %vm1878, %v4501, -inf
      %v4597 = vmax.f32 %v4595, %v4596
      %s4598 = scalar_lea.vmem [#allocation2], 192
      %v4599 = vld [vmem:[%s4598] sm:$0xff]
      %v4600 = vld [vmem:[%s4598 + $0x8] sm:$0xff]
      %v4601 = vld [vmem:[%s4598 + $0x18] sm:$0xff]
      %v4602 = vld [vmem:[%s4598 + $0x20] sm:$0xff]
      %v4603 = vld [vmem:[%s4598 + $0x30] sm:$0xff]
      %v4604 = vld [vmem:[%s4598 + $0x38] sm:$0xff]
      %v4605 = vld [vmem:[%s4598 + $0x48] sm:$0xff]
      %v4606 = vld [vmem:[%s4598 + $0x50] sm:$0xff]
      %v4607 = vld [vmem:[%s4598 + $0x60] sm:$0xff]
      %v4608 = vld [vmem:[%s4598 + $0x68] sm:$0xff]
      %v4609 = vld [vmem:[%s4598 + $0x78] sm:$0xff]
      %v4610 = vld [vmem:[%s4598 + $0x80] sm:$0xff]
      %v4611 = vld [vmem:[%s4598 + $0x90] sm:$0xff]
      %v4612 = vld [vmem:[%s4598 + $0x98] sm:$0xff]
      %v4613 = vld [vmem:[%s4598 + $0xa8] sm:$0xff]
      %v4614 = vld [vmem:[%s4598 + $0xb0] sm:$0xff]
      %v4615 = vld [vmem:[%s4598 + $0x1] sm:$0xff]
      %v4616 = vld [vmem:[%s4598 + $0x9] sm:$0xff]
      %v4617 = vld [vmem:[%s4598 + $0x19] sm:$0xff]
      %v4618 = vld [vmem:[%s4598 + $0x21] sm:$0xff]
      %v4619 = vld [vmem:[%s4598 + $0x31] sm:$0xff]
      %v4620 = vld [vmem:[%s4598 + $0x39] sm:$0xff]
      %v4621 = vld [vmem:[%s4598 + $0x49] sm:$0xff]
      %v4622 = vld [vmem:[%s4598 + $0x51] sm:$0xff]
      %v4623 = vld [vmem:[%s4598 + $0x61] sm:$0xff]
      %v4624 = vld [vmem:[%s4598 + $0x69] sm:$0xff]
      %v4625 = vld [vmem:[%s4598 + $0x79] sm:$0xff]
      %v4626 = vld [vmem:[%s4598 + $0x81] sm:$0xff]
      %v4627 = vld [vmem:[%s4598 + $0x91] sm:$0xff]
      %v4628 = vld [vmem:[%s4598 + $0x99] sm:$0xff]
      %v4629 = vld [vmem:[%s4598 + $0xa9] sm:$0xff]
      %v4630 = vld [vmem:[%s4598 + $0xb1] sm:$0xff]
      %4647 = vrot.lane.b32.xlu0 %v4615, 64
      %v4648 = vpop.permute.xlu0 %4647
      %4649 = vrot.lane.b32.xlu0 %v4616, 64
      %v4650 = vpop.permute.xlu0 %4649
      %4651 = vrot.lane.b32.xlu0 %v4617, 64
      %v4652 = vpop.permute.xlu0 %4651
      %4653 = vrot.lane.b32.xlu0 %v4618, 64
      %v4654 = vpop.permute.xlu0 %4653
      %4655 = vrot.lane.b32.xlu0 %v4619, 64
      %v4656 = vpop.permute.xlu0 %4655
      %4657 = vrot.lane.b32.xlu0 %v4620, 64
      %v4658 = vpop.permute.xlu0 %4657
      %4659 = vrot.lane.b32.xlu0 %v4621, 64
      %v4660 = vpop.permute.xlu0 %4659
      %4661 = vrot.lane.b32.xlu0 %v4622, 64
      %v4662 = vpop.permute.xlu0 %4661
      %4663 = vrot.lane.b32.xlu0 %v4623, 64
      %v4664 = vpop.permute.xlu0 %4663
      %4665 = vrot.lane.b32.xlu0 %v4624, 64
      %v4666 = vpop.permute.xlu0 %4665
      %4667 = vrot.lane.b32.xlu0 %v4625, 64
      %v4668 = vpop.permute.xlu0 %4667
      %4669 = vrot.lane.b32.xlu0 %v4626, 64
      %v4670 = vpop.permute.xlu0 %4669
      %4671 = vrot.lane.b32.xlu0 %v4627, 64
      %v4672 = vpop.permute.xlu0 %4671
      %4673 = vrot.lane.b32.xlu0 %v4628, 64
      %v4674 = vpop.permute.xlu0 %4673
      %4675 = vrot.lane.b32.xlu0 %v4629, 64
      %v4676 = vpop.permute.xlu0 %4675
      %4677 = vrot.lane.b32.xlu0 %v4630, 64
      %v4678 = vpop.permute.xlu0 %4677
      %v4695 = vsel %vm1878, %v4599, %v4648
      %v4696 = vsel %vm1878, %v4600, %v4650
      %v4697 = vsel %vm1878, %v4601, %v4652
      %v4698 = vsel %vm1878, %v4602, %v4654
      %v4699 = vsel %vm1878, %v4603, %v4656
      %v4700 = vsel %vm1878, %v4604, %v4658
      %v4701 = vsel %vm1878, %v4605, %v4660
      %v4702 = vsel %vm1878, %v4606, %v4662
      %v4703 = vsel %vm1878, %v4607, %v4664
      %v4704 = vsel %vm1878, %v4608, %v4666
      %v4705 = vsel %vm1878, %v4609, %v4668
      %v4706 = vsel %vm1878, %v4610, %v4670
      %v4707 = vsel %vm1878, %v4611, %v4672
      %v4708 = vsel %vm1878, %v4612, %v4674
      %v4709 = vsel %vm1878, %v4613, %v4676
      %v4710 = vsel %vm1878, %v4614, %v4678
      %4711 = vst [vmem:[#allocation3 + $0x280] sm:$0xff] %v4695
      %4712 = vst [vmem:[#allocation3 + $0x2a8] sm:$0xff] %v4696
      %4713 = vst [vmem:[#allocation3 + $0x2d0] sm:$0xff] %v4697
      %4714 = vst [vmem:[#allocation3 + $0x2f8] sm:$0xff] %v4698
      %4715 = vst [vmem:[#allocation3 + $0x320] sm:$0xff] %v4699
      %4716 = vst [vmem:[#allocation3 + $0x348] sm:$0xff] %v4700
      %4717 = vst [vmem:[#allocation3 + $0x370] sm:$0xff] %v4701
      %4718 = vst [vmem:[#allocation3 + $0x398] sm:$0xff] %v4702
      %4719 = vst [vmem:[#allocation3 + $0x3c0] sm:$0xff] %v4703
      %4720 = vst [vmem:[#allocation3 + $0x3e8] sm:$0xff] %v4704
      %4721 = vst [vmem:[#allocation3 + $0x410] sm:$0xff] %v4705
      %4722 = vst [vmem:[#allocation3 + $0x438] sm:$0xff] %v4706
      %4723 = vst [vmem:[#allocation3 + $0x460] sm:$0xff] %v4707
      %4724 = vst [vmem:[#allocation3 + $0x488] sm:$0xff] %v4708
      %4725 = vst [vmem:[#allocation3 + $0x4b0] sm:$0xff] %v4709
      %4726 = vst [vmem:[#allocation3 + $0x4d8] sm:$0xff] %v4710
      %v4727 = vld [vmem:[%s4598 + $0x2] sm:$0xff]
      %v4728 = vld [vmem:[%s4598 + $0xa] sm:$0xff]
      %v4729 = vld [vmem:[%s4598 + $0x1a] sm:$0xff]
      %v4730 = vld [vmem:[%s4598 + $0x22] sm:$0xff]
      %v4731 = vld [vmem:[%s4598 + $0x32] sm:$0xff]
      %v4732 = vld [vmem:[%s4598 + $0x3a] sm:$0xff]
      %v4733 = vld [vmem:[%s4598 + $0x4a] sm:$0xff]
      %v4734 = vld [vmem:[%s4598 + $0x52] sm:$0xff]
      %v4735 = vld [vmem:[%s4598 + $0x62] sm:$0xff]
      %v4736 = vld [vmem:[%s4598 + $0x6a] sm:$0xff]
      %v4737 = vld [vmem:[%s4598 + $0x7a] sm:$0xff]
      %v4738 = vld [vmem:[%s4598 + $0x82] sm:$0xff]
      %v4739 = vld [vmem:[%s4598 + $0x92] sm:$0xff]
      %v4740 = vld [vmem:[%s4598 + $0x9a] sm:$0xff]
      %v4741 = vld [vmem:[%s4598 + $0xaa] sm:$0xff]
      %v4742 = vld [vmem:[%s4598 + $0xb2] sm:$0xff]
      %s4743 = scalar_lea.vmem [#allocation2], 216
      %v4744 = vld [vmem:[%s4743] sm:$0xff]
      %v4745 = vld [vmem:[%s4743 + $0x8] sm:$0xff]
      %v4746 = vld [vmem:[%s4743 + $0x18] sm:$0xff]
      %v4747 = vld [vmem:[%s4743 + $0x20] sm:$0xff]
      %v4748 = vld [vmem:[%s4743 + $0x30] sm:$0xff]
      %v4749 = vld [vmem:[%s4743 + $0x38] sm:$0xff]
      %v4750 = vld [vmem:[%s4743 + $0x48] sm:$0xff]
      %v4751 = vld [vmem:[%s4743 + $0x50] sm:$0xff]
      %v4752 = vld [vmem:[%s4743 + $0x60] sm:$0xff]
      %v4753 = vld [vmem:[%s4743 + $0x68] sm:$0xff]
      %v4754 = vld [vmem:[%s4743 + $0x78] sm:$0xff]
      %v4755 = vld [vmem:[%s4743 + $0x80] sm:$0xff]
      %v4756 = vld [vmem:[%s4743 + $0x90] sm:$0xff]
      %v4757 = vld [vmem:[%s4743 + $0x98] sm:$0xff]
      %v4758 = vld [vmem:[%s4743 + $0xa8] sm:$0xff]
      %v4759 = vld [vmem:[%s4743 + $0xb0] sm:$0xff]
      %4776 = vrot.lane.b32.xlu0 %v4744, 64
      %v4777 = vpop.permute.xlu0 %4776
      %4778 = vrot.lane.b32.xlu0 %v4745, 64
      %v4779 = vpop.permute.xlu0 %4778
      %4780 = vrot.lane.b32.xlu0 %v4746, 64
      %v4781 = vpop.permute.xlu0 %4780
      %4782 = vrot.lane.b32.xlu0 %v4747, 64
      %v4783 = vpop.permute.xlu0 %4782
      %4784 = vrot.lane.b32.xlu0 %v4748, 64
      %v4785 = vpop.permute.xlu0 %4784
      %4786 = vrot.lane.b32.xlu0 %v4749, 64
      %v4787 = vpop.permute.xlu0 %4786
      %4788 = vrot.lane.b32.xlu0 %v4750, 64
      %v4789 = vpop.permute.xlu0 %4788
      %4790 = vrot.lane.b32.xlu0 %v4751, 64
      %v4791 = vpop.permute.xlu0 %4790
      %4792 = vrot.lane.b32.xlu0 %v4752, 64
      %v4793 = vpop.permute.xlu0 %4792
      %4794 = vrot.lane.b32.xlu0 %v4753, 64
      %v4795 = vpop.permute.xlu0 %4794
      %4796 = vrot.lane.b32.xlu0 %v4754, 64
      %v4797 = vpop.permute.xlu0 %4796
      %4798 = vrot.lane.b32.xlu0 %v4755, 64
      %v4799 = vpop.permute.xlu0 %4798
      %4800 = vrot.lane.b32.xlu0 %v4756, 64
      %v4801 = vpop.permute.xlu0 %4800
      %4802 = vrot.lane.b32.xlu0 %v4757, 64
      %v4803 = vpop.permute.xlu0 %4802
      %4804 = vrot.lane.b32.xlu0 %v4758, 64
      %v4805 = vpop.permute.xlu0 %4804
      %4806 = vrot.lane.b32.xlu0 %v4759, 64
      %v4807 = vpop.permute.xlu0 %4806
      %v4824 = vsel %vm1878, %v4727, %v4777
      %v4825 = vsel %vm1878, %v4728, %v4779
      %v4826 = vsel %vm1878, %v4729, %v4781
      %v4827 = vsel %vm1878, %v4730, %v4783
      %v4828 = vsel %vm1878, %v4731, %v4785
      %v4829 = vsel %vm1878, %v4732, %v4787
      %v4830 = vsel %vm1878, %v4733, %v4789
      %v4831 = vsel %vm1878, %v4734, %v4791
      %v4832 = vsel %vm1878, %v4735, %v4793
      %v4833 = vsel %vm1878, %v4736, %v4795
      %v4834 = vsel %vm1878, %v4737, %v4797
      %v4835 = vsel %vm1878, %v4738, %v4799
      %v4836 = vsel %vm1878, %v4739, %v4801
      %v4837 = vsel %vm1878, %v4740, %v4803
      %v4838 = vsel %vm1878, %v4741, %v4805
      %v4839 = vsel %vm1878, %v4742, %v4807
      %4840 = vst [vmem:[#allocation3 + $0x288] sm:$0xff] %v4824
      %4841 = vst [vmem:[#allocation3 + $0x2b0] sm:$0xff] %v4825
      %4842 = vst [vmem:[#allocation3 + $0x2d8] sm:$0xff] %v4826
      %4843 = vst [vmem:[#allocation3 + $0x300] sm:$0xff] %v4827
      %4844 = vst [vmem:[#allocation3 + $0x328] sm:$0xff] %v4828
      %4845 = vst [vmem:[#allocation3 + $0x350] sm:$0xff] %v4829
      %4846 = vst [vmem:[#allocation3 + $0x378] sm:$0xff] %v4830
      %4847 = vst [vmem:[#allocation3 + $0x3a0] sm:$0xff] %v4831
      %4848 = vst [vmem:[#allocation3 + $0x3c8] sm:$0xff] %v4832
      %4849 = vst [vmem:[#allocation3 + $0x3f0] sm:$0xff] %v4833
      %4850 = vst [vmem:[#allocation3 + $0x418] sm:$0xff] %v4834
      %4851 = vst [vmem:[#allocation3 + $0x440] sm:$0xff] %v4835
      %4852 = vst [vmem:[#allocation3 + $0x468] sm:$0xff] %v4836
      %4853 = vst [vmem:[#allocation3 + $0x490] sm:$0xff] %v4837
      %4854 = vst [vmem:[#allocation3 + $0x4b8] sm:$0xff] %v4838
      %4855 = vst [vmem:[#allocation3 + $0x4e0] sm:$0xff] %v4839
      %v4856 = vld [vmem:[%s4743 + $0x1] sm:$0xff]
      %v4857 = vld [vmem:[%s4743 + $0x9] sm:$0xff]
      %v4858 = vld [vmem:[%s4743 + $0x19] sm:$0xff]
      %v4859 = vld [vmem:[%s4743 + $0x21] sm:$0xff]
      %v4860 = vld [vmem:[%s4743 + $0x31] sm:$0xff]
      %v4861 = vld [vmem:[%s4743 + $0x39] sm:$0xff]
      %v4862 = vld [vmem:[%s4743 + $0x49] sm:$0xff]
      %v4863 = vld [vmem:[%s4743 + $0x51] sm:$0xff]
      %v4864 = vld [vmem:[%s4743 + $0x61] sm:$0xff]
      %v4865 = vld [vmem:[%s4743 + $0x69] sm:$0xff]
      %v4866 = vld [vmem:[%s4743 + $0x79] sm:$0xff]
      %v4867 = vld [vmem:[%s4743 + $0x81] sm:$0xff]
      %v4868 = vld [vmem:[%s4743 + $0x91] sm:$0xff]
      %v4869 = vld [vmem:[%s4743 + $0x99] sm:$0xff]
      %v4870 = vld [vmem:[%s4743 + $0xa9] sm:$0xff]
      %v4871 = vld [vmem:[%s4743 + $0xb1] sm:$0xff]
      %v4872 = vld [vmem:[%s4743 + $0x2] sm:$0xff]
      %v4873 = vld [vmem:[%s4743 + $0xa] sm:$0xff]
      %v4874 = vld [vmem:[%s4743 + $0x1a] sm:$0xff]
      %v4875 = vld [vmem:[%s4743 + $0x22] sm:$0xff]
      %v4876 = vld [vmem:[%s4743 + $0x32] sm:$0xff]
      %v4877 = vld [vmem:[%s4743 + $0x3a] sm:$0xff]
      %v4878 = vld [vmem:[%s4743 + $0x4a] sm:$0xff]
      %v4879 = vld [vmem:[%s4743 + $0x52] sm:$0xff]
      %v4880 = vld [vmem:[%s4743 + $0x62] sm:$0xff]
      %v4881 = vld [vmem:[%s4743 + $0x6a] sm:$0xff]
      %v4882 = vld [vmem:[%s4743 + $0x7a] sm:$0xff]
      %v4883 = vld [vmem:[%s4743 + $0x82] sm:$0xff]
      %v4884 = vld [vmem:[%s4743 + $0x92] sm:$0xff]
      %v4885 = vld [vmem:[%s4743 + $0x9a] sm:$0xff]
      %v4886 = vld [vmem:[%s4743 + $0xaa] sm:$0xff]
      %v4887 = vld [vmem:[%s4743 + $0xb2] sm:$0xff]
      %4904 = vrot.lane.b32.xlu0 %v4872, 64
      %v4905 = vpop.permute.xlu0 %4904
      %4906 = vrot.lane.b32.xlu0 %v4873, 64
      %v4907 = vpop.permute.xlu0 %4906
      %4908 = vrot.lane.b32.xlu0 %v4874, 64
      %v4909 = vpop.permute.xlu0 %4908
      %4910 = vrot.lane.b32.xlu0 %v4875, 64
      %v4911 = vpop.permute.xlu0 %4910
      %4912 = vrot.lane.b32.xlu0 %v4876, 64
      %v4913 = vpop.permute.xlu0 %4912
      %4914 = vrot.lane.b32.xlu0 %v4877, 64
      %v4915 = vpop.permute.xlu0 %4914
      %4916 = vrot.lane.b32.xlu0 %v4878, 64
      %v4917 = vpop.permute.xlu0 %4916
      %4918 = vrot.lane.b32.xlu0 %v4879, 64
      %v4919 = vpop.permute.xlu0 %4918
      %4920 = vrot.lane.b32.xlu0 %v4880, 64
      %v4921 = vpop.permute.xlu0 %4920
      %4922 = vrot.lane.b32.xlu0 %v4881, 64
      %v4923 = vpop.permute.xlu0 %4922
      %4924 = vrot.lane.b32.xlu0 %v4882, 64
      %v4925 = vpop.permute.xlu0 %4924
      %4926 = vrot.lane.b32.xlu0 %v4883, 64
      %v4927 = vpop.permute.xlu0 %4926
      %4928 = vrot.lane.b32.xlu0 %v4884, 64
      %v4929 = vpop.permute.xlu0 %4928
      %4930 = vrot.lane.b32.xlu0 %v4885, 64
      %v4931 = vpop.permute.xlu0 %4930
      %4932 = vrot.lane.b32.xlu0 %v4886, 64
      %v4933 = vpop.permute.xlu0 %4932
      %4934 = vrot.lane.b32.xlu0 %v4887, 64
      %v4935 = vpop.permute.xlu0 %4934
      %v4952 = vsel %vm1878, %v4856, %v4905
      %v4953 = vsel %vm1878, %v4857, %v4907
      %v4954 = vsel %vm1878, %v4858, %v4909
      %v4955 = vsel %vm1878, %v4859, %v4911
      %v4956 = vsel %vm1878, %v4860, %v4913
      %v4957 = vsel %vm1878, %v4861, %v4915
      %v4958 = vsel %vm1878, %v4862, %v4917
      %v4959 = vsel %vm1878, %v4863, %v4919
      %v4960 = vsel %vm1878, %v4864, %v4921
      %v4961 = vsel %vm1878, %v4865, %v4923
      %v4962 = vsel %vm1878, %v4866, %v4925
      %v4963 = vsel %vm1878, %v4867, %v4927
      %v4964 = vsel %vm1878, %v4868, %v4929
      %v4965 = vsel %vm1878, %v4869, %v4931
      %v4966 = vsel %vm1878, %v4870, %v4933
      %v4967 = vsel %vm1878, %v4871, %v4935
      %4968 = vst [vmem:[#allocation3 + $0x290] sm:$0xff] %v4952
      %4969 = vst [vmem:[#allocation3 + $0x2b8] sm:$0xff] %v4953
      %4970 = vst [vmem:[#allocation3 + $0x2e0] sm:$0xff] %v4954
      %4971 = vst [vmem:[#allocation3 + $0x308] sm:$0xff] %v4955
      %4972 = vst [vmem:[#allocation3 + $0x330] sm:$0xff] %v4956
      %4973 = vst [vmem:[#allocation3 + $0x358] sm:$0xff] %v4957
      %4974 = vst [vmem:[#allocation3 + $0x380] sm:$0xff] %v4958
      %4975 = vst [vmem:[#allocation3 + $0x3a8] sm:$0xff] %v4959
      %4976 = vst [vmem:[#allocation3 + $0x3d0] sm:$0xff] %v4960
      %4977 = vst [vmem:[#allocation3 + $0x3f8] sm:$0xff] %v4961
      %4978 = vst [vmem:[#allocation3 + $0x420] sm:$0xff] %v4962
      %4979 = vst [vmem:[#allocation3 + $0x448] sm:$0xff] %v4963
      %4980 = vst [vmem:[#allocation3 + $0x470] sm:$0xff] %v4964
      %4981 = vst [vmem:[#allocation3 + $0x498] sm:$0xff] %v4965
      %4982 = vst [vmem:[#allocation3 + $0x4c0] sm:$0xff] %v4966
      %4983 = vst [vmem:[#allocation3 + $0x4e8] sm:$0xff] %v4967
      %s4984 = scalar_lea.vmem [#allocation2], 240
      %v4985 = vld [vmem:[%s4984] sm:$0xff]
      %v4986 = vld [vmem:[%s4984 + $0x8] sm:$0xff]
      %v4987 = vld [vmem:[%s4984 + $0x18] sm:$0xff]
      %v4988 = vld [vmem:[%s4984 + $0x20] sm:$0xff]
      %v4989 = vld [vmem:[%s4984 + $0x30] sm:$0xff]
      %v4990 = vld [vmem:[%s4984 + $0x38] sm:$0xff]
      %v4991 = vld [vmem:[%s4984 + $0x48] sm:$0xff]
      %v4992 = vld [vmem:[%s4984 + $0x50] sm:$0xff]
      %v4993 = vld [vmem:[%s4984 + $0x60] sm:$0xff]
      %v4994 = vld [vmem:[%s4984 + $0x68] sm:$0xff]
      %v4995 = vld [vmem:[%s4984 + $0x78] sm:$0xff]
      %v4996 = vld [vmem:[%s4984 + $0x80] sm:$0xff]
      %v4997 = vld [vmem:[%s4984 + $0x90] sm:$0xff]
      %v4998 = vld [vmem:[%s4984 + $0x98] sm:$0xff]
      %v4999 = vld [vmem:[%s4984 + $0xa8] sm:$0xff]
      %v5000 = vld [vmem:[%s4984 + $0xb0] sm:$0xff]
      %v5001 = vld [vmem:[%s4984 + $0x1] sm:$0xff]
      %v5002 = vld [vmem:[%s4984 + $0x9] sm:$0xff]
      %v5003 = vld [vmem:[%s4984 + $0x19] sm:$0xff]
      %v5004 = vld [vmem:[%s4984 + $0x21] sm:$0xff]
      %v5005 = vld [vmem:[%s4984 + $0x31] sm:$0xff]
      %v5006 = vld [vmem:[%s4984 + $0x39] sm:$0xff]
      %v5007 = vld [vmem:[%s4984 + $0x49] sm:$0xff]
      %v5008 = vld [vmem:[%s4984 + $0x51] sm:$0xff]
      %v5009 = vld [vmem:[%s4984 + $0x61] sm:$0xff]
      %v5010 = vld [vmem:[%s4984 + $0x69] sm:$0xff]
      %v5011 = vld [vmem:[%s4984 + $0x79] sm:$0xff]
      %v5012 = vld [vmem:[%s4984 + $0x81] sm:$0xff]
      %v5013 = vld [vmem:[%s4984 + $0x91] sm:$0xff]
      %v5014 = vld [vmem:[%s4984 + $0x99] sm:$0xff]
      %v5015 = vld [vmem:[%s4984 + $0xa9] sm:$0xff]
      %v5016 = vld [vmem:[%s4984 + $0xb1] sm:$0xff]
      %5033 = vrot.lane.b32.xlu0 %v5001, 64
      %v5034 = vpop.permute.xlu0 %5033
      %5035 = vrot.lane.b32.xlu0 %v5002, 64
      %v5036 = vpop.permute.xlu0 %5035
      %5037 = vrot.lane.b32.xlu0 %v5003, 64
      %v5038 = vpop.permute.xlu0 %5037
      %5039 = vrot.lane.b32.xlu0 %v5004, 64
      %v5040 = vpop.permute.xlu0 %5039
      %5041 = vrot.lane.b32.xlu0 %v5005, 64
      %v5042 = vpop.permute.xlu0 %5041
      %5043 = vrot.lane.b32.xlu0 %v5006, 64
      %v5044 = vpop.permute.xlu0 %5043
      %5045 = vrot.lane.b32.xlu0 %v5007, 64
      %v5046 = vpop.permute.xlu0 %5045
      %5047 = vrot.lane.b32.xlu0 %v5008, 64
      %v5048 = vpop.permute.xlu0 %5047
      %5049 = vrot.lane.b32.xlu0 %v5009, 64
      %v5050 = vpop.permute.xlu0 %5049
      %5051 = vrot.lane.b32.xlu0 %v5010, 64
      %v5052 = vpop.permute.xlu0 %5051
      %5053 = vrot.lane.b32.xlu0 %v5011, 64
      %v5054 = vpop.permute.xlu0 %5053
      %5055 = vrot.lane.b32.xlu0 %v5012, 64
      %v5056 = vpop.permute.xlu0 %5055
      %5057 = vrot.lane.b32.xlu0 %v5013, 64
      %v5058 = vpop.permute.xlu0 %5057
      %5059 = vrot.lane.b32.xlu0 %v5014, 64
      %v5060 = vpop.permute.xlu0 %5059
      %5061 = vrot.lane.b32.xlu0 %v5015, 64
      %v5062 = vpop.permute.xlu0 %5061
      %5063 = vrot.lane.b32.xlu0 %v5016, 64
      %v5064 = vpop.permute.xlu0 %5063
      %v5081 = vsel %vm1878, %v4985, %v5034
      %v5082 = vsel %vm1878, %v4986, %v5036
      %v5083 = vsel %vm1878, %v4987, %v5038
      %v5084 = vsel %vm1878, %v4988, %v5040
      %v5085 = vsel %vm1878, %v4989, %v5042
      %v5086 = vsel %vm1878, %v4990, %v5044
      %v5087 = vsel %vm1878, %v4991, %v5046
      %v5088 = vsel %vm1878, %v4992, %v5048
      %v5089 = vsel %vm1878, %v4993, %v5050
      %v5090 = vsel %vm1878, %v4994, %v5052
      %v5091 = vsel %vm1878, %v4995, %v5054
      %v5092 = vsel %vm1878, %v4996, %v5056
      %v5093 = vsel %vm1878, %v4997, %v5058
      %v5094 = vsel %vm1878, %v4998, %v5060
      %v5095 = vsel %vm1878, %v4999, %v5062
      %v5096 = vsel %vm1878, %v5000, %v5064
      %5097 = vst [vmem:[#allocation3 + $0x298] sm:$0xff] %v5081
      %5098 = vst [vmem:[#allocation3 + $0x2c0] sm:$0xff] %v5082
      %5099 = vst [vmem:[#allocation3 + $0x2e8] sm:$0xff] %v5083
      %5100 = vst [vmem:[#allocation3 + $0x310] sm:$0xff] %v5084
      %5101 = vst [vmem:[#allocation3 + $0x338] sm:$0xff] %v5085
      %5102 = vst [vmem:[#allocation3 + $0x360] sm:$0xff] %v5086
      %5103 = vst [vmem:[#allocation3 + $0x388] sm:$0xff] %v5087
      %5104 = vst [vmem:[#allocation3 + $0x3b0] sm:$0xff] %v5088
      %5105 = vst [vmem:[#allocation3 + $0x3d8] sm:$0xff] %v5089
      %5106 = vst [vmem:[#allocation3 + $0x400] sm:$0xff] %v5090
      %5107 = vst [vmem:[#allocation3 + $0x428] sm:$0xff] %v5091
      %5108 = vst [vmem:[#allocation3 + $0x450] sm:$0xff] %v5092
      %5109 = vst [vmem:[#allocation3 + $0x478] sm:$0xff] %v5093
      %5110 = vst [vmem:[#allocation3 + $0x4a0] sm:$0xff] %v5094
      %5111 = vst [vmem:[#allocation3 + $0x4c8] sm:$0xff] %v5095
      %5112 = vst [vmem:[#allocation3 + $0x4f0] sm:$0xff] %v5096
      %v5113 = vld [vmem:[%s4984 + $0x2] sm:$0xff]
      %v5114 = vld [vmem:[%s4984 + $0xa] sm:$0xff]
      %v5115 = vld [vmem:[%s4984 + $0x1a] sm:$0xff]
      %v5116 = vld [vmem:[%s4984 + $0x22] sm:$0xff]
      %v5117 = vld [vmem:[%s4984 + $0x32] sm:$0xff]
      %v5118 = vld [vmem:[%s4984 + $0x3a] sm:$0xff]
      %v5119 = vld [vmem:[%s4984 + $0x4a] sm:$0xff]
      %v5120 = vld [vmem:[%s4984 + $0x52] sm:$0xff]
      %v5121 = vld [vmem:[%s4984 + $0x62] sm:$0xff]
      %v5122 = vld [vmem:[%s4984 + $0x6a] sm:$0xff]
      %v5123 = vld [vmem:[%s4984 + $0x7a] sm:$0xff]
      %v5124 = vld [vmem:[%s4984 + $0x82] sm:$0xff]
      %v5125 = vld [vmem:[%s4984 + $0x92] sm:$0xff]
      %v5126 = vld [vmem:[%s4984 + $0x9a] sm:$0xff]
      %v5127 = vld [vmem:[%s4984 + $0xaa] sm:$0xff]
      %v5128 = vld [vmem:[%s4984 + $0xb2] sm:$0xff]
      %5129 = vst.msk [vmem:[#allocation3 + $0x2a0] sm:$0xff] %vm1878, %v5113
      %5130 = vst.msk [vmem:[#allocation3 + $0x2c8] sm:$0xff] %vm1878, %v5114
      %5131 = vst.msk [vmem:[#allocation3 + $0x2f0] sm:$0xff] %vm1878, %v5115
      %5132 = vst.msk [vmem:[#allocation3 + $0x318] sm:$0xff] %vm1878, %v5116
      %5133 = vst.msk [vmem:[#allocation3 + $0x340] sm:$0xff] %vm1878, %v5117
      %5134 = vst.msk [vmem:[#allocation3 + $0x368] sm:$0xff] %vm1878, %v5118
      %5135 = vst.msk [vmem:[#allocation3 + $0x390] sm:$0xff] %vm1878, %v5119
      %5136 = vst.msk [vmem:[#allocation3 + $0x3b8] sm:$0xff] %vm1878, %v5120
      %5137 = vst.msk [vmem:[#allocation3 + $0x3e0] sm:$0xff] %vm1878, %v5121
      %5138 = vst.msk [vmem:[#allocation3 + $0x408] sm:$0xff] %vm1878, %v5122
      %5139 = vst.msk [vmem:[#allocation3 + $0x430] sm:$0xff] %vm1878, %v5123
      %5140 = vst.msk [vmem:[#allocation3 + $0x458] sm:$0xff] %vm1878, %v5124
      %5141 = vst.msk [vmem:[#allocation3 + $0x480] sm:$0xff] %vm1878, %v5125
      %5142 = vst.msk [vmem:[#allocation3 + $0x4a8] sm:$0xff] %vm1878, %v5126
      %5143 = vst.msk [vmem:[#allocation3 + $0x4d0] sm:$0xff] %vm1878, %v5127
      %5144 = vst.msk [vmem:[#allocation3 + $0x4f8] sm:$0xff] %vm1878, %v5128
      %v5145 = vld [vmem:[#allocation3 + $0x280] sm:$0xff]
      %v5146 = vld [vmem:[#allocation3 + $0x288] sm:$0xff]
      %v5147 = vld [vmem:[#allocation3 + $0x290] sm:$0xff]
      %v5148 = vld [vmem:[#allocation3 + $0x298] sm:$0xff]
      %v5149 = vld [vmem:[#allocation3 + $0x2a0] sm:$0xff]
      %v5150 = vld [vmem:[#allocation3 + $0x2a8] sm:$0xff]
      %v5151 = vld [vmem:[#allocation3 + $0x2b0] sm:$0xff]
      %v5152 = vld [vmem:[#allocation3 + $0x2b8] sm:$0xff]
      %v5153 = vld [vmem:[#allocation3 + $0x2c0] sm:$0xff]
      %v5154 = vld [vmem:[#allocation3 + $0x2c8] sm:$0xff]
      %v5155 = vld [vmem:[#allocation3 + $0x2d0] sm:$0xff]
      %v5156 = vld [vmem:[#allocation3 + $0x2d8] sm:$0xff]
      %v5157 = vld [vmem:[#allocation3 + $0x2e0] sm:$0xff]
      %v5158 = vld [vmem:[#allocation3 + $0x2e8] sm:$0xff]
      %v5159 = vld [vmem:[#allocation3 + $0x2f0] sm:$0xff]
      %v5160 = vld [vmem:[#allocation3 + $0x2f8] sm:$0xff]
      %v5161 = vld [vmem:[#allocation3 + $0x300] sm:$0xff]
      %v5162 = vld [vmem:[#allocation3 + $0x308] sm:$0xff]
      %v5163 = vld [vmem:[#allocation3 + $0x310] sm:$0xff]
      %v5164 = vld [vmem:[#allocation3 + $0x318] sm:$0xff]
      %v5165 = vld [vmem:[#allocation3 + $0x320] sm:$0xff]
      %v5166 = vld [vmem:[#allocation3 + $0x328] sm:$0xff]
      %v5167 = vld [vmem:[#allocation3 + $0x330] sm:$0xff]
      %v5168 = vld [vmem:[#allocation3 + $0x338] sm:$0xff]
      %v5169 = vld [vmem:[#allocation3 + $0x340] sm:$0xff]
      %v5170 = vld [vmem:[#allocation3 + $0x348] sm:$0xff]
      %v5171 = vld [vmem:[#allocation3 + $0x350] sm:$0xff]
      %v5172 = vld [vmem:[#allocation3 + $0x358] sm:$0xff]
      %v5173 = vld [vmem:[#allocation3 + $0x360] sm:$0xff]
      %v5174 = vld [vmem:[#allocation3 + $0x368] sm:$0xff]
      %v5175 = vld [vmem:[#allocation3 + $0x370] sm:$0xff]
      %v5176 = vld [vmem:[#allocation3 + $0x378] sm:$0xff]
      %v5177 = vld [vmem:[#allocation3 + $0x380] sm:$0xff]
      %v5178 = vld [vmem:[#allocation3 + $0x388] sm:$0xff]
      %v5179 = vld [vmem:[#allocation3 + $0x390] sm:$0xff]
      %v5180 = vld [vmem:[#allocation3 + $0x398] sm:$0xff]
      %v5181 = vld [vmem:[#allocation3 + $0x3a0] sm:$0xff]
      %v5182 = vld [vmem:[#allocation3 + $0x3a8] sm:$0xff]
      %v5183 = vld [vmem:[#allocation3 + $0x3b0] sm:$0xff]
      %v5184 = vld [vmem:[#allocation3 + $0x3b8] sm:$0xff]
      %v5185 = vld [vmem:[#allocation3 + $0x3c0] sm:$0xff]
      %v5186 = vld [vmem:[#allocation3 + $0x3c8] sm:$0xff]
      %v5187 = vld [vmem:[#allocation3 + $0x3d0] sm:$0xff]
      %v5188 = vld [vmem:[#allocation3 + $0x3d8] sm:$0xff]
      %v5189 = vld [vmem:[#allocation3 + $0x3e0] sm:$0xff]
      %v5190 = vld [vmem:[#allocation3 + $0x3e8] sm:$0xff]
      %v5191 = vld [vmem:[#allocation3 + $0x3f0] sm:$0xff]
      %v5192 = vld [vmem:[#allocation3 + $0x3f8] sm:$0xff]
      %v5193 = vld [vmem:[#allocation3 + $0x400] sm:$0xff]
      %v5194 = vld [vmem:[#allocation3 + $0x408] sm:$0xff]
      %v5195 = vld [vmem:[#allocation3 + $0x410] sm:$0xff]
      %v5196 = vld [vmem:[#allocation3 + $0x418] sm:$0xff]
      %v5197 = vld [vmem:[#allocation3 + $0x420] sm:$0xff]
      %v5198 = vld [vmem:[#allocation3 + $0x428] sm:$0xff]
      %v5199 = vld [vmem:[#allocation3 + $0x430] sm:$0xff]
      %v5200 = vld [vmem:[#allocation3 + $0x438] sm:$0xff]
      %v5201 = vld [vmem:[#allocation3 + $0x440] sm:$0xff]
      %v5202 = vld [vmem:[#allocation3 + $0x448] sm:$0xff]
      %v5203 = vld [vmem:[#allocation3 + $0x450] sm:$0xff]
      %v5204 = vld [vmem:[#allocation3 + $0x458] sm:$0xff]
      %v5205 = vld [vmem:[#allocation3 + $0x460] sm:$0xff]
      %v5206 = vld [vmem:[#allocation3 + $0x468] sm:$0xff]
      %v5207 = vld [vmem:[#allocation3 + $0x470] sm:$0xff]
      %v5208 = vld [vmem:[#allocation3 + $0x478] sm:$0xff]
      %v5209 = vld [vmem:[#allocation3 + $0x480] sm:$0xff]
      %v5210 = vld [vmem:[#allocation3 + $0x488] sm:$0xff]
      %v5211 = vld [vmem:[#allocation3 + $0x490] sm:$0xff]
      %v5212 = vld [vmem:[#allocation3 + $0x498] sm:$0xff]
      %v5213 = vld [vmem:[#allocation3 + $0x4a0] sm:$0xff]
      %v5214 = vld [vmem:[#allocation3 + $0x4a8] sm:$0xff]
      %v5215 = vld [vmem:[#allocation3 + $0x4b0] sm:$0xff]
      %v5216 = vld [vmem:[#allocation3 + $0x4b8] sm:$0xff]
      %v5217 = vld [vmem:[#allocation3 + $0x4c0] sm:$0xff]
      %v5218 = vld [vmem:[#allocation3 + $0x4c8] sm:$0xff]
      %v5219 = vld [vmem:[#allocation3 + $0x4d0] sm:$0xff]
      %v5220 = vld [vmem:[#allocation3 + $0x4d8] sm:$0xff]
      %v5221 = vld [vmem:[#allocation3 + $0x4e0] sm:$0xff]
      %v5222 = vld [vmem:[#allocation3 + $0x4e8] sm:$0xff]
      %v5223 = vld [vmem:[#allocation3 + $0x4f0] sm:$0xff]
      %v5224 = vld [vmem:[#allocation3 + $0x4f8] sm:$0xff]
      %v5225 = vld [vmem:[%s3] sm:$0xff]
      %v5226 = vld [vmem:[%s3 + $0x8] sm:$0xff]
      %v5227 = vld [vmem:[%s3 + $0x10] sm:$0xff]
      %v5228 = vld [vmem:[%s3 + $0x18] sm:$0xff]
      %v5229 = vld [vmem:[%s3 + $0x20] sm:$0xff]
      %v5230 = vld [vmem:[%s3 + $0x28] sm:$0xff]
      %v5231 = vld [vmem:[%s3 + $0x30] sm:$0xff]
      %v5232 = vld [vmem:[%s3 + $0x38] sm:$0xff]
      %v5233 = vld [vmem:[%s3 + $0x40] sm:$0xff]
      %v5234 = vld [vmem:[%s3 + $0x48] sm:$0xff]
      %v5235 = vld [vmem:[%s3 + $0x50] sm:$0xff]
      %v5236 = vld [vmem:[%s3 + $0x58] sm:$0xff]
      %v5237 = vld [vmem:[%s3 + $0x60] sm:$0xff]
      %v5238 = vld [vmem:[%s3 + $0x68] sm:$0xff]
      %v5239 = vld [vmem:[%s3 + $0x70] sm:$0xff]
      %v5240 = vld [vmem:[%s3 + $0x78] sm:$0xff]
      %v5241 = vld [vmem:[%s3 + $0x80] sm:$0xff]
      %v5242 = vld [vmem:[%s3 + $0x88] sm:$0xff]
      %v5243 = vld [vmem:[%s3 + $0x90] sm:$0xff]
      %v5244 = vld [vmem:[%s3 + $0x98] sm:$0xff]
      %v5245 = vld [vmem:[%s3 + $0xa0] sm:$0xff]
      %v5246 = vld [vmem:[%s3 + $0xa8] sm:$0xff]
      %v5247 = vld [vmem:[%s3 + $0xb0] sm:$0xff]
      %v5248 = vld [vmem:[%s3 + $0xb8] sm:$0xff]
      %v5249 = vld [vmem:[%s3 + $0xc0] sm:$0xff]
      %v5250 = vld [vmem:[%s3 + $0xc8] sm:$0xff]
      %v5251 = vld [vmem:[%s3 + $0xd0] sm:$0xff]
      %v5252 = vld [vmem:[%s3 + $0xd8] sm:$0xff]
      %v5253 = vld [vmem:[%s3 + $0xe0] sm:$0xff]
      %v5254 = vld [vmem:[%s3 + $0xe8] sm:$0xff]
      %v5255 = vld [vmem:[%s3 + $0xf0] sm:$0xff]
      %v5256 = vld [vmem:[%s3 + $0xf8] sm:$0xff]
      %v5257 = vld [vmem:[%s3 + $0x100] sm:$0xff]
      %v5258 = vld [vmem:[%s3 + $0x108] sm:$0xff]
      %v5259 = vld [vmem:[%s3 + $0x110] sm:$0xff]
      %v5260 = vld [vmem:[%s3 + $0x118] sm:$0xff]
      %v5261 = vld [vmem:[%s3 + $0x120] sm:$0xff]
      %v5262 = vld [vmem:[%s3 + $0x128] sm:$0xff]
      %v5263 = vld [vmem:[%s3 + $0x130] sm:$0xff]
      %v5264 = vld [vmem:[%s3 + $0x138] sm:$0xff]
      %v5265 = vld [vmem:[%s3 + $0x140] sm:$0xff]
      %v5266 = vld [vmem:[%s3 + $0x148] sm:$0xff]
      %v5267 = vld [vmem:[%s3 + $0x150] sm:$0xff]
      %v5268 = vld [vmem:[%s3 + $0x158] sm:$0xff]
      %v5269 = vld [vmem:[%s3 + $0x160] sm:$0xff]
      %v5270 = vld [vmem:[%s3 + $0x168] sm:$0xff]
      %v5271 = vld [vmem:[%s3 + $0x170] sm:$0xff]
      %v5272 = vld [vmem:[%s3 + $0x178] sm:$0xff]
      %v5273 = vld [vmem:[%s3 + $0x180] sm:$0xff]
      %v5274 = vld [vmem:[%s3 + $0x188] sm:$0xff]
      %v5275 = vld [vmem:[%s3 + $0x190] sm:$0xff]
      %v5276 = vld [vmem:[%s3 + $0x198] sm:$0xff]
      %v5277 = vld [vmem:[%s3 + $0x1a0] sm:$0xff]
      %v5278 = vld [vmem:[%s3 + $0x1a8] sm:$0xff]
      %v5279 = vld [vmem:[%s3 + $0x1b0] sm:$0xff]
      %v5280 = vld [vmem:[%s3 + $0x1b8] sm:$0xff]
      %v5281 = vld [vmem:[%s3 + $0x1c0] sm:$0xff]
      %v5282 = vld [vmem:[%s3 + $0x1c8] sm:$0xff]
      %v5283 = vld [vmem:[%s3 + $0x1d0] sm:$0xff]
      %v5284 = vld [vmem:[%s3 + $0x1d8] sm:$0xff]
      %v5285 = vld [vmem:[%s3 + $0x1e0] sm:$0xff]
      %v5286 = vld [vmem:[%s3 + $0x1e8] sm:$0xff]
      %v5287 = vld [vmem:[%s3 + $0x1f0] sm:$0xff]
      %v5288 = vld [vmem:[%s3 + $0x1f8] sm:$0xff]
      %v5289 = vld [vmem:[%s3 + $0x200] sm:$0xff]
      %v5290 = vld [vmem:[%s3 + $0x208] sm:$0xff]
      %v5291 = vld [vmem:[%s3 + $0x210] sm:$0xff]
      %v5292 = vld [vmem:[%s3 + $0x218] sm:$0xff]
      %v5293 = vld [vmem:[%s3 + $0x220] sm:$0xff]
      %v5294 = vld [vmem:[%s3 + $0x228] sm:$0xff]
      %v5295 = vld [vmem:[%s3 + $0x230] sm:$0xff]
      %v5296 = vld [vmem:[%s3 + $0x238] sm:$0xff]
      %v5297 = vld [vmem:[%s4] sm:$0x1]
      %v5299 = vlaneseq
      %v5300 = vshrl.u32 %v5299, 7
      %v5301 = vsub.s32 0, %v5300
      %v5302 = vrot.slane %v5297, %v5301
      %v5305 = vsel %vm1878, %v5149, 0
      %v5308 = vsel %vm1878, %v5154, 0
      %v5311 = vsel %vm1878, %v5159, 0
      %v5314 = vsel %vm1878, %v5164, 0
      %v5317 = vsel %vm1878, %v5169, 0
      %v5320 = vsel %vm1878, %v5174, 0
      %v5323 = vsel %vm1878, %v5179, 0
      %v5326 = vsel %vm1878, %v5184, 0
      %v5329 = vsel %vm1878, %v5189, 0
      %v5332 = vsel %vm1878, %v5194, 0
      %v5335 = vsel %vm1878, %v5199, 0
      %v5338 = vsel %vm1878, %v5204, 0
      %v5341 = vsel %vm1878, %v5209, 0
      %v5344 = vsel %vm1878, %v5214, 0
      %v5347 = vsel %vm1878, %v5219, 0
      %v5350 = vsel %vm1878, %v5224, 0
      %5352 = vmatprep.subr.mxu0 0.0
      %5353 = vmatpush1.msra.mxu0 %v5240
      %5354 = vmatprep.subr.mxu0 0.0
      %5355 = vmatpush1.msra.mxu0 %v5239
      %5356 = vmatprep.subr.mxu0 0.0
      %5357 = vmatpush1.msra.mxu0 %v5238
      %5358 = vmatprep.subr.mxu0 0.0
      %5359 = vmatpush1.msra.mxu0 %v5237
      %5360 = vmatprep.subr.mxu0 0.0
      %5361 = vmatpush1.msra.mxu0 %v5236
      %5362 = vmatprep.subr.mxu0 0.0
      %5363 = vmatpush1.msra.mxu0 %v5235
      %5364 = vmatprep.subr.mxu0 0.0
      %5365 = vmatpush1.msra.mxu0 %v5234
      %5366 = vmatprep.subr.mxu0 0.0
      %5367 = vmatpush1.msra.mxu0 %v5233
      %5368 = vmatprep.subr.mxu0 0.0
      %5369 = vmatpush1.msra.mxu0 %v5232
      %5370 = vmatprep.subr.mxu0 0.0
      %5371 = vmatpush1.msra.mxu0 %v5231
      %5372 = vmatprep.subr.mxu0 0.0
      %5373 = vmatpush1.msra.mxu0 %v5230
      %5374 = vmatprep.subr.mxu0 0.0
      %5375 = vmatpush1.msra.mxu0 %v5229
      %5376 = vmatprep.subr.mxu0 0.0
      %5377 = vmatpush1.msra.mxu0 %v5228
      %5378 = vmatprep.subr.mxu0 0.0
      %5379 = vmatpush1.msra.mxu0 %v5227
      %5380 = vmatprep.subr.mxu0 0.0
      %5381 = vmatpush1.msra.mxu0 %v5226
      %5382 = vmatprep.subr.mxu0 0.0
      %5383 = vmatpush1.msra.mxu0 %v5225
      %5384 = vmatprep.subr.mxu0 0.0
      %5385 = vmatpush2.msra.mxu0 %v5256
      %5386 = vmatprep.subr.mxu0 0.0
      %5387 = vmatpush2.msra.mxu0 %v5255
      %5388 = vmatprep.subr.mxu0 0.0
      %5389 = vmatpush2.msra.mxu0 %v5254
      %5390 = vmatprep.subr.mxu0 0.0
      %5391 = vmatpush2.msra.mxu0 %v5253
      %5392 = vmatprep.subr.mxu0 0.0
      %5393 = vmatpush2.msra.mxu0 %v5252
      %5394 = vmatprep.subr.mxu0 0.0
      %5395 = vmatpush2.msra.mxu0 %v5251
      %5396 = vmatprep.subr.mxu0 0.0
      %5397 = vmatpush2.msra.mxu0 %v5250
      %5398 = vmatprep.subr.mxu0 0.0
      %5399 = vmatpush2.msra.mxu0 %v5249
      %5400 = vmatprep.subr.mxu0 0.0
      %5401 = vmatpush2.msra.mxu0 %v5248
      %5402 = vmatprep.subr.mxu0 0.0
      %5403 = vmatpush2.msra.mxu0 %v5247
      %5404 = vmatprep.subr.mxu0 0.0
      %5405 = vmatpush2.msra.mxu0 %v5246
      %5406 = vmatprep.subr.mxu0 0.0
      %5407 = vmatpush2.msra.mxu0 %v5245
      %5408 = vmatprep.subr.mxu0 0.0
      %5409 = vmatpush2.msra.mxu0 %v5244
      %5410 = vmatprep.subr.mxu0 0.0
      %5411 = vmatpush2.msra.mxu0 %v5243
      %5412 = vmatprep.subr.mxu0 0.0
      %5413 = vmatpush2.msra.mxu0 %v5242
      %5414 = vmatprep.subr.mxu0 0.0
      %5415 = vmatpush2.msra.mxu0 %v5241
      %5416 = vmatprep.mubr.f32.mxu0 %v5146
      %5417 = vmatmul.mubr.f32.gmra.mxu0 %v5145
      %v5418 = vpop.f32.mrf.mxu0
      %v5419 = vadd.f32 %v5302, %v5418
      %v5420 = vpop.f32.mrf.mxu0
      %5421 = vmatprep.mubr.f32.mxu0 %v5151
      %5422 = vmatmul.mubr.f32.gmra.mxu0 %v5150
      %v5423 = vpop.f32.mrf.mxu0
      %v5424 = vadd.f32 %v5302, %v5423
      %v5425 = vpop.f32.mrf.mxu0
      %5426 = vmatprep.mubr.f32.mxu0 %v5156
      %5427 = vmatmul.mubr.f32.gmra.mxu0 %v5155
      %v5428 = vpop.f32.mrf.mxu0
      %v5429 = vadd.f32 %v5302, %v5428
      %v5430 = vpop.f32.mrf.mxu0
      %5431 = vmatprep.mubr.f32.mxu0 %v5161
      %5432 = vmatmul.mubr.f32.gmra.mxu0 %v5160
      %v5433 = vpop.f32.mrf.mxu0
      %v5434 = vadd.f32 %v5302, %v5433
      %v5435 = vpop.f32.mrf.mxu0
      %5436 = vmatprep.mubr.f32.mxu0 %v5166
      %5437 = vmatmul.mubr.f32.gmra.mxu0 %v5165
      %v5438 = vpop.f32.mrf.mxu0
      %v5439 = vadd.f32 %v5302, %v5438
      %v5440 = vpop.f32.mrf.mxu0
      %5441 = vmatprep.mubr.f32.mxu0 %v5171
      %5442 = vmatmul.mubr.f32.gmra.mxu0 %v5170
      %v5443 = vpop.f32.mrf.mxu0
      %v5444 = vadd.f32 %v5302, %v5443
      %v5445 = vpop.f32.mrf.mxu0
      %5446 = vmatprep.mubr.f32.mxu0 %v5176
      %5447 = vmatmul.mubr.f32.gmra.mxu0 %v5175
      %v5448 = vpop.f32.mrf.mxu0
      %v5449 = vadd.f32 %v5302, %v5448
      %v5450 = vpop.f32.mrf.mxu0
      %5451 = vmatprep.mubr.f32.mxu0 %v5181
      %5452 = vmatmul.mubr.f32.gmra.mxu0 %v5180
      %v5453 = vpop.f32.mrf.mxu0
      %v5454 = vadd.f32 %v5302, %v5453
      %v5455 = vpop.f32.mrf.mxu0
      %5456 = vmatprep.mubr.f32.mxu0 %v5186
      %5457 = vmatmul.mubr.f32.gmra.mxu0 %v5185
      %v5458 = vpop.f32.mrf.mxu0
      %v5459 = vadd.f32 %v5302, %v5458
      %v5460 = vpop.f32.mrf.mxu0
      %5461 = vmatprep.mubr.f32.mxu0 %v5191
      %5462 = vmatmul.mubr.f32.gmra.mxu0 %v5190
      %v5463 = vpop.f32.mrf.mxu0
      %v5464 = vadd.f32 %v5302, %v5463
      %v5465 = vpop.f32.mrf.mxu0
      %5466 = vmatprep.mubr.f32.mxu0 %v5196
      %5467 = vmatmul.mubr.f32.gmra.mxu0 %v5195
      %v5468 = vpop.f32.mrf.mxu0
      %v5469 = vadd.f32 %v5302, %v5468
      %v5470 = vpop.f32.mrf.mxu0
      %5471 = vmatprep.mubr.f32.mxu0 %v5201
      %5472 = vmatmul.mubr.f32.gmra.mxu0 %v5200
      %v5473 = vpop.f32.mrf.mxu0
      %v5474 = vadd.f32 %v5302, %v5473
      %v5475 = vpop.f32.mrf.mxu0
      %5476 = vmatprep.mubr.f32.mxu0 %v5206
      %5477 = vmatmul.mubr.f32.gmra.mxu0 %v5205
      %v5478 = vpop.f32.mrf.mxu0
      %v5479 = vadd.f32 %v5302, %v5478
      %v5480 = vpop.f32.mrf.mxu0
      %5481 = vmatprep.mubr.f32.mxu0 %v5211
      %5482 = vmatmul.mubr.f32.gmra.mxu0 %v5210
      %v5483 = vpop.f32.mrf.mxu0
      %v5484 = vadd.f32 %v5302, %v5483
      %v5485 = vpop.f32.mrf.mxu0
      %5486 = vmatprep.mubr.f32.mxu0 %v5216
      %5487 = vmatmul.mubr.f32.gmra.mxu0 %v5215
      %v5488 = vpop.f32.mrf.mxu0
      %v5489 = vadd.f32 %v5302, %v5488
      %v5490 = vpop.f32.mrf.mxu0
      %5491 = vmatprep.mubr.f32.mxu0 %v5221
      %5492 = vmatmul.mubr.f32.gmra.mxu0 %v5220
      %v5493 = vpop.f32.mrf.mxu0
      %v5494 = vadd.f32 %v5302, %v5493
      %v5495 = vpop.f32.mrf.mxu0
      %5496 = vdwg.mxu0
      %5497 = vmatprep.subr.mxu0 0.0
      %5498 = vmatpush1.msra.mxu0 %v5272
      %5499 = vmatprep.subr.mxu0 0.0
      %5500 = vmatpush1.msra.mxu0 %v5271
      %5501 = vmatprep.subr.mxu0 0.0
      %5502 = vmatpush1.msra.mxu0 %v5270
      %5503 = vmatprep.subr.mxu0 0.0
      %5504 = vmatpush1.msra.mxu0 %v5269
      %5505 = vmatprep.subr.mxu0 0.0
      %5506 = vmatpush1.msra.mxu0 %v5268
      %5507 = vmatprep.subr.mxu0 0.0
      %5508 = vmatpush1.msra.mxu0 %v5267
      %5509 = vmatprep.subr.mxu0 0.0
      %5510 = vmatpush1.msra.mxu0 %v5266
      %5511 = vmatprep.subr.mxu0 0.0
      %5512 = vmatpush1.msra.mxu0 %v5265
      %5513 = vmatprep.subr.mxu0 0.0
      %5514 = vmatpush1.msra.mxu0 %v5264
      %5515 = vmatprep.subr.mxu0 0.0
      %5516 = vmatpush1.msra.mxu0 %v5263
      %5517 = vmatprep.subr.mxu0 0.0
      %5518 = vmatpush1.msra.mxu0 %v5262
      %5519 = vmatprep.subr.mxu0 0.0
      %5520 = vmatpush1.msra.mxu0 %v5261
      %5521 = vmatprep.subr.mxu0 0.0
      %5522 = vmatpush1.msra.mxu0 %v5260
      %5523 = vmatprep.subr.mxu0 0.0
      %5524 = vmatpush1.msra.mxu0 %v5259
      %5525 = vmatprep.subr.mxu0 0.0
      %5526 = vmatpush1.msra.mxu0 %v5258
      %5527 = vmatprep.subr.mxu0 0.0
      %5528 = vmatpush1.msra.mxu0 %v5257
      %5529 = vmatprep.subr.mxu0 0.0
      %5530 = vmatpush2.msra.mxu0 %v5288
      %5531 = vmatprep.subr.mxu0 0.0
      %5532 = vmatpush2.msra.mxu0 %v5287
      %5533 = vmatprep.subr.mxu0 0.0
      %5534 = vmatpush2.msra.mxu0 %v5286
      %5535 = vmatprep.subr.mxu0 0.0
      %5536 = vmatpush2.msra.mxu0 %v5285
      %5537 = vmatprep.subr.mxu0 0.0
      %5538 = vmatpush2.msra.mxu0 %v5284
      %5539 = vmatprep.subr.mxu0 0.0
      %5540 = vmatpush2.msra.mxu0 %v5283
      %5541 = vmatprep.subr.mxu0 0.0
      %5542 = vmatpush2.msra.mxu0 %v5282
      %5543 = vmatprep.subr.mxu0 0.0
      %5544 = vmatpush2.msra.mxu0 %v5281
      %5545 = vmatprep.subr.mxu0 0.0
      %5546 = vmatpush2.msra.mxu0 %v5280
      %5547 = vmatprep.subr.mxu0 0.0
      %5548 = vmatpush2.msra.mxu0 %v5279
      %5549 = vmatprep.subr.mxu0 0.0
      %5550 = vmatpush2.msra.mxu0 %v5278
      %5551 = vmatprep.subr.mxu0 0.0
      %5552 = vmatpush2.msra.mxu0 %v5277
      %5553 = vmatprep.subr.mxu0 0.0
      %5554 = vmatpush2.msra.mxu0 %v5276
      %5555 = vmatprep.subr.mxu0 0.0
      %5556 = vmatpush2.msra.mxu0 %v5275
      %5557 = vmatprep.subr.mxu0 0.0
      %5558 = vmatpush2.msra.mxu0 %v5274
      %5559 = vmatprep.subr.mxu0 0.0
      %5560 = vmatpush2.msra.mxu0 %v5273
      %5561 = vmatprep.mubr.f32.mxu0 %v5148
      %5562 = vmatmul.mubr.f32.gmra.mxu0 %v5147
      %v5563 = vpop.f32.mrf.mxu0
      %v5564 = vadd.f32 %v5419, %v5563
      %v5565 = vpop.f32.mrf.mxu0
      %5566 = vmatprep.mubr.f32.mxu0 %v5153
      %5567 = vmatmul.mubr.f32.gmra.mxu0 %v5152
      %v5568 = vpop.f32.mrf.mxu0
      %v5569 = vadd.f32 %v5424, %v5568
      %v5570 = vpop.f32.mrf.mxu0
      %5571 = vmatprep.mubr.f32.mxu0 %v5158
      %5572 = vmatmul.mubr.f32.gmra.mxu0 %v5157
      %v5573 = vpop.f32.mrf.mxu0
      %v5574 = vadd.f32 %v5429, %v5573
      %v5575 = vpop.f32.mrf.mxu0
      %5576 = vmatprep.mubr.f32.mxu0 %v5163
      %5577 = vmatmul.mubr.f32.gmra.mxu0 %v5162
      %v5578 = vpop.f32.mrf.mxu0
      %v5579 = vadd.f32 %v5434, %v5578
      %v5580 = vpop.f32.mrf.mxu0
      %5581 = vmatprep.mubr.f32.mxu0 %v5168
      %5582 = vmatmul.mubr.f32.gmra.mxu0 %v5167
      %v5583 = vpop.f32.mrf.mxu0
      %v5584 = vadd.f32 %v5439, %v5583
      %v5585 = vpop.f32.mrf.mxu0
      %5586 = vmatprep.mubr.f32.mxu0 %v5173
      %5587 = vmatmul.mubr.f32.gmra.mxu0 %v5172
      %v5588 = vpop.f32.mrf.mxu0
      %v5589 = vadd.f32 %v5444, %v5588
      %v5590 = vpop.f32.mrf.mxu0
      %5591 = vmatprep.mubr.f32.mxu0 %v5178
      %5592 = vmatmul.mubr.f32.gmra.mxu0 %v5177
      %v5593 = vpop.f32.mrf.mxu0
      %v5594 = vadd.f32 %v5449, %v5593
      %v5595 = vpop.f32.mrf.mxu0
      %5596 = vmatprep.mubr.f32.mxu0 %v5183
      %5597 = vmatmul.mubr.f32.gmra.mxu0 %v5182
      %v5598 = vpop.f32.mrf.mxu0
      %v5599 = vadd.f32 %v5454, %v5598
      %v5600 = vpop.f32.mrf.mxu0
      %5601 = vmatprep.mubr.f32.mxu0 %v5188
      %5602 = vmatmul.mubr.f32.gmra.mxu0 %v5187
      %v5603 = vpop.f32.mrf.mxu0
      %v5604 = vadd.f32 %v5459, %v5603
      %v5605 = vpop.f32.mrf.mxu0
      %5606 = vmatprep.mubr.f32.mxu0 %v5193
      %5607 = vmatmul.mubr.f32.gmra.mxu0 %v5192
      %v5608 = vpop.f32.mrf.mxu0
      %v5609 = vadd.f32 %v5464, %v5608
      %v5610 = vpop.f32.mrf.mxu0
      %5611 = vmatprep.mubr.f32.mxu0 %v5198
      %5612 = vmatmul.mubr.f32.gmra.mxu0 %v5197
      %v5613 = vpop.f32.mrf.mxu0
      %v5614 = vadd.f32 %v5469, %v5613
      %v5615 = vpop.f32.mrf.mxu0
      %5616 = vmatprep.mubr.f32.mxu0 %v5203
      %5617 = vmatmul.mubr.f32.gmra.mxu0 %v5202
      %v5618 = vpop.f32.mrf.mxu0
      %v5619 = vadd.f32 %v5474, %v5618
      %v5620 = vpop.f32.mrf.mxu0
      %5621 = vmatprep.mubr.f32.mxu0 %v5208
      %5622 = vmatmul.mubr.f32.gmra.mxu0 %v5207
      %v5623 = vpop.f32.mrf.mxu0
      %v5624 = vadd.f32 %v5479, %v5623
      %v5625 = vpop.f32.mrf.mxu0
      %5626 = vmatprep.mubr.f32.mxu0 %v5213
      %5627 = vmatmul.mubr.f32.gmra.mxu0 %v5212
      %v5628 = vpop.f32.mrf.mxu0
      %v5629 = vadd.f32 %v5484, %v5628
      %v5630 = vpop.f32.mrf.mxu0
      %5631 = vmatprep.mubr.f32.mxu0 %v5218
      %5632 = vmatmul.mubr.f32.gmra.mxu0 %v5217
      %v5633 = vpop.f32.mrf.mxu0
      %v5634 = vadd.f32 %v5489, %v5633
      %v5635 = vpop.f32.mrf.mxu0
      %5636 = vmatprep.mubr.f32.mxu0 %v5223
      %5637 = vmatmul.mubr.f32.gmra.mxu0 %v5222
      %v5638 = vpop.f32.mrf.mxu0
      %v5639 = vadd.f32 %v5494, %v5638
      %v5640 = vpop.f32.mrf.mxu0
      %5641 = vdwg.mxu0
      %5642 = vmatprep.subr.mxu0 0.0
      %5643 = vmatpush1.msra.mxu0 0.0
      %5644 = vmatprep.subr.mxu0 0.0
      %5645 = vmatpush1.msra.mxu0 0.0
      %5646 = vmatprep.subr.mxu0 0.0
      %5647 = vmatpush1.msra.mxu0 0.0
      %5648 = vmatprep.subr.mxu0 0.0
      %5649 = vmatpush1.msra.mxu0 0.0
      %5650 = vmatprep.subr.mxu0 0.0
      %5651 = vmatpush1.msra.mxu0 0.0
      %5652 = vmatprep.subr.mxu0 0.0
      %5653 = vmatpush1.msra.mxu0 0.0
      %5654 = vmatprep.subr.mxu0 0.0
      %5655 = vmatpush1.msra.mxu0 0.0
      %5656 = vmatprep.subr.mxu0 0.0
      %5657 = vmatpush1.msra.mxu0 0.0
      %5658 = vmatprep.subr.mxu0 0.0
      %5659 = vmatpush1.msra.mxu0 %v5296
      %5660 = vmatprep.subr.mxu0 0.0
      %5661 = vmatpush1.msra.mxu0 %v5295
      %5662 = vmatprep.subr.mxu0 0.0
      %5663 = vmatpush1.msra.mxu0 %v5294
      %5664 = vmatprep.subr.mxu0 0.0
      %5665 = vmatpush1.msra.mxu0 %v5293
      %5666 = vmatprep.subr.mxu0 0.0
      %5667 = vmatpush1.msra.mxu0 %v5292
      %5668 = vmatprep.subr.mxu0 0.0
      %5669 = vmatpush1.msra.mxu0 %v5291
      %5670 = vmatprep.subr.mxu0 0.0
      %5671 = vmatpush1.msra.mxu0 %v5290
      %5672 = vmatprep.subr.mxu0 0.0
      %5673 = vmatpush1.msra.mxu0 %v5289
      %5674 = vmatprep.subr.mxu0 0.0
      %5675 = vmatpush2.msra.mxu0 0.0
      %5676 = vmatprep.subr.mxu0 0.0
      %5677 = vmatpush2.msra.mxu0 0.0
      %5678 = vmatprep.subr.mxu0 0.0
      %5679 = vmatpush2.msra.mxu0 0.0
      %5680 = vmatprep.subr.mxu0 0.0
      %5681 = vmatpush2.msra.mxu0 0.0
      %5682 = vmatprep.subr.mxu0 0.0
      %5683 = vmatpush2.msra.mxu0 0.0
      %5684 = vmatprep.subr.mxu0 0.0
      %5685 = vmatpush2.msra.mxu0 0.0
      %5686 = vmatprep.subr.mxu0 0.0
      %5687 = vmatpush2.msra.mxu0 0.0
      %5688 = vmatprep.subr.mxu0 0.0
      %5689 = vmatpush2.msra.mxu0 0.0
      %5690 = vmatprep.subr.mxu0 0.0
      %5691 = vmatpush2.msra.mxu0 0.0
      %5692 = vmatprep.subr.mxu0 0.0
      %5693 = vmatpush2.msra.mxu0 0.0
      %5694 = vmatprep.subr.mxu0 0.0
      %5695 = vmatpush2.msra.mxu0 0.0
      %5696 = vmatprep.subr.mxu0 0.0
      %5697 = vmatpush2.msra.mxu0 0.0
      %5698 = vmatprep.subr.mxu0 0.0
      %5699 = vmatpush2.msra.mxu0 0.0
      %5700 = vmatprep.subr.mxu0 0.0
      %5701 = vmatpush2.msra.mxu0 0.0
      %5702 = vmatprep.subr.mxu0 0.0
      %5703 = vmatpush2.msra.mxu0 0.0
      %5704 = vmatprep.subr.mxu0 0.0
      %5705 = vmatpush2.msra.mxu0 0.0
      %5706 = vmatprep.mubr.f32.mxu0 0.0
      %5707 = vmatmul.mubr.f32.gmra.mxu0 %v5305
      %v5708 = vpop.f32.mrf.mxu0
      %v5709 = vadd.f32 %v5564, %v5708
      %v5710 = vpop.f32.mrf.mxu0
      %5711 = vmatprep.mubr.f32.mxu0 0.0
      %5712 = vmatmul.mubr.f32.gmra.mxu0 %v5308
      %v5713 = vpop.f32.mrf.mxu0
      %v5714 = vadd.f32 %v5569, %v5713
      %v5715 = vpop.f32.mrf.mxu0
      %5716 = vmatprep.mubr.f32.mxu0 0.0
      %5717 = vmatmul.mubr.f32.gmra.mxu0 %v5311
      %v5718 = vpop.f32.mrf.mxu0
      %v5719 = vadd.f32 %v5574, %v5718
      %v5720 = vpop.f32.mrf.mxu0
      %5721 = vmatprep.mubr.f32.mxu0 0.0
      %5722 = vmatmul.mubr.f32.gmra.mxu0 %v5314
      %v5723 = vpop.f32.mrf.mxu0
      %v5724 = vadd.f32 %v5579, %v5723
      %v5725 = vpop.f32.mrf.mxu0
      %5726 = vmatprep.mubr.f32.mxu0 0.0
      %5727 = vmatmul.mubr.f32.gmra.mxu0 %v5317
      %v5728 = vpop.f32.mrf.mxu0
      %v5729 = vadd.f32 %v5584, %v5728
      %v5730 = vpop.f32.mrf.mxu0
      %5731 = vmatprep.mubr.f32.mxu0 0.0
      %5732 = vmatmul.mubr.f32.gmra.mxu0 %v5320
      %v5733 = vpop.f32.mrf.mxu0
      %v5734 = vadd.f32 %v5589, %v5733
      %v5735 = vpop.f32.mrf.mxu0
      %5736 = vmatprep.mubr.f32.mxu0 0.0
      %5737 = vmatmul.mubr.f32.gmra.mxu0 %v5323
      %v5738 = vpop.f32.mrf.mxu0
      %v5739 = vadd.f32 %v5594, %v5738
      %v5740 = vpop.f32.mrf.mxu0
      %5741 = vmatprep.mubr.f32.mxu0 0.0
      %5742 = vmatmul.mubr.f32.gmra.mxu0 %v5326
      %v5743 = vpop.f32.mrf.mxu0
      %v5744 = vadd.f32 %v5599, %v5743
      %v5745 = vpop.f32.mrf.mxu0
      %5746 = vmatprep.mubr.f32.mxu0 0.0
      %5747 = vmatmul.mubr.f32.gmra.mxu0 %v5329
      %v5748 = vpop.f32.mrf.mxu0
      %v5749 = vadd.f32 %v5604, %v5748
      %v5750 = vpop.f32.mrf.mxu0
      %5751 = vmatprep.mubr.f32.mxu0 0.0
      %5752 = vmatmul.mubr.f32.gmra.mxu0 %v5332
      %v5753 = vpop.f32.mrf.mxu0
      %v5754 = vadd.f32 %v5609, %v5753
      %v5755 = vpop.f32.mrf.mxu0
      %5756 = vmatprep.mubr.f32.mxu0 0.0
      %5757 = vmatmul.mubr.f32.gmra.mxu0 %v5335
      %v5758 = vpop.f32.mrf.mxu0
      %v5759 = vadd.f32 %v5614, %v5758
      %v5760 = vpop.f32.mrf.mxu0
      %5761 = vmatprep.mubr.f32.mxu0 0.0
      %5762 = vmatmul.mubr.f32.gmra.mxu0 %v5338
      %v5763 = vpop.f32.mrf.mxu0
      %v5764 = vadd.f32 %v5619, %v5763
      %v5765 = vpop.f32.mrf.mxu0
      %5766 = vmatprep.mubr.f32.mxu0 0.0
      %5767 = vmatmul.mubr.f32.gmra.mxu0 %v5341
      %v5768 = vpop.f32.mrf.mxu0
      %v5769 = vadd.f32 %v5624, %v5768
      %v5770 = vpop.f32.mrf.mxu0
      %5771 = vmatprep.mubr.f32.mxu0 0.0
      %5772 = vmatmul.mubr.f32.gmra.mxu0 %v5344
      %v5773 = vpop.f32.mrf.mxu0
      %v5774 = vadd.f32 %v5629, %v5773
      %v5775 = vpop.f32.mrf.mxu0
      %5776 = vmatprep.mubr.f32.mxu0 0.0
      %5777 = vmatmul.mubr.f32.gmra.mxu0 %v5347
      %v5778 = vpop.f32.mrf.mxu0
      %v5779 = vadd.f32 %v5634, %v5778
      %v5780 = vpop.f32.mrf.mxu0
      %5781 = vmatprep.mubr.f32.mxu0 0.0
      %5782 = vmatmul.mubr.f32.gmra.mxu0 %v5350
      %v5783 = vpop.f32.mrf.mxu0
      %v5784 = vadd.f32 %v5639, %v5783
      %v5785 = vpop.f32.mrf.mxu0
      %5786 = vdwg.mxu0
      %v5787 = vmax.f32 %v5709, 0.0
      %v5788 = vmax.f32 %v5714, 0.0
      %v5789 = vmax.f32 %v5719, 0.0
      %v5790 = vmax.f32 %v5724, 0.0
      %v5791 = vmax.f32 %v5729, 0.0
      %v5792 = vmax.f32 %v5734, 0.0
      %v5793 = vmax.f32 %v5739, 0.0
      %v5794 = vmax.f32 %v5744, 0.0
      %v5795 = vmax.f32 %v5749, 0.0
      %v5796 = vmax.f32 %v5754, 0.0
      %v5797 = vmax.f32 %v5759, 0.0
      %v5798 = vmax.f32 %v5764, 0.0
      %v5799 = vmax.f32 %v5769, 0.0
      %v5800 = vmax.f32 %v5774, 0.0
      %v5801 = vmax.f32 %v5779, 0.0
      %v5802 = vmax.f32 %v5784, 0.0
      %v5819 = vcombine.high %v5787, %v5787
      %v5821 = vunpack.c.l.s4 1983009808
      %v5822 = vunpack.c.0.s8 %v5821
      %v5823 = vlaneseq
      %v5824 = vshrl.u32 %v5823, 7
      %v5825 = vsub.s32 %v5822, %v5824
      %v5826 = vrot.slane %v5787, %v5825
      %v5828 = vunpack.c.l.s4 1983009808
      %v5829 = vunpack.c.0.s8 %v5828
      %v5830 = vlaneseq
      %v5831 = vshrl.u32 %v5830, 7
      %v5832 = vsub.s32 %v5829, %v5831
      %v5833 = vrot.slane %v5819, %v5832
      %v5834 = vcombine.high %v5826, %v5826
      %v5835 = vcombine.high %v5833, %v5833
      %v5836 = vcombine.high %v5788, %v5788
      %v5838 = vunpack.c.l.s4 1983009808
      %v5839 = vunpack.c.0.s8 %v5838
      %v5840 = vlaneseq
      %v5841 = vshrl.u32 %v5840, 7
      %v5842 = vsub.s32 %v5839, %v5841
      %v5843 = vrot.slane %v5788, %v5842
      %v5845 = vunpack.c.l.s4 1983009808
      %v5846 = vunpack.c.0.s8 %v5845
      %v5847 = vlaneseq
      %v5848 = vshrl.u32 %v5847, 7
      %v5849 = vsub.s32 %v5846, %v5848
      %v5850 = vrot.slane %v5836, %v5849
      %v5851 = vcombine.high %v5843, %v5843
      %v5852 = vcombine.high %v5850, %v5850
      %v5853 = vcombine.high %v5789, %v5789
      %v5855 = vunpack.c.l.s4 1983009808
      %v5856 = vunpack.c.0.s8 %v5855
      %v5857 = vlaneseq
      %v5858 = vshrl.u32 %v5857, 7
      %v5859 = vsub.s32 %v5856, %v5858
      %v5860 = vrot.slane %v5789, %v5859
      %v5862 = vunpack.c.l.s4 1983009808
      %v5863 = vunpack.c.0.s8 %v5862
      %v5864 = vlaneseq
      %v5865 = vshrl.u32 %v5864, 7
      %v5866 = vsub.s32 %v5863, %v5865
      %v5867 = vrot.slane %v5853, %v5866
      %v5868 = vcombine.high %v5860, %v5860
      %v5869 = vcombine.high %v5867, %v5867
      %v5870 = vcombine.high %v5790, %v5790
      %v5872 = vunpack.c.l.s4 1983009808
      %v5873 = vunpack.c.0.s8 %v5872
      %v5874 = vlaneseq
      %v5875 = vshrl.u32 %v5874, 7
      %v5876 = vsub.s32 %v5873, %v5875
      %v5877 = vrot.slane %v5790, %v5876
      %v5879 = vunpack.c.l.s4 1983009808
      %v5880 = vunpack.c.0.s8 %v5879
      %v5881 = vlaneseq
      %v5882 = vshrl.u32 %v5881, 7
      %v5883 = vsub.s32 %v5880, %v5882
      %v5884 = vrot.slane %v5870, %v5883
      %v5885 = vcombine.high %v5877, %v5877
      %v5886 = vcombine.high %v5884, %v5884
      %v5887 = vcombine.high %v5791, %v5791
      %v5889 = vunpack.c.l.s4 1983009808
      %v5890 = vunpack.c.0.s8 %v5889
      %v5891 = vlaneseq
      %v5892 = vshrl.u32 %v5891, 7
      %v5893 = vsub.s32 %v5890, %v5892
      %v5894 = vrot.slane %v5791, %v5893
      %v5896 = vunpack.c.l.s4 1983009808
      %v5897 = vunpack.c.0.s8 %v5896
      %v5898 = vlaneseq
      %v5899 = vshrl.u32 %v5898, 7
      %v5900 = vsub.s32 %v5897, %v5899
      %v5901 = vrot.slane %v5887, %v5900
      %v5902 = vcombine.high %v5894, %v5894
      %v5903 = vcombine.high %v5901, %v5901
      %v5904 = vcombine.high %v5792, %v5792
      %v5906 = vunpack.c.l.s4 1983009808
      %v5907 = vunpack.c.0.s8 %v5906
      %v5908 = vlaneseq
      %v5909 = vshrl.u32 %v5908, 7
      %v5910 = vsub.s32 %v5907, %v5909
      %v5911 = vrot.slane %v5792, %v5910
      %v5913 = vunpack.c.l.s4 1983009808
      %v5914 = vunpack.c.0.s8 %v5913
      %v5915 = vlaneseq
      %v5916 = vshrl.u32 %v5915, 7
      %v5917 = vsub.s32 %v5914, %v5916
      %v5918 = vrot.slane %v5904, %v5917
      %v5919 = vcombine.high %v5911, %v5911
      %v5920 = vcombine.high %v5918, %v5918
      %v5921 = vcombine.high %v5793, %v5793
      %v5923 = vunpack.c.l.s4 1983009808
      %v5924 = vunpack.c.0.s8 %v5923
      %v5925 = vlaneseq
      %v5926 = vshrl.u32 %v5925, 7
      %v5927 = vsub.s32 %v5924, %v5926
      %v5928 = vrot.slane %v5793, %v5927
      %v5930 = vunpack.c.l.s4 1983009808
      %v5931 = vunpack.c.0.s8 %v5930
      %v5932 = vlaneseq
      %v5933 = vshrl.u32 %v5932, 7
      %v5934 = vsub.s32 %v5931, %v5933
      %v5935 = vrot.slane %v5921, %v5934
      %v5936 = vcombine.high %v5928, %v5928
      %v5937 = vcombine.high %v5935, %v5935
      %v5938 = vcombine.high %v5794, %v5794
      %v5940 = vunpack.c.l.s4 1983009808
      %v5941 = vunpack.c.0.s8 %v5940
      %v5942 = vlaneseq
      %v5943 = vshrl.u32 %v5942, 7
      %v5944 = vsub.s32 %v5941, %v5943
      %v5945 = vrot.slane %v5794, %v5944
      %v5947 = vunpack.c.l.s4 1983009808
      %v5948 = vunpack.c.0.s8 %v5947
      %v5949 = vlaneseq
      %v5950 = vshrl.u32 %v5949, 7
      %v5951 = vsub.s32 %v5948, %v5950
      %v5952 = vrot.slane %v5938, %v5951
      %v5953 = vcombine.high %v5945, %v5945
      %v5954 = vcombine.high %v5952, %v5952
      %v5955 = vcombine.high %v5795, %v5795
      %v5957 = vunpack.c.l.s4 1983009808
      %v5958 = vunpack.c.0.s8 %v5957
      %v5959 = vlaneseq
      %v5960 = vshrl.u32 %v5959, 7
      %v5961 = vsub.s32 %v5958, %v5960
      %v5962 = vrot.slane %v5795, %v5961
      %v5964 = vunpack.c.l.s4 1983009808
      %v5965 = vunpack.c.0.s8 %v5964
      %v5966 = vlaneseq
      %v5967 = vshrl.u32 %v5966, 7
      %v5968 = vsub.s32 %v5965, %v5967
      %v5969 = vrot.slane %v5955, %v5968
      %v5970 = vcombine.high %v5962, %v5962
      %v5971 = vcombine.high %v5969, %v5969
      %v5972 = vcombine.high %v5796, %v5796
      %v5974 = vunpack.c.l.s4 1983009808
      %v5975 = vunpack.c.0.s8 %v5974
      %v5976 = vlaneseq
      %v5977 = vshrl.u32 %v5976, 7
      %v5978 = vsub.s32 %v5975, %v5977
      %v5979 = vrot.slane %v5796, %v5978
      %v5981 = vunpack.c.l.s4 1983009808
      %v5982 = vunpack.c.0.s8 %v5981
      %v5983 = vlaneseq
      %v5984 = vshrl.u32 %v5983, 7
      %v5985 = vsub.s32 %v5982, %v5984
      %v5986 = vrot.slane %v5972, %v5985
      %v5987 = vcombine.high %v5979, %v5979
      %v5988 = vcombine.high %v5986, %v5986
      %v5989 = vcombine.high %v5797, %v5797
      %v5991 = vunpack.c.l.s4 1983009808
      %v5992 = vunpack.c.0.s8 %v5991
      %v5993 = vlaneseq
      %v5994 = vshrl.u32 %v5993, 7
      %v5995 = vsub.s32 %v5992, %v5994
      %v5996 = vrot.slane %v5797, %v5995
      %v5998 = vunpack.c.l.s4 1983009808
      %v5999 = vunpack.c.0.s8 %v5998
      %v6000 = vlaneseq
      %v6001 = vshrl.u32 %v6000, 7
      %v6002 = vsub.s32 %v5999, %v6001
      %v6003 = vrot.slane %v5989, %v6002
      %v6004 = vcombine.high %v5996, %v5996
      %v6005 = vcombine.high %v6003, %v6003
      %v6006 = vcombine.high %v5798, %v5798
      %v6008 = vunpack.c.l.s4 1983009808
      %v6009 = vunpack.c.0.s8 %v6008
      %v6010 = vlaneseq
      %v6011 = vshrl.u32 %v6010, 7
      %v6012 = vsub.s32 %v6009, %v6011
      %v6013 = vrot.slane %v5798, %v6012
      %v6015 = vunpack.c.l.s4 1983009808
      %v6016 = vunpack.c.0.s8 %v6015
      %v6017 = vlaneseq
      %v6018 = vshrl.u32 %v6017, 7
      %v6019 = vsub.s32 %v6016, %v6018
      %v6020 = vrot.slane %v6006, %v6019
      %v6021 = vcombine.high %v6013, %v6013
      %v6022 = vcombine.high %v6020, %v6020
      %v6023 = vcombine.high %v5799, %v5799
      %v6025 = vunpack.c.l.s4 1983009808
      %v6026 = vunpack.c.0.s8 %v6025
      %v6027 = vlaneseq
      %v6028 = vshrl.u32 %v6027, 7
      %v6029 = vsub.s32 %v6026, %v6028
      %v6030 = vrot.slane %v5799, %v6029
      %v6032 = vunpack.c.l.s4 1983009808
      %v6033 = vunpack.c.0.s8 %v6032
      %v6034 = vlaneseq
      %v6035 = vshrl.u32 %v6034, 7
      %v6036 = vsub.s32 %v6033, %v6035
      %v6037 = vrot.slane %v6023, %v6036
      %v6038 = vcombine.high %v6030, %v6030
      %v6039 = vcombine.high %v6037, %v6037
      %v6040 = vcombine.high %v5800, %v5800
      %v6042 = vunpack.c.l.s4 1983009808
      %v6043 = vunpack.c.0.s8 %v6042
      %v6044 = vlaneseq
      %v6045 = vshrl.u32 %v6044, 7
      %v6046 = vsub.s32 %v6043, %v6045
      %v6047 = vrot.slane %v5800, %v6046
      %v6049 = vunpack.c.l.s4 1983009808
      %v6050 = vunpack.c.0.s8 %v6049
      %v6051 = vlaneseq
      %v6052 = vshrl.u32 %v6051, 7
      %v6053 = vsub.s32 %v6050, %v6052
      %v6054 = vrot.slane %v6040, %v6053
      %v6055 = vcombine.high %v6047, %v6047
      %v6056 = vcombine.high %v6054, %v6054
      %v6057 = vcombine.high %v5801, %v5801
      %v6059 = vunpack.c.l.s4 1983009808
      %v6060 = vunpack.c.0.s8 %v6059
      %v6061 = vlaneseq
      %v6062 = vshrl.u32 %v6061, 7
      %v6063 = vsub.s32 %v6060, %v6062
      %v6064 = vrot.slane %v5801, %v6063
      %v6066 = vunpack.c.l.s4 1983009808
      %v6067 = vunpack.c.0.s8 %v6066
      %v6068 = vlaneseq
      %v6069 = vshrl.u32 %v6068, 7
      %v6070 = vsub.s32 %v6067, %v6069
      %v6071 = vrot.slane %v6057, %v6070
      %v6072 = vcombine.high %v6064, %v6064
      %v6073 = vcombine.high %v6071, %v6071
      %v6074 = vcombine.high %v5802, %v5802
      %v6076 = vunpack.c.l.s4 1983009808
      %v6077 = vunpack.c.0.s8 %v6076
      %v6078 = vlaneseq
      %v6079 = vshrl.u32 %v6078, 7
      %v6080 = vsub.s32 %v6077, %v6079
      %v6081 = vrot.slane %v5802, %v6080
      %v6083 = vunpack.c.l.s4 1983009808
      %v6084 = vunpack.c.0.s8 %v6083
      %v6085 = vlaneseq
      %v6086 = vshrl.u32 %v6085, 7
      %v6087 = vsub.s32 %v6084, %v6086
      %v6088 = vrot.slane %v6074, %v6087
      %v6089 = vcombine.high %v6081, %v6081
      %v6090 = vcombine.high %v6088, %v6088
      %v6155 = vsel %vm2283, %v5826, -inf
      %v6156 = vrot.slane %v6155, 4
      %v6157 = vmax.f32 %v6155, %v6156
      %v6158 = vrot.slane %v6157, 2
      %v6159 = vmax.f32 %v6157, %v6158
      %v6160 = vrot.slane %v6159, 1
      %v6161 = vmax.f32 %v6159, %v6160
      %v6162 = vsel %vm2283, %v5834, -inf
      %v6163 = vrot.slane %v6162, 4
      %v6164 = vmax.f32 %v6162, %v6163
      %v6165 = vrot.slane %v6164, 2
      %v6166 = vmax.f32 %v6164, %v6165
      %v6167 = vrot.slane %v6166, 1
      %v6168 = vmax.f32 %v6166, %v6167
      %v6169 = vsel %vm2283, %v5833, -inf
      %v6170 = vrot.slane %v6169, 4
      %v6171 = vmax.f32 %v6169, %v6170
      %v6172 = vrot.slane %v6171, 2
      %v6173 = vmax.f32 %v6171, %v6172
      %v6174 = vrot.slane %v6173, 1
      %v6175 = vmax.f32 %v6173, %v6174
      %v6176 = vsel %vm2283, %v5835, -inf
      %v6177 = vrot.slane %v6176, 4
      %v6178 = vmax.f32 %v6176, %v6177
      %v6179 = vrot.slane %v6178, 2
      %v6180 = vmax.f32 %v6178, %v6179
      %v6181 = vrot.slane %v6180, 1
      %v6182 = vmax.f32 %v6180, %v6181
      %v6183 = vsel %vm2283, %v5843, -inf
      %v6184 = vrot.slane %v6183, 4
      %v6185 = vmax.f32 %v6183, %v6184
      %v6186 = vrot.slane %v6185, 2
      %v6187 = vmax.f32 %v6185, %v6186
      %v6188 = vrot.slane %v6187, 1
      %v6189 = vmax.f32 %v6187, %v6188
      %v6190 = vsel %vm2283, %v5851, -inf
      %v6191 = vrot.slane %v6190, 4
      %v6192 = vmax.f32 %v6190, %v6191
      %v6193 = vrot.slane %v6192, 2
      %v6194 = vmax.f32 %v6192, %v6193
      %v6195 = vrot.slane %v6194, 1
      %v6196 = vmax.f32 %v6194, %v6195
      %v6197 = vsel %vm2283, %v5850, -inf
      %v6198 = vrot.slane %v6197, 4
      %v6199 = vmax.f32 %v6197, %v6198
      %v6200 = vrot.slane %v6199, 2
      %v6201 = vmax.f32 %v6199, %v6200
      %v6202 = vrot.slane %v6201, 1
      %v6203 = vmax.f32 %v6201, %v6202
      %v6204 = vsel %vm2283, %v5852, -inf
      %v6205 = vrot.slane %v6204, 4
      %v6206 = vmax.f32 %v6204, %v6205
      %v6207 = vrot.slane %v6206, 2
      %v6208 = vmax.f32 %v6206, %v6207
      %v6209 = vrot.slane %v6208, 1
      %v6210 = vmax.f32 %v6208, %v6209
      %v6211 = vsel %vm2283, %v5860, -inf
      %v6212 = vrot.slane %v6211, 4
      %v6213 = vmax.f32 %v6211, %v6212
      %v6214 = vrot.slane %v6213, 2
      %v6215 = vmax.f32 %v6213, %v6214
      %v6216 = vrot.slane %v6215, 1
      %v6217 = vmax.f32 %v6215, %v6216
      %v6218 = vsel %vm2283, %v5868, -inf
      %v6219 = vrot.slane %v6218, 4
      %v6220 = vmax.f32 %v6218, %v6219
      %v6221 = vrot.slane %v6220, 2
      %v6222 = vmax.f32 %v6220, %v6221
      %v6223 = vrot.slane %v6222, 1
      %v6224 = vmax.f32 %v6222, %v6223
      %v6225 = vsel %vm2283, %v5867, -inf
      %v6226 = vrot.slane %v6225, 4
      %v6227 = vmax.f32 %v6225, %v6226
      %v6228 = vrot.slane %v6227, 2
      %v6229 = vmax.f32 %v6227, %v6228
      %v6230 = vrot.slane %v6229, 1
      %v6231 = vmax.f32 %v6229, %v6230
      %v6232 = vsel %vm2283, %v5869, -inf
      %v6233 = vrot.slane %v6232, 4
      %v6234 = vmax.f32 %v6232, %v6233
      %v6235 = vrot.slane %v6234, 2
      %v6236 = vmax.f32 %v6234, %v6235
      %v6237 = vrot.slane %v6236, 1
      %v6238 = vmax.f32 %v6236, %v6237
      %v6239 = vsel %vm2283, %v5877, -inf
      %v6240 = vrot.slane %v6239, 4
      %v6241 = vmax.f32 %v6239, %v6240
      %v6242 = vrot.slane %v6241, 2
      %v6243 = vmax.f32 %v6241, %v6242
      %v6244 = vrot.slane %v6243, 1
      %v6245 = vmax.f32 %v6243, %v6244
      %v6246 = vsel %vm2283, %v5885, -inf
      %v6247 = vrot.slane %v6246, 4
      %v6248 = vmax.f32 %v6246, %v6247
      %v6249 = vrot.slane %v6248, 2
      %v6250 = vmax.f32 %v6248, %v6249
      %v6251 = vrot.slane %v6250, 1
      %v6252 = vmax.f32 %v6250, %v6251
      %v6253 = vsel %vm2283, %v5884, -inf
      %v6254 = vrot.slane %v6253, 4
      %v6255 = vmax.f32 %v6253, %v6254
      %v6256 = vrot.slane %v6255, 2
      %v6257 = vmax.f32 %v6255, %v6256
      %v6258 = vrot.slane %v6257, 1
      %v6259 = vmax.f32 %v6257, %v6258
      %v6260 = vsel %vm2283, %v5886, -inf
      %v6261 = vrot.slane %v6260, 4
      %v6262 = vmax.f32 %v6260, %v6261
      %v6263 = vrot.slane %v6262, 2
      %v6264 = vmax.f32 %v6262, %v6263
      %v6265 = vrot.slane %v6264, 1
      %v6266 = vmax.f32 %v6264, %v6265
      %v6267 = vsel %vm2283, %v5894, -inf
      %v6268 = vrot.slane %v6267, 4
      %v6269 = vmax.f32 %v6267, %v6268
      %v6270 = vrot.slane %v6269, 2
      %v6271 = vmax.f32 %v6269, %v6270
      %v6272 = vrot.slane %v6271, 1
      %v6273 = vmax.f32 %v6271, %v6272
      %v6274 = vsel %vm2283, %v5902, -inf
      %v6275 = vrot.slane %v6274, 4
      %v6276 = vmax.f32 %v6274, %v6275
      %v6277 = vrot.slane %v6276, 2
      %v6278 = vmax.f32 %v6276, %v6277
      %v6279 = vrot.slane %v6278, 1
      %v6280 = vmax.f32 %v6278, %v6279
      %v6281 = vsel %vm2283, %v5901, -inf
      %v6282 = vrot.slane %v6281, 4
      %v6283 = vmax.f32 %v6281, %v6282
      %v6284 = vrot.slane %v6283, 2
      %v6285 = vmax.f32 %v6283, %v6284
      %v6286 = vrot.slane %v6285, 1
      %v6287 = vmax.f32 %v6285, %v6286
      %v6288 = vsel %vm2283, %v5903, -inf
      %v6289 = vrot.slane %v6288, 4
      %v6290 = vmax.f32 %v6288, %v6289
      %v6291 = vrot.slane %v6290, 2
      %v6292 = vmax.f32 %v6290, %v6291
      %v6293 = vrot.slane %v6292, 1
      %v6294 = vmax.f32 %v6292, %v6293
      %v6295 = vsel %vm2283, %v5911, -inf
      %v6296 = vrot.slane %v6295, 4
      %v6297 = vmax.f32 %v6295, %v6296
      %v6298 = vrot.slane %v6297, 2
      %v6299 = vmax.f32 %v6297, %v6298
      %v6300 = vrot.slane %v6299, 1
      %v6301 = vmax.f32 %v6299, %v6300
      %v6302 = vsel %vm2283, %v5919, -inf
      %v6303 = vrot.slane %v6302, 4
      %v6304 = vmax.f32 %v6302, %v6303
      %v6305 = vrot.slane %v6304, 2
      %v6306 = vmax.f32 %v6304, %v6305
      %v6307 = vrot.slane %v6306, 1
      %v6308 = vmax.f32 %v6306, %v6307
      %v6309 = vsel %vm2283, %v5918, -inf
      %v6310 = vrot.slane %v6309, 4
      %v6311 = vmax.f32 %v6309, %v6310
      %v6312 = vrot.slane %v6311, 2
      %v6313 = vmax.f32 %v6311, %v6312
      %v6314 = vrot.slane %v6313, 1
      %v6315 = vmax.f32 %v6313, %v6314
      %v6316 = vsel %vm2283, %v5920, -inf
      %v6317 = vrot.slane %v6316, 4
      %v6318 = vmax.f32 %v6316, %v6317
      %v6319 = vrot.slane %v6318, 2
      %v6320 = vmax.f32 %v6318, %v6319
      %v6321 = vrot.slane %v6320, 1
      %v6322 = vmax.f32 %v6320, %v6321
      %v6323 = vsel %vm2283, %v5928, -inf
      %v6324 = vrot.slane %v6323, 4
      %v6325 = vmax.f32 %v6323, %v6324
      %v6326 = vrot.slane %v6325, 2
      %v6327 = vmax.f32 %v6325, %v6326
      %v6328 = vrot.slane %v6327, 1
      %v6329 = vmax.f32 %v6327, %v6328
      %v6330 = vsel %vm2283, %v5936, -inf
      %v6331 = vrot.slane %v6330, 4
      %v6332 = vmax.f32 %v6330, %v6331
      %v6333 = vrot.slane %v6332, 2
      %v6334 = vmax.f32 %v6332, %v6333
      %v6335 = vrot.slane %v6334, 1
      %v6336 = vmax.f32 %v6334, %v6335
      %v6337 = vsel %vm2283, %v5935, -inf
      %v6338 = vrot.slane %v6337, 4
      %v6339 = vmax.f32 %v6337, %v6338
      %v6340 = vrot.slane %v6339, 2
      %v6341 = vmax.f32 %v6339, %v6340
      %v6342 = vrot.slane %v6341, 1
      %v6343 = vmax.f32 %v6341, %v6342
      %v6344 = vsel %vm2283, %v5937, -inf
      %v6345 = vrot.slane %v6344, 4
      %v6346 = vmax.f32 %v6344, %v6345
      %v6347 = vrot.slane %v6346, 2
      %v6348 = vmax.f32 %v6346, %v6347
      %v6349 = vrot.slane %v6348, 1
      %v6350 = vmax.f32 %v6348, %v6349
      %v6351 = vsel %vm2283, %v5945, -inf
      %v6352 = vrot.slane %v6351, 4
      %v6353 = vmax.f32 %v6351, %v6352
      %v6354 = vrot.slane %v6353, 2
      %v6355 = vmax.f32 %v6353, %v6354
      %v6356 = vrot.slane %v6355, 1
      %v6357 = vmax.f32 %v6355, %v6356
      %v6358 = vsel %vm2283, %v5953, -inf
      %v6359 = vrot.slane %v6358, 4
      %v6360 = vmax.f32 %v6358, %v6359
      %v6361 = vrot.slane %v6360, 2
      %v6362 = vmax.f32 %v6360, %v6361
      %v6363 = vrot.slane %v6362, 1
      %v6364 = vmax.f32 %v6362, %v6363
      %v6365 = vsel %vm2283, %v5952, -inf
      %v6366 = vrot.slane %v6365, 4
      %v6367 = vmax.f32 %v6365, %v6366
      %v6368 = vrot.slane %v6367, 2
      %v6369 = vmax.f32 %v6367, %v6368
      %v6370 = vrot.slane %v6369, 1
      %v6371 = vmax.f32 %v6369, %v6370
      %v6372 = vsel %vm2283, %v5954, -inf
      %v6373 = vrot.slane %v6372, 4
      %v6374 = vmax.f32 %v6372, %v6373
      %v6375 = vrot.slane %v6374, 2
      %v6376 = vmax.f32 %v6374, %v6375
      %v6377 = vrot.slane %v6376, 1
      %v6378 = vmax.f32 %v6376, %v6377
      %v6379 = vsel %vm2283, %v5962, -inf
      %v6380 = vrot.slane %v6379, 4
      %v6381 = vmax.f32 %v6379, %v6380
      %v6382 = vrot.slane %v6381, 2
      %v6383 = vmax.f32 %v6381, %v6382
      %v6384 = vrot.slane %v6383, 1
      %v6385 = vmax.f32 %v6383, %v6384
      %v6386 = vsel %vm2283, %v5970, -inf
      %v6387 = vrot.slane %v6386, 4
      %v6388 = vmax.f32 %v6386, %v6387
      %v6389 = vrot.slane %v6388, 2
      %v6390 = vmax.f32 %v6388, %v6389
      %v6391 = vrot.slane %v6390, 1
      %v6392 = vmax.f32 %v6390, %v6391
      %v6393 = vsel %vm2283, %v5969, -inf
      %v6394 = vrot.slane %v6393, 4
      %v6395 = vmax.f32 %v6393, %v6394
      %v6396 = vrot.slane %v6395, 2
      %v6397 = vmax.f32 %v6395, %v6396
      %v6398 = vrot.slane %v6397, 1
      %v6399 = vmax.f32 %v6397, %v6398
      %v6400 = vsel %vm2283, %v5971, -inf
      %v6401 = vrot.slane %v6400, 4
      %v6402 = vmax.f32 %v6400, %v6401
      %v6403 = vrot.slane %v6402, 2
      %v6404 = vmax.f32 %v6402, %v6403
      %v6405 = vrot.slane %v6404, 1
      %v6406 = vmax.f32 %v6404, %v6405
      %v6407 = vsel %vm2283, %v5979, -inf
      %v6408 = vrot.slane %v6407, 4
      %v6409 = vmax.f32 %v6407, %v6408
      %v6410 = vrot.slane %v6409, 2
      %v6411 = vmax.f32 %v6409, %v6410
      %v6412 = vrot.slane %v6411, 1
      %v6413 = vmax.f32 %v6411, %v6412
      %v6414 = vsel %vm2283, %v5987, -inf
      %v6415 = vrot.slane %v6414, 4
      %v6416 = vmax.f32 %v6414, %v6415
      %v6417 = vrot.slane %v6416, 2
      %v6418 = vmax.f32 %v6416, %v6417
      %v6419 = vrot.slane %v6418, 1
      %v6420 = vmax.f32 %v6418, %v6419
      %v6421 = vsel %vm2283, %v5986, -inf
      %v6422 = vrot.slane %v6421, 4
      %v6423 = vmax.f32 %v6421, %v6422
      %v6424 = vrot.slane %v6423, 2
      %v6425 = vmax.f32 %v6423, %v6424
      %v6426 = vrot.slane %v6425, 1
      %v6427 = vmax.f32 %v6425, %v6426
      %v6428 = vsel %vm2283, %v5988, -inf
      %v6429 = vrot.slane %v6428, 4
      %v6430 = vmax.f32 %v6428, %v6429
      %v6431 = vrot.slane %v6430, 2
      %v6432 = vmax.f32 %v6430, %v6431
      %v6433 = vrot.slane %v6432, 1
      %v6434 = vmax.f32 %v6432, %v6433
      %v6435 = vsel %vm2283, %v5996, -inf
      %v6436 = vrot.slane %v6435, 4
      %v6437 = vmax.f32 %v6435, %v6436
      %v6438 = vrot.slane %v6437, 2
      %v6439 = vmax.f32 %v6437, %v6438
      %v6440 = vrot.slane %v6439, 1
      %v6441 = vmax.f32 %v6439, %v6440
      %v6442 = vsel %vm2283, %v6004, -inf
      %v6443 = vrot.slane %v6442, 4
      %v6444 = vmax.f32 %v6442, %v6443
      %v6445 = vrot.slane %v6444, 2
      %v6446 = vmax.f32 %v6444, %v6445
      %v6447 = vrot.slane %v6446, 1
      %v6448 = vmax.f32 %v6446, %v6447
      %v6449 = vsel %vm2283, %v6003, -inf
      %v6450 = vrot.slane %v6449, 4
      %v6451 = vmax.f32 %v6449, %v6450
      %v6452 = vrot.slane %v6451, 2
      %v6453 = vmax.f32 %v6451, %v6452
      %v6454 = vrot.slane %v6453, 1
      %v6455 = vmax.f32 %v6453, %v6454
      %v6456 = vsel %vm2283, %v6005, -inf
      %v6457 = vrot.slane %v6456, 4
      %v6458 = vmax.f32 %v6456, %v6457
      %v6459 = vrot.slane %v6458, 2
      %v6460 = vmax.f32 %v6458, %v6459
      %v6461 = vrot.slane %v6460, 1
      %v6462 = vmax.f32 %v6460, %v6461
      %v6463 = vsel %vm2283, %v6013, -inf
      %v6464 = vrot.slane %v6463, 4
      %v6465 = vmax.f32 %v6463, %v6464
      %v6466 = vrot.slane %v6465, 2
      %v6467 = vmax.f32 %v6465, %v6466
      %v6468 = vrot.slane %v6467, 1
      %v6469 = vmax.f32 %v6467, %v6468
      %v6470 = vsel %vm2283, %v6021, -inf
      %v6471 = vrot.slane %v6470, 4
      %v6472 = vmax.f32 %v6470, %v6471
      %v6473 = vrot.slane %v6472, 2
      %v6474 = vmax.f32 %v6472, %v6473
      %v6475 = vrot.slane %v6474, 1
      %v6476 = vmax.f32 %v6474, %v6475
      %v6477 = vsel %vm2283, %v6020, -inf
      %v6478 = vrot.slane %v6477, 4
      %v6479 = vmax.f32 %v6477, %v6478
      %v6480 = vrot.slane %v6479, 2
      %v6481 = vmax.f32 %v6479, %v6480
      %v6482 = vrot.slane %v6481, 1
      %v6483 = vmax.f32 %v6481, %v6482
      %v6484 = vsel %vm2283, %v6022, -inf
      %v6485 = vrot.slane %v6484, 4
      %v6486 = vmax.f32 %v6484, %v6485
      %v6487 = vrot.slane %v6486, 2
      %v6488 = vmax.f32 %v6486, %v6487
      %v6489 = vrot.slane %v6488, 1
      %v6490 = vmax.f32 %v6488, %v6489
      %v6491 = vsel %vm2283, %v6030, -inf
      %v6492 = vrot.slane %v6491, 4
      %v6493 = vmax.f32 %v6491, %v6492
      %v6494 = vrot.slane %v6493, 2
      %v6495 = vmax.f32 %v6493, %v6494
      %v6496 = vrot.slane %v6495, 1
      %v6497 = vmax.f32 %v6495, %v6496
      %v6498 = vsel %vm2283, %v6038, -inf
      %v6499 = vrot.slane %v6498, 4
      %v6500 = vmax.f32 %v6498, %v6499
      %v6501 = vrot.slane %v6500, 2
      %v6502 = vmax.f32 %v6500, %v6501
      %v6503 = vrot.slane %v6502, 1
      %v6504 = vmax.f32 %v6502, %v6503
      %v6505 = vsel %vm2283, %v6037, -inf
      %v6506 = vrot.slane %v6505, 4
      %v6507 = vmax.f32 %v6505, %v6506
      %v6508 = vrot.slane %v6507, 2
      %v6509 = vmax.f32 %v6507, %v6508
      %v6510 = vrot.slane %v6509, 1
      %v6511 = vmax.f32 %v6509, %v6510
      %v6512 = vsel %vm2283, %v6039, -inf
      %v6513 = vrot.slane %v6512, 4
      %v6514 = vmax.f32 %v6512, %v6513
      %v6515 = vrot.slane %v6514, 2
      %v6516 = vmax.f32 %v6514, %v6515
      %v6517 = vrot.slane %v6516, 1
      %v6518 = vmax.f32 %v6516, %v6517
      %v6519 = vsel %vm2283, %v6047, -inf
      %v6520 = vrot.slane %v6519, 4
      %v6521 = vmax.f32 %v6519, %v6520
      %v6522 = vrot.slane %v6521, 2
      %v6523 = vmax.f32 %v6521, %v6522
      %v6524 = vrot.slane %v6523, 1
      %v6525 = vmax.f32 %v6523, %v6524
      %v6526 = vsel %vm2283, %v6055, -inf
      %v6527 = vrot.slane %v6526, 4
      %v6528 = vmax.f32 %v6526, %v6527
      %v6529 = vrot.slane %v6528, 2
      %v6530 = vmax.f32 %v6528, %v6529
      %v6531 = vrot.slane %v6530, 1
      %v6532 = vmax.f32 %v6530, %v6531
      %v6533 = vsel %vm2283, %v6054, -inf
      %v6534 = vrot.slane %v6533, 4
      %v6535 = vmax.f32 %v6533, %v6534
      %v6536 = vrot.slane %v6535, 2
      %v6537 = vmax.f32 %v6535, %v6536
      %v6538 = vrot.slane %v6537, 1
      %v6539 = vmax.f32 %v6537, %v6538
      %v6540 = vsel %vm2283, %v6056, -inf
      %v6541 = vrot.slane %v6540, 4
      %v6542 = vmax.f32 %v6540, %v6541
      %v6543 = vrot.slane %v6542, 2
      %v6544 = vmax.f32 %v6542, %v6543
      %v6545 = vrot.slane %v6544, 1
      %v6546 = vmax.f32 %v6544, %v6545
      %v6547 = vsel %vm2283, %v6064, -inf
      %v6548 = vrot.slane %v6547, 4
      %v6549 = vmax.f32 %v6547, %v6548
      %v6550 = vrot.slane %v6549, 2
      %v6551 = vmax.f32 %v6549, %v6550
      %v6552 = vrot.slane %v6551, 1
      %v6553 = vmax.f32 %v6551, %v6552
      %v6554 = vsel %vm2283, %v6072, -inf
      %v6555 = vrot.slane %v6554, 4
      %v6556 = vmax.f32 %v6554, %v6555
      %v6557 = vrot.slane %v6556, 2
      %v6558 = vmax.f32 %v6556, %v6557
      %v6559 = vrot.slane %v6558, 1
      %v6560 = vmax.f32 %v6558, %v6559
      %v6561 = vsel %vm2283, %v6071, -inf
      %v6562 = vrot.slane %v6561, 4
      %v6563 = vmax.f32 %v6561, %v6562
      %v6564 = vrot.slane %v6563, 2
      %v6565 = vmax.f32 %v6563, %v6564
      %v6566 = vrot.slane %v6565, 1
      %v6567 = vmax.f32 %v6565, %v6566
      %v6568 = vsel %vm2283, %v6073, -inf
      %v6569 = vrot.slane %v6568, 4
      %v6570 = vmax.f32 %v6568, %v6569
      %v6571 = vrot.slane %v6570, 2
      %v6572 = vmax.f32 %v6570, %v6571
      %v6573 = vrot.slane %v6572, 1
      %v6574 = vmax.f32 %v6572, %v6573
      %v6575 = vsel %vm2283, %v6081, -inf
      %v6576 = vrot.slane %v6575, 4
      %v6577 = vmax.f32 %v6575, %v6576
      %v6578 = vrot.slane %v6577, 2
      %v6579 = vmax.f32 %v6577, %v6578
      %v6580 = vrot.slane %v6579, 1
      %v6581 = vmax.f32 %v6579, %v6580
      %v6582 = vsel %vm2283, %v6089, -inf
      %v6583 = vrot.slane %v6582, 4
      %v6584 = vmax.f32 %v6582, %v6583
      %v6585 = vrot.slane %v6584, 2
      %v6586 = vmax.f32 %v6584, %v6585
      %v6587 = vrot.slane %v6586, 1
      %v6588 = vmax.f32 %v6586, %v6587
      %v6589 = vsel %vm2283, %v6088, -inf
      %v6590 = vrot.slane %v6589, 4
      %v6591 = vmax.f32 %v6589, %v6590
      %v6592 = vrot.slane %v6591, 2
      %v6593 = vmax.f32 %v6591, %v6592
      %v6594 = vrot.slane %v6593, 1
      %v6595 = vmax.f32 %v6593, %v6594
      %v6596 = vsel %vm2283, %v6090, -inf
      %v6597 = vrot.slane %v6596, 4
      %v6598 = vmax.f32 %v6596, %v6597
      %v6599 = vrot.slane %v6598, 2
      %v6600 = vmax.f32 %v6598, %v6599
      %v6601 = vrot.slane %v6600, 1
      %v6602 = vmax.f32 %v6600, %v6601
      %v6603 = vsel %vm1878, %v6161, -inf
      %v6604 = vsel %vm1878, %v6217, -inf
      %v6605 = vmax.f32 %v6603, %v6604
      %v6606 = vsel %vm1878, %v6168, -inf
      %v6607 = vsel %vm1878, %v6224, -inf
      %v6608 = vmax.f32 %v6606, %v6607
      %v6609 = vsel %vm1878, %v6175, -inf
      %v6610 = vsel %vm1878, %v6231, -inf
      %v6611 = vmax.f32 %v6609, %v6610
      %v6612 = vsel %vm1878, %v6182, -inf
      %v6613 = vsel %vm1878, %v6238, -inf
      %v6614 = vmax.f32 %v6612, %v6613
      %v6615 = vsel %vm1878, %v6189, -inf
      %v6616 = vsel %vm1878, %v6245, -inf
      %v6617 = vmax.f32 %v6615, %v6616
      %v6618 = vsel %vm1878, %v6196, -inf
      %v6619 = vsel %vm1878, %v6252, -inf
      %v6620 = vmax.f32 %v6618, %v6619
      %v6621 = vsel %vm1878, %v6203, -inf
      %v6622 = vsel %vm1878, %v6259, -inf
      %v6623 = vmax.f32 %v6621, %v6622
      %v6624 = vsel %vm1878, %v6210, -inf
      %v6625 = vsel %vm1878, %v6266, -inf
      %v6626 = vmax.f32 %v6624, %v6625
      %v6627 = vsel %vm1878, %v6273, -inf
      %v6628 = vsel %vm1878, %v6329, -inf
      %v6629 = vmax.f32 %v6627, %v6628
      %v6630 = vsel %vm1878, %v6280, -inf
      %v6631 = vsel %vm1878, %v6336, -inf
      %v6632 = vmax.f32 %v6630, %v6631
      %v6633 = vsel %vm1878, %v6287, -inf
      %v6634 = vsel %vm1878, %v6343, -inf
      %v6635 = vmax.f32 %v6633, %v6634
      %v6636 = vsel %vm1878, %v6294, -inf
      %v6637 = vsel %vm1878, %v6350, -inf
      %v6638 = vmax.f32 %v6636, %v6637
      %v6639 = vsel %vm1878, %v6301, -inf
      %v6640 = vsel %vm1878, %v6357, -inf
      %v6641 = vmax.f32 %v6639, %v6640
      %v6642 = vsel %vm1878, %v6308, -inf
      %v6643 = vsel %vm1878, %v6364, -inf
      %v6644 = vmax.f32 %v6642, %v6643
      %v6645 = vsel %vm1878, %v6315, -inf
      %v6646 = vsel %vm1878, %v6371, -inf
      %v6647 = vmax.f32 %v6645, %v6646
      %v6648 = vsel %vm1878, %v6322, -inf
      %v6649 = vsel %vm1878, %v6378, -inf
      %v6650 = vmax.f32 %v6648, %v6649
      %v6651 = vsel %vm1878, %v6385, -inf
      %v6652 = vsel %vm1878, %v6441, -inf
      %v6653 = vmax.f32 %v6651, %v6652
      %v6654 = vsel %vm1878, %v6392, -inf
      %v6655 = vsel %vm1878, %v6448, -inf
      %v6656 = vmax.f32 %v6654, %v6655
      %v6657 = vsel %vm1878, %v6399, -inf
      %v6658 = vsel %vm1878, %v6455, -inf
      %v6659 = vmax.f32 %v6657, %v6658
      %v6660 = vsel %vm1878, %v6406, -inf
      %v6661 = vsel %vm1878, %v6462, -inf
      %v6662 = vmax.f32 %v6660, %v6661
      %v6663 = vsel %vm1878, %v6413, -inf
      %v6664 = vsel %vm1878, %v6469, -inf
      %v6665 = vmax.f32 %v6663, %v6664
      %v6666 = vsel %vm1878, %v6420, -inf
      %v6667 = vsel %vm1878, %v6476, -inf
      %v6668 = vmax.f32 %v6666, %v6667
      %v6669 = vsel %vm1878, %v6427, -inf
      %v6670 = vsel %vm1878, %v6483, -inf
      %v6671 = vmax.f32 %v6669, %v6670
      %v6672 = vsel %vm1878, %v6434, -inf
      %v6673 = vsel %vm1878, %v6490, -inf
      %v6674 = vmax.f32 %v6672, %v6673
      %v6675 = vsel %vm1878, %v6497, -inf
      %v6676 = vsel %vm1878, %v6553, -inf
      %v6677 = vmax.f32 %v6675, %v6676
      %v6678 = vsel %vm1878, %v6504, -inf
      %v6679 = vsel %vm1878, %v6560, -inf
      %v6680 = vmax.f32 %v6678, %v6679
      %v6681 = vsel %vm1878, %v6511, -inf
      %v6682 = vsel %vm1878, %v6567, -inf
      %v6683 = vmax.f32 %v6681, %v6682
      %v6684 = vsel %vm1878, %v6518, -inf
      %v6685 = vsel %vm1878, %v6574, -inf
      %v6686 = vmax.f32 %v6684, %v6685
      %v6687 = vsel %vm1878, %v6525, -inf
      %v6688 = vsel %vm1878, %v6581, -inf
      %v6689 = vmax.f32 %v6687, %v6688
      %v6690 = vsel %vm1878, %v6532, -inf
      %v6691 = vsel %vm1878, %v6588, -inf
      %v6692 = vmax.f32 %v6690, %v6691
      %v6693 = vsel %vm1878, %v6539, -inf
      %v6694 = vsel %vm1878, %v6595, -inf
      %v6695 = vmax.f32 %v6693, %v6694
      %v6696 = vsel %vm1878, %v6546, -inf
      %v6697 = vsel %vm1878, %v6602, -inf
      %v6698 = vmax.f32 %v6696, %v6697
      %v6699 = vld [vmem:[%s5] sm:$0xff]
      %v6700 = vld [vmem:[%s5 + $0x8] sm:$0xff]
      %v6701 = vld [vmem:[%s5 + $0x10] sm:$0xff]
      %v6702 = vld [vmem:[%s5 + $0x18] sm:$0xff]
      %v6703 = vld [vmem:[%s5 + $0x20] sm:$0xff]
      %v6704 = vld [vmem:[%s5 + $0x28] sm:$0xff]
      %v6705 = vld [vmem:[%s5 + $0x30] sm:$0xff]
      %v6706 = vld [vmem:[%s5 + $0x38] sm:$0xff]
      %v6707 = vld [vmem:[%s5 + $0x40] sm:$0xff]
      %v6708 = vld [vmem:[%s5 + $0x48] sm:$0xff]
      %v6709 = vld [vmem:[%s5 + $0x50] sm:$0xff]
      %v6710 = vld [vmem:[%s5 + $0x58] sm:$0xff]
      %v6711 = vld [vmem:[%s5 + $0x60] sm:$0xff]
      %v6712 = vld [vmem:[%s5 + $0x68] sm:$0xff]
      %v6713 = vld [vmem:[%s5 + $0x70] sm:$0xff]
      %v6714 = vld [vmem:[%s5 + $0x78] sm:$0xff]
      %v6715 = vld [vmem:[%s6] sm:$0x3]
      %v6717 = vlaneseq
      %v6718 = vshrl.u32 %v6717, 7
      %v6719 = vsub.s32 0, %v6718
      %v6720 = vrot.slane %v6715, %v6719
      %v6721 = vlaneseq
      %v6722 = vshrl.u32 %v6721, 7
      %v6723 = vsub.s32 1, %v6722
      %v6724 = vrot.slane %v6715, %v6723
      %v6791 = vrot.slane %v4507, 7
      %vm6792 = vcmask 1041409
      %v6793 = vsel %vm6792, %v6791, %v4504
      %v6794 = vrot.slane %v4510, 6
      %vm6795 = vcmask 1042434
      %v6796 = vsel %vm6795, %v6794, %v6793
      %v6797 = vrot.slane %v4513, 5
      %vm6798 = vcmask 1043459
      %v6799 = vsel %vm6798, %v6797, %v6796
      %v6800 = vrot.slane %v4516, 4
      %vm6801 = vcmask 1044484
      %v6802 = vsel %vm6801, %v6800, %v6799
      %v6803 = vrot.slane %v4519, 3
      %vm6804 = vcmask 1045509
      %v6805 = vsel %vm6804, %v6803, %v6802
      %v6806 = vrot.slane %v4522, 2
      %vm6807 = vcmask 1046534
      %v6808 = vsel %vm6807, %v6806, %v6805
      %v6809 = vrot.slane %v4525, 1
      %vm6810 = vcmask 1047559
      %v6811 = vsel %vm6810, %v6809, %v6808
      %v6812 = vrot.slane %v4531, 7
      %v6813 = vsel %vm6792, %v6812, %v4528
      %v6814 = vrot.slane %v4534, 6
      %v6815 = vsel %vm6795, %v6814, %v6813
      %v6816 = vrot.slane %v4537, 5
      %v6817 = vsel %vm6798, %v6816, %v6815
      %v6818 = vrot.slane %v4540, 4
      %v6819 = vsel %vm6801, %v6818, %v6817
      %v6820 = vrot.slane %v4543, 3
      %v6821 = vsel %vm6804, %v6820, %v6819
      %v6822 = vrot.slane %v4546, 2
      %v6823 = vsel %vm6807, %v6822, %v6821
      %v6824 = vrot.slane %v4549, 1
      %v6825 = vsel %vm6810, %v6824, %v6823
      %v6826 = vrot.slane %v4555, 7
      %v6827 = vsel %vm6792, %v6826, %v4552
      %v6828 = vrot.slane %v4558, 6
      %v6829 = vsel %vm6795, %v6828, %v6827
      %v6830 = vrot.slane %v4561, 5
      %v6831 = vsel %vm6798, %v6830, %v6829
      %v6832 = vrot.slane %v4564, 4
      %v6833 = vsel %vm6801, %v6832, %v6831
      %v6834 = vrot.slane %v4567, 3
      %v6835 = vsel %vm6804, %v6834, %v6833
      %v6836 = vrot.slane %v4570, 2
      %v6837 = vsel %vm6807, %v6836, %v6835
      %v6838 = vrot.slane %v4573, 1
      %v6839 = vsel %vm6810, %v6838, %v6837
      %v6840 = vrot.slane %v4579, 7
      %v6841 = vsel %vm6792, %v6840, %v4576
      %v6842 = vrot.slane %v4582, 6
      %v6843 = vsel %vm6795, %v6842, %v6841
      %v6844 = vrot.slane %v4585, 5
      %v6845 = vsel %vm6798, %v6844, %v6843
      %v6846 = vrot.slane %v4588, 4
      %v6847 = vsel %vm6801, %v6846, %v6845
      %v6848 = vrot.slane %v4591, 3
      %v6849 = vsel %vm6804, %v6848, %v6847
      %v6850 = vrot.slane %v4594, 2
      %v6851 = vsel %vm6807, %v6850, %v6849
      %v6852 = vrot.slane %v4597, 1
      %v6853 = vsel %vm6810, %v6852, %v6851
      %v6854 = vrot.slane %v6608, 7
      %v6855 = vsel %vm6792, %v6854, %v6605
      %v6856 = vrot.slane %v6611, 6
      %v6857 = vsel %vm6795, %v6856, %v6855
      %v6858 = vrot.slane %v6614, 5
      %v6859 = vsel %vm6798, %v6858, %v6857
      %v6860 = vrot.slane %v6617, 4
      %v6861 = vsel %vm6801, %v6860, %v6859
      %v6862 = vrot.slane %v6620, 3
      %v6863 = vsel %vm6804, %v6862, %v6861
      %v6864 = vrot.slane %v6623, 2
      %v6865 = vsel %vm6807, %v6864, %v6863
      %v6866 = vrot.slane %v6626, 1
      %v6867 = vsel %vm6810, %v6866, %v6865
      %v6868 = vrot.slane %v6632, 7
      %v6869 = vsel %vm6792, %v6868, %v6629
      %v6870 = vrot.slane %v6635, 6
      %v6871 = vsel %vm6795, %v6870, %v6869
      %v6872 = vrot.slane %v6638, 5
      %v6873 = vsel %vm6798, %v6872, %v6871
      %v6874 = vrot.slane %v6641, 4
      %v6875 = vsel %vm6801, %v6874, %v6873
      %v6876 = vrot.slane %v6644, 3
      %v6877 = vsel %vm6804, %v6876, %v6875
      %v6878 = vrot.slane %v6647, 2
      %v6879 = vsel %vm6807, %v6878, %v6877
      %v6880 = vrot.slane %v6650, 1
      %v6881 = vsel %vm6810, %v6880, %v6879
      %v6882 = vrot.slane %v6656, 7
      %v6883 = vsel %vm6792, %v6882, %v6653
      %v6884 = vrot.slane %v6659, 6
      %v6885 = vsel %vm6795, %v6884, %v6883
      %v6886 = vrot.slane %v6662, 5
      %v6887 = vsel %vm6798, %v6886, %v6885
      %v6888 = vrot.slane %v6665, 4
      %v6889 = vsel %vm6801, %v6888, %v6887
      %v6890 = vrot.slane %v6668, 3
      %v6891 = vsel %vm6804, %v6890, %v6889
      %v6892 = vrot.slane %v6671, 2
      %v6893 = vsel %vm6807, %v6892, %v6891
      %v6894 = vrot.slane %v6674, 1
      %v6895 = vsel %vm6810, %v6894, %v6893
      %v6896 = vrot.slane %v6680, 7
      %v6897 = vsel %vm6792, %v6896, %v6677
      %v6898 = vrot.slane %v6683, 6
      %v6899 = vsel %vm6795, %v6898, %v6897
      %v6900 = vrot.slane %v6686, 5
      %v6901 = vsel %vm6798, %v6900, %v6899
      %v6902 = vrot.slane %v6689, 4
      %v6903 = vsel %vm6801, %v6902, %v6901
      %v6904 = vrot.slane %v6692, 3
      %v6905 = vsel %vm6804, %v6904, %v6903
      %v6906 = vrot.slane %v6695, 2
      %v6907 = vsel %vm6807, %v6906, %v6905
      %v6908 = vrot.slane %v6698, 1
      %v6909 = vsel %vm6810, %v6908, %v6907
      %v6910 = vsel %vm1878, %v6811, 0
      %v6912 = vsel %vm1878, %v6825, 0
      %v6914 = vsel %vm1878, %v6839, 0
      %v6916 = vsel %vm1878, %v6853, 0
      %v6918 = vsel %vm1878, %v6867, 0
      %v6920 = vsel %vm1878, %v6881, 0
      %v6922 = vsel %vm1878, %v6895, 0
      %v6924 = vsel %vm1878, %v6909, 0
      %6926 = vmatprep.subr.mxu0 0.0
      %6927 = vmatpush1.msra.mxu0 0.0
      %6928 = vmatprep.subr.mxu0 0.0
      %6929 = vmatpush1.msra.mxu0 0.0
      %6930 = vmatprep.subr.mxu0 0.0
      %6931 = vmatpush1.msra.mxu0 0.0
      %6932 = vmatprep.subr.mxu0 0.0
      %6933 = vmatpush1.msra.mxu0 0.0
      %6934 = vmatprep.subr.mxu0 0.0
      %6935 = vmatpush1.msra.mxu0 0.0
      %6936 = vmatprep.subr.mxu0 0.0
      %6937 = vmatpush1.msra.mxu0 0.0
      %6938 = vmatprep.subr.mxu0 0.0
      %6939 = vmatpush1.msra.mxu0 0.0
      %6940 = vmatprep.subr.mxu0 0.0
      %6941 = vmatpush1.msra.mxu0 0.0
      %6942 = vmatprep.subr.mxu0 %v6714
      %6943 = vmatpush1.msra.mxu0 %v6713
      %6944 = vmatprep.subr.mxu0 %v6712
      %6945 = vmatpush1.msra.mxu0 %v6711
      %6946 = vmatprep.subr.mxu0 %v6710
      %6947 = vmatpush1.msra.mxu0 %v6709
      %6948 = vmatprep.subr.mxu0 %v6708
      %6949 = vmatpush1.msra.mxu0 %v6707
      %6950 = vmatprep.subr.mxu0 %v6706
      %6951 = vmatpush1.msra.mxu0 %v6705
      %6952 = vmatprep.subr.mxu0 %v6704
      %6953 = vmatpush1.msra.mxu0 %v6703
      %6954 = vmatprep.subr.mxu0 %v6702
      %6955 = vmatpush1.msra.mxu0 %v6701
      %6956 = vmatprep.subr.mxu0 %v6700
      %6957 = vmatpush1.msra.mxu0 %v6699
      %6958 = vmatprep.subr.mxu0 0.0
      %6959 = vmatpush2.msra.mxu0 0.0
      %6960 = vmatprep.subr.mxu0 0.0
      %6961 = vmatpush2.msra.mxu0 0.0
      %6962 = vmatprep.subr.mxu0 0.0
      %6963 = vmatpush2.msra.mxu0 0.0
      %6964 = vmatprep.subr.mxu0 0.0
      %6965 = vmatpush2.msra.mxu0 0.0
      %6966 = vmatprep.subr.mxu0 0.0
      %6967 = vmatpush2.msra.mxu0 0.0
      %6968 = vmatprep.subr.mxu0 0.0
      %6969 = vmatpush2.msra.mxu0 0.0
      %6970 = vmatprep.subr.mxu0 0.0
      %6971 = vmatpush2.msra.mxu0 0.0
      %6972 = vmatprep.subr.mxu0 0.0
      %6973 = vmatpush2.msra.mxu0 0.0
      %6974 = vmatprep.subr.mxu0 0.0
      %6975 = vmatpush2.msra.mxu0 0.0
      %6976 = vmatprep.subr.mxu0 0.0
      %6977 = vmatpush2.msra.mxu0 0.0
      %6978 = vmatprep.subr.mxu0 0.0
      %6979 = vmatpush2.msra.mxu0 0.0
      %6980 = vmatprep.subr.mxu0 0.0
      %6981 = vmatpush2.msra.mxu0 0.0
      %6982 = vmatprep.subr.mxu0 0.0
      %6983 = vmatpush2.msra.mxu0 0.0
      %6984 = vmatprep.subr.mxu0 0.0
      %6985 = vmatpush2.msra.mxu0 0.0
      %6986 = vmatprep.subr.mxu0 0.0
      %6987 = vmatpush2.msra.mxu0 0.0
      %6988 = vmatprep.subr.mxu0 0.0
      %6989 = vmatpush2.msra.mxu0 0.0
      %6990 = vmatprep.mubr.f32.mxu0 0.0
      %6991 = vmatmul.mubr.f32.gmra.mxu0 %v6910
      %v6992 = vpop.f32.mrf.mxu0
      %v6993 = vadd.f32 %v6720, %v6992
      %v6994 = vpop.f32.mrf.mxu0
      %v6995 = vadd.f32 %v6724, %v6994
      %6996 = vmatprep.mubr.f32.mxu0 0.0
      %6997 = vmatmul.mubr.f32.gmra.mxu0 %v6912
      %v6998 = vpop.f32.mrf.mxu0
      %v6999 = vadd.f32 %v6720, %v6998
      %v7000 = vpop.f32.mrf.mxu0
      %v7001 = vadd.f32 %v6724, %v7000
      %7002 = vmatprep.mubr.f32.mxu0 0.0
      %7003 = vmatmul.mubr.f32.gmra.mxu0 %v6914
      %v7004 = vpop.f32.mrf.mxu0
      %v7005 = vadd.f32 %v6720, %v7004
      %v7006 = vpop.f32.mrf.mxu0
      %v7007 = vadd.f32 %v6724, %v7006
      %7008 = vmatprep.mubr.f32.mxu0 0.0
      %7009 = vmatmul.mubr.f32.gmra.mxu0 %v6916
      %v7010 = vpop.f32.mrf.mxu0
      %v7011 = vadd.f32 %v6720, %v7010
      %v7012 = vpop.f32.mrf.mxu0
      %v7013 = vadd.f32 %v6724, %v7012
      %7014 = vmatprep.mubr.f32.mxu0 0.0
      %7015 = vmatmul.mubr.f32.gmra.mxu0 %v6918
      %v7016 = vpop.f32.mrf.mxu0
      %v7017 = vadd.f32 %v6720, %v7016
      %v7018 = vpop.f32.mrf.mxu0
      %v7019 = vadd.f32 %v6724, %v7018
      %7020 = vmatprep.mubr.f32.mxu0 0.0
      %7021 = vmatmul.mubr.f32.gmra.mxu0 %v6920
      %v7022 = vpop.f32.mrf.mxu0
      %v7023 = vadd.f32 %v6720, %v7022
      %v7024 = vpop.f32.mrf.mxu0
      %v7025 = vadd.f32 %v6724, %v7024
      %7026 = vmatprep.mubr.f32.mxu0 0.0
      %7027 = vmatmul.mubr.f32.gmra.mxu0 %v6922
      %v7028 = vpop.f32.mrf.mxu0
      %v7029 = vadd.f32 %v6720, %v7028
      %v7030 = vpop.f32.mrf.mxu0
      %v7031 = vadd.f32 %v6724, %v7030
      %7032 = vmatprep.mubr.f32.mxu0 0.0
      %7033 = vmatmul.mubr.f32.gmra.mxu0 %v6924
      %v7034 = vpop.f32.mrf.mxu0
      %v7035 = vadd.f32 %v6720, %v7034
      %v7036 = vpop.f32.mrf.mxu0
      %v7037 = vadd.f32 %v6724, %v7036
      %7038 = vdwg.mxu0
      %v7039 = vmax.f32 %v6993, 0.0
      %v7040 = vmax.f32 %v6995, 0.0
      %v7041 = vmax.f32 %v6999, 0.0
      %v7042 = vmax.f32 %v7001, 0.0
      %v7043 = vmax.f32 %v7005, 0.0
      %v7044 = vmax.f32 %v7007, 0.0
      %v7045 = vmax.f32 %v7011, 0.0
      %v7046 = vmax.f32 %v7013, 0.0
      %v7047 = vmax.f32 %v7017, 0.0
      %v7048 = vmax.f32 %v7019, 0.0
      %v7049 = vmax.f32 %v7023, 0.0
      %v7050 = vmax.f32 %v7025, 0.0
      %v7051 = vmax.f32 %v7029, 0.0
      %v7052 = vmax.f32 %v7031, 0.0
      %v7053 = vmax.f32 %v7035, 0.0
      %v7054 = vmax.f32 %v7037, 0.0
      %7055 = vst [vmem:[#allocation4] sm:$0xff] 0.0
      %7056 = vst [vmem:[#allocation4 + $0x8] sm:$0x3] 0.0
      %7057 = vst [vmem:[#allocation4 + $0xa0] sm:$0xff] 0.0
      %7058 = vst [vmem:[#allocation4 + $0xa8] sm:$0x3] 0.0
      %s7059 = scalar_lea.vmem [#allocation4], 144
      %7060 = vst [vmem:[%s7059] sm:$0xff] 0.0
      %7061 = vst [vmem:[%s7059 + $0x8] sm:$0x3] 0.0
      %7062 = vst [vmem:[%s7059 + $0xa0] sm:$0xff] 0.0
      %7063 = vst [vmem:[%s7059 + $0xa8] sm:$0x3] 0.0
      %v7072 = vrot.slane %v7039, 7
      %v7073 = vrot.slane %v7041, 7
      %v7074 = vrot.slane %v7043, 7
      %v7075 = vrot.slane %v7045, 7
      %v7076 = vrot.slane %v7047, 7
      %v7077 = vrot.slane %v7049, 7
      %v7078 = vrot.slane %v7051, 7
      %v7079 = vrot.slane %v7053, 7
      %v7088 = vsel %vm2321, 0.0, %v7072
      %v7089 = vsel %vm2321, 0.0, %v7073
      %v7090 = vsel %vm2321, 0.0, %v7074
      %v7091 = vsel %vm2321, 0.0, %v7075
      %v7092 = vsel %vm2321, 0.0, %v7076
      %v7093 = vsel %vm2321, 0.0, %v7077
      %v7094 = vsel %vm2321, 0.0, %v7078
      %v7095 = vsel %vm2321, 0.0, %v7079
      %v7096 = vsel %vm2321, %v7072, 0.0
      %v7097 = vsel %vm2321, %v7073, 0.0
      %v7098 = vsel %vm2321, %v7074, 0.0
      %v7099 = vsel %vm2321, %v7075, 0.0
      %v7100 = vsel %vm2321, %v7076, 0.0
      %v7101 = vsel %vm2321, %v7077, 0.0
      %v7102 = vsel %vm2321, %v7078, 0.0
      %v7103 = vsel %vm2321, %v7079, 0.0
      %s7104 = scalar_lea.vmem [#allocation4], 16
      %7105 = vst [vmem:[%s7104] sm:$0xff] %v7088
      %7106 = vst [vmem:[%s7104 + $0x8] sm:$0x3] %v7096
      %7107 = vst [vmem:[%s7104 + $0x10] sm:$0xff] %v7089
      %7108 = vst [vmem:[%s7104 + $0x18] sm:$0x3] %v7097
      %7109 = vst [vmem:[%s7104 + $0x20] sm:$0xff] %v7090
      %7110 = vst [vmem:[%s7104 + $0x28] sm:$0x3] %v7098
      %7111 = vst [vmem:[%s7104 + $0x30] sm:$0xff] %v7091
      %7112 = vst [vmem:[%s7104 + $0x38] sm:$0x3] %v7099
      %7113 = vst [vmem:[%s7104 + $0x40] sm:$0xff] %v7092
      %7114 = vst [vmem:[%s7104 + $0x48] sm:$0x3] %v7100
      %7115 = vst [vmem:[%s7104 + $0x50] sm:$0xff] %v7093
      %7116 = vst [vmem:[%s7104 + $0x58] sm:$0x3] %v7101
      %7117 = vst [vmem:[%s7104 + $0x60] sm:$0xff] %v7094
      %7118 = vst [vmem:[%s7104 + $0x68] sm:$0x3] %v7102
      %7119 = vst [vmem:[%s7104 + $0x70] sm:$0xff] %v7095
      %7120 = vst [vmem:[%s7104 + $0x78] sm:$0x3] %v7103
      %v7129 = vrot.slane %v7040, 7
      %v7130 = vrot.slane %v7042, 7
      %v7131 = vrot.slane %v7044, 7
      %v7132 = vrot.slane %v7046, 7
      %v7133 = vrot.slane %v7048, 7
      %v7134 = vrot.slane %v7050, 7
      %v7135 = vrot.slane %v7052, 7
      %v7136 = vrot.slane %v7054, 7
      %v7145 = vsel %vm2321, 0.0, %v7129
      %v7146 = vsel %vm2321, 0.0, %v7130
      %v7147 = vsel %vm2321, 0.0, %v7131
      %v7148 = vsel %vm2321, 0.0, %v7132
      %v7149 = vsel %vm2321, 0.0, %v7133
      %v7150 = vsel %vm2321, 0.0, %v7134
      %v7151 = vsel %vm2321, 0.0, %v7135
      %v7152 = vsel %vm2321, 0.0, %v7136
      %v7153 = vsel %vm2321, %v7129, 0.0
      %v7154 = vsel %vm2321, %v7130, 0.0
      %v7155 = vsel %vm2321, %v7131, 0.0
      %v7156 = vsel %vm2321, %v7132, 0.0
      %v7157 = vsel %vm2321, %v7133, 0.0
      %v7158 = vsel %vm2321, %v7134, 0.0
      %v7159 = vsel %vm2321, %v7135, 0.0
      %v7160 = vsel %vm2321, %v7136, 0.0
      %s7161 = scalar_lea.vmem [#allocation4], 176
      %7162 = vst [vmem:[%s7161] sm:$0xff] %v7145
      %7163 = vst [vmem:[%s7161 + $0x8] sm:$0x3] %v7153
      %7164 = vst [vmem:[%s7161 + $0x10] sm:$0xff] %v7146
      %7165 = vst [vmem:[%s7161 + $0x18] sm:$0x3] %v7154
      %7166 = vst [vmem:[%s7161 + $0x20] sm:$0xff] %v7147
      %7167 = vst [vmem:[%s7161 + $0x28] sm:$0x3] %v7155
      %7168 = vst [vmem:[%s7161 + $0x30] sm:$0xff] %v7148
      %7169 = vst [vmem:[%s7161 + $0x38] sm:$0x3] %v7156
      %7170 = vst [vmem:[%s7161 + $0x40] sm:$0xff] %v7149
      %7171 = vst [vmem:[%s7161 + $0x48] sm:$0x3] %v7157
      %7172 = vst [vmem:[%s7161 + $0x50] sm:$0xff] %v7150
      %7173 = vst [vmem:[%s7161 + $0x58] sm:$0x3] %v7158
      %7174 = vst [vmem:[%s7161 + $0x60] sm:$0xff] %v7151
      %7175 = vst [vmem:[%s7161 + $0x68] sm:$0x3] %v7159
      %7176 = vst [vmem:[%s7161 + $0x70] sm:$0xff] %v7152
      %7177 = vst [vmem:[%s7161 + $0x78] sm:$0x3] %v7160
      %s7178 = scalar_lea.vmem [#allocation4], 160
      %v7179 = vld [vmem:[%s7178] sm:$0xff]
      %v7180 = vld [vmem:[%s7178 + $0x10] sm:$0xff]
      %v7181 = vld [vmem:[%s7178 + $0x20] sm:$0xff]
      %v7182 = vld [vmem:[%s7178 + $0x30] sm:$0xff]
      %v7183 = vld [vmem:[%s7178 + $0x40] sm:$0xff]
      %v7184 = vld [vmem:[%s7178 + $0x50] sm:$0xff]
      %v7185 = vld [vmem:[%s7178 + $0x60] sm:$0xff]
      %v7186 = vld [vmem:[%s7178 + $0x70] sm:$0xff]
      %v7187 = vld [vmem:[%s7178 + $0x1] sm:$0xff]
      %v7188 = vld [vmem:[%s7178 + $0x11] sm:$0xff]
      %v7189 = vld [vmem:[%s7178 + $0x21] sm:$0xff]
      %v7190 = vld [vmem:[%s7178 + $0x31] sm:$0xff]
      %v7191 = vld [vmem:[%s7178 + $0x41] sm:$0xff]
      %v7192 = vld [vmem:[%s7178 + $0x51] sm:$0xff]
      %v7193 = vld [vmem:[%s7178 + $0x61] sm:$0xff]
      %v7194 = vld [vmem:[%s7178 + $0x71] sm:$0xff]
      %7203 = vrot.lane.b32.xlu0 %v7179, 64
      %v7204 = vpop.permute.xlu0 %7203
      %7205 = vrot.lane.b32.xlu0 %v7180, 64
      %v7206 = vpop.permute.xlu0 %7205
      %7207 = vrot.lane.b32.xlu0 %v7181, 64
      %v7208 = vpop.permute.xlu0 %7207
      %7209 = vrot.lane.b32.xlu0 %v7182, 64
      %v7210 = vpop.permute.xlu0 %7209
      %7211 = vrot.lane.b32.xlu0 %v7183, 64
      %v7212 = vpop.permute.xlu0 %7211
      %7213 = vrot.lane.b32.xlu0 %v7184, 64
      %v7214 = vpop.permute.xlu0 %7213
      %7215 = vrot.lane.b32.xlu0 %v7185, 64
      %v7216 = vpop.permute.xlu0 %7215
      %7217 = vrot.lane.b32.xlu0 %v7186, 64
      %v7218 = vpop.permute.xlu0 %7217
      %7235 = vrot.lane.b32.xlu0 %v7187, 64
      %v7236 = vpop.permute.xlu0 %7235
      %7237 = vrot.lane.b32.xlu0 %v7188, 64
      %v7238 = vpop.permute.xlu0 %7237
      %7239 = vrot.lane.b32.xlu0 %v7189, 64
      %v7240 = vpop.permute.xlu0 %7239
      %7241 = vrot.lane.b32.xlu0 %v7190, 64
      %v7242 = vpop.permute.xlu0 %7241
      %7243 = vrot.lane.b32.xlu0 %v7191, 64
      %v7244 = vpop.permute.xlu0 %7243
      %7245 = vrot.lane.b32.xlu0 %v7192, 64
      %v7246 = vpop.permute.xlu0 %7245
      %7247 = vrot.lane.b32.xlu0 %v7193, 64
      %v7248 = vpop.permute.xlu0 %7247
      %7249 = vrot.lane.b32.xlu0 %v7194, 64
      %v7250 = vpop.permute.xlu0 %7249
      %v7259 = vsel %vm1878, %v7204, %v7236
      %v7260 = vsel %vm1878, %v7206, %v7238
      %v7261 = vsel %vm1878, %v7208, %v7240
      %v7262 = vsel %vm1878, %v7210, %v7242
      %v7263 = vsel %vm1878, %v7212, %v7244
      %v7264 = vsel %vm1878, %v7214, %v7246
      %v7265 = vsel %vm1878, %v7216, %v7248
      %v7266 = vsel %vm1878, %v7218, %v7250
      %7267 = vst [vmem:[#allocation3] sm:$0xff] %v7259
      %7268 = vst [vmem:[#allocation3 + $0x28] sm:$0xff] %v7260
      %7269 = vst [vmem:[#allocation3 + $0x50] sm:$0xff] %v7261
      %7270 = vst [vmem:[#allocation3 + $0x78] sm:$0xff] %v7262
      %7271 = vst [vmem:[#allocation3 + $0xa0] sm:$0xff] %v7263
      %7272 = vst [vmem:[#allocation3 + $0xc8] sm:$0xff] %v7264
      %7273 = vst [vmem:[#allocation3 + $0xf0] sm:$0xff] %v7265
      %7274 = vst [vmem:[#allocation3 + $0x118] sm:$0xff] %v7266
      %v7275 = vld [vmem:[%s7178 + $0x1] sm:$0xff]
      %v7276 = vld [vmem:[%s7178 + $0x11] sm:$0xff]
      %v7277 = vld [vmem:[%s7178 + $0x21] sm:$0xff]
      %v7278 = vld [vmem:[%s7178 + $0x31] sm:$0xff]
      %v7279 = vld [vmem:[%s7178 + $0x41] sm:$0xff]
      %v7280 = vld [vmem:[%s7178 + $0x51] sm:$0xff]
      %v7281 = vld [vmem:[%s7178 + $0x61] sm:$0xff]
      %v7282 = vld [vmem:[%s7178 + $0x71] sm:$0xff]
      %v7283 = vld [vmem:[%s7104] sm:$0xff]
      %v7284 = vld [vmem:[%s7104 + $0x10] sm:$0xff]
      %v7285 = vld [vmem:[%s7104 + $0x20] sm:$0xff]
      %v7286 = vld [vmem:[%s7104 + $0x30] sm:$0xff]
      %v7287 = vld [vmem:[%s7104 + $0x40] sm:$0xff]
      %v7288 = vld [vmem:[%s7104 + $0x50] sm:$0xff]
      %v7289 = vld [vmem:[%s7104 + $0x60] sm:$0xff]
      %v7290 = vld [vmem:[%s7104 + $0x70] sm:$0xff]
      %7299 = vrot.lane.b32.xlu0 %v7275, 64
      %v7300 = vpop.permute.xlu0 %7299
      %7301 = vrot.lane.b32.xlu0 %v7276, 64
      %v7302 = vpop.permute.xlu0 %7301
      %7303 = vrot.lane.b32.xlu0 %v7277, 64
      %v7304 = vpop.permute.xlu0 %7303
      %7305 = vrot.lane.b32.xlu0 %v7278, 64
      %v7306 = vpop.permute.xlu0 %7305
      %7307 = vrot.lane.b32.xlu0 %v7279, 64
      %v7308 = vpop.permute.xlu0 %7307
      %7309 = vrot.lane.b32.xlu0 %v7280, 64
      %v7310 = vpop.permute.xlu0 %7309
      %7311 = vrot.lane.b32.xlu0 %v7281, 64
      %v7312 = vpop.permute.xlu0 %7311
      %7313 = vrot.lane.b32.xlu0 %v7282, 64
      %v7314 = vpop.permute.xlu0 %7313
      %v7323 = vsel %vm1878, %v7300, %v7283
      %v7324 = vsel %vm1878, %v7302, %v7284
      %v7325 = vsel %vm1878, %v7304, %v7285
      %v7326 = vsel %vm1878, %v7306, %v7286
      %v7327 = vsel %vm1878, %v7308, %v7287
      %v7328 = vsel %vm1878, %v7310, %v7288
      %v7329 = vsel %vm1878, %v7312, %v7289
      %v7330 = vsel %vm1878, %v7314, %v7290
      %7331 = vst [vmem:[#allocation3 + $0x8] sm:$0xff] %v7323
      %7332 = vst [vmem:[#allocation3 + $0x30] sm:$0xff] %v7324
      %7333 = vst [vmem:[#allocation3 + $0x58] sm:$0xff] %v7325
      %7334 = vst [vmem:[#allocation3 + $0x80] sm:$0xff] %v7326
      %7335 = vst [vmem:[#allocation3 + $0xa8] sm:$0xff] %v7327
      %7336 = vst [vmem:[#allocation3 + $0xd0] sm:$0xff] %v7328
      %7337 = vst [vmem:[#allocation3 + $0xf8] sm:$0xff] %v7329
      %7338 = vst [vmem:[#allocation3 + $0x120] sm:$0xff] %v7330
      %v7339 = vld [vmem:[%s7104 + $0x1] sm:$0xff]
      %v7340 = vld [vmem:[%s7104 + $0x11] sm:$0xff]
      %v7341 = vld [vmem:[%s7104 + $0x21] sm:$0xff]
      %v7342 = vld [vmem:[%s7104 + $0x31] sm:$0xff]
      %v7343 = vld [vmem:[%s7104 + $0x41] sm:$0xff]
      %v7344 = vld [vmem:[%s7104 + $0x51] sm:$0xff]
      %v7345 = vld [vmem:[%s7104 + $0x61] sm:$0xff]
      %v7346 = vld [vmem:[%s7104 + $0x71] sm:$0xff]
      %7347 = vst [vmem:[#allocation3 + $0x10] sm:$0xff] %v7339
      %7348 = vst [vmem:[#allocation3 + $0x38] sm:$0xff] %v7340
      %7349 = vst [vmem:[#allocation3 + $0x60] sm:$0xff] %v7341
      %7350 = vst [vmem:[#allocation3 + $0x88] sm:$0xff] %v7342
      %7351 = vst [vmem:[#allocation3 + $0xb0] sm:$0xff] %v7343
      %7352 = vst [vmem:[#allocation3 + $0xd8] sm:$0xff] %v7344
      %7353 = vst [vmem:[#allocation3 + $0x100] sm:$0xff] %v7345
      %7354 = vst [vmem:[#allocation3 + $0x128] sm:$0xff] %v7346
      %v7355 = vld [vmem:[%s7161] sm:$0xff]
      %v7356 = vld [vmem:[%s7161 + $0x10] sm:$0xff]
      %v7357 = vld [vmem:[%s7161 + $0x20] sm:$0xff]
      %v7358 = vld [vmem:[%s7161 + $0x30] sm:$0xff]
      %v7359 = vld [vmem:[%s7161 + $0x40] sm:$0xff]
      %v7360 = vld [vmem:[%s7161 + $0x50] sm:$0xff]
      %v7361 = vld [vmem:[%s7161 + $0x60] sm:$0xff]
      %v7362 = vld [vmem:[%s7161 + $0x70] sm:$0xff]
      %v7363 = vld [vmem:[%s7161 + $0x1] sm:$0xff]
      %v7364 = vld [vmem:[%s7161 + $0x11] sm:$0xff]
      %v7365 = vld [vmem:[%s7161 + $0x21] sm:$0xff]
      %v7366 = vld [vmem:[%s7161 + $0x31] sm:$0xff]
      %v7367 = vld [vmem:[%s7161 + $0x41] sm:$0xff]
      %v7368 = vld [vmem:[%s7161 + $0x51] sm:$0xff]
      %v7369 = vld [vmem:[%s7161 + $0x61] sm:$0xff]
      %v7370 = vld [vmem:[%s7161 + $0x71] sm:$0xff]
      %7379 = vrot.lane.b32.xlu0 %v7355, 64
      %v7380 = vpop.permute.xlu0 %7379
      %7381 = vrot.lane.b32.xlu0 %v7356, 64
      %v7382 = vpop.permute.xlu0 %7381
      %7383 = vrot.lane.b32.xlu0 %v7357, 64
      %v7384 = vpop.permute.xlu0 %7383
      %7385 = vrot.lane.b32.xlu0 %v7358, 64
      %v7386 = vpop.permute.xlu0 %7385
      %7387 = vrot.lane.b32.xlu0 %v7359, 64
      %v7388 = vpop.permute.xlu0 %7387
      %7389 = vrot.lane.b32.xlu0 %v7360, 64
      %v7390 = vpop.permute.xlu0 %7389
      %7391 = vrot.lane.b32.xlu0 %v7361, 64
      %v7392 = vpop.permute.xlu0 %7391
      %7393 = vrot.lane.b32.xlu0 %v7362, 64
      %v7394 = vpop.permute.xlu0 %7393
      %7411 = vrot.lane.b32.xlu0 %v7363, 64
      %v7412 = vpop.permute.xlu0 %7411
      %7413 = vrot.lane.b32.xlu0 %v7364, 64
      %v7414 = vpop.permute.xlu0 %7413
      %7415 = vrot.lane.b32.xlu0 %v7365, 64
      %v7416 = vpop.permute.xlu0 %7415
      %7417 = vrot.lane.b32.xlu0 %v7366, 64
      %v7418 = vpop.permute.xlu0 %7417
      %7419 = vrot.lane.b32.xlu0 %v7367, 64
      %v7420 = vpop.permute.xlu0 %7419
      %7421 = vrot.lane.b32.xlu0 %v7368, 64
      %v7422 = vpop.permute.xlu0 %7421
      %7423 = vrot.lane.b32.xlu0 %v7369, 64
      %v7424 = vpop.permute.xlu0 %7423
      %7425 = vrot.lane.b32.xlu0 %v7370, 64
      %v7426 = vpop.permute.xlu0 %7425
      %v7435 = vsel %vm1878, %v7380, %v7412
      %v7436 = vsel %vm1878, %v7382, %v7414
      %v7437 = vsel %vm1878, %v7384, %v7416
      %v7438 = vsel %vm1878, %v7386, %v7418
      %v7439 = vsel %vm1878, %v7388, %v7420
      %v7440 = vsel %vm1878, %v7390, %v7422
      %v7441 = vsel %vm1878, %v7392, %v7424
      %v7442 = vsel %vm1878, %v7394, %v7426
      %7443 = vst [vmem:[#allocation3 + $0x18] sm:$0xff] %v7435
      %7444 = vst [vmem:[#allocation3 + $0x40] sm:$0xff] %v7436
      %7445 = vst [vmem:[#allocation3 + $0x68] sm:$0xff] %v7437
      %7446 = vst [vmem:[#allocation3 + $0x90] sm:$0xff] %v7438
      %7447 = vst [vmem:[#allocation3 + $0xb8] sm:$0xff] %v7439
      %7448 = vst [vmem:[#allocation3 + $0xe0] sm:$0xff] %v7440
      %7449 = vst [vmem:[#allocation3 + $0x108] sm:$0xff] %v7441
      %7450 = vst [vmem:[#allocation3 + $0x130] sm:$0xff] %v7442
      %v7451 = vld [vmem:[%s7161 + $0x1] sm:$0xff]
      %v7452 = vld [vmem:[%s7161 + $0x11] sm:$0xff]
      %v7453 = vld [vmem:[%s7161 + $0x21] sm:$0xff]
      %v7454 = vld [vmem:[%s7161 + $0x31] sm:$0xff]
      %v7455 = vld [vmem:[%s7161 + $0x41] sm:$0xff]
      %v7456 = vld [vmem:[%s7161 + $0x51] sm:$0xff]
      %v7457 = vld [vmem:[%s7161 + $0x61] sm:$0xff]
      %v7458 = vld [vmem:[%s7161 + $0x71] sm:$0xff]
      %7467 = vrot.lane.b32.xlu0 %v7451, 64
      %v7468 = vpop.permute.xlu0 %7467
      %7469 = vrot.lane.b32.xlu0 %v7452, 64
      %v7470 = vpop.permute.xlu0 %7469
      %7471 = vrot.lane.b32.xlu0 %v7453, 64
      %v7472 = vpop.permute.xlu0 %7471
      %7473 = vrot.lane.b32.xlu0 %v7454, 64
      %v7474 = vpop.permute.xlu0 %7473
      %7475 = vrot.lane.b32.xlu0 %v7455, 64
      %v7476 = vpop.permute.xlu0 %7475
      %7477 = vrot.lane.b32.xlu0 %v7456, 64
      %v7478 = vpop.permute.xlu0 %7477
      %7479 = vrot.lane.b32.xlu0 %v7457, 64
      %v7480 = vpop.permute.xlu0 %7479
      %7481 = vrot.lane.b32.xlu0 %v7458, 64
      %v7482 = vpop.permute.xlu0 %7481
      %7491 = vst.msk [vmem:[#allocation3 + $0x20] sm:$0xff] %vm1878, %v7468
      %7492 = vst.msk [vmem:[#allocation3 + $0x48] sm:$0xff] %vm1878, %v7470
      %7493 = vst.msk [vmem:[#allocation3 + $0x70] sm:$0xff] %vm1878, %v7472
      %7494 = vst.msk [vmem:[#allocation3 + $0x98] sm:$0xff] %vm1878, %v7474
      %7495 = vst.msk [vmem:[#allocation3 + $0xc0] sm:$0xff] %vm1878, %v7476
      %7496 = vst.msk [vmem:[#allocation3 + $0xe8] sm:$0xff] %vm1878, %v7478
      %7497 = vst.msk [vmem:[#allocation3 + $0x110] sm:$0xff] %vm1878, %v7480
      %7498 = vst.msk [vmem:[#allocation3 + $0x138] sm:$0xff] %vm1878, %v7482
      %v7499 = vld [vmem:[#allocation3] sm:$0xff]
      %v7500 = vld [vmem:[#allocation3 + $0x8] sm:$0xff]
      %v7501 = vld [vmem:[#allocation3 + $0x10] sm:$0xff]
      %v7502 = vld [vmem:[#allocation3 + $0x18] sm:$0xff]
      %v7503 = vld [vmem:[#allocation3 + $0x20] sm:$0xff]
      %v7504 = vld [vmem:[#allocation3 + $0x28] sm:$0xff]
      %v7505 = vld [vmem:[#allocation3 + $0x30] sm:$0xff]
      %v7506 = vld [vmem:[#allocation3 + $0x38] sm:$0xff]
      %v7507 = vld [vmem:[#allocation3 + $0x40] sm:$0xff]
      %v7508 = vld [vmem:[#allocation3 + $0x48] sm:$0xff]
      %v7509 = vld [vmem:[#allocation3 + $0x50] sm:$0xff]
      %v7510 = vld [vmem:[#allocation3 + $0x58] sm:$0xff]
      %v7511 = vld [vmem:[#allocation3 + $0x60] sm:$0xff]
      %v7512 = vld [vmem:[#allocation3 + $0x68] sm:$0xff]
      %v7513 = vld [vmem:[#allocation3 + $0x70] sm:$0xff]
      %v7514 = vld [vmem:[#allocation3 + $0x78] sm:$0xff]
      %v7515 = vld [vmem:[#allocation3 + $0x80] sm:$0xff]
      %v7516 = vld [vmem:[#allocation3 + $0x88] sm:$0xff]
      %v7517 = vld [vmem:[#allocation3 + $0x90] sm:$0xff]
      %v7518 = vld [vmem:[#allocation3 + $0x98] sm:$0xff]
      %v7519 = vld [vmem:[#allocation3 + $0xa0] sm:$0xff]
      %v7520 = vld [vmem:[#allocation3 + $0xa8] sm:$0xff]
      %v7521 = vld [vmem:[#allocation3 + $0xb0] sm:$0xff]
      %v7522 = vld [vmem:[#allocation3 + $0xb8] sm:$0xff]
      %v7523 = vld [vmem:[#allocation3 + $0xc0] sm:$0xff]
      %v7524 = vld [vmem:[#allocation3 + $0xc8] sm:$0xff]
      %v7525 = vld [vmem:[#allocation3 + $0xd0] sm:$0xff]
      %v7526 = vld [vmem:[#allocation3 + $0xd8] sm:$0xff]
      %v7527 = vld [vmem:[#allocation3 + $0xe0] sm:$0xff]
      %v7528 = vld [vmem:[#allocation3 + $0xe8] sm:$0xff]
      %v7529 = vld [vmem:[#allocation3 + $0xf0] sm:$0xff]
      %v7530 = vld [vmem:[#allocation3 + $0xf8] sm:$0xff]
      %v7531 = vld [vmem:[#allocation3 + $0x100] sm:$0xff]
      %v7532 = vld [vmem:[#allocation3 + $0x108] sm:$0xff]
      %v7533 = vld [vmem:[#allocation3 + $0x110] sm:$0xff]
      %v7534 = vld [vmem:[#allocation3 + $0x118] sm:$0xff]
      %v7535 = vld [vmem:[#allocation3 + $0x120] sm:$0xff]
      %v7536 = vld [vmem:[#allocation3 + $0x128] sm:$0xff]
      %v7537 = vld [vmem:[#allocation3 + $0x130] sm:$0xff]
      %v7538 = vld [vmem:[#allocation3 + $0x138] sm:$0xff]
      %v7539 = vld [vmem:[%s7] sm:$0xff]
      %v7540 = vld [vmem:[%s7 + $0x8] sm:$0xff]
      %v7541 = vld [vmem:[%s7 + $0x10] sm:$0xff]
      %v7542 = vld [vmem:[%s7 + $0x18] sm:$0xff]
      %v7543 = vld [vmem:[%s7 + $0x20] sm:$0xff]
      %v7544 = vld [vmem:[%s7 + $0x28] sm:$0xff]
      %v7545 = vld [vmem:[%s7 + $0x30] sm:$0xff]
      %v7546 = vld [vmem:[%s7 + $0x38] sm:$0xff]
      %v7547 = vld [vmem:[%s7 + $0x40] sm:$0xff]
      %v7548 = vld [vmem:[%s7 + $0x48] sm:$0xff]
      %v7549 = vld [vmem:[%s7 + $0x50] sm:$0xff]
      %v7550 = vld [vmem:[%s7 + $0x58] sm:$0xff]
      %v7551 = vld [vmem:[%s7 + $0x60] sm:$0xff]
      %v7552 = vld [vmem:[%s7 + $0x68] sm:$0xff]
      %v7553 = vld [vmem:[%s7 + $0x70] sm:$0xff]
      %v7554 = vld [vmem:[%s7 + $0x78] sm:$0xff]
      %v7555 = vld [vmem:[%s7 + $0x80] sm:$0xff]
      %v7556 = vld [vmem:[%s7 + $0x88] sm:$0xff]
      %v7557 = vld [vmem:[%s7 + $0x90] sm:$0xff]
      %v7558 = vld [vmem:[%s7 + $0x98] sm:$0xff]
      %v7559 = vld [vmem:[%s7 + $0xa0] sm:$0xff]
      %v7560 = vld [vmem:[%s7 + $0xa8] sm:$0xff]
      %v7561 = vld [vmem:[%s7 + $0xb0] sm:$0xff]
      %v7562 = vld [vmem:[%s7 + $0xb8] sm:$0xff]
      %v7563 = vld [vmem:[%s7 + $0xc0] sm:$0xff]
      %v7564 = vld [vmem:[%s7 + $0xc8] sm:$0xff]
      %v7565 = vld [vmem:[%s7 + $0xd0] sm:$0xff]
      %v7566 = vld [vmem:[%s7 + $0xd8] sm:$0xff]
      %v7567 = vld [vmem:[%s7 + $0xe0] sm:$0xff]
      %v7568 = vld [vmem:[%s7 + $0xe8] sm:$0xff]
      %v7569 = vld [vmem:[%s7 + $0xf0] sm:$0xff]
      %v7570 = vld [vmem:[%s7 + $0xf8] sm:$0xff]
      %v7571 = vld [vmem:[%s7 + $0x100] sm:$0xff]
      %v7572 = vld [vmem:[%s7 + $0x108] sm:$0xff]
      %v7573 = vld [vmem:[%s7 + $0x110] sm:$0xff]
      %v7574 = vld [vmem:[%s7 + $0x118] sm:$0xff]
      %v7575 = vld [vmem:[%s7 + $0x120] sm:$0xff]
      %v7576 = vld [vmem:[%s7 + $0x128] sm:$0xff]
      %v7577 = vld [vmem:[%s7 + $0x130] sm:$0xff]
      %v7578 = vld [vmem:[%s7 + $0x138] sm:$0xff]
      %v7579 = vld [vmem:[%s7 + $0x140] sm:$0xff]
      %v7580 = vld [vmem:[%s7 + $0x148] sm:$0xff]
      %v7581 = vld [vmem:[%s7 + $0x150] sm:$0xff]
      %v7582 = vld [vmem:[%s7 + $0x158] sm:$0xff]
      %v7583 = vld [vmem:[%s7 + $0x160] sm:$0xff]
      %v7584 = vld [vmem:[%s7 + $0x168] sm:$0xff]
      %v7585 = vld [vmem:[%s7 + $0x170] sm:$0xff]
      %v7586 = vld [vmem:[%s7 + $0x178] sm:$0xff]
      %v7587 = vld [vmem:[%s7 + $0x180] sm:$0xff]
      %v7588 = vld [vmem:[%s7 + $0x188] sm:$0xff]
      %v7589 = vld [vmem:[%s7 + $0x190] sm:$0xff]
      %v7590 = vld [vmem:[%s7 + $0x198] sm:$0xff]
      %v7591 = vld [vmem:[%s7 + $0x1a0] sm:$0xff]
      %v7592 = vld [vmem:[%s7 + $0x1a8] sm:$0xff]
      %v7593 = vld [vmem:[%s7 + $0x1b0] sm:$0xff]
      %v7594 = vld [vmem:[%s7 + $0x1b8] sm:$0xff]
      %v7595 = vld [vmem:[%s7 + $0x1c0] sm:$0xff]
      %v7596 = vld [vmem:[%s7 + $0x1c8] sm:$0xff]
      %v7597 = vld [vmem:[%s7 + $0x1d0] sm:$0xff]
      %v7598 = vld [vmem:[%s7 + $0x1d8] sm:$0xff]
      %v7599 = vld [vmem:[%s7 + $0x1e0] sm:$0xff]
      %v7600 = vld [vmem:[%s7 + $0x1e8] sm:$0xff]
      %v7601 = vld [vmem:[%s7 + $0x1f0] sm:$0xff]
      %v7602 = vld [vmem:[%s7 + $0x1f8] sm:$0xff]
      %v7603 = vld [vmem:[%s7 + $0x200] sm:$0xff]
      %v7604 = vld [vmem:[%s7 + $0x208] sm:$0xff]
      %v7605 = vld [vmem:[%s7 + $0x210] sm:$0xff]
      %v7606 = vld [vmem:[%s7 + $0x218] sm:$0xff]
      %v7607 = vld [vmem:[%s7 + $0x220] sm:$0xff]
      %v7608 = vld [vmem:[%s7 + $0x228] sm:$0xff]
      %v7609 = vld [vmem:[%s7 + $0x230] sm:$0xff]
      %v7610 = vld [vmem:[%s7 + $0x238] sm:$0xff]
      %v7611 = vld [vmem:[%s8] sm:$0x1]
      %v7613 = vlaneseq
      %v7614 = vshrl.u32 %v7613, 7
      %v7615 = vsub.s32 0, %v7614
      %v7616 = vrot.slane %v7611, %v7615
      %v7619 = vsel %vm1878, %v7503, 0
      %v7622 = vsel %vm1878, %v7508, 0
      %v7625 = vsel %vm1878, %v7513, 0
      %v7628 = vsel %vm1878, %v7518, 0
      %v7631 = vsel %vm1878, %v7523, 0
      %v7634 = vsel %vm1878, %v7528, 0
      %v7637 = vsel %vm1878, %v7533, 0
      %v7640 = vsel %vm1878, %v7538, 0
      %7642 = vmatprep.subr.mxu0 0.0
      %7643 = vmatpush1.msra.mxu0 %v7554
      %7644 = vmatprep.subr.mxu0 0.0
      %7645 = vmatpush1.msra.mxu0 %v7553
      %7646 = vmatprep.subr.mxu0 0.0
      %7647 = vmatpush1.msra.mxu0 %v7552
      %7648 = vmatprep.subr.mxu0 0.0
      %7649 = vmatpush1.msra.mxu0 %v7551
      %7650 = vmatprep.subr.mxu0 0.0
      %7651 = vmatpush1.msra.mxu0 %v7550
      %7652 = vmatprep.subr.mxu0 0.0
      %7653 = vmatpush1.msra.mxu0 %v7549
      %7654 = vmatprep.subr.mxu0 0.0
      %7655 = vmatpush1.msra.mxu0 %v7548
      %7656 = vmatprep.subr.mxu0 0.0
      %7657 = vmatpush1.msra.mxu0 %v7547
      %7658 = vmatprep.subr.mxu0 0.0
      %7659 = vmatpush1.msra.mxu0 %v7546
      %7660 = vmatprep.subr.mxu0 0.0
      %7661 = vmatpush1.msra.mxu0 %v7545
      %7662 = vmatprep.subr.mxu0 0.0
      %7663 = vmatpush1.msra.mxu0 %v7544
      %7664 = vmatprep.subr.mxu0 0.0
      %7665 = vmatpush1.msra.mxu0 %v7543
      %7666 = vmatprep.subr.mxu0 0.0
      %7667 = vmatpush1.msra.mxu0 %v7542
      %7668 = vmatprep.subr.mxu0 0.0
      %7669 = vmatpush1.msra.mxu0 %v7541
      %7670 = vmatprep.subr.mxu0 0.0
      %7671 = vmatpush1.msra.mxu0 %v7540
      %7672 = vmatprep.subr.mxu0 0.0
      %7673 = vmatpush1.msra.mxu0 %v7539
      %7674 = vmatprep.subr.mxu0 0.0
      %7675 = vmatpush2.msra.mxu0 %v7570
      %7676 = vmatprep.subr.mxu0 0.0
      %7677 = vmatpush2.msra.mxu0 %v7569
      %7678 = vmatprep.subr.mxu0 0.0
      %7679 = vmatpush2.msra.mxu0 %v7568
      %7680 = vmatprep.subr.mxu0 0.0
      %7681 = vmatpush2.msra.mxu0 %v7567
      %7682 = vmatprep.subr.mxu0 0.0
      %7683 = vmatpush2.msra.mxu0 %v7566
      %7684 = vmatprep.subr.mxu0 0.0
      %7685 = vmatpush2.msra.mxu0 %v7565
      %7686 = vmatprep.subr.mxu0 0.0
      %7687 = vmatpush2.msra.mxu0 %v7564
      %7688 = vmatprep.subr.mxu0 0.0
      %7689 = vmatpush2.msra.mxu0 %v7563
      %7690 = vmatprep.subr.mxu0 0.0
      %7691 = vmatpush2.msra.mxu0 %v7562
      %7692 = vmatprep.subr.mxu0 0.0
      %7693 = vmatpush2.msra.mxu0 %v7561
      %7694 = vmatprep.subr.mxu0 0.0
      %7695 = vmatpush2.msra.mxu0 %v7560
      %7696 = vmatprep.subr.mxu0 0.0
      %7697 = vmatpush2.msra.mxu0 %v7559
      %7698 = vmatprep.subr.mxu0 0.0
      %7699 = vmatpush2.msra.mxu0 %v7558
      %7700 = vmatprep.subr.mxu0 0.0
      %7701 = vmatpush2.msra.mxu0 %v7557
      %7702 = vmatprep.subr.mxu0 0.0
      %7703 = vmatpush2.msra.mxu0 %v7556
      %7704 = vmatprep.subr.mxu0 0.0
      %7705 = vmatpush2.msra.mxu0 %v7555
      %7706 = vmatprep.mubr.f32.mxu0 %v7500
      %7707 = vmatmul.mubr.f32.gmra.mxu0 %v7499
      %v7708 = vpop.f32.mrf.mxu0
      %v7709 = vadd.f32 %v7616, %v7708
      %v7710 = vpop.f32.mrf.mxu0
      %7711 = vmatprep.mubr.f32.mxu0 %v7505
      %7712 = vmatmul.mubr.f32.gmra.mxu0 %v7504
      %v7713 = vpop.f32.mrf.mxu0
      %v7714 = vadd.f32 %v7616, %v7713
      %v7715 = vpop.f32.mrf.mxu0
      %7716 = vmatprep.mubr.f32.mxu0 %v7510
      %7717 = vmatmul.mubr.f32.gmra.mxu0 %v7509
      %v7718 = vpop.f32.mrf.mxu0
      %v7719 = vadd.f32 %v7616, %v7718
      %v7720 = vpop.f32.mrf.mxu0
      %7721 = vmatprep.mubr.f32.mxu0 %v7515
      %7722 = vmatmul.mubr.f32.gmra.mxu0 %v7514
      %v7723 = vpop.f32.mrf.mxu0
      %v7724 = vadd.f32 %v7616, %v7723
      %v7725 = vpop.f32.mrf.mxu0
      %7726 = vmatprep.mubr.f32.mxu0 %v7520
      %7727 = vmatmul.mubr.f32.gmra.mxu0 %v7519
      %v7728 = vpop.f32.mrf.mxu0
      %v7729 = vadd.f32 %v7616, %v7728
      %v7730 = vpop.f32.mrf.mxu0
      %7731 = vmatprep.mubr.f32.mxu0 %v7525
      %7732 = vmatmul.mubr.f32.gmra.mxu0 %v7524
      %v7733 = vpop.f32.mrf.mxu0
      %v7734 = vadd.f32 %v7616, %v7733
      %v7735 = vpop.f32.mrf.mxu0
      %7736 = vmatprep.mubr.f32.mxu0 %v7530
      %7737 = vmatmul.mubr.f32.gmra.mxu0 %v7529
      %v7738 = vpop.f32.mrf.mxu0
      %v7739 = vadd.f32 %v7616, %v7738
      %v7740 = vpop.f32.mrf.mxu0
      %7741 = vmatprep.mubr.f32.mxu0 %v7535
      %7742 = vmatmul.mubr.f32.gmra.mxu0 %v7534
      %v7743 = vpop.f32.mrf.mxu0
      %v7744 = vadd.f32 %v7616, %v7743
      %v7745 = vpop.f32.mrf.mxu0
      %7746 = vdwg.mxu0
      %7747 = vmatprep.subr.mxu0 0.0
      %7748 = vmatpush1.msra.mxu0 %v7586
      %7749 = vmatprep.subr.mxu0 0.0
      %7750 = vmatpush1.msra.mxu0 %v7585
      %7751 = vmatprep.subr.mxu0 0.0
      %7752 = vmatpush1.msra.mxu0 %v7584
      %7753 = vmatprep.subr.mxu0 0.0
      %7754 = vmatpush1.msra.mxu0 %v7583
      %7755 = vmatprep.subr.mxu0 0.0
      %7756 = vmatpush1.msra.mxu0 %v7582
      %7757 = vmatprep.subr.mxu0 0.0
      %7758 = vmatpush1.msra.mxu0 %v7581
      %7759 = vmatprep.subr.mxu0 0.0
      %7760 = vmatpush1.msra.mxu0 %v7580
      %7761 = vmatprep.subr.mxu0 0.0
      %7762 = vmatpush1.msra.mxu0 %v7579
      %7763 = vmatprep.subr.mxu0 0.0
      %7764 = vmatpush1.msra.mxu0 %v7578
      %7765 = vmatprep.subr.mxu0 0.0
      %7766 = vmatpush1.msra.mxu0 %v7577
      %7767 = vmatprep.subr.mxu0 0.0
      %7768 = vmatpush1.msra.mxu0 %v7576
      %7769 = vmatprep.subr.mxu0 0.0
      %7770 = vmatpush1.msra.mxu0 %v7575
      %7771 = vmatprep.subr.mxu0 0.0
      %7772 = vmatpush1.msra.mxu0 %v7574
      %7773 = vmatprep.subr.mxu0 0.0
      %7774 = vmatpush1.msra.mxu0 %v7573
      %7775 = vmatprep.subr.mxu0 0.0
      %7776 = vmatpush1.msra.mxu0 %v7572
      %7777 = vmatprep.subr.mxu0 0.0
      %7778 = vmatpush1.msra.mxu0 %v7571
      %7779 = vmatprep.subr.mxu0 0.0
      %7780 = vmatpush2.msra.mxu0 %v7602
      %7781 = vmatprep.subr.mxu0 0.0
      %7782 = vmatpush2.msra.mxu0 %v7601
      %7783 = vmatprep.subr.mxu0 0.0
      %7784 = vmatpush2.msra.mxu0 %v7600
      %7785 = vmatprep.subr.mxu0 0.0
      %7786 = vmatpush2.msra.mxu0 %v7599
      %7787 = vmatprep.subr.mxu0 0.0
      %7788 = vmatpush2.msra.mxu0 %v7598
      %7789 = vmatprep.subr.mxu0 0.0
      %7790 = vmatpush2.msra.mxu0 %v7597
      %7791 = vmatprep.subr.mxu0 0.0
      %7792 = vmatpush2.msra.mxu0 %v7596
      %7793 = vmatprep.subr.mxu0 0.0
      %7794 = vmatpush2.msra.mxu0 %v7595
      %7795 = vmatprep.subr.mxu0 0.0
      %7796 = vmatpush2.msra.mxu0 %v7594
      %7797 = vmatprep.subr.mxu0 0.0
      %7798 = vmatpush2.msra.mxu0 %v7593
      %7799 = vmatprep.subr.mxu0 0.0
      %7800 = vmatpush2.msra.mxu0 %v7592
      %7801 = vmatprep.subr.mxu0 0.0
      %7802 = vmatpush2.msra.mxu0 %v7591
      %7803 = vmatprep.subr.mxu0 0.0
      %7804 = vmatpush2.msra.mxu0 %v7590
      %7805 = vmatprep.subr.mxu0 0.0
      %7806 = vmatpush2.msra.mxu0 %v7589
      %7807 = vmatprep.subr.mxu0 0.0
      %7808 = vmatpush2.msra.mxu0 %v7588
      %7809 = vmatprep.subr.mxu0 0.0
      %7810 = vmatpush2.msra.mxu0 %v7587
      %7811 = vmatprep.mubr.f32.mxu0 %v7502
      %7812 = vmatmul.mubr.f32.gmra.mxu0 %v7501
      %v7813 = vpop.f32.mrf.mxu0
      %v7814 = vadd.f32 %v7709, %v7813
      %v7815 = vpop.f32.mrf.mxu0
      %7816 = vmatprep.mubr.f32.mxu0 %v7507
      %7817 = vmatmul.mubr.f32.gmra.mxu0 %v7506
      %v7818 = vpop.f32.mrf.mxu0
      %v7819 = vadd.f32 %v7714, %v7818
      %v7820 = vpop.f32.mrf.mxu0
      %7821 = vmatprep.mubr.f32.mxu0 %v7512
      %7822 = vmatmul.mubr.f32.gmra.mxu0 %v7511
      %v7823 = vpop.f32.mrf.mxu0
      %v7824 = vadd.f32 %v7719, %v7823
      %v7825 = vpop.f32.mrf.mxu0
      %7826 = vmatprep.mubr.f32.mxu0 %v7517
      %7827 = vmatmul.mubr.f32.gmra.mxu0 %v7516
      %v7828 = vpop.f32.mrf.mxu0
      %v7829 = vadd.f32 %v7724, %v7828
      %v7830 = vpop.f32.mrf.mxu0
      %7831 = vmatprep.mubr.f32.mxu0 %v7522
      %7832 = vmatmul.mubr.f32.gmra.mxu0 %v7521
      %v7833 = vpop.f32.mrf.mxu0
      %v7834 = vadd.f32 %v7729, %v7833
      %v7835 = vpop.f32.mrf.mxu0
      %7836 = vmatprep.mubr.f32.mxu0 %v7527
      %7837 = vmatmul.mubr.f32.gmra.mxu0 %v7526
      %v7838 = vpop.f32.mrf.mxu0
      %v7839 = vadd.f32 %v7734, %v7838
      %v7840 = vpop.f32.mrf.mxu0
      %7841 = vmatprep.mubr.f32.mxu0 %v7532
      %7842 = vmatmul.mubr.f32.gmra.mxu0 %v7531
      %v7843 = vpop.f32.mrf.mxu0
      %v7844 = vadd.f32 %v7739, %v7843
      %v7845 = vpop.f32.mrf.mxu0
      %7846 = vmatprep.mubr.f32.mxu0 %v7537
      %7847 = vmatmul.mubr.f32.gmra.mxu0 %v7536
      %v7848 = vpop.f32.mrf.mxu0
      %v7849 = vadd.f32 %v7744, %v7848
      %v7850 = vpop.f32.mrf.mxu0
      %7851 = vdwg.mxu0
      %7852 = vmatprep.subr.mxu0 0.0
      %7853 = vmatpush1.msra.mxu0 0.0
      %7854 = vmatprep.subr.mxu0 0.0
      %7855 = vmatpush1.msra.mxu0 0.0
      %7856 = vmatprep.subr.mxu0 0.0
      %7857 = vmatpush1.msra.mxu0 0.0
      %7858 = vmatprep.subr.mxu0 0.0
      %7859 = vmatpush1.msra.mxu0 0.0
      %7860 = vmatprep.subr.mxu0 0.0
      %7861 = vmatpush1.msra.mxu0 0.0
      %7862 = vmatprep.subr.mxu0 0.0
      %7863 = vmatpush1.msra.mxu0 0.0
      %7864 = vmatprep.subr.mxu0 0.0
      %7865 = vmatpush1.msra.mxu0 0.0
      %7866 = vmatprep.subr.mxu0 0.0
      %7867 = vmatpush1.msra.mxu0 0.0
      %7868 = vmatprep.subr.mxu0 0.0
      %7869 = vmatpush1.msra.mxu0 %v7610
      %7870 = vmatprep.subr.mxu0 0.0
      %7871 = vmatpush1.msra.mxu0 %v7609
      %7872 = vmatprep.subr.mxu0 0.0
      %7873 = vmatpush1.msra.mxu0 %v7608
      %7874 = vmatprep.subr.mxu0 0.0
      %7875 = vmatpush1.msra.mxu0 %v7607
      %7876 = vmatprep.subr.mxu0 0.0
      %7877 = vmatpush1.msra.mxu0 %v7606
      %7878 = vmatprep.subr.mxu0 0.0
      %7879 = vmatpush1.msra.mxu0 %v7605
      %7880 = vmatprep.subr.mxu0 0.0
      %7881 = vmatpush1.msra.mxu0 %v7604
      %7882 = vmatprep.subr.mxu0 0.0
      %7883 = vmatpush1.msra.mxu0 %v7603
      %7884 = vmatprep.subr.mxu0 0.0
      %7885 = vmatpush2.msra.mxu0 0.0
      %7886 = vmatprep.subr.mxu0 0.0
      %7887 = vmatpush2.msra.mxu0 0.0
      %7888 = vmatprep.subr.mxu0 0.0
      %7889 = vmatpush2.msra.mxu0 0.0
      %7890 = vmatprep.subr.mxu0 0.0
      %7891 = vmatpush2.msra.mxu0 0.0
      %7892 = vmatprep.subr.mxu0 0.0
      %7893 = vmatpush2.msra.mxu0 0.0
      %7894 = vmatprep.subr.mxu0 0.0
      %7895 = vmatpush2.msra.mxu0 0.0
      %7896 = vmatprep.subr.mxu0 0.0
      %7897 = vmatpush2.msra.mxu0 0.0
      %7898 = vmatprep.subr.mxu0 0.0
      %7899 = vmatpush2.msra.mxu0 0.0
      %7900 = vmatprep.subr.mxu0 0.0
      %7901 = vmatpush2.msra.mxu0 0.0
      %7902 = vmatprep.subr.mxu0 0.0
      %7903 = vmatpush2.msra.mxu0 0.0
      %7904 = vmatprep.subr.mxu0 0.0
      %7905 = vmatpush2.msra.mxu0 0.0
      %7906 = vmatprep.subr.mxu0 0.0
      %7907 = vmatpush2.msra.mxu0 0.0
      %7908 = vmatprep.subr.mxu0 0.0
      %7909 = vmatpush2.msra.mxu0 0.0
      %7910 = vmatprep.subr.mxu0 0.0
      %7911 = vmatpush2.msra.mxu0 0.0
      %7912 = vmatprep.subr.mxu0 0.0
      %7913 = vmatpush2.msra.mxu0 0.0
      %7914 = vmatprep.subr.mxu0 0.0
      %7915 = vmatpush2.msra.mxu0 0.0
      %7916 = vmatprep.mubr.f32.mxu0 0.0
      %7917 = vmatmul.mubr.f32.gmra.mxu0 %v7619
      %v7918 = vpop.f32.mrf.mxu0
      %v7919 = vadd.f32 %v7814, %v7918
      %v7920 = vpop.f32.mrf.mxu0
      %7921 = vmatprep.mubr.f32.mxu0 0.0
      %7922 = vmatmul.mubr.f32.gmra.mxu0 %v7622
      %v7923 = vpop.f32.mrf.mxu0
      %v7924 = vadd.f32 %v7819, %v7923
      %v7925 = vpop.f32.mrf.mxu0
      %7926 = vmatprep.mubr.f32.mxu0 0.0
      %7927 = vmatmul.mubr.f32.gmra.mxu0 %v7625
      %v7928 = vpop.f32.mrf.mxu0
      %v7929 = vadd.f32 %v7824, %v7928
      %v7930 = vpop.f32.mrf.mxu0
      %7931 = vmatprep.mubr.f32.mxu0 0.0
      %7932 = vmatmul.mubr.f32.gmra.mxu0 %v7628
      %v7933 = vpop.f32.mrf.mxu0
      %v7934 = vadd.f32 %v7829, %v7933
      %v7935 = vpop.f32.mrf.mxu0
      %7936 = vmatprep.mubr.f32.mxu0 0.0
      %7937 = vmatmul.mubr.f32.gmra.mxu0 %v7631
      %v7938 = vpop.f32.mrf.mxu0
      %v7939 = vadd.f32 %v7834, %v7938
      %v7940 = vpop.f32.mrf.mxu0
      %7941 = vmatprep.mubr.f32.mxu0 0.0
      %7942 = vmatmul.mubr.f32.gmra.mxu0 %v7634
      %v7943 = vpop.f32.mrf.mxu0
      %v7944 = vadd.f32 %v7839, %v7943
      %v7945 = vpop.f32.mrf.mxu0
      %7946 = vmatprep.mubr.f32.mxu0 0.0
      %7947 = vmatmul.mubr.f32.gmra.mxu0 %v7637
      %v7948 = vpop.f32.mrf.mxu0
      %v7949 = vadd.f32 %v7844, %v7948
      %v7950 = vpop.f32.mrf.mxu0
      %7951 = vmatprep.mubr.f32.mxu0 0.0
      %7952 = vmatmul.mubr.f32.gmra.mxu0 %v7640
      %v7953 = vpop.f32.mrf.mxu0
      %v7954 = vadd.f32 %v7849, %v7953
      %v7955 = vpop.f32.mrf.mxu0
      %7956 = vdwg.mxu0
      %v7957 = vsub.f32 0.0, %v7919
      %v7958 = vsub.f32 0.0, %v7924
      %v7959 = vsub.f32 0.0, %v7929
      %v7960 = vsub.f32 0.0, %v7934
      %v7961 = vsub.f32 0.0, %v7939
      %v7962 = vsub.f32 0.0, %v7944
      %v7963 = vsub.f32 0.0, %v7949
      %v7964 = vsub.f32 0.0, %v7954
      %v7965 = vmul.f32 %v7957, 1.442695
      %v7966 = vpow.pop %v7965
      %v7967 = vmul.f32 %v7958, 1.442695
      %v7968 = vpow.pop %v7967
      %v7969 = vmul.f32 %v7959, 1.442695
      %v7970 = vpow.pop %v7969
      %v7971 = vmul.f32 %v7960, 1.442695
      %v7972 = vpow.pop %v7971
      %v7973 = vmul.f32 %v7961, 1.442695
      %v7974 = vpow.pop %v7973
      %v7975 = vmul.f32 %v7962, 1.442695
      %v7976 = vpow.pop %v7975
      %v7977 = vmul.f32 %v7963, 1.442695
      %v7978 = vpow.pop %v7977
      %v7979 = vmul.f32 %v7964, 1.442695
      %v7980 = vpow.pop %v7979
      %v7981 = vadd.f32 %v7966, 1.0
      %v7982 = vadd.f32 %v7968, 1.0
      %v7983 = vadd.f32 %v7970, 1.0
      %v7984 = vadd.f32 %v7972, 1.0
      %v7985 = vadd.f32 %v7974, 1.0
      %v7986 = vadd.f32 %v7976, 1.0
      %v7987 = vadd.f32 %v7978, 1.0
      %v7988 = vadd.f32 %v7980, 1.0
      %v7989 = vrcp.pop %v7981
      %v7990 = vrcp.pop %v7982
      %v7991 = vrcp.pop %v7983
      %v7992 = vrcp.pop %v7984
      %v7993 = vrcp.pop %v7985
      %v7994 = vrcp.pop %v7986
      %v7995 = vrcp.pop %v7987
      %v7996 = vrcp.pop %v7988
      %7997 = vst [vmem:[%s332] sm:$0xff] %v7989
      %7998 = vst [vmem:[%s332 + $0x8] sm:$0xff] %v7990
      %7999 = vst [vmem:[%s332 + $0x10] sm:$0xff] %v7991
      %8000 = vst [vmem:[%s332 + $0x18] sm:$0xff] %v7992
      %8001 = vst [vmem:[%s332 + $0x20] sm:$0xff] %v7993
      %8002 = vst [vmem:[%s332 + $0x28] sm:$0xff] %v7994
      %8003 = vst [vmem:[%s332 + $0x30] sm:$0xff] %v7995
      %8004 = vst [vmem:[%s332 + $0x38] sm:$0xff] %v7996
      %v8005 = vld [vmem:[%s7178 + $0x1] sm:$0xff]
      %v8006 = vld [vmem:[%s7178 + $0x11] sm:$0xff]
      %v8007 = vld [vmem:[%s7178 + $0x21] sm:$0xff]
      %v8008 = vld [vmem:[%s7178 + $0x31] sm:$0xff]
      %v8009 = vld [vmem:[%s7178 + $0x41] sm:$0xff]
      %v8010 = vld [vmem:[%s7178 + $0x51] sm:$0xff]
      %v8011 = vld [vmem:[%s7178 + $0x61] sm:$0xff]
      %v8012 = vld [vmem:[%s7178 + $0x71] sm:$0xff]
      %8013 = vst [vmem:[#allocation3 + $0x140] sm:$0xff] %v8005
      %8014 = vst [vmem:[#allocation3 + $0x168] sm:$0xff] %v8006
      %8015 = vst [vmem:[#allocation3 + $0x190] sm:$0xff] %v8007
      %8016 = vst [vmem:[#allocation3 + $0x1b8] sm:$0xff] %v8008
      %8017 = vst [vmem:[#allocation3 + $0x1e0] sm:$0xff] %v8009
      %8018 = vst [vmem:[#allocation3 + $0x208] sm:$0xff] %v8010
      %8019 = vst [vmem:[#allocation3 + $0x230] sm:$0xff] %v8011
      %8020 = vst [vmem:[#allocation3 + $0x258] sm:$0xff] %v8012
      %v8021 = vld [vmem:[%s7178 + $0x2] sm:$0xff]
      %v8022 = vld [vmem:[%s7178 + $0x12] sm:$0xff]
      %v8023 = vld [vmem:[%s7178 + $0x22] sm:$0xff]
      %v8024 = vld [vmem:[%s7178 + $0x32] sm:$0xff]
      %v8025 = vld [vmem:[%s7178 + $0x42] sm:$0xff]
      %v8026 = vld [vmem:[%s7178 + $0x52] sm:$0xff]
      %v8027 = vld [vmem:[%s7178 + $0x62] sm:$0xff]
      %v8028 = vld [vmem:[%s7178 + $0x72] sm:$0xff]
      %v8029 = vld [vmem:[%s7104 + $0x1] sm:$0xff]
      %v8030 = vld [vmem:[%s7104 + $0x11] sm:$0xff]
      %v8031 = vld [vmem:[%s7104 + $0x21] sm:$0xff]
      %v8032 = vld [vmem:[%s7104 + $0x31] sm:$0xff]
      %v8033 = vld [vmem:[%s7104 + $0x41] sm:$0xff]
      %v8034 = vld [vmem:[%s7104 + $0x51] sm:$0xff]
      %v8035 = vld [vmem:[%s7104 + $0x61] sm:$0xff]
      %v8036 = vld [vmem:[%s7104 + $0x71] sm:$0xff]
      %8045 = vrot.lane.b32.xlu0 %v8029, 64
      %v8046 = vpop.permute.xlu0 %8045
      %8047 = vrot.lane.b32.xlu0 %v8030, 64
      %v8048 = vpop.permute.xlu0 %8047
      %8049 = vrot.lane.b32.xlu0 %v8031, 64
      %v8050 = vpop.permute.xlu0 %8049
      %8051 = vrot.lane.b32.xlu0 %v8032, 64
      %v8052 = vpop.permute.xlu0 %8051
      %8053 = vrot.lane.b32.xlu0 %v8033, 64
      %v8054 = vpop.permute.xlu0 %8053
      %8055 = vrot.lane.b32.xlu0 %v8034, 64
      %v8056 = vpop.permute.xlu0 %8055
      %8057 = vrot.lane.b32.xlu0 %v8035, 64
      %v8058 = vpop.permute.xlu0 %8057
      %8059 = vrot.lane.b32.xlu0 %v8036, 64
      %v8060 = vpop.permute.xlu0 %8059
      %v8069 = vsel %vm1878, %v8021, %v8046
      %v8070 = vsel %vm1878, %v8022, %v8048
      %v8071 = vsel %vm1878, %v8023, %v8050
      %v8072 = vsel %vm1878, %v8024, %v8052
      %v8073 = vsel %vm1878, %v8025, %v8054
      %v8074 = vsel %vm1878, %v8026, %v8056
      %v8075 = vsel %vm1878, %v8027, %v8058
      %v8076 = vsel %vm1878, %v8028, %v8060
      %8077 = vst [vmem:[#allocation3 + $0x148] sm:$0xff] %v8069
      %8078 = vst [vmem:[#allocation3 + $0x170] sm:$0xff] %v8070
      %8079 = vst [vmem:[#allocation3 + $0x198] sm:$0xff] %v8071
      %8080 = vst [vmem:[#allocation3 + $0x1c0] sm:$0xff] %v8072
      %8081 = vst [vmem:[#allocation3 + $0x1e8] sm:$0xff] %v8073
      %8082 = vst [vmem:[#allocation3 + $0x210] sm:$0xff] %v8074
      %8083 = vst [vmem:[#allocation3 + $0x238] sm:$0xff] %v8075
      %8084 = vst [vmem:[#allocation3 + $0x260] sm:$0xff] %v8076
      %v8085 = vld [vmem:[%s7104 + $0x1] sm:$0xff]
      %v8086 = vld [vmem:[%s7104 + $0x11] sm:$0xff]
      %v8087 = vld [vmem:[%s7104 + $0x21] sm:$0xff]
      %v8088 = vld [vmem:[%s7104 + $0x31] sm:$0xff]
      %v8089 = vld [vmem:[%s7104 + $0x41] sm:$0xff]
      %v8090 = vld [vmem:[%s7104 + $0x51] sm:$0xff]
      %v8091 = vld [vmem:[%s7104 + $0x61] sm:$0xff]
      %v8092 = vld [vmem:[%s7104 + $0x71] sm:$0xff]
      %v8093 = vld [vmem:[%s7104 + $0x2] sm:$0xff]
      %v8094 = vld [vmem:[%s7104 + $0x12] sm:$0xff]
      %v8095 = vld [vmem:[%s7104 + $0x22] sm:$0xff]
      %v8096 = vld [vmem:[%s7104 + $0x32] sm:$0xff]
      %v8097 = vld [vmem:[%s7104 + $0x42] sm:$0xff]
      %v8098 = vld [vmem:[%s7104 + $0x52] sm:$0xff]
      %v8099 = vld [vmem:[%s7104 + $0x62] sm:$0xff]
      %v8100 = vld [vmem:[%s7104 + $0x72] sm:$0xff]
      %8109 = vrot.lane.b32.xlu0 %v8085, 64
      %v8110 = vpop.permute.xlu0 %8109
      %8111 = vrot.lane.b32.xlu0 %v8086, 64
      %v8112 = vpop.permute.xlu0 %8111
      %8113 = vrot.lane.b32.xlu0 %v8087, 64
      %v8114 = vpop.permute.xlu0 %8113
      %8115 = vrot.lane.b32.xlu0 %v8088, 64
      %v8116 = vpop.permute.xlu0 %8115
      %8117 = vrot.lane.b32.xlu0 %v8089, 64
      %v8118 = vpop.permute.xlu0 %8117
      %8119 = vrot.lane.b32.xlu0 %v8090, 64
      %v8120 = vpop.permute.xlu0 %8119
      %8121 = vrot.lane.b32.xlu0 %v8091, 64
      %v8122 = vpop.permute.xlu0 %8121
      %8123 = vrot.lane.b32.xlu0 %v8092, 64
      %v8124 = vpop.permute.xlu0 %8123
      %8141 = vrot.lane.b32.xlu0 %v8093, 64
      %v8142 = vpop.permute.xlu0 %8141
      %8143 = vrot.lane.b32.xlu0 %v8094, 64
      %v8144 = vpop.permute.xlu0 %8143
      %8145 = vrot.lane.b32.xlu0 %v8095, 64
      %v8146 = vpop.permute.xlu0 %8145
      %8147 = vrot.lane.b32.xlu0 %v8096, 64
      %v8148 = vpop.permute.xlu0 %8147
      %8149 = vrot.lane.b32.xlu0 %v8097, 64
      %v8150 = vpop.permute.xlu0 %8149
      %8151 = vrot.lane.b32.xlu0 %v8098, 64
      %v8152 = vpop.permute.xlu0 %8151
      %8153 = vrot.lane.b32.xlu0 %v8099, 64
      %v8154 = vpop.permute.xlu0 %8153
      %8155 = vrot.lane.b32.xlu0 %v8100, 64
      %v8156 = vpop.permute.xlu0 %8155
      %v8165 = vsel %vm1878, %v8110, %v8142
      %v8166 = vsel %vm1878, %v8112, %v8144
      %v8167 = vsel %vm1878, %v8114, %v8146
      %v8168 = vsel %vm1878, %v8116, %v8148
      %v8169 = vsel %vm1878, %v8118, %v8150
      %v8170 = vsel %vm1878, %v8120, %v8152
      %v8171 = vsel %vm1878, %v8122, %v8154
      %v8172 = vsel %vm1878, %v8124, %v8156
      %8173 = vst [vmem:[#allocation3 + $0x150] sm:$0xff] %v8165
      %8174 = vst [vmem:[#allocation3 + $0x178] sm:$0xff] %v8166
      %8175 = vst [vmem:[#allocation3 + $0x1a0] sm:$0xff] %v8167
      %8176 = vst [vmem:[#allocation3 + $0x1c8] sm:$0xff] %v8168
      %8177 = vst [vmem:[#allocation3 + $0x1f0] sm:$0xff] %v8169
      %8178 = vst [vmem:[#allocation3 + $0x218] sm:$0xff] %v8170
      %8179 = vst [vmem:[#allocation3 + $0x240] sm:$0xff] %v8171
      %8180 = vst [vmem:[#allocation3 + $0x268] sm:$0xff] %v8172
      %v8181 = vld [vmem:[%s7161 + $0x1] sm:$0xff]
      %v8182 = vld [vmem:[%s7161 + $0x11] sm:$0xff]
      %v8183 = vld [vmem:[%s7161 + $0x21] sm:$0xff]
      %v8184 = vld [vmem:[%s7161 + $0x31] sm:$0xff]
      %v8185 = vld [vmem:[%s7161 + $0x41] sm:$0xff]
      %v8186 = vld [vmem:[%s7161 + $0x51] sm:$0xff]
      %v8187 = vld [vmem:[%s7161 + $0x61] sm:$0xff]
      %v8188 = vld [vmem:[%s7161 + $0x71] sm:$0xff]
      %8189 = vst [vmem:[#allocation3 + $0x158] sm:$0xff] %v8181
      %8190 = vst [vmem:[#allocation3 + $0x180] sm:$0xff] %v8182
      %8191 = vst [vmem:[#allocation3 + $0x1a8] sm:$0xff] %v8183
      %8192 = vst [vmem:[#allocation3 + $0x1d0] sm:$0xff] %v8184
      %8193 = vst [vmem:[#allocation3 + $0x1f8] sm:$0xff] %v8185
      %8194 = vst [vmem:[#allocation3 + $0x220] sm:$0xff] %v8186
      %8195 = vst [vmem:[#allocation3 + $0x248] sm:$0xff] %v8187
      %8196 = vst [vmem:[#allocation3 + $0x270] sm:$0xff] %v8188
      %v8197 = vld [vmem:[%s7161 + $0x2] sm:$0xff]
      %v8198 = vld [vmem:[%s7161 + $0x12] sm:$0xff]
      %v8199 = vld [vmem:[%s7161 + $0x22] sm:$0xff]
      %v8200 = vld [vmem:[%s7161 + $0x32] sm:$0xff]
      %v8201 = vld [vmem:[%s7161 + $0x42] sm:$0xff]
      %v8202 = vld [vmem:[%s7161 + $0x52] sm:$0xff]
      %v8203 = vld [vmem:[%s7161 + $0x62] sm:$0xff]
      %v8204 = vld [vmem:[%s7161 + $0x72] sm:$0xff]
      %8205 = vst.msk [vmem:[#allocation3 + $0x160] sm:$0xff] %vm1878, %v8197
      %8206 = vst.msk [vmem:[#allocation3 + $0x188] sm:$0xff] %vm1878, %v8198
      %8207 = vst.msk [vmem:[#allocation3 + $0x1b0] sm:$0xff] %vm1878, %v8199
      %8208 = vst.msk [vmem:[#allocation3 + $0x1d8] sm:$0xff] %vm1878, %v8200
      %8209 = vst.msk [vmem:[#allocation3 + $0x200] sm:$0xff] %vm1878, %v8201
      %8210 = vst.msk [vmem:[#allocation3 + $0x228] sm:$0xff] %vm1878, %v8202
      %8211 = vst.msk [vmem:[#allocation3 + $0x250] sm:$0xff] %vm1878, %v8203
      %8212 = vst.msk [vmem:[#allocation3 + $0x278] sm:$0xff] %vm1878, %v8204
      %v8213 = vld [vmem:[#allocation3 + $0x140] sm:$0xff]
      %v8214 = vld [vmem:[#allocation3 + $0x148] sm:$0xff]
      %v8215 = vld [vmem:[#allocation3 + $0x150] sm:$0xff]
      %v8216 = vld [vmem:[#allocation3 + $0x158] sm:$0xff]
      %v8217 = vld [vmem:[#allocation3 + $0x160] sm:$0xff]
      %v8218 = vld [vmem:[#allocation3 + $0x168] sm:$0xff]
      %v8219 = vld [vmem:[#allocation3 + $0x170] sm:$0xff]
      %v8220 = vld [vmem:[#allocation3 + $0x178] sm:$0xff]
      %v8221 = vld [vmem:[#allocation3 + $0x180] sm:$0xff]
      %v8222 = vld [vmem:[#allocation3 + $0x188] sm:$0xff]
      %v8223 = vld [vmem:[#allocation3 + $0x190] sm:$0xff]
      %v8224 = vld [vmem:[#allocation3 + $0x198] sm:$0xff]
      %v8225 = vld [vmem:[#allocation3 + $0x1a0] sm:$0xff]
      %v8226 = vld [vmem:[#allocation3 + $0x1a8] sm:$0xff]
      %v8227 = vld [vmem:[#allocation3 + $0x1b0] sm:$0xff]
      %v8228 = vld [vmem:[#allocation3 + $0x1b8] sm:$0xff]
      %v8229 = vld [vmem:[#allocation3 + $0x1c0] sm:$0xff]
      %v8230 = vld [vmem:[#allocation3 + $0x1c8] sm:$0xff]
      %v8231 = vld [vmem:[#allocation3 + $0x1d0] sm:$0xff]
      %v8232 = vld [vmem:[#allocation3 + $0x1d8] sm:$0xff]
      %v8233 = vld [vmem:[#allocation3 + $0x1e0] sm:$0xff]
      %v8234 = vld [vmem:[#allocation3 + $0x1e8] sm:$0xff]
      %v8235 = vld [vmem:[#allocation3 + $0x1f0] sm:$0xff]
      %v8236 = vld [vmem:[#allocation3 + $0x1f8] sm:$0xff]
      %v8237 = vld [vmem:[#allocation3 + $0x200] sm:$0xff]
      %v8238 = vld [vmem:[#allocation3 + $0x208] sm:$0xff]
      %v8239 = vld [vmem:[#allocation3 + $0x210] sm:$0xff]
      %v8240 = vld [vmem:[#allocation3 + $0x218] sm:$0xff]
      %v8241 = vld [vmem:[#allocation3 + $0x220] sm:$0xff]
      %v8242 = vld [vmem:[#allocation3 + $0x228] sm:$0xff]
      %v8243 = vld [vmem:[#allocation3 + $0x230] sm:$0xff]
      %v8244 = vld [vmem:[#allocation3 + $0x238] sm:$0xff]
      %v8245 = vld [vmem:[#allocation3 + $0x240] sm:$0xff]
      %v8246 = vld [vmem:[#allocation3 + $0x248] sm:$0xff]
      %v8247 = vld [vmem:[#allocation3 + $0x250] sm:$0xff]
      %v8248 = vld [vmem:[#allocation3 + $0x258] sm:$0xff]
      %v8249 = vld [vmem:[#allocation3 + $0x260] sm:$0xff]
      %v8250 = vld [vmem:[#allocation3 + $0x268] sm:$0xff]
      %v8251 = vld [vmem:[#allocation3 + $0x270] sm:$0xff]
      %v8252 = vld [vmem:[#allocation3 + $0x278] sm:$0xff]
      %v8253 = vld [vmem:[%s7] sm:$0xff]
      %v8254 = vld [vmem:[%s7 + $0x8] sm:$0xff]
      %v8255 = vld [vmem:[%s7 + $0x10] sm:$0xff]
      %v8256 = vld [vmem:[%s7 + $0x18] sm:$0xff]
      %v8257 = vld [vmem:[%s7 + $0x20] sm:$0xff]
      %v8258 = vld [vmem:[%s7 + $0x28] sm:$0xff]
      %v8259 = vld [vmem:[%s7 + $0x30] sm:$0xff]
      %v8260 = vld [vmem:[%s7 + $0x38] sm:$0xff]
      %v8261 = vld [vmem:[%s7 + $0x40] sm:$0xff]
      %v8262 = vld [vmem:[%s7 + $0x48] sm:$0xff]
      %v8263 = vld [vmem:[%s7 + $0x50] sm:$0xff]
      %v8264 = vld [vmem:[%s7 + $0x58] sm:$0xff]
      %v8265 = vld [vmem:[%s7 + $0x60] sm:$0xff]
      %v8266 = vld [vmem:[%s7 + $0x68] sm:$0xff]
      %v8267 = vld [vmem:[%s7 + $0x70] sm:$0xff]
      %v8268 = vld [vmem:[%s7 + $0x78] sm:$0xff]
      %v8269 = vld [vmem:[%s7 + $0x80] sm:$0xff]
      %v8270 = vld [vmem:[%s7 + $0x88] sm:$0xff]
      %v8271 = vld [vmem:[%s7 + $0x90] sm:$0xff]
      %v8272 = vld [vmem:[%s7 + $0x98] sm:$0xff]
      %v8273 = vld [vmem:[%s7 + $0xa0] sm:$0xff]
      %v8274 = vld [vmem:[%s7 + $0xa8] sm:$0xff]
      %v8275 = vld [vmem:[%s7 + $0xb0] sm:$0xff]
      %v8276 = vld [vmem:[%s7 + $0xb8] sm:$0xff]
      %v8277 = vld [vmem:[%s7 + $0xc0] sm:$0xff]
      %v8278 = vld [vmem:[%s7 + $0xc8] sm:$0xff]
      %v8279 = vld [vmem:[%s7 + $0xd0] sm:$0xff]
      %v8280 = vld [vmem:[%s7 + $0xd8] sm:$0xff]
      %v8281 = vld [vmem:[%s7 + $0xe0] sm:$0xff]
      %v8282 = vld [vmem:[%s7 + $0xe8] sm:$0xff]
      %v8283 = vld [vmem:[%s7 + $0xf0] sm:$0xff]
      %v8284 = vld [vmem:[%s7 + $0xf8] sm:$0xff]
      %v8285 = vld [vmem:[%s7 + $0x100] sm:$0xff]
      %v8286 = vld [vmem:[%s7 + $0x108] sm:$0xff]
      %v8287 = vld [vmem:[%s7 + $0x110] sm:$0xff]
      %v8288 = vld [vmem:[%s7 + $0x118] sm:$0xff]
      %v8289 = vld [vmem:[%s7 + $0x120] sm:$0xff]
      %v8290 = vld [vmem:[%s7 + $0x128] sm:$0xff]
      %v8291 = vld [vmem:[%s7 + $0x130] sm:$0xff]
      %v8292 = vld [vmem:[%s7 + $0x138] sm:$0xff]
      %v8293 = vld [vmem:[%s7 + $0x140] sm:$0xff]
      %v8294 = vld [vmem:[%s7 + $0x148] sm:$0xff]
      %v8295 = vld [vmem:[%s7 + $0x150] sm:$0xff]
      %v8296 = vld [vmem:[%s7 + $0x158] sm:$0xff]
      %v8297 = vld [vmem:[%s7 + $0x160] sm:$0xff]
      %v8298 = vld [vmem:[%s7 + $0x168] sm:$0xff]
      %v8299 = vld [vmem:[%s7 + $0x170] sm:$0xff]
      %v8300 = vld [vmem:[%s7 + $0x178] sm:$0xff]
      %v8301 = vld [vmem:[%s7 + $0x180] sm:$0xff]
      %v8302 = vld [vmem:[%s7 + $0x188] sm:$0xff]
      %v8303 = vld [vmem:[%s7 + $0x190] sm:$0xff]
      %v8304 = vld [vmem:[%s7 + $0x198] sm:$0xff]
      %v8305 = vld [vmem:[%s7 + $0x1a0] sm:$0xff]
      %v8306 = vld [vmem:[%s7 + $0x1a8] sm:$0xff]
      %v8307 = vld [vmem:[%s7 + $0x1b0] sm:$0xff]
      %v8308 = vld [vmem:[%s7 + $0x1b8] sm:$0xff]
      %v8309 = vld [vmem:[%s7 + $0x1c0] sm:$0xff]
      %v8310 = vld [vmem:[%s7 + $0x1c8] sm:$0xff]
      %v8311 = vld [vmem:[%s7 + $0x1d0] sm:$0xff]
      %v8312 = vld [vmem:[%s7 + $0x1d8] sm:$0xff]
      %v8313 = vld [vmem:[%s7 + $0x1e0] sm:$0xff]
      %v8314 = vld [vmem:[%s7 + $0x1e8] sm:$0xff]
      %v8315 = vld [vmem:[%s7 + $0x1f0] sm:$0xff]
      %v8316 = vld [vmem:[%s7 + $0x1f8] sm:$0xff]
      %v8317 = vld [vmem:[%s7 + $0x200] sm:$0xff]
      %v8318 = vld [vmem:[%s7 + $0x208] sm:$0xff]
      %v8319 = vld [vmem:[%s7 + $0x210] sm:$0xff]
      %v8320 = vld [vmem:[%s7 + $0x218] sm:$0xff]
      %v8321 = vld [vmem:[%s7 + $0x220] sm:$0xff]
      %v8322 = vld [vmem:[%s7 + $0x228] sm:$0xff]
      %v8323 = vld [vmem:[%s7 + $0x230] sm:$0xff]
      %v8324 = vld [vmem:[%s7 + $0x238] sm:$0xff]
      %v8325 = vld [vmem:[%s8] sm:$0x1]
      %v8327 = vlaneseq
      %v8328 = vshrl.u32 %v8327, 7
      %v8329 = vsub.s32 0, %v8328
      %v8330 = vrot.slane %v8325, %v8329
      %v8333 = vsel %vm1878, %v8217, 0
      %v8336 = vsel %vm1878, %v8222, 0
      %v8339 = vsel %vm1878, %v8227, 0
      %v8342 = vsel %vm1878, %v8232, 0
      %v8345 = vsel %vm1878, %v8237, 0
      %v8348 = vsel %vm1878, %v8242, 0
      %v8351 = vsel %vm1878, %v8247, 0
      %v8354 = vsel %vm1878, %v8252, 0
      %8356 = vmatprep.subr.mxu0 0.0
      %8357 = vmatpush1.msra.mxu0 %v8268
      %8358 = vmatprep.subr.mxu0 0.0
      %8359 = vmatpush1.msra.mxu0 %v8267
      %8360 = vmatprep.subr.mxu0 0.0
      %8361 = vmatpush1.msra.mxu0 %v8266
      %8362 = vmatprep.subr.mxu0 0.0
      %8363 = vmatpush1.msra.mxu0 %v8265
      %8364 = vmatprep.subr.mxu0 0.0
      %8365 = vmatpush1.msra.mxu0 %v8264
      %8366 = vmatprep.subr.mxu0 0.0
      %8367 = vmatpush1.msra.mxu0 %v8263
      %8368 = vmatprep.subr.mxu0 0.0
      %8369 = vmatpush1.msra.mxu0 %v8262
      %8370 = vmatprep.subr.mxu0 0.0
      %8371 = vmatpush1.msra.mxu0 %v8261
      %8372 = vmatprep.subr.mxu0 0.0
      %8373 = vmatpush1.msra.mxu0 %v8260
      %8374 = vmatprep.subr.mxu0 0.0
      %8375 = vmatpush1.msra.mxu0 %v8259
      %8376 = vmatprep.subr.mxu0 0.0
      %8377 = vmatpush1.msra.mxu0 %v8258
      %8378 = vmatprep.subr.mxu0 0.0
      %8379 = vmatpush1.msra.mxu0 %v8257
      %8380 = vmatprep.subr.mxu0 0.0
      %8381 = vmatpush1.msra.mxu0 %v8256
      %8382 = vmatprep.subr.mxu0 0.0
      %8383 = vmatpush1.msra.mxu0 %v8255
      %8384 = vmatprep.subr.mxu0 0.0
      %8385 = vmatpush1.msra.mxu0 %v8254
      %8386 = vmatprep.subr.mxu0 0.0
      %8387 = vmatpush1.msra.mxu0 %v8253
      %8388 = vmatprep.subr.mxu0 0.0
      %8389 = vmatpush2.msra.mxu0 %v8284
      %8390 = vmatprep.subr.mxu0 0.0
      %8391 = vmatpush2.msra.mxu0 %v8283
      %8392 = vmatprep.subr.mxu0 0.0
      %8393 = vmatpush2.msra.mxu0 %v8282
      %8394 = vmatprep.subr.mxu0 0.0
      %8395 = vmatpush2.msra.mxu0 %v8281
      %8396 = vmatprep.subr.mxu0 0.0
      %8397 = vmatpush2.msra.mxu0 %v8280
      %8398 = vmatprep.subr.mxu0 0.0
      %8399 = vmatpush2.msra.mxu0 %v8279
      %8400 = vmatprep.subr.mxu0 0.0
      %8401 = vmatpush2.msra.mxu0 %v8278
      %8402 = vmatprep.subr.mxu0 0.0
      %8403 = vmatpush2.msra.mxu0 %v8277
      %8404 = vmatprep.subr.mxu0 0.0
      %8405 = vmatpush2.msra.mxu0 %v8276
      %8406 = vmatprep.subr.mxu0 0.0
      %8407 = vmatpush2.msra.mxu0 %v8275
      %8408 = vmatprep.subr.mxu0 0.0
      %8409 = vmatpush2.msra.mxu0 %v8274
      %8410 = vmatprep.subr.mxu0 0.0
      %8411 = vmatpush2.msra.mxu0 %v8273
      %8412 = vmatprep.subr.mxu0 0.0
      %8413 = vmatpush2.msra.mxu0 %v8272
      %8414 = vmatprep.subr.mxu0 0.0
      %8415 = vmatpush2.msra.mxu0 %v8271
      %8416 = vmatprep.subr.mxu0 0.0
      %8417 = vmatpush2.msra.mxu0 %v8270
      %8418 = vmatprep.subr.mxu0 0.0
      %8419 = vmatpush2.msra.mxu0 %v8269
      %8420 = vmatprep.mubr.f32.mxu0 %v8214
      %8421 = vmatmul.mubr.f32.gmra.mxu0 %v8213
      %v8422 = vpop.f32.mrf.mxu0
      %v8423 = vadd.f32 %v8330, %v8422
      %v8424 = vpop.f32.mrf.mxu0
      %8425 = vmatprep.mubr.f32.mxu0 %v8219
      %8426 = vmatmul.mubr.f32.gmra.mxu0 %v8218
      %v8427 = vpop.f32.mrf.mxu0
      %v8428 = vadd.f32 %v8330, %v8427
      %v8429 = vpop.f32.mrf.mxu0
      %8430 = vmatprep.mubr.f32.mxu0 %v8224
      %8431 = vmatmul.mubr.f32.gmra.mxu0 %v8223
      %v8432 = vpop.f32.mrf.mxu0
      %v8433 = vadd.f32 %v8330, %v8432
      %v8434 = vpop.f32.mrf.mxu0
      %8435 = vmatprep.mubr.f32.mxu0 %v8229
      %8436 = vmatmul.mubr.f32.gmra.mxu0 %v8228
      %v8437 = vpop.f32.mrf.mxu0
      %v8438 = vadd.f32 %v8330, %v8437
      %v8439 = vpop.f32.mrf.mxu0
      %8440 = vmatprep.mubr.f32.mxu0 %v8234
      %8441 = vmatmul.mubr.f32.gmra.mxu0 %v8233
      %v8442 = vpop.f32.mrf.mxu0
      %v8443 = vadd.f32 %v8330, %v8442
      %v8444 = vpop.f32.mrf.mxu0
      %8445 = vmatprep.mubr.f32.mxu0 %v8239
      %8446 = vmatmul.mubr.f32.gmra.mxu0 %v8238
      %v8447 = vpop.f32.mrf.mxu0
      %v8448 = vadd.f32 %v8330, %v8447
      %v8449 = vpop.f32.mrf.mxu0
      %8450 = vmatprep.mubr.f32.mxu0 %v8244
      %8451 = vmatmul.mubr.f32.gmra.mxu0 %v8243
      %v8452 = vpop.f32.mrf.mxu0
      %v8453 = vadd.f32 %v8330, %v8452
      %v8454 = vpop.f32.mrf.mxu0
      %8455 = vmatprep.mubr.f32.mxu0 %v8249
      %8456 = vmatmul.mubr.f32.gmra.mxu0 %v8248
      %v8457 = vpop.f32.mrf.mxu0
      %v8458 = vadd.f32 %v8330, %v8457
      %v8459 = vpop.f32.mrf.mxu0
      %8460 = vdwg.mxu0
      %8461 = vmatprep.subr.mxu0 0.0
      %8462 = vmatpush1.msra.mxu0 %v8300
      %8463 = vmatprep.subr.mxu0 0.0
      %8464 = vmatpush1.msra.mxu0 %v8299
      %8465 = vmatprep.subr.mxu0 0.0
      %8466 = vmatpush1.msra.mxu0 %v8298
      %8467 = vmatprep.subr.mxu0 0.0
      %8468 = vmatpush1.msra.mxu0 %v8297
      %8469 = vmatprep.subr.mxu0 0.0
      %8470 = vmatpush1.msra.mxu0 %v8296
      %8471 = vmatprep.subr.mxu0 0.0
      %8472 = vmatpush1.msra.mxu0 %v8295
      %8473 = vmatprep.subr.mxu0 0.0
      %8474 = vmatpush1.msra.mxu0 %v8294
      %8475 = vmatprep.subr.mxu0 0.0
      %8476 = vmatpush1.msra.mxu0 %v8293
      %8477 = vmatprep.subr.mxu0 0.0
      %8478 = vmatpush1.msra.mxu0 %v8292
      %8479 = vmatprep.subr.mxu0 0.0
      %8480 = vmatpush1.msra.mxu0 %v8291
      %8481 = vmatprep.subr.mxu0 0.0
      %8482 = vmatpush1.msra.mxu0 %v8290
      %8483 = vmatprep.subr.mxu0 0.0
      %8484 = vmatpush1.msra.mxu0 %v8289
      %8485 = vmatprep.subr.mxu0 0.0
      %8486 = vmatpush1.msra.mxu0 %v8288
      %8487 = vmatprep.subr.mxu0 0.0
      %8488 = vmatpush1.msra.mxu0 %v8287
      %8489 = vmatprep.subr.mxu0 0.0
      %8490 = vmatpush1.msra.mxu0 %v8286
      %8491 = vmatprep.subr.mxu0 0.0
      %8492 = vmatpush1.msra.mxu0 %v8285
      %8493 = vmatprep.subr.mxu0 0.0
      %8494 = vmatpush2.msra.mxu0 %v8316
      %8495 = vmatprep.subr.mxu0 0.0
      %8496 = vmatpush2.msra.mxu0 %v8315
      %8497 = vmatprep.subr.mxu0 0.0
      %8498 = vmatpush2.msra.mxu0 %v8314
      %8499 = vmatprep.subr.mxu0 0.0
      %8500 = vmatpush2.msra.mxu0 %v8313
      %8501 = vmatprep.subr.mxu0 0.0
      %8502 = vmatpush2.msra.mxu0 %v8312
      %8503 = vmatprep.subr.mxu0 0.0
      %8504 = vmatpush2.msra.mxu0 %v8311
      %8505 = vmatprep.subr.mxu0 0.0
      %8506 = vmatpush2.msra.mxu0 %v8310
      %8507 = vmatprep.subr.mxu0 0.0
      %8508 = vmatpush2.msra.mxu0 %v8309
      %8509 = vmatprep.subr.mxu0 0.0
      %8510 = vmatpush2.msra.mxu0 %v8308
      %8511 = vmatprep.subr.mxu0 0.0
      %8512 = vmatpush2.msra.mxu0 %v8307
      %8513 = vmatprep.subr.mxu0 0.0
      %8514 = vmatpush2.msra.mxu0 %v8306
      %8515 = vmatprep.subr.mxu0 0.0
      %8516 = vmatpush2.msra.mxu0 %v8305
      %8517 = vmatprep.subr.mxu0 0.0
      %8518 = vmatpush2.msra.mxu0 %v8304
      %8519 = vmatprep.subr.mxu0 0.0
      %8520 = vmatpush2.msra.mxu0 %v8303
      %8521 = vmatprep.subr.mxu0 0.0
      %8522 = vmatpush2.msra.mxu0 %v8302
      %8523 = vmatprep.subr.mxu0 0.0
      %8524 = vmatpush2.msra.mxu0 %v8301
      %8525 = vmatprep.mubr.f32.mxu0 %v8216
      %8526 = vmatmul.mubr.f32.gmra.mxu0 %v8215
      %v8527 = vpop.f32.mrf.mxu0
      %v8528 = vadd.f32 %v8423, %v8527
      %v8529 = vpop.f32.mrf.mxu0
      %8530 = vmatprep.mubr.f32.mxu0 %v8221
      %8531 = vmatmul.mubr.f32.gmra.mxu0 %v8220
      %v8532 = vpop.f32.mrf.mxu0
      %v8533 = vadd.f32 %v8428, %v8532
      %v8534 = vpop.f32.mrf.mxu0
      %8535 = vmatprep.mubr.f32.mxu0 %v8226
      %8536 = vmatmul.mubr.f32.gmra.mxu0 %v8225
      %v8537 = vpop.f32.mrf.mxu0
      %v8538 = vadd.f32 %v8433, %v8537
      %v8539 = vpop.f32.mrf.mxu0
      %8540 = vmatprep.mubr.f32.mxu0 %v8231
      %8541 = vmatmul.mubr.f32.gmra.mxu0 %v8230
      %v8542 = vpop.f32.mrf.mxu0
      %v8543 = vadd.f32 %v8438, %v8542
      %v8544 = vpop.f32.mrf.mxu0
      %8545 = vmatprep.mubr.f32.mxu0 %v8236
      %8546 = vmatmul.mubr.f32.gmra.mxu0 %v8235
      %v8547 = vpop.f32.mrf.mxu0
      %v8548 = vadd.f32 %v8443, %v8547
      %v8549 = vpop.f32.mrf.mxu0
      %8550 = vmatprep.mubr.f32.mxu0 %v8241
      %8551 = vmatmul.mubr.f32.gmra.mxu0 %v8240
      %v8552 = vpop.f32.mrf.mxu0
      %v8553 = vadd.f32 %v8448, %v8552
      %v8554 = vpop.f32.mrf.mxu0
      %8555 = vmatprep.mubr.f32.mxu0 %v8246
      %8556 = vmatmul.mubr.f32.gmra.mxu0 %v8245
      %v8557 = vpop.f32.mrf.mxu0
      %v8558 = vadd.f32 %v8453, %v8557
      %v8559 = vpop.f32.mrf.mxu0
      %8560 = vmatprep.mubr.f32.mxu0 %v8251
      %8561 = vmatmul.mubr.f32.gmra.mxu0 %v8250
      %v8562 = vpop.f32.mrf.mxu0
      %v8563 = vadd.f32 %v8458, %v8562
      %v8564 = vpop.f32.mrf.mxu0
      %8565 = vdwg.mxu0
      %8566 = vmatprep.subr.mxu0 0.0
      %8567 = vmatpush1.msra.mxu0 0.0
      %8568 = vmatprep.subr.mxu0 0.0
      %8569 = vmatpush1.msra.mxu0 0.0
      %8570 = vmatprep.subr.mxu0 0.0
      %8571 = vmatpush1.msra.mxu0 0.0
      %8572 = vmatprep.subr.mxu0 0.0
      %8573 = vmatpush1.msra.mxu0 0.0
      %8574 = vmatprep.subr.mxu0 0.0
      %8575 = vmatpush1.msra.mxu0 0.0
      %8576 = vmatprep.subr.mxu0 0.0
      %8577 = vmatpush1.msra.mxu0 0.0
      %8578 = vmatprep.subr.mxu0 0.0
      %8579 = vmatpush1.msra.mxu0 0.0
      %8580 = vmatprep.subr.mxu0 0.0
      %8581 = vmatpush1.msra.mxu0 0.0
      %8582 = vmatprep.subr.mxu0 0.0
      %8583 = vmatpush1.msra.mxu0 %v8324
      %8584 = vmatprep.subr.mxu0 0.0
      %8585 = vmatpush1.msra.mxu0 %v8323
      %8586 = vmatprep.subr.mxu0 0.0
      %8587 = vmatpush1.msra.mxu0 %v8322
      %8588 = vmatprep.subr.mxu0 0.0
      %8589 = vmatpush1.msra.mxu0 %v8321
      %8590 = vmatprep.subr.mxu0 0.0
      %8591 = vmatpush1.msra.mxu0 %v8320
      %8592 = vmatprep.subr.mxu0 0.0
      %8593 = vmatpush1.msra.mxu0 %v8319
      %8594 = vmatprep.subr.mxu0 0.0
      %8595 = vmatpush1.msra.mxu0 %v8318
      %8596 = vmatprep.subr.mxu0 0.0
      %8597 = vmatpush1.msra.mxu0 %v8317
      %8598 = vmatprep.subr.mxu0 0.0
      %8599 = vmatpush2.msra.mxu0 0.0
      %8600 = vmatprep.subr.mxu0 0.0
      %8601 = vmatpush2.msra.mxu0 0.0
      %8602 = vmatprep.subr.mxu0 0.0
      %8603 = vmatpush2.msra.mxu0 0.0
      %8604 = vmatprep.subr.mxu0 0.0
      %8605 = vmatpush2.msra.mxu0 0.0
      %8606 = vmatprep.subr.mxu0 0.0
      %8607 = vmatpush2.msra.mxu0 0.0
      %8608 = vmatprep.subr.mxu0 0.0
      %8609 = vmatpush2.msra.mxu0 0.0
      %8610 = vmatprep.subr.mxu0 0.0
      %8611 = vmatpush2.msra.mxu0 0.0
      %8612 = vmatprep.subr.mxu0 0.0
      %8613 = vmatpush2.msra.mxu0 0.0
      %8614 = vmatprep.subr.mxu0 0.0
      %8615 = vmatpush2.msra.mxu0 0.0
      %8616 = vmatprep.subr.mxu0 0.0
      %8617 = vmatpush2.msra.mxu0 0.0
      %8618 = vmatprep.subr.mxu0 0.0
      %8619 = vmatpush2.msra.mxu0 0.0
      %8620 = vmatprep.subr.mxu0 0.0
      %8621 = vmatpush2.msra.mxu0 0.0
      %8622 = vmatprep.subr.mxu0 0.0
      %8623 = vmatpush2.msra.mxu0 0.0
      %8624 = vmatprep.subr.mxu0 0.0
      %8625 = vmatpush2.msra.mxu0 0.0
      %8626 = vmatprep.subr.mxu0 0.0
      %8627 = vmatpush2.msra.mxu0 0.0
      %8628 = vmatprep.subr.mxu0 0.0
      %8629 = vmatpush2.msra.mxu0 0.0
      %8630 = vmatprep.mubr.f32.mxu0 0.0
      %8631 = vmatmul.mubr.f32.gmra.mxu0 %v8333
      %v8632 = vpop.f32.mrf.mxu0
      %v8633 = vadd.f32 %v8528, %v8632
      %v8634 = vpop.f32.mrf.mxu0
      %8635 = vmatprep.mubr.f32.mxu0 0.0
      %8636 = vmatmul.mubr.f32.gmra.mxu0 %v8336
      %v8637 = vpop.f32.mrf.mxu0
      %v8638 = vadd.f32 %v8533, %v8637
      %v8639 = vpop.f32.mrf.mxu0
      %8640 = vmatprep.mubr.f32.mxu0 0.0
      %8641 = vmatmul.mubr.f32.gmra.mxu0 %v8339
      %v8642 = vpop.f32.mrf.mxu0
      %v8643 = vadd.f32 %v8538, %v8642
      %v8644 = vpop.f32.mrf.mxu0
      %8645 = vmatprep.mubr.f32.mxu0 0.0
      %8646 = vmatmul.mubr.f32.gmra.mxu0 %v8342
      %v8647 = vpop.f32.mrf.mxu0
      %v8648 = vadd.f32 %v8543, %v8647
      %v8649 = vpop.f32.mrf.mxu0
      %8650 = vmatprep.mubr.f32.mxu0 0.0
      %8651 = vmatmul.mubr.f32.gmra.mxu0 %v8345
      %v8652 = vpop.f32.mrf.mxu0
      %v8653 = vadd.f32 %v8548, %v8652
      %v8654 = vpop.f32.mrf.mxu0
      %8655 = vmatprep.mubr.f32.mxu0 0.0
      %8656 = vmatmul.mubr.f32.gmra.mxu0 %v8348
      %v8657 = vpop.f32.mrf.mxu0
      %v8658 = vadd.f32 %v8553, %v8657
      %v8659 = vpop.f32.mrf.mxu0
      %8660 = vmatprep.mubr.f32.mxu0 0.0
      %8661 = vmatmul.mubr.f32.gmra.mxu0 %v8351
      %v8662 = vpop.f32.mrf.mxu0
      %v8663 = vadd.f32 %v8558, %v8662
      %v8664 = vpop.f32.mrf.mxu0
      %8665 = vmatprep.mubr.f32.mxu0 0.0
      %8666 = vmatmul.mubr.f32.gmra.mxu0 %v8354
      %v8667 = vpop.f32.mrf.mxu0
      %v8668 = vadd.f32 %v8563, %v8667
      %v8669 = vpop.f32.mrf.mxu0
      %8670 = vdwg.mxu0
      %v8671 = vsub.f32 0.0, %v8633
      %v8672 = vsub.f32 0.0, %v8638
      %v8673 = vsub.f32 0.0, %v8643
      %v8674 = vsub.f32 0.0, %v8648
      %v8675 = vsub.f32 0.0, %v8653
      %v8676 = vsub.f32 0.0, %v8658
      %v8677 = vsub.f32 0.0, %v8663
      %v8678 = vsub.f32 0.0, %v8668
      %v8679 = vmul.f32 %v8671, 1.442695
      %v8680 = vpow.pop %v8679
      %v8681 = vmul.f32 %v8672, 1.442695
      %v8682 = vpow.pop %v8681
      %v8683 = vmul.f32 %v8673, 1.442695
      %v8684 = vpow.pop %v8683
      %v8685 = vmul.f32 %v8674, 1.442695
      %v8686 = vpow.pop %v8685
      %v8687 = vmul.f32 %v8675, 1.442695
      %v8688 = vpow.pop %v8687
      %v8689 = vmul.f32 %v8676, 1.442695
      %v8690 = vpow.pop %v8689
      %v8691 = vmul.f32 %v8677, 1.442695
      %v8692 = vpow.pop %v8691
      %v8693 = vmul.f32 %v8678, 1.442695
      %v8694 = vpow.pop %v8693
      %v8695 = vadd.f32 %v8680, 1.0
      %v8696 = vadd.f32 %v8682, 1.0
      %v8697 = vadd.f32 %v8684, 1.0
      %v8698 = vadd.f32 %v8686, 1.0
      %v8699 = vadd.f32 %v8688, 1.0
      %v8700 = vadd.f32 %v8690, 1.0
      %v8701 = vadd.f32 %v8692, 1.0
      %v8702 = vadd.f32 %v8694, 1.0
      %v8703 = vrcp.pop %v8695
      %v8704 = vrcp.pop %v8696
      %v8705 = vrcp.pop %v8697
      %v8706 = vrcp.pop %v8698
      %v8707 = vrcp.pop %v8699
      %v8708 = vrcp.pop %v8700
      %v8709 = vrcp.pop %v8701
      %v8710 = vrcp.pop %v8702
      %8711 = vst [vmem:[%s332 + $0x40] sm:$0xff] %v8703
      %8712 = vst [vmem:[%s332 + $0x48] sm:$0xff] %v8704
      %8713 = vst [vmem:[%s332 + $0x50] sm:$0xff] %v8705
      %8714 = vst [vmem:[%s332 + $0x58] sm:$0xff] %v8706
      %8715 = vst [vmem:[%s332 + $0x60] sm:$0xff] %v8707
      %8716 = vst [vmem:[%s332 + $0x68] sm:$0xff] %v8708
      %8717 = vst [vmem:[%s332 + $0x70] sm:$0xff] %v8709
      %8718 = vst [vmem:[%s332 + $0x78] sm:$0xff] %v8710
      %v8719 = vld [vmem:[%s7104] sm:$0xff]
      %v8720 = vld [vmem:[%s7104 + $0x10] sm:$0xff]
      %v8721 = vld [vmem:[%s7104 + $0x20] sm:$0xff]
      %v8722 = vld [vmem:[%s7104 + $0x30] sm:$0xff]
      %v8723 = vld [vmem:[%s7104 + $0x40] sm:$0xff]
      %v8724 = vld [vmem:[%s7104 + $0x50] sm:$0xff]
      %v8725 = vld [vmem:[%s7104 + $0x60] sm:$0xff]
      %v8726 = vld [vmem:[%s7104 + $0x70] sm:$0xff]
      %v8727 = vld [vmem:[%s7104 + $0x1] sm:$0xff]
      %v8728 = vld [vmem:[%s7104 + $0x11] sm:$0xff]
      %v8729 = vld [vmem:[%s7104 + $0x21] sm:$0xff]
      %v8730 = vld [vmem:[%s7104 + $0x31] sm:$0xff]
      %v8731 = vld [vmem:[%s7104 + $0x41] sm:$0xff]
      %v8732 = vld [vmem:[%s7104 + $0x51] sm:$0xff]
      %v8733 = vld [vmem:[%s7104 + $0x61] sm:$0xff]
      %v8734 = vld [vmem:[%s7104 + $0x71] sm:$0xff]
      %8743 = vrot.lane.b32.xlu0 %v8719, 64
      %v8744 = vpop.permute.xlu0 %8743
      %8745 = vrot.lane.b32.xlu0 %v8720, 64
      %v8746 = vpop.permute.xlu0 %8745
      %8747 = vrot.lane.b32.xlu0 %v8721, 64
      %v8748 = vpop.permute.xlu0 %8747
      %8749 = vrot.lane.b32.xlu0 %v8722, 64
      %v8750 = vpop.permute.xlu0 %8749
      %8751 = vrot.lane.b32.xlu0 %v8723, 64
      %v8752 = vpop.permute.xlu0 %8751
      %8753 = vrot.lane.b32.xlu0 %v8724, 64
      %v8754 = vpop.permute.xlu0 %8753
      %8755 = vrot.lane.b32.xlu0 %v8725, 64
      %v8756 = vpop.permute.xlu0 %8755
      %8757 = vrot.lane.b32.xlu0 %v8726, 64
      %v8758 = vpop.permute.xlu0 %8757
      %8775 = vrot.lane.b32.xlu0 %v8727, 64
      %v8776 = vpop.permute.xlu0 %8775
      %8777 = vrot.lane.b32.xlu0 %v8728, 64
      %v8778 = vpop.permute.xlu0 %8777
      %8779 = vrot.lane.b32.xlu0 %v8729, 64
      %v8780 = vpop.permute.xlu0 %8779
      %8781 = vrot.lane.b32.xlu0 %v8730, 64
      %v8782 = vpop.permute.xlu0 %8781
      %8783 = vrot.lane.b32.xlu0 %v8731, 64
      %v8784 = vpop.permute.xlu0 %8783
      %8785 = vrot.lane.b32.xlu0 %v8732, 64
      %v8786 = vpop.permute.xlu0 %8785
      %8787 = vrot.lane.b32.xlu0 %v8733, 64
      %v8788 = vpop.permute.xlu0 %8787
      %8789 = vrot.lane.b32.xlu0 %v8734, 64
      %v8790 = vpop.permute.xlu0 %8789
      %v8799 = vsel %vm1878, %v8744, %v8776
      %v8800 = vsel %vm1878, %v8746, %v8778
      %v8801 = vsel %vm1878, %v8748, %v8780
      %v8802 = vsel %vm1878, %v8750, %v8782
      %v8803 = vsel %vm1878, %v8752, %v8784
      %v8804 = vsel %vm1878, %v8754, %v8786
      %v8805 = vsel %vm1878, %v8756, %v8788
      %v8806 = vsel %vm1878, %v8758, %v8790
      %8807 = vst [vmem:[#allocation3 + $0x280] sm:$0xff] %v8799
      %8808 = vst [vmem:[#allocation3 + $0x2a8] sm:$0xff] %v8800
      %8809 = vst [vmem:[#allocation3 + $0x2d0] sm:$0xff] %v8801
      %8810 = vst [vmem:[#allocation3 + $0x2f8] sm:$0xff] %v8802
      %8811 = vst [vmem:[#allocation3 + $0x320] sm:$0xff] %v8803
      %8812 = vst [vmem:[#allocation3 + $0x348] sm:$0xff] %v8804
      %8813 = vst [vmem:[#allocation3 + $0x370] sm:$0xff] %v8805
      %8814 = vst [vmem:[#allocation3 + $0x398] sm:$0xff] %v8806
      %v8815 = vld [vmem:[%s7104 + $0x1] sm:$0xff]
      %v8816 = vld [vmem:[%s7104 + $0x11] sm:$0xff]
      %v8817 = vld [vmem:[%s7104 + $0x21] sm:$0xff]
      %v8818 = vld [vmem:[%s7104 + $0x31] sm:$0xff]
      %v8819 = vld [vmem:[%s7104 + $0x41] sm:$0xff]
      %v8820 = vld [vmem:[%s7104 + $0x51] sm:$0xff]
      %v8821 = vld [vmem:[%s7104 + $0x61] sm:$0xff]
      %v8822 = vld [vmem:[%s7104 + $0x71] sm:$0xff]
      %v8823 = vld [vmem:[%s7161] sm:$0xff]
      %v8824 = vld [vmem:[%s7161 + $0x10] sm:$0xff]
      %v8825 = vld [vmem:[%s7161 + $0x20] sm:$0xff]
      %v8826 = vld [vmem:[%s7161 + $0x30] sm:$0xff]
      %v8827 = vld [vmem:[%s7161 + $0x40] sm:$0xff]
      %v8828 = vld [vmem:[%s7161 + $0x50] sm:$0xff]
      %v8829 = vld [vmem:[%s7161 + $0x60] sm:$0xff]
      %v8830 = vld [vmem:[%s7161 + $0x70] sm:$0xff]
      %8839 = vrot.lane.b32.xlu0 %v8815, 64
      %v8840 = vpop.permute.xlu0 %8839
      %8841 = vrot.lane.b32.xlu0 %v8816, 64
      %v8842 = vpop.permute.xlu0 %8841
      %8843 = vrot.lane.b32.xlu0 %v8817, 64
      %v8844 = vpop.permute.xlu0 %8843
      %8845 = vrot.lane.b32.xlu0 %v8818, 64
      %v8846 = vpop.permute.xlu0 %8845
      %8847 = vrot.lane.b32.xlu0 %v8819, 64
      %v8848 = vpop.permute.xlu0 %8847
      %8849 = vrot.lane.b32.xlu0 %v8820, 64
      %v8850 = vpop.permute.xlu0 %8849
      %8851 = vrot.lane.b32.xlu0 %v8821, 64
      %v8852 = vpop.permute.xlu0 %8851
      %8853 = vrot.lane.b32.xlu0 %v8822, 64
      %v8854 = vpop.permute.xlu0 %8853
      %v8863 = vsel %vm1878, %v8840, %v8823
      %v8864 = vsel %vm1878, %v8842, %v8824
      %v8865 = vsel %vm1878, %v8844, %v8825
      %v8866 = vsel %vm1878, %v8846, %v8826
      %v8867 = vsel %vm1878, %v8848, %v8827
      %v8868 = vsel %vm1878, %v8850, %v8828
      %v8869 = vsel %vm1878, %v8852, %v8829
      %v8870 = vsel %vm1878, %v8854, %v8830
      %8871 = vst [vmem:[#allocation3 + $0x288] sm:$0xff] %v8863
      %8872 = vst [vmem:[#allocation3 + $0x2b0] sm:$0xff] %v8864
      %8873 = vst [vmem:[#allocation3 + $0x2d8] sm:$0xff] %v8865
      %8874 = vst [vmem:[#allocation3 + $0x300] sm:$0xff] %v8866
      %8875 = vst [vmem:[#allocation3 + $0x328] sm:$0xff] %v8867
      %8876 = vst [vmem:[#allocation3 + $0x350] sm:$0xff] %v8868
      %8877 = vst [vmem:[#allocation3 + $0x378] sm:$0xff] %v8869
      %8878 = vst [vmem:[#allocation3 + $0x3a0] sm:$0xff] %v8870
      %v8879 = vld [vmem:[%s7161 + $0x1] sm:$0xff]
      %v8880 = vld [vmem:[%s7161 + $0x11] sm:$0xff]
      %v8881 = vld [vmem:[%s7161 + $0x21] sm:$0xff]
      %v8882 = vld [vmem:[%s7161 + $0x31] sm:$0xff]
      %v8883 = vld [vmem:[%s7161 + $0x41] sm:$0xff]
      %v8884 = vld [vmem:[%s7161 + $0x51] sm:$0xff]
      %v8885 = vld [vmem:[%s7161 + $0x61] sm:$0xff]
      %v8886 = vld [vmem:[%s7161 + $0x71] sm:$0xff]
      %8887 = vst [vmem:[#allocation3 + $0x290] sm:$0xff] %v8879
      %8888 = vst [vmem:[#allocation3 + $0x2b8] sm:$0xff] %v8880
      %8889 = vst [vmem:[#allocation3 + $0x2e0] sm:$0xff] %v8881
      %8890 = vst [vmem:[#allocation3 + $0x308] sm:$0xff] %v8882
      %8891 = vst [vmem:[#allocation3 + $0x330] sm:$0xff] %v8883
      %8892 = vst [vmem:[#allocation3 + $0x358] sm:$0xff] %v8884
      %8893 = vst [vmem:[#allocation3 + $0x380] sm:$0xff] %v8885
      %8894 = vst [vmem:[#allocation3 + $0x3a8] sm:$0xff] %v8886
      %s8895 = scalar_lea.vmem [#allocation4], 32
      %v8896 = vld [vmem:[%s8895] sm:$0xff]
      %v8897 = vld [vmem:[%s8895 + $0x10] sm:$0xff]
      %v8898 = vld [vmem:[%s8895 + $0x20] sm:$0xff]
      %v8899 = vld [vmem:[%s8895 + $0x30] sm:$0xff]
      %v8900 = vld [vmem:[%s8895 + $0x40] sm:$0xff]
      %v8901 = vld [vmem:[%s8895 + $0x50] sm:$0xff]
      %v8902 = vld [vmem:[%s8895 + $0x60] sm:$0xff]
      %v8903 = vld [vmem:[%s8895 + $0x70] sm:$0xff]
      %v8904 = vld [vmem:[%s8895 + $0x1] sm:$0xff]
      %v8905 = vld [vmem:[%s8895 + $0x11] sm:$0xff]
      %v8906 = vld [vmem:[%s8895 + $0x21] sm:$0xff]
      %v8907 = vld [vmem:[%s8895 + $0x31] sm:$0xff]
      %v8908 = vld [vmem:[%s8895 + $0x41] sm:$0xff]
      %v8909 = vld [vmem:[%s8895 + $0x51] sm:$0xff]
      %v8910 = vld [vmem:[%s8895 + $0x61] sm:$0xff]
      %v8911 = vld [vmem:[%s8895 + $0x71] sm:$0xff]
      %8920 = vrot.lane.b32.xlu0 %v8896, 64
      %v8921 = vpop.permute.xlu0 %8920
      %8922 = vrot.lane.b32.xlu0 %v8897, 64
      %v8923 = vpop.permute.xlu0 %8922
      %8924 = vrot.lane.b32.xlu0 %v8898, 64
      %v8925 = vpop.permute.xlu0 %8924
      %8926 = vrot.lane.b32.xlu0 %v8899, 64
      %v8927 = vpop.permute.xlu0 %8926
      %8928 = vrot.lane.b32.xlu0 %v8900, 64
      %v8929 = vpop.permute.xlu0 %8928
      %8930 = vrot.lane.b32.xlu0 %v8901, 64
      %v8931 = vpop.permute.xlu0 %8930
      %8932 = vrot.lane.b32.xlu0 %v8902, 64
      %v8933 = vpop.permute.xlu0 %8932
      %8934 = vrot.lane.b32.xlu0 %v8903, 64
      %v8935 = vpop.permute.xlu0 %8934
      %8952 = vrot.lane.b32.xlu0 %v8904, 64
      %v8953 = vpop.permute.xlu0 %8952
      %8954 = vrot.lane.b32.xlu0 %v8905, 64
      %v8955 = vpop.permute.xlu0 %8954
      %8956 = vrot.lane.b32.xlu0 %v8906, 64
      %v8957 = vpop.permute.xlu0 %8956
      %8958 = vrot.lane.b32.xlu0 %v8907, 64
      %v8959 = vpop.permute.xlu0 %8958
      %8960 = vrot.lane.b32.xlu0 %v8908, 64
      %v8961 = vpop.permute.xlu0 %8960
      %8962 = vrot.lane.b32.xlu0 %v8909, 64
      %v8963 = vpop.permute.xlu0 %8962
      %8964 = vrot.lane.b32.xlu0 %v8910, 64
      %v8965 = vpop.permute.xlu0 %8964
      %8966 = vrot.lane.b32.xlu0 %v8911, 64
      %v8967 = vpop.permute.xlu0 %8966
      %v8976 = vsel %vm1878, %v8921, %v8953
      %v8977 = vsel %vm1878, %v8923, %v8955
      %v8978 = vsel %vm1878, %v8925, %v8957
      %v8979 = vsel %vm1878, %v8927, %v8959
      %v8980 = vsel %vm1878, %v8929, %v8961
      %v8981 = vsel %vm1878, %v8931, %v8963
      %v8982 = vsel %vm1878, %v8933, %v8965
      %v8983 = vsel %vm1878, %v8935, %v8967
      %8984 = vst [vmem:[#allocation3 + $0x298] sm:$0xff] %v8976
      %8985 = vst [vmem:[#allocation3 + $0x2c0] sm:$0xff] %v8977
      %8986 = vst [vmem:[#allocation3 + $0x2e8] sm:$0xff] %v8978
      %8987 = vst [vmem:[#allocation3 + $0x310] sm:$0xff] %v8979
      %8988 = vst [vmem:[#allocation3 + $0x338] sm:$0xff] %v8980
      %8989 = vst [vmem:[#allocation3 + $0x360] sm:$0xff] %v8981
      %8990 = vst [vmem:[#allocation3 + $0x388] sm:$0xff] %v8982
      %8991 = vst [vmem:[#allocation3 + $0x3b0] sm:$0xff] %v8983
      %v8992 = vld [vmem:[%s8895 + $0x1] sm:$0xff]
      %v8993 = vld [vmem:[%s8895 + $0x11] sm:$0xff]
      %v8994 = vld [vmem:[%s8895 + $0x21] sm:$0xff]
      %v8995 = vld [vmem:[%s8895 + $0x31] sm:$0xff]
      %v8996 = vld [vmem:[%s8895 + $0x41] sm:$0xff]
      %v8997 = vld [vmem:[%s8895 + $0x51] sm:$0xff]
      %v8998 = vld [vmem:[%s8895 + $0x61] sm:$0xff]
      %v8999 = vld [vmem:[%s8895 + $0x71] sm:$0xff]
      %9008 = vrot.lane.b32.xlu0 %v8992, 64
      %v9009 = vpop.permute.xlu0 %9008
      %9010 = vrot.lane.b32.xlu0 %v8993, 64
      %v9011 = vpop.permute.xlu0 %9010
      %9012 = vrot.lane.b32.xlu0 %v8994, 64
      %v9013 = vpop.permute.xlu0 %9012
      %9014 = vrot.lane.b32.xlu0 %v8995, 64
      %v9015 = vpop.permute.xlu0 %9014
      %9016 = vrot.lane.b32.xlu0 %v8996, 64
      %v9017 = vpop.permute.xlu0 %9016
      %9018 = vrot.lane.b32.xlu0 %v8997, 64
      %v9019 = vpop.permute.xlu0 %9018
      %9020 = vrot.lane.b32.xlu0 %v8998, 64
      %v9021 = vpop.permute.xlu0 %9020
      %9022 = vrot.lane.b32.xlu0 %v8999, 64
      %v9023 = vpop.permute.xlu0 %9022
      %9032 = vst.msk [vmem:[#allocation3 + $0x2a0] sm:$0xff] %vm1878, %v9009
      %9033 = vst.msk [vmem:[#allocation3 + $0x2c8] sm:$0xff] %vm1878, %v9011
      %9034 = vst.msk [vmem:[#allocation3 + $0x2f0] sm:$0xff] %vm1878, %v9013
      %9035 = vst.msk [vmem:[#allocation3 + $0x318] sm:$0xff] %vm1878, %v9015
      %9036 = vst.msk [vmem:[#allocation3 + $0x340] sm:$0xff] %vm1878, %v9017
      %9037 = vst.msk [vmem:[#allocation3 + $0x368] sm:$0xff] %vm1878, %v9019
      %9038 = vst.msk [vmem:[#allocation3 + $0x390] sm:$0xff] %vm1878, %v9021
      %9039 = vst.msk [vmem:[#allocation3 + $0x3b8] sm:$0xff] %vm1878, %v9023
      %v9040 = vld [vmem:[#allocation3 + $0x280] sm:$0xff]
      %v9041 = vld [vmem:[#allocation3 + $0x288] sm:$0xff]
      %v9042 = vld [vmem:[#allocation3 + $0x290] sm:$0xff]
      %v9043 = vld [vmem:[#allocation3 + $0x298] sm:$0xff]
      %v9044 = vld [vmem:[#allocation3 + $0x2a0] sm:$0xff]
      %v9045 = vld [vmem:[#allocation3 + $0x2a8] sm:$0xff]
      %v9046 = vld [vmem:[#allocation3 + $0x2b0] sm:$0xff]
      %v9047 = vld [vmem:[#allocation3 + $0x2b8] sm:$0xff]
      %v9048 = vld [vmem:[#allocation3 + $0x2c0] sm:$0xff]
      %v9049 = vld [vmem:[#allocation3 + $0x2c8] sm:$0xff]
      %v9050 = vld [vmem:[#allocation3 + $0x2d0] sm:$0xff]
      %v9051 = vld [vmem:[#allocation3 + $0x2d8] sm:$0xff]
      %v9052 = vld [vmem:[#allocation3 + $0x2e0] sm:$0xff]
      %v9053 = vld [vmem:[#allocation3 + $0x2e8] sm:$0xff]
      %v9054 = vld [vmem:[#allocation3 + $0x2f0] sm:$0xff]
      %v9055 = vld [vmem:[#allocation3 + $0x2f8] sm:$0xff]
      %v9056 = vld [vmem:[#allocation3 + $0x300] sm:$0xff]
      %v9057 = vld [vmem:[#allocation3 + $0x308] sm:$0xff]
      %v9058 = vld [vmem:[#allocation3 + $0x310] sm:$0xff]
      %v9059 = vld [vmem:[#allocation3 + $0x318] sm:$0xff]
      %v9060 = vld [vmem:[#allocation3 + $0x320] sm:$0xff]
      %v9061 = vld [vmem:[#allocation3 + $0x328] sm:$0xff]
      %v9062 = vld [vmem:[#allocation3 + $0x330] sm:$0xff]
      %v9063 = vld [vmem:[#allocation3 + $0x338] sm:$0xff]
      %v9064 = vld [vmem:[#allocation3 + $0x340] sm:$0xff]
      %v9065 = vld [vmem:[#allocation3 + $0x348] sm:$0xff]
      %v9066 = vld [vmem:[#allocation3 + $0x350] sm:$0xff]
      %v9067 = vld [vmem:[#allocation3 + $0x358] sm:$0xff]
      %v9068 = vld [vmem:[#allocation3 + $0x360] sm:$0xff]
      %v9069 = vld [vmem:[#allocation3 + $0x368] sm:$0xff]
      %v9070 = vld [vmem:[#allocation3 + $0x370] sm:$0xff]
      %v9071 = vld [vmem:[#allocation3 + $0x378] sm:$0xff]
      %v9072 = vld [vmem:[#allocation3 + $0x380] sm:$0xff]
      %v9073 = vld [vmem:[#allocation3 + $0x388] sm:$0xff]
      %v9074 = vld [vmem:[#allocation3 + $0x390] sm:$0xff]
      %v9075 = vld [vmem:[#allocation3 + $0x398] sm:$0xff]
      %v9076 = vld [vmem:[#allocation3 + $0x3a0] sm:$0xff]
      %v9077 = vld [vmem:[#allocation3 + $0x3a8] sm:$0xff]
      %v9078 = vld [vmem:[#allocation3 + $0x3b0] sm:$0xff]
      %v9079 = vld [vmem:[#allocation3 + $0x3b8] sm:$0xff]
      %v9080 = vld [vmem:[%s7] sm:$0xff]
      %v9081 = vld [vmem:[%s7 + $0x8] sm:$0xff]
      %v9082 = vld [vmem:[%s7 + $0x10] sm:$0xff]
      %v9083 = vld [vmem:[%s7 + $0x18] sm:$0xff]
      %v9084 = vld [vmem:[%s7 + $0x20] sm:$0xff]
      %v9085 = vld [vmem:[%s7 + $0x28] sm:$0xff]
      %v9086 = vld [vmem:[%s7 + $0x30] sm:$0xff]
      %v9087 = vld [vmem:[%s7 + $0x38] sm:$0xff]
      %v9088 = vld [vmem:[%s7 + $0x40] sm:$0xff]
      %v9089 = vld [vmem:[%s7 + $0x48] sm:$0xff]
      %v9090 = vld [vmem:[%s7 + $0x50] sm:$0xff]
      %v9091 = vld [vmem:[%s7 + $0x58] sm:$0xff]
      %v9092 = vld [vmem:[%s7 + $0x60] sm:$0xff]
      %v9093 = vld [vmem:[%s7 + $0x68] sm:$0xff]
      %v9094 = vld [vmem:[%s7 + $0x70] sm:$0xff]
      %v9095 = vld [vmem:[%s7 + $0x78] sm:$0xff]
      %v9096 = vld [vmem:[%s7 + $0x80] sm:$0xff]
      %v9097 = vld [vmem:[%s7 + $0x88] sm:$0xff]
      %v9098 = vld [vmem:[%s7 + $0x90] sm:$0xff]
      %v9099 = vld [vmem:[%s7 + $0x98] sm:$0xff]
      %v9100 = vld [vmem:[%s7 + $0xa0] sm:$0xff]
      %v9101 = vld [vmem:[%s7 + $0xa8] sm:$0xff]
      %v9102 = vld [vmem:[%s7 + $0xb0] sm:$0xff]
      %v9103 = vld [vmem:[%s7 + $0xb8] sm:$0xff]
      %v9104 = vld [vmem:[%s7 + $0xc0] sm:$0xff]
      %v9105 = vld [vmem:[%s7 + $0xc8] sm:$0xff]
      %v9106 = vld [vmem:[%s7 + $0xd0] sm:$0xff]
      %v9107 = vld [vmem:[%s7 + $0xd8] sm:$0xff]
      %v9108 = vld [vmem:[%s7 + $0xe0] sm:$0xff]
      %v9109 = vld [vmem:[%s7 + $0xe8] sm:$0xff]
      %v9110 = vld [vmem:[%s7 + $0xf0] sm:$0xff]
      %v9111 = vld [vmem:[%s7 + $0xf8] sm:$0xff]
      %v9112 = vld [vmem:[%s7 + $0x100] sm:$0xff]
      %v9113 = vld [vmem:[%s7 + $0x108] sm:$0xff]
      %v9114 = vld [vmem:[%s7 + $0x110] sm:$0xff]
      %v9115 = vld [vmem:[%s7 + $0x118] sm:$0xff]
      %v9116 = vld [vmem:[%s7 + $0x120] sm:$0xff]
      %v9117 = vld [vmem:[%s7 + $0x128] sm:$0xff]
      %v9118 = vld [vmem:[%s7 + $0x130] sm:$0xff]
      %v9119 = vld [vmem:[%s7 + $0x138] sm:$0xff]
      %v9120 = vld [vmem:[%s7 + $0x140] sm:$0xff]
      %v9121 = vld [vmem:[%s7 + $0x148] sm:$0xff]
      %v9122 = vld [vmem:[%s7 + $0x150] sm:$0xff]
      %v9123 = vld [vmem:[%s7 + $0x158] sm:$0xff]
      %v9124 = vld [vmem:[%s7 + $0x160] sm:$0xff]
      %v9125 = vld [vmem:[%s7 + $0x168] sm:$0xff]
      %v9126 = vld [vmem:[%s7 + $0x170] sm:$0xff]
      %v9127 = vld [vmem:[%s7 + $0x178] sm:$0xff]
      %v9128 = vld [vmem:[%s7 + $0x180] sm:$0xff]
      %v9129 = vld [vmem:[%s7 + $0x188] sm:$0xff]
      %v9130 = vld [vmem:[%s7 + $0x190] sm:$0xff]
      %v9131 = vld [vmem:[%s7 + $0x198] sm:$0xff]
      %v9132 = vld [vmem:[%s7 + $0x1a0] sm:$0xff]
      %v9133 = vld [vmem:[%s7 + $0x1a8] sm:$0xff]
      %v9134 = vld [vmem:[%s7 + $0x1b0] sm:$0xff]
      %v9135 = vld [vmem:[%s7 + $0x1b8] sm:$0xff]
      %v9136 = vld [vmem:[%s7 + $0x1c0] sm:$0xff]
      %v9137 = vld [vmem:[%s7 + $0x1c8] sm:$0xff]
      %v9138 = vld [vmem:[%s7 + $0x1d0] sm:$0xff]
      %v9139 = vld [vmem:[%s7 + $0x1d8] sm:$0xff]
      %v9140 = vld [vmem:[%s7 + $0x1e0] sm:$0xff]
      %v9141 = vld [vmem:[%s7 + $0x1e8] sm:$0xff]
      %v9142 = vld [vmem:[%s7 + $0x1f0] sm:$0xff]
      %v9143 = vld [vmem:[%s7 + $0x1f8] sm:$0xff]
      %v9144 = vld [vmem:[%s7 + $0x200] sm:$0xff]
      %v9145 = vld [vmem:[%s7 + $0x208] sm:$0xff]
      %v9146 = vld [vmem:[%s7 + $0x210] sm:$0xff]
      %v9147 = vld [vmem:[%s7 + $0x218] sm:$0xff]
      %v9148 = vld [vmem:[%s7 + $0x220] sm:$0xff]
      %v9149 = vld [vmem:[%s7 + $0x228] sm:$0xff]
      %v9150 = vld [vmem:[%s7 + $0x230] sm:$0xff]
      %v9151 = vld [vmem:[%s7 + $0x238] sm:$0xff]
      %v9152 = vld [vmem:[%s8] sm:$0x1]
      %v9154 = vlaneseq
      %v9155 = vshrl.u32 %v9154, 7
      %v9156 = vsub.s32 0, %v9155
      %v9157 = vrot.slane %v9152, %v9156
      %v9160 = vsel %vm1878, %v9044, 0
      %v9163 = vsel %vm1878, %v9049, 0
      %v9166 = vsel %vm1878, %v9054, 0
      %v9169 = vsel %vm1878, %v9059, 0
      %v9172 = vsel %vm1878, %v9064, 0
      %v9175 = vsel %vm1878, %v9069, 0
      %v9178 = vsel %vm1878, %v9074, 0
      %v9181 = vsel %vm1878, %v9079, 0
      %9183 = vmatprep.subr.mxu0 0.0
      %9184 = vmatpush1.msra.mxu0 %v9095
      %9185 = vmatprep.subr.mxu0 0.0
      %9186 = vmatpush1.msra.mxu0 %v9094
      %9187 = vmatprep.subr.mxu0 0.0
      %9188 = vmatpush1.msra.mxu0 %v9093
      %9189 = vmatprep.subr.mxu0 0.0
      %9190 = vmatpush1.msra.mxu0 %v9092
      %9191 = vmatprep.subr.mxu0 0.0
      %9192 = vmatpush1.msra.mxu0 %v9091
      %9193 = vmatprep.subr.mxu0 0.0
      %9194 = vmatpush1.msra.mxu0 %v9090
      %9195 = vmatprep.subr.mxu0 0.0
      %9196 = vmatpush1.msra.mxu0 %v9089
      %9197 = vmatprep.subr.mxu0 0.0
      %9198 = vmatpush1.msra.mxu0 %v9088
      %9199 = vmatprep.subr.mxu0 0.0
      %9200 = vmatpush1.msra.mxu0 %v9087
      %9201 = vmatprep.subr.mxu0 0.0
      %9202 = vmatpush1.msra.mxu0 %v9086
      %9203 = vmatprep.subr.mxu0 0.0
      %9204 = vmatpush1.msra.mxu0 %v9085
      %9205 = vmatprep.subr.mxu0 0.0
      %9206 = vmatpush1.msra.mxu0 %v9084
      %9207 = vmatprep.subr.mxu0 0.0
      %9208 = vmatpush1.msra.mxu0 %v9083
      %9209 = vmatprep.subr.mxu0 0.0
      %9210 = vmatpush1.msra.mxu0 %v9082
      %9211 = vmatprep.subr.mxu0 0.0
      %9212 = vmatpush1.msra.mxu0 %v9081
      %9213 = vmatprep.subr.mxu0 0.0
      %9214 = vmatpush1.msra.mxu0 %v9080
      %9215 = vmatprep.subr.mxu0 0.0
      %9216 = vmatpush2.msra.mxu0 %v9111
      %9217 = vmatprep.subr.mxu0 0.0
      %9218 = vmatpush2.msra.mxu0 %v9110
      %9219 = vmatprep.subr.mxu0 0.0
      %9220 = vmatpush2.msra.mxu0 %v9109
      %9221 = vmatprep.subr.mxu0 0.0
      %9222 = vmatpush2.msra.mxu0 %v9108
      %9223 = vmatprep.subr.mxu0 0.0
      %9224 = vmatpush2.msra.mxu0 %v9107
      %9225 = vmatprep.subr.mxu0 0.0
      %9226 = vmatpush2.msra.mxu0 %v9106
      %9227 = vmatprep.subr.mxu0 0.0
      %9228 = vmatpush2.msra.mxu0 %v9105
      %9229 = vmatprep.subr.mxu0 0.0
      %9230 = vmatpush2.msra.mxu0 %v9104
      %9231 = vmatprep.subr.mxu0 0.0
      %9232 = vmatpush2.msra.mxu0 %v9103
      %9233 = vmatprep.subr.mxu0 0.0
      %9234 = vmatpush2.msra.mxu0 %v9102
      %9235 = vmatprep.subr.mxu0 0.0
      %9236 = vmatpush2.msra.mxu0 %v9101
      %9237 = vmatprep.subr.mxu0 0.0
      %9238 = vmatpush2.msra.mxu0 %v9100
      %9239 = vmatprep.subr.mxu0 0.0
      %9240 = vmatpush2.msra.mxu0 %v9099
      %9241 = vmatprep.subr.mxu0 0.0
      %9242 = vmatpush2.msra.mxu0 %v9098
      %9243 = vmatprep.subr.mxu0 0.0
      %9244 = vmatpush2.msra.mxu0 %v9097
      %9245 = vmatprep.subr.mxu0 0.0
      %9246 = vmatpush2.msra.mxu0 %v9096
      %9247 = vmatprep.mubr.f32.mxu0 %v9041
      %9248 = vmatmul.mubr.f32.gmra.mxu0 %v9040
      %v9249 = vpop.f32.mrf.mxu0
      %v9250 = vadd.f32 %v9157, %v9249
      %v9251 = vpop.f32.mrf.mxu0
      %9252 = vmatprep.mubr.f32.mxu0 %v9046
      %9253 = vmatmul.mubr.f32.gmra.mxu0 %v9045
      %v9254 = vpop.f32.mrf.mxu0
      %v9255 = vadd.f32 %v9157, %v9254
      %v9256 = vpop.f32.mrf.mxu0
      %9257 = vmatprep.mubr.f32.mxu0 %v9051
      %9258 = vmatmul.mubr.f32.gmra.mxu0 %v9050
      %v9259 = vpop.f32.mrf.mxu0
      %v9260 = vadd.f32 %v9157, %v9259
      %v9261 = vpop.f32.mrf.mxu0
      %9262 = vmatprep.mubr.f32.mxu0 %v9056
      %9263 = vmatmul.mubr.f32.gmra.mxu0 %v9055
      %v9264 = vpop.f32.mrf.mxu0
      %v9265 = vadd.f32 %v9157, %v9264
      %v9266 = vpop.f32.mrf.mxu0
      %9267 = vmatprep.mubr.f32.mxu0 %v9061
      %9268 = vmatmul.mubr.f32.gmra.mxu0 %v9060
      %v9269 = vpop.f32.mrf.mxu0
      %v9270 = vadd.f32 %v9157, %v9269
      %v9271 = vpop.f32.mrf.mxu0
      %9272 = vmatprep.mubr.f32.mxu0 %v9066
      %9273 = vmatmul.mubr.f32.gmra.mxu0 %v9065
      %v9274 = vpop.f32.mrf.mxu0
      %v9275 = vadd.f32 %v9157, %v9274
      %v9276 = vpop.f32.mrf.mxu0
      %9277 = vmatprep.mubr.f32.mxu0 %v9071
      %9278 = vmatmul.mubr.f32.gmra.mxu0 %v9070
      %v9279 = vpop.f32.mrf.mxu0
      %v9280 = vadd.f32 %v9157, %v9279
      %v9281 = vpop.f32.mrf.mxu0
      %9282 = vmatprep.mubr.f32.mxu0 %v9076
      %9283 = vmatmul.mubr.f32.gmra.mxu0 %v9075
      %v9284 = vpop.f32.mrf.mxu0
      %v9285 = vadd.f32 %v9157, %v9284
      %v9286 = vpop.f32.mrf.mxu0
      %9287 = vdwg.mxu0
      %9288 = vmatprep.subr.mxu0 0.0
      %9289 = vmatpush1.msra.mxu0 %v9127
      %9290 = vmatprep.subr.mxu0 0.0
      %9291 = vmatpush1.msra.mxu0 %v9126
      %9292 = vmatprep.subr.mxu0 0.0
      %9293 = vmatpush1.msra.mxu0 %v9125
      %9294 = vmatprep.subr.mxu0 0.0
      %9295 = vmatpush1.msra.mxu0 %v9124
      %9296 = vmatprep.subr.mxu0 0.0
      %9297 = vmatpush1.msra.mxu0 %v9123
      %9298 = vmatprep.subr.mxu0 0.0
      %9299 = vmatpush1.msra.mxu0 %v9122
      %9300 = vmatprep.subr.mxu0 0.0
      %9301 = vmatpush1.msra.mxu0 %v9121
      %9302 = vmatprep.subr.mxu0 0.0
      %9303 = vmatpush1.msra.mxu0 %v9120
      %9304 = vmatprep.subr.mxu0 0.0
      %9305 = vmatpush1.msra.mxu0 %v9119
      %9306 = vmatprep.subr.mxu0 0.0
      %9307 = vmatpush1.msra.mxu0 %v9118
      %9308 = vmatprep.subr.mxu0 0.0
      %9309 = vmatpush1.msra.mxu0 %v9117
      %9310 = vmatprep.subr.mxu0 0.0
      %9311 = vmatpush1.msra.mxu0 %v9116
      %9312 = vmatprep.subr.mxu0 0.0
      %9313 = vmatpush1.msra.mxu0 %v9115
      %9314 = vmatprep.subr.mxu0 0.0
      %9315 = vmatpush1.msra.mxu0 %v9114
      %9316 = vmatprep.subr.mxu0 0.0
      %9317 = vmatpush1.msra.mxu0 %v9113
      %9318 = vmatprep.subr.mxu0 0.0
      %9319 = vmatpush1.msra.mxu0 %v9112
      %9320 = vmatprep.subr.mxu0 0.0
      %9321 = vmatpush2.msra.mxu0 %v9143
      %9322 = vmatprep.subr.mxu0 0.0
      %9323 = vmatpush2.msra.mxu0 %v9142
      %9324 = vmatprep.subr.mxu0 0.0
      %9325 = vmatpush2.msra.mxu0 %v9141
      %9326 = vmatprep.subr.mxu0 0.0
      %9327 = vmatpush2.msra.mxu0 %v9140
      %9328 = vmatprep.subr.mxu0 0.0
      %9329 = vmatpush2.msra.mxu0 %v9139
      %9330 = vmatprep.subr.mxu0 0.0
      %9331 = vmatpush2.msra.mxu0 %v9138
      %9332 = vmatprep.subr.mxu0 0.0
      %9333 = vmatpush2.msra.mxu0 %v9137
      %9334 = vmatprep.subr.mxu0 0.0
      %9335 = vmatpush2.msra.mxu0 %v9136
      %9336 = vmatprep.subr.mxu0 0.0
      %9337 = vmatpush2.msra.mxu0 %v9135
      %9338 = vmatprep.subr.mxu0 0.0
      %9339 = vmatpush2.msra.mxu0 %v9134
      %9340 = vmatprep.subr.mxu0 0.0
      %9341 = vmatpush2.msra.mxu0 %v9133
      %9342 = vmatprep.subr.mxu0 0.0
      %9343 = vmatpush2.msra.mxu0 %v9132
      %9344 = vmatprep.subr.mxu0 0.0
      %9345 = vmatpush2.msra.mxu0 %v9131
      %9346 = vmatprep.subr.mxu0 0.0
      %9347 = vmatpush2.msra.mxu0 %v9130
      %9348 = vmatprep.subr.mxu0 0.0
      %9349 = vmatpush2.msra.mxu0 %v9129
      %9350 = vmatprep.subr.mxu0 0.0
      %9351 = vmatpush2.msra.mxu0 %v9128
      %9352 = vmatprep.mubr.f32.mxu0 %v9043
      %9353 = vmatmul.mubr.f32.gmra.mxu0 %v9042
      %v9354 = vpop.f32.mrf.mxu0
      %v9355 = vadd.f32 %v9250, %v9354
      %v9356 = vpop.f32.mrf.mxu0
      %9357 = vmatprep.mubr.f32.mxu0 %v9048
      %9358 = vmatmul.mubr.f32.gmra.mxu0 %v9047
      %v9359 = vpop.f32.mrf.mxu0
      %v9360 = vadd.f32 %v9255, %v9359
      %v9361 = vpop.f32.mrf.mxu0
      %9362 = vmatprep.mubr.f32.mxu0 %v9053
      %9363 = vmatmul.mubr.f32.gmra.mxu0 %v9052
      %v9364 = vpop.f32.mrf.mxu0
      %v9365 = vadd.f32 %v9260, %v9364
      %v9366 = vpop.f32.mrf.mxu0
      %9367 = vmatprep.mubr.f32.mxu0 %v9058
      %9368 = vmatmul.mubr.f32.gmra.mxu0 %v9057
      %v9369 = vpop.f32.mrf.mxu0
      %v9370 = vadd.f32 %v9265, %v9369
      %v9371 = vpop.f32.mrf.mxu0
      %9372 = vmatprep.mubr.f32.mxu0 %v9063
      %9373 = vmatmul.mubr.f32.gmra.mxu0 %v9062
      %v9374 = vpop.f32.mrf.mxu0
      %v9375 = vadd.f32 %v9270, %v9374
      %v9376 = vpop.f32.mrf.mxu0
      %9377 = vmatprep.mubr.f32.mxu0 %v9068
      %9378 = vmatmul.mubr.f32.gmra.mxu0 %v9067
      %v9379 = vpop.f32.mrf.mxu0
      %v9380 = vadd.f32 %v9275, %v9379
      %v9381 = vpop.f32.mrf.mxu0
      %9382 = vmatprep.mubr.f32.mxu0 %v9073
      %9383 = vmatmul.mubr.f32.gmra.mxu0 %v9072
      %v9384 = vpop.f32.mrf.mxu0
      %v9385 = vadd.f32 %v9280, %v9384
      %v9386 = vpop.f32.mrf.mxu0
      %9387 = vmatprep.mubr.f32.mxu0 %v9078
      %9388 = vmatmul.mubr.f32.gmra.mxu0 %v9077
      %v9389 = vpop.f32.mrf.mxu0
      %v9390 = vadd.f32 %v9285, %v9389
      %v9391 = vpop.f32.mrf.mxu0
      %9392 = vdwg.mxu0
      %9393 = vmatprep.subr.mxu0 0.0
      %9394 = vmatpush1.msra.mxu0 0.0
      %9395 = vmatprep.subr.mxu0 0.0
      %9396 = vmatpush1.msra.mxu0 0.0
      %9397 = vmatprep.subr.mxu0 0.0
      %9398 = vmatpush1.msra.mxu0 0.0
      %9399 = vmatprep.subr.mxu0 0.0
      %9400 = vmatpush1.msra.mxu0 0.0
      %9401 = vmatprep.subr.mxu0 0.0
      %9402 = vmatpush1.msra.mxu0 0.0
      %9403 = vmatprep.subr.mxu0 0.0
      %9404 = vmatpush1.msra.mxu0 0.0
      %9405 = vmatprep.subr.mxu0 0.0
      %9406 = vmatpush1.msra.mxu0 0.0
      %9407 = vmatprep.subr.mxu0 0.0
      %9408 = vmatpush1.msra.mxu0 0.0
      %9409 = vmatprep.subr.mxu0 0.0
      %9410 = vmatpush1.msra.mxu0 %v9151
      %9411 = vmatprep.subr.mxu0 0.0
      %9412 = vmatpush1.msra.mxu0 %v9150
      %9413 = vmatprep.subr.mxu0 0.0
      %9414 = vmatpush1.msra.mxu0 %v9149
      %9415 = vmatprep.subr.mxu0 0.0
      %9416 = vmatpush1.msra.mxu0 %v9148
      %9417 = vmatprep.subr.mxu0 0.0
      %9418 = vmatpush1.msra.mxu0 %v9147
      %9419 = vmatprep.subr.mxu0 0.0
      %9420 = vmatpush1.msra.mxu0 %v9146
      %9421 = vmatprep.subr.mxu0 0.0
      %9422 = vmatpush1.msra.mxu0 %v9145
      %9423 = vmatprep.subr.mxu0 0.0
      %9424 = vmatpush1.msra.mxu0 %v9144
      %9425 = vmatprep.subr.mxu0 0.0
      %9426 = vmatpush2.msra.mxu0 0.0
      %9427 = vmatprep.subr.mxu0 0.0
      %9428 = vmatpush2.msra.mxu0 0.0
      %9429 = vmatprep.subr.mxu0 0.0
      %9430 = vmatpush2.msra.mxu0 0.0
      %9431 = vmatprep.subr.mxu0 0.0
      %9432 = vmatpush2.msra.mxu0 0.0
      %9433 = vmatprep.subr.mxu0 0.0
      %9434 = vmatpush2.msra.mxu0 0.0
      %9435 = vmatprep.subr.mxu0 0.0
      %9436 = vmatpush2.msra.mxu0 0.0
      %9437 = vmatprep.subr.mxu0 0.0
      %9438 = vmatpush2.msra.mxu0 0.0
      %9439 = vmatprep.subr.mxu0 0.0
      %9440 = vmatpush2.msra.mxu0 0.0
      %9441 = vmatprep.subr.mxu0 0.0
      %9442 = vmatpush2.msra.mxu0 0.0
      %9443 = vmatprep.subr.mxu0 0.0
      %9444 = vmatpush2.msra.mxu0 0.0
      %9445 = vmatprep.subr.mxu0 0.0
      %9446 = vmatpush2.msra.mxu0 0.0
      %9447 = vmatprep.subr.mxu0 0.0
      %9448 = vmatpush2.msra.mxu0 0.0
      %9449 = vmatprep.subr.mxu0 0.0
      %9450 = vmatpush2.msra.mxu0 0.0
      %9451 = vmatprep.subr.mxu0 0.0
      %9452 = vmatpush2.msra.mxu0 0.0
      %9453 = vmatprep.subr.mxu0 0.0
      %9454 = vmatpush2.msra.mxu0 0.0
      %9455 = vmatprep.subr.mxu0 0.0
      %9456 = vmatpush2.msra.mxu0 0.0
      %9457 = vmatprep.mubr.f32.mxu0 0.0
      %9458 = vmatmul.mubr.f32.gmra.mxu0 %v9160
      %v9459 = vpop.f32.mrf.mxu0
      %v9460 = vadd.f32 %v9355, %v9459
      %v9461 = vpop.f32.mrf.mxu0
      %9462 = vmatprep.mubr.f32.mxu0 0.0
      %9463 = vmatmul.mubr.f32.gmra.mxu0 %v9163
      %v9464 = vpop.f32.mrf.mxu0
      %v9465 = vadd.f32 %v9360, %v9464
      %v9466 = vpop.f32.mrf.mxu0
      %9467 = vmatprep.mubr.f32.mxu0 0.0
      %9468 = vmatmul.mubr.f32.gmra.mxu0 %v9166
      %v9469 = vpop.f32.mrf.mxu0
      %v9470 = vadd.f32 %v9365, %v9469
      %v9471 = vpop.f32.mrf.mxu0
      %9472 = vmatprep.mubr.f32.mxu0 0.0
      %9473 = vmatmul.mubr.f32.gmra.mxu0 %v9169
      %v9474 = vpop.f32.mrf.mxu0
      %v9475 = vadd.f32 %v9370, %v9474
      %v9476 = vpop.f32.mrf.mxu0
      %9477 = vmatprep.mubr.f32.mxu0 0.0
      %9478 = vmatmul.mubr.f32.gmra.mxu0 %v9172
      %v9479 = vpop.f32.mrf.mxu0
      %v9480 = vadd.f32 %v9375, %v9479
      %v9481 = vpop.f32.mrf.mxu0
      %9482 = vmatprep.mubr.f32.mxu0 0.0
      %9483 = vmatmul.mubr.f32.gmra.mxu0 %v9175
      %v9484 = vpop.f32.mrf.mxu0
      %v9485 = vadd.f32 %v9380, %v9484
      %v9486 = vpop.f32.mrf.mxu0
      %9487 = vmatprep.mubr.f32.mxu0 0.0
      %9488 = vmatmul.mubr.f32.gmra.mxu0 %v9178
      %v9489 = vpop.f32.mrf.mxu0
      %v9490 = vadd.f32 %v9385, %v9489
      %v9491 = vpop.f32.mrf.mxu0
      %9492 = vmatprep.mubr.f32.mxu0 0.0
      %9493 = vmatmul.mubr.f32.gmra.mxu0 %v9181
      %v9494 = vpop.f32.mrf.mxu0
      %v9495 = vadd.f32 %v9390, %v9494
      %v9496 = vpop.f32.mrf.mxu0
      %9497 = vdwg.mxu0
      %v9498 = vsub.f32 0.0, %v9460
      %v9499 = vsub.f32 0.0, %v9465
      %v9500 = vsub.f32 0.0, %v9470
      %v9501 = vsub.f32 0.0, %v9475
      %v9502 = vsub.f32 0.0, %v9480
      %v9503 = vsub.f32 0.0, %v9485
      %v9504 = vsub.f32 0.0, %v9490
      %v9505 = vsub.f32 0.0, %v9495
      %v9506 = vmul.f32 %v9498, 1.442695
      %v9507 = vpow.pop %v9506
      %v9508 = vmul.f32 %v9499, 1.442695
      %v9509 = vpow.pop %v9508
      %v9510 = vmul.f32 %v9500, 1.442695
      %v9511 = vpow.pop %v9510
      %v9512 = vmul.f32 %v9501, 1.442695
      %v9513 = vpow.pop %v9512
      %v9514 = vmul.f32 %v9502, 1.442695
      %v9515 = vpow.pop %v9514
      %v9516 = vmul.f32 %v9503, 1.442695
      %v9517 = vpow.pop %v9516
      %v9518 = vmul.f32 %v9504, 1.442695
      %v9519 = vpow.pop %v9518
      %v9520 = vmul.f32 %v9505, 1.442695
      %v9521 = vpow.pop %v9520
      %v9522 = vadd.f32 %v9507, 1.0
      %v9523 = vadd.f32 %v9509, 1.0
      %v9524 = vadd.f32 %v9511, 1.0
      %v9525 = vadd.f32 %v9513, 1.0
      %v9526 = vadd.f32 %v9515, 1.0
      %v9527 = vadd.f32 %v9517, 1.0
      %v9528 = vadd.f32 %v9519, 1.0
      %v9529 = vadd.f32 %v9521, 1.0
      %v9530 = vrcp.pop %v9522
      %v9531 = vrcp.pop %v9523
      %v9532 = vrcp.pop %v9524
      %v9533 = vrcp.pop %v9525
      %v9534 = vrcp.pop %v9526
      %v9535 = vrcp.pop %v9527
      %v9536 = vrcp.pop %v9528
      %v9537 = vrcp.pop %v9529
      %9538 = vst [vmem:[%s332 + $0x80] sm:$0xff] %v9530
      %9539 = vst [vmem:[%s332 + $0x88] sm:$0xff] %v9531
      %9540 = vst [vmem:[%s332 + $0x90] sm:$0xff] %v9532
      %9541 = vst [vmem:[%s332 + $0x98] sm:$0xff] %v9533
      %9542 = vst [vmem:[%s332 + $0xa0] sm:$0xff] %v9534
      %9543 = vst [vmem:[%s332 + $0xa8] sm:$0xff] %v9535
      %9544 = vst [vmem:[%s332 + $0xb0] sm:$0xff] %v9536
      %9545 = vst [vmem:[%s332 + $0xb8] sm:$0xff] %v9537
      %v9546 = vld [vmem:[%s7104 + $0x1] sm:$0xff]
      %v9547 = vld [vmem:[%s7104 + $0x11] sm:$0xff]
      %v9548 = vld [vmem:[%s7104 + $0x21] sm:$0xff]
      %v9549 = vld [vmem:[%s7104 + $0x31] sm:$0xff]
      %v9550 = vld [vmem:[%s7104 + $0x41] sm:$0xff]
      %v9551 = vld [vmem:[%s7104 + $0x51] sm:$0xff]
      %v9552 = vld [vmem:[%s7104 + $0x61] sm:$0xff]
      %v9553 = vld [vmem:[%s7104 + $0x71] sm:$0xff]
      %9554 = vst [vmem:[#allocation3 + $0x3c0] sm:$0xff] %v9546
      %9555 = vst [vmem:[#allocation3 + $0x3e8] sm:$0xff] %v9547
      %9556 = vst [vmem:[#allocation3 + $0x410] sm:$0xff] %v9548
      %9557 = vst [vmem:[#allocation3 + $0x438] sm:$0xff] %v9549
      %9558 = vst [vmem:[#allocation3 + $0x460] sm:$0xff] %v9550
      %9559 = vst [vmem:[#allocation3 + $0x488] sm:$0xff] %v9551
      %9560 = vst [vmem:[#allocation3 + $0x4b0] sm:$0xff] %v9552
      %9561 = vst [vmem:[#allocation3 + $0x4d8] sm:$0xff] %v9553
      %v9562 = vld [vmem:[%s7104 + $0x2] sm:$0xff]
      %v9563 = vld [vmem:[%s7104 + $0x12] sm:$0xff]
      %v9564 = vld [vmem:[%s7104 + $0x22] sm:$0xff]
      %v9565 = vld [vmem:[%s7104 + $0x32] sm:$0xff]
      %v9566 = vld [vmem:[%s7104 + $0x42] sm:$0xff]
      %v9567 = vld [vmem:[%s7104 + $0x52] sm:$0xff]
      %v9568 = vld [vmem:[%s7104 + $0x62] sm:$0xff]
      %v9569 = vld [vmem:[%s7104 + $0x72] sm:$0xff]
      %v9570 = vld [vmem:[%s7161 + $0x1] sm:$0xff]
      %v9571 = vld [vmem:[%s7161 + $0x11] sm:$0xff]
      %v9572 = vld [vmem:[%s7161 + $0x21] sm:$0xff]
      %v9573 = vld [vmem:[%s7161 + $0x31] sm:$0xff]
      %v9574 = vld [vmem:[%s7161 + $0x41] sm:$0xff]
      %v9575 = vld [vmem:[%s7161 + $0x51] sm:$0xff]
      %v9576 = vld [vmem:[%s7161 + $0x61] sm:$0xff]
      %v9577 = vld [vmem:[%s7161 + $0x71] sm:$0xff]
      %9586 = vrot.lane.b32.xlu0 %v9570, 64
      %v9587 = vpop.permute.xlu0 %9586
      %9588 = vrot.lane.b32.xlu0 %v9571, 64
      %v9589 = vpop.permute.xlu0 %9588
      %9590 = vrot.lane.b32.xlu0 %v9572, 64
      %v9591 = vpop.permute.xlu0 %9590
      %9592 = vrot.lane.b32.xlu0 %v9573, 64
      %v9593 = vpop.permute.xlu0 %9592
      %9594 = vrot.lane.b32.xlu0 %v9574, 64
      %v9595 = vpop.permute.xlu0 %9594
      %9596 = vrot.lane.b32.xlu0 %v9575, 64
      %v9597 = vpop.permute.xlu0 %9596
      %9598 = vrot.lane.b32.xlu0 %v9576, 64
      %v9599 = vpop.permute.xlu0 %9598
      %9600 = vrot.lane.b32.xlu0 %v9577, 64
      %v9601 = vpop.permute.xlu0 %9600
      %v9610 = vsel %vm1878, %v9562, %v9587
      %v9611 = vsel %vm1878, %v9563, %v9589
      %v9612 = vsel %vm1878, %v9564, %v9591
      %v9613 = vsel %vm1878, %v9565, %v9593
      %v9614 = vsel %vm1878, %v9566, %v9595
      %v9615 = vsel %vm1878, %v9567, %v9597
      %v9616 = vsel %vm1878, %v9568, %v9599
      %v9617 = vsel %vm1878, %v9569, %v9601
      %9618 = vst [vmem:[#allocation3 + $0x3c8] sm:$0xff] %v9610
      %9619 = vst [vmem:[#allocation3 + $0x3f0] sm:$0xff] %v9611
      %9620 = vst [vmem:[#allocation3 + $0x418] sm:$0xff] %v9612
      %9621 = vst [vmem:[#allocation3 + $0x440] sm:$0xff] %v9613
      %9622 = vst [vmem:[#allocation3 + $0x468] sm:$0xff] %v9614
      %9623 = vst [vmem:[#allocation3 + $0x490] sm:$0xff] %v9615
      %9624 = vst [vmem:[#allocation3 + $0x4b8] sm:$0xff] %v9616
      %9625 = vst [vmem:[#allocation3 + $0x4e0] sm:$0xff] %v9617
      %v9626 = vld [vmem:[%s7161 + $0x1] sm:$0xff]
      %v9627 = vld [vmem:[%s7161 + $0x11] sm:$0xff]
      %v9628 = vld [vmem:[%s7161 + $0x21] sm:$0xff]
      %v9629 = vld [vmem:[%s7161 + $0x31] sm:$0xff]
      %v9630 = vld [vmem:[%s7161 + $0x41] sm:$0xff]
      %v9631 = vld [vmem:[%s7161 + $0x51] sm:$0xff]
      %v9632 = vld [vmem:[%s7161 + $0x61] sm:$0xff]
      %v9633 = vld [vmem:[%s7161 + $0x71] sm:$0xff]
      %v9634 = vld [vmem:[%s7161 + $0x2] sm:$0xff]
      %v9635 = vld [vmem:[%s7161 + $0x12] sm:$0xff]
      %v9636 = vld [vmem:[%s7161 + $0x22] sm:$0xff]
      %v9637 = vld [vmem:[%s7161 + $0x32] sm:$0xff]
      %v9638 = vld [vmem:[%s7161 + $0x42] sm:$0xff]
      %v9639 = vld [vmem:[%s7161 + $0x52] sm:$0xff]
      %v9640 = vld [vmem:[%s7161 + $0x62] sm:$0xff]
      %v9641 = vld [vmem:[%s7161 + $0x72] sm:$0xff]
      %9650 = vrot.lane.b32.xlu0 %v9626, 64
      %v9651 = vpop.permute.xlu0 %9650
      %9652 = vrot.lane.b32.xlu0 %v9627, 64
      %v9653 = vpop.permute.xlu0 %9652
      %9654 = vrot.lane.b32.xlu0 %v9628, 64
      %v9655 = vpop.permute.xlu0 %9654
      %9656 = vrot.lane.b32.xlu0 %v9629, 64
      %v9657 = vpop.permute.xlu0 %9656
      %9658 = vrot.lane.b32.xlu0 %v9630, 64
      %v9659 = vpop.permute.xlu0 %9658
      %9660 = vrot.lane.b32.xlu0 %v9631, 64
      %v9661 = vpop.permute.xlu0 %9660
      %9662 = vrot.lane.b32.xlu0 %v9632, 64
      %v9663 = vpop.permute.xlu0 %9662
      %9664 = vrot.lane.b32.xlu0 %v9633, 64
      %v9665 = vpop.permute.xlu0 %9664
      %9682 = vrot.lane.b32.xlu0 %v9634, 64
      %v9683 = vpop.permute.xlu0 %9682
      %9684 = vrot.lane.b32.xlu0 %v9635, 64
      %v9685 = vpop.permute.xlu0 %9684
      %9686 = vrot.lane.b32.xlu0 %v9636, 64
      %v9687 = vpop.permute.xlu0 %9686
      %9688 = vrot.lane.b32.xlu0 %v9637, 64
      %v9689 = vpop.permute.xlu0 %9688
      %9690 = vrot.lane.b32.xlu0 %v9638, 64
      %v9691 = vpop.permute.xlu0 %9690
      %9692 = vrot.lane.b32.xlu0 %v9639, 64
      %v9693 = vpop.permute.xlu0 %9692
      %9694 = vrot.lane.b32.xlu0 %v9640, 64
      %v9695 = vpop.permute.xlu0 %9694
      %9696 = vrot.lane.b32.xlu0 %v9641, 64
      %v9697 = vpop.permute.xlu0 %9696
      %v9706 = vsel %vm1878, %v9651, %v9683
      %v9707 = vsel %vm1878, %v9653, %v9685
      %v9708 = vsel %vm1878, %v9655, %v9687
      %v9709 = vsel %vm1878, %v9657, %v9689
      %v9710 = vsel %vm1878, %v9659, %v9691
      %v9711 = vsel %vm1878, %v9661, %v9693
      %v9712 = vsel %vm1878, %v9663, %v9695
      %v9713 = vsel %vm1878, %v9665, %v9697
      %9714 = vst [vmem:[#allocation3 + $0x3d0] sm:$0xff] %v9706
      %9715 = vst [vmem:[#allocation3 + $0x3f8] sm:$0xff] %v9707
      %9716 = vst [vmem:[#allocation3 + $0x420] sm:$0xff] %v9708
      %9717 = vst [vmem:[#allocation3 + $0x448] sm:$0xff] %v9709
      %9718 = vst [vmem:[#allocation3 + $0x470] sm:$0xff] %v9710
      %9719 = vst [vmem:[#allocation3 + $0x498] sm:$0xff] %v9711
      %9720 = vst [vmem:[#allocation3 + $0x4c0] sm:$0xff] %v9712
      %9721 = vst [vmem:[#allocation3 + $0x4e8] sm:$0xff] %v9713
      %v9722 = vld [vmem:[%s8895 + $0x1] sm:$0xff]
      %v9723 = vld [vmem:[%s8895 + $0x11] sm:$0xff]
      %v9724 = vld [vmem:[%s8895 + $0x21] sm:$0xff]
      %v9725 = vld [vmem:[%s8895 + $0x31] sm:$0xff]
      %v9726 = vld [vmem:[%s8895 + $0x41] sm:$0xff]
      %v9727 = vld [vmem:[%s8895 + $0x51] sm:$0xff]
      %v9728 = vld [vmem:[%s8895 + $0x61] sm:$0xff]
      %v9729 = vld [vmem:[%s8895 + $0x71] sm:$0xff]
      %9730 = vst [vmem:[#allocation3 + $0x3d8] sm:$0xff] %v9722
      %9731 = vst [vmem:[#allocation3 + $0x400] sm:$0xff] %v9723
      %9732 = vst [vmem:[#allocation3 + $0x428] sm:$0xff] %v9724
      %9733 = vst [vmem:[#allocation3 + $0x450] sm:$0xff] %v9725
      %9734 = vst [vmem:[#allocation3 + $0x478] sm:$0xff] %v9726
      %9735 = vst [vmem:[#allocation3 + $0x4a0] sm:$0xff] %v9727
      %9736 = vst [vmem:[#allocation3 + $0x4c8] sm:$0xff] %v9728
      %9737 = vst [vmem:[#allocation3 + $0x4f0] sm:$0xff] %v9729
      %v9738 = vld [vmem:[%s8895 + $0x2] sm:$0xff]
      %v9739 = vld [vmem:[%s8895 + $0x12] sm:$0xff]
      %v9740 = vld [vmem:[%s8895 + $0x22] sm:$0xff]
      %v9741 = vld [vmem:[%s8895 + $0x32] sm:$0xff]
      %v9742 = vld [vmem:[%s8895 + $0x42] sm:$0xff]
      %v9743 = vld [vmem:[%s8895 + $0x52] sm:$0xff]
      %v9744 = vld [vmem:[%s8895 + $0x62] sm:$0xff]
      %v9745 = vld [vmem:[%s8895 + $0x72] sm:$0xff]
      %9746 = vst.msk [vmem:[#allocation3 + $0x3e0] sm:$0xff] %vm1878, %v9738
      %9747 = vst.msk [vmem:[#allocation3 + $0x408] sm:$0xff] %vm1878, %v9739
      %9748 = vst.msk [vmem:[#allocation3 + $0x430] sm:$0xff] %vm1878, %v9740
      %9749 = vst.msk [vmem:[#allocation3 + $0x458] sm:$0xff] %vm1878, %v9741
      %9750 = vst.msk [vmem:[#allocation3 + $0x480] sm:$0xff] %vm1878, %v9742
      %9751 = vst.msk [vmem:[#allocation3 + $0x4a8] sm:$0xff] %vm1878, %v9743
      %9752 = vst.msk [vmem:[#allocation3 + $0x4d0] sm:$0xff] %vm1878, %v9744
      %9753 = vst.msk [vmem:[#allocation3 + $0x4f8] sm:$0xff] %vm1878, %v9745
      %v9754 = vld [vmem:[#allocation3 + $0x3c0] sm:$0xff]
      %v9755 = vld [vmem:[#allocation3 + $0x3c8] sm:$0xff]
      %v9756 = vld [vmem:[#allocation3 + $0x3d0] sm:$0xff]
      %v9757 = vld [vmem:[#allocation3 + $0x3d8] sm:$0xff]
      %v9758 = vld [vmem:[#allocation3 + $0x3e0] sm:$0xff]
      %v9759 = vld [vmem:[#allocation3 + $0x3e8] sm:$0xff]
      %v9760 = vld [vmem:[#allocation3 + $0x3f0] sm:$0xff]
      %v9761 = vld [vmem:[#allocation3 + $0x3f8] sm:$0xff]
      %v9762 = vld [vmem:[#allocation3 + $0x400] sm:$0xff]
      %v9763 = vld [vmem:[#allocation3 + $0x408] sm:$0xff]
      %v9764 = vld [vmem:[#allocation3 + $0x410] sm:$0xff]
      %v9765 = vld [vmem:[#allocation3 + $0x418] sm:$0xff]
      %v9766 = vld [vmem:[#allocation3 + $0x420] sm:$0xff]
      %v9767 = vld [vmem:[#allocation3 + $0x428] sm:$0xff]
      %v9768 = vld [vmem:[#allocation3 + $0x430] sm:$0xff]
      %v9769 = vld [vmem:[#allocation3 + $0x438] sm:$0xff]
      %v9770 = vld [vmem:[#allocation3 + $0x440] sm:$0xff]
      %v9771 = vld [vmem:[#allocation3 + $0x448] sm:$0xff]
      %v9772 = vld [vmem:[#allocation3 + $0x450] sm:$0xff]
      %v9773 = vld [vmem:[#allocation3 + $0x458] sm:$0xff]
      %v9774 = vld [vmem:[#allocation3 + $0x460] sm:$0xff]
      %v9775 = vld [vmem:[#allocation3 + $0x468] sm:$0xff]
      %v9776 = vld [vmem:[#allocation3 + $0x470] sm:$0xff]
      %v9777 = vld [vmem:[#allocation3 + $0x478] sm:$0xff]
      %v9778 = vld [vmem:[#allocation3 + $0x480] sm:$0xff]
      %v9779 = vld [vmem:[#allocation3 + $0x488] sm:$0xff]
      %v9780 = vld [vmem:[#allocation3 + $0x490] sm:$0xff]
      %v9781 = vld [vmem:[#allocation3 + $0x498] sm:$0xff]
      %v9782 = vld [vmem:[#allocation3 + $0x4a0] sm:$0xff]
      %v9783 = vld [vmem:[#allocation3 + $0x4a8] sm:$0xff]
      %v9784 = vld [vmem:[#allocation3 + $0x4b0] sm:$0xff]
      %v9785 = vld [vmem:[#allocation3 + $0x4b8] sm:$0xff]
      %v9786 = vld [vmem:[#allocation3 + $0x4c0] sm:$0xff]
      %v9787 = vld [vmem:[#allocation3 + $0x4c8] sm:$0xff]
      %v9788 = vld [vmem:[#allocation3 + $0x4d0] sm:$0xff]
      %v9789 = vld [vmem:[#allocation3 + $0x4d8] sm:$0xff]
      %v9790 = vld [vmem:[#allocation3 + $0x4e0] sm:$0xff]
      %v9791 = vld [vmem:[#allocation3 + $0x4e8] sm:$0xff]
      %v9792 = vld [vmem:[#allocation3 + $0x4f0] sm:$0xff]
      %v9793 = vld [vmem:[#allocation3 + $0x4f8] sm:$0xff]
      %v9794 = vld [vmem:[%s7] sm:$0xff]
      %v9795 = vld [vmem:[%s7 + $0x8] sm:$0xff]
      %v9796 = vld [vmem:[%s7 + $0x10] sm:$0xff]
      %v9797 = vld [vmem:[%s7 + $0x18] sm:$0xff]
      %v9798 = vld [vmem:[%s7 + $0x20] sm:$0xff]
      %v9799 = vld [vmem:[%s7 + $0x28] sm:$0xff]
      %v9800 = vld [vmem:[%s7 + $0x30] sm:$0xff]
      %v9801 = vld [vmem:[%s7 + $0x38] sm:$0xff]
      %v9802 = vld [vmem:[%s7 + $0x40] sm:$0xff]
      %v9803 = vld [vmem:[%s7 + $0x48] sm:$0xff]
      %v9804 = vld [vmem:[%s7 + $0x50] sm:$0xff]
      %v9805 = vld [vmem:[%s7 + $0x58] sm:$0xff]
      %v9806 = vld [vmem:[%s7 + $0x60] sm:$0xff]
      %v9807 = vld [vmem:[%s7 + $0x68] sm:$0xff]
      %v9808 = vld [vmem:[%s7 + $0x70] sm:$0xff]
      %v9809 = vld [vmem:[%s7 + $0x78] sm:$0xff]
      %v9810 = vld [vmem:[%s7 + $0x80] sm:$0xff]
      %v9811 = vld [vmem:[%s7 + $0x88] sm:$0xff]
      %v9812 = vld [vmem:[%s7 + $0x90] sm:$0xff]
      %v9813 = vld [vmem:[%s7 + $0x98] sm:$0xff]
      %v9814 = vld [vmem:[%s7 + $0xa0] sm:$0xff]
      %v9815 = vld [vmem:[%s7 + $0xa8] sm:$0xff]
      %v9816 = vld [vmem:[%s7 + $0xb0] sm:$0xff]
      %v9817 = vld [vmem:[%s7 + $0xb8] sm:$0xff]
      %v9818 = vld [vmem:[%s7 + $0xc0] sm:$0xff]
      %v9819 = vld [vmem:[%s7 + $0xc8] sm:$0xff]
      %v9820 = vld [vmem:[%s7 + $0xd0] sm:$0xff]
      %v9821 = vld [vmem:[%s7 + $0xd8] sm:$0xff]
      %v9822 = vld [vmem:[%s7 + $0xe0] sm:$0xff]
      %v9823 = vld [vmem:[%s7 + $0xe8] sm:$0xff]
      %v9824 = vld [vmem:[%s7 + $0xf0] sm:$0xff]
      %v9825 = vld [vmem:[%s7 + $0xf8] sm:$0xff]
      %v9826 = vld [vmem:[%s7 + $0x100] sm:$0xff]
      %v9827 = vld [vmem:[%s7 + $0x108] sm:$0xff]
      %v9828 = vld [vmem:[%s7 + $0x110] sm:$0xff]
      %v9829 = vld [vmem:[%s7 + $0x118] sm:$0xff]
      %v9830 = vld [vmem:[%s7 + $0x120] sm:$0xff]
      %v9831 = vld [vmem:[%s7 + $0x128] sm:$0xff]
      %v9832 = vld [vmem:[%s7 + $0x130] sm:$0xff]
      %v9833 = vld [vmem:[%s7 + $0x138] sm:$0xff]
      %v9834 = vld [vmem:[%s7 + $0x140] sm:$0xff]
      %v9835 = vld [vmem:[%s7 + $0x148] sm:$0xff]
      %v9836 = vld [vmem:[%s7 + $0x150] sm:$0xff]
      %v9837 = vld [vmem:[%s7 + $0x158] sm:$0xff]
      %v9838 = vld [vmem:[%s7 + $0x160] sm:$0xff]
      %v9839 = vld [vmem:[%s7 + $0x168] sm:$0xff]
      %v9840 = vld [vmem:[%s7 + $0x170] sm:$0xff]
      %v9841 = vld [vmem:[%s7 + $0x178] sm:$0xff]
      %v9842 = vld [vmem:[%s7 + $0x180] sm:$0xff]
      %v9843 = vld [vmem:[%s7 + $0x188] sm:$0xff]
      %v9844 = vld [vmem:[%s7 + $0x190] sm:$0xff]
      %v9845 = vld [vmem:[%s7 + $0x198] sm:$0xff]
      %v9846 = vld [vmem:[%s7 + $0x1a0] sm:$0xff]
      %v9847 = vld [vmem:[%s7 + $0x1a8] sm:$0xff]
      %v9848 = vld [vmem:[%s7 + $0x1b0] sm:$0xff]
      %v9849 = vld [vmem:[%s7 + $0x1b8] sm:$0xff]
      %v9850 = vld [vmem:[%s7 + $0x1c0] sm:$0xff]
      %v9851 = vld [vmem:[%s7 + $0x1c8] sm:$0xff]
      %v9852 = vld [vmem:[%s7 + $0x1d0] sm:$0xff]
      %v9853 = vld [vmem:[%s7 + $0x1d8] sm:$0xff]
      %v9854 = vld [vmem:[%s7 + $0x1e0] sm:$0xff]
      %v9855 = vld [vmem:[%s7 + $0x1e8] sm:$0xff]
      %v9856 = vld [vmem:[%s7 + $0x1f0] sm:$0xff]
      %v9857 = vld [vmem:[%s7 + $0x1f8] sm:$0xff]
      %v9858 = vld [vmem:[%s7 + $0x200] sm:$0xff]
      %v9859 = vld [vmem:[%s7 + $0x208] sm:$0xff]
      %v9860 = vld [vmem:[%s7 + $0x210] sm:$0xff]
      %v9861 = vld [vmem:[%s7 + $0x218] sm:$0xff]
      %v9862 = vld [vmem:[%s7 + $0x220] sm:$0xff]
      %v9863 = vld [vmem:[%s7 + $0x228] sm:$0xff]
      %v9864 = vld [vmem:[%s7 + $0x230] sm:$0xff]
      %v9865 = vld [vmem:[%s7 + $0x238] sm:$0xff]
      %v9866 = vld [vmem:[%s8] sm:$0x1]
      %v9868 = vlaneseq
      %v9869 = vshrl.u32 %v9868, 7
      %v9870 = vsub.s32 0, %v9869
      %v9871 = vrot.slane %v9866, %v9870
      %v9874 = vsel %vm1878, %v9758, 0
      %v9877 = vsel %vm1878, %v9763, 0
      %v9880 = vsel %vm1878, %v9768, 0
      %v9883 = vsel %vm1878, %v9773, 0
      %v9886 = vsel %vm1878, %v9778, 0
      %v9889 = vsel %vm1878, %v9783, 0
      %v9892 = vsel %vm1878, %v9788, 0
      %v9895 = vsel %vm1878, %v9793, 0
      %9897 = vmatprep.subr.mxu0 0.0
      %9898 = vmatpush1.msra.mxu0 %v9809
      %9899 = vmatprep.subr.mxu0 0.0
      %9900 = vmatpush1.msra.mxu0 %v9808
      %9901 = vmatprep.subr.mxu0 0.0
      %9902 = vmatpush1.msra.mxu0 %v9807
      %9903 = vmatprep.subr.mxu0 0.0
      %9904 = vmatpush1.msra.mxu0 %v9806
      %9905 = vmatprep.subr.mxu0 0.0
      %9906 = vmatpush1.msra.mxu0 %v9805
      %9907 = vmatprep.subr.mxu0 0.0
      %9908 = vmatpush1.msra.mxu0 %v9804
      %9909 = vmatprep.subr.mxu0 0.0
      %9910 = vmatpush1.msra.mxu0 %v9803
      %9911 = vmatprep.subr.mxu0 0.0
      %9912 = vmatpush1.msra.mxu0 %v9802
      %9913 = vmatprep.subr.mxu0 0.0
      %9914 = vmatpush1.msra.mxu0 %v9801
      %9915 = vmatprep.subr.mxu0 0.0
      %9916 = vmatpush1.msra.mxu0 %v9800
      %9917 = vmatprep.subr.mxu0 0.0
      %9918 = vmatpush1.msra.mxu0 %v9799
      %9919 = vmatprep.subr.mxu0 0.0
      %9920 = vmatpush1.msra.mxu0 %v9798
      %9921 = vmatprep.subr.mxu0 0.0
      %9922 = vmatpush1.msra.mxu0 %v9797
      %9923 = vmatprep.subr.mxu0 0.0
      %9924 = vmatpush1.msra.mxu0 %v9796
      %9925 = vmatprep.subr.mxu0 0.0
      %9926 = vmatpush1.msra.mxu0 %v9795
      %9927 = vmatprep.subr.mxu0 0.0
      %9928 = vmatpush1.msra.mxu0 %v9794
      %9929 = vmatprep.subr.mxu0 0.0
      %9930 = vmatpush2.msra.mxu0 %v9825
      %9931 = vmatprep.subr.mxu0 0.0
      %9932 = vmatpush2.msra.mxu0 %v9824
      %9933 = vmatprep.subr.mxu0 0.0
      %9934 = vmatpush2.msra.mxu0 %v9823
      %9935 = vmatprep.subr.mxu0 0.0
      %9936 = vmatpush2.msra.mxu0 %v9822
      %9937 = vmatprep.subr.mxu0 0.0
      %9938 = vmatpush2.msra.mxu0 %v9821
      %9939 = vmatprep.subr.mxu0 0.0
      %9940 = vmatpush2.msra.mxu0 %v9820
      %9941 = vmatprep.subr.mxu0 0.0
      %9942 = vmatpush2.msra.mxu0 %v9819
      %9943 = vmatprep.subr.mxu0 0.0
      %9944 = vmatpush2.msra.mxu0 %v9818
      %9945 = vmatprep.subr.mxu0 0.0
      %9946 = vmatpush2.msra.mxu0 %v9817
      %9947 = vmatprep.subr.mxu0 0.0
      %9948 = vmatpush2.msra.mxu0 %v9816
      %9949 = vmatprep.subr.mxu0 0.0
      %9950 = vmatpush2.msra.mxu0 %v9815
      %9951 = vmatprep.subr.mxu0 0.0
      %9952 = vmatpush2.msra.mxu0 %v9814
      %9953 = vmatprep.subr.mxu0 0.0
      %9954 = vmatpush2.msra.mxu0 %v9813
      %9955 = vmatprep.subr.mxu0 0.0
      %9956 = vmatpush2.msra.mxu0 %v9812
      %9957 = vmatprep.subr.mxu0 0.0
      %9958 = vmatpush2.msra.mxu0 %v9811
      %9959 = vmatprep.subr.mxu0 0.0
      %9960 = vmatpush2.msra.mxu0 %v9810
      %9961 = vmatprep.mubr.f32.mxu0 %v9755
      %9962 = vmatmul.mubr.f32.gmra.mxu0 %v9754
      %v9963 = vpop.f32.mrf.mxu0
      %v9964 = vadd.f32 %v9871, %v9963
      %v9965 = vpop.f32.mrf.mxu0
      %9966 = vmatprep.mubr.f32.mxu0 %v9760
      %9967 = vmatmul.mubr.f32.gmra.mxu0 %v9759
      %v9968 = vpop.f32.mrf.mxu0
      %v9969 = vadd.f32 %v9871, %v9968
      %v9970 = vpop.f32.mrf.mxu0
      %9971 = vmatprep.mubr.f32.mxu0 %v9765
      %9972 = vmatmul.mubr.f32.gmra.mxu0 %v9764
      %v9973 = vpop.f32.mrf.mxu0
      %v9974 = vadd.f32 %v9871, %v9973
      %v9975 = vpop.f32.mrf.mxu0
      %9976 = vmatprep.mubr.f32.mxu0 %v9770
      %9977 = vmatmul.mubr.f32.gmra.mxu0 %v9769
      %v9978 = vpop.f32.mrf.mxu0
      %v9979 = vadd.f32 %v9871, %v9978
      %v9980 = vpop.f32.mrf.mxu0
      %9981 = vmatprep.mubr.f32.mxu0 %v9775
      %9982 = vmatmul.mubr.f32.gmra.mxu0 %v9774
      %v9983 = vpop.f32.mrf.mxu0
      %v9984 = vadd.f32 %v9871, %v9983
      %v9985 = vpop.f32.mrf.mxu0
      %9986 = vmatprep.mubr.f32.mxu0 %v9780
      %9987 = vmatmul.mubr.f32.gmra.mxu0 %v9779
      %v9988 = vpop.f32.mrf.mxu0
      %v9989 = vadd.f32 %v9871, %v9988
      %v9990 = vpop.f32.mrf.mxu0
      %9991 = vmatprep.mubr.f32.mxu0 %v9785
      %9992 = vmatmul.mubr.f32.gmra.mxu0 %v9784
      %v9993 = vpop.f32.mrf.mxu0
      %v9994 = vadd.f32 %v9871, %v9993
      %v9995 = vpop.f32.mrf.mxu0
      %9996 = vmatprep.mubr.f32.mxu0 %v9790
      %9997 = vmatmul.mubr.f32.gmra.mxu0 %v9789
      %v9998 = vpop.f32.mrf.mxu0
      %v9999 = vadd.f32 %v9871, %v9998
      %v10000 = vpop.f32.mrf.mxu0
      %10001 = vdwg.mxu0
      %10002 = vmatprep.subr.mxu0 0.0
      %10003 = vmatpush1.msra.mxu0 %v9841
      %10004 = vmatprep.subr.mxu0 0.0
      %10005 = vmatpush1.msra.mxu0 %v9840
      %10006 = vmatprep.subr.mxu0 0.0
      %10007 = vmatpush1.msra.mxu0 %v9839
      %10008 = vmatprep.subr.mxu0 0.0
      %10009 = vmatpush1.msra.mxu0 %v9838
      %10010 = vmatprep.subr.mxu0 0.0
      %10011 = vmatpush1.msra.mxu0 %v9837
      %10012 = vmatprep.subr.mxu0 0.0
      %10013 = vmatpush1.msra.mxu0 %v9836
      %10014 = vmatprep.subr.mxu0 0.0
      %10015 = vmatpush1.msra.mxu0 %v9835
      %10016 = vmatprep.subr.mxu0 0.0
      %10017 = vmatpush1.msra.mxu0 %v9834
      %10018 = vmatprep.subr.mxu0 0.0
      %10019 = vmatpush1.msra.mxu0 %v9833
      %10020 = vmatprep.subr.mxu0 0.0
      %10021 = vmatpush1.msra.mxu0 %v9832
      %10022 = vmatprep.subr.mxu0 0.0
      %10023 = vmatpush1.msra.mxu0 %v9831
      %10024 = vmatprep.subr.mxu0 0.0
      %10025 = vmatpush1.msra.mxu0 %v9830
      %10026 = vmatprep.subr.mxu0 0.0
      %10027 = vmatpush1.msra.mxu0 %v9829
      %10028 = vmatprep.subr.mxu0 0.0
      %10029 = vmatpush1.msra.mxu0 %v9828
      %10030 = vmatprep.subr.mxu0 0.0
      %10031 = vmatpush1.msra.mxu0 %v9827
      %10032 = vmatprep.subr.mxu0 0.0
      %10033 = vmatpush1.msra.mxu0 %v9826
      %10034 = vmatprep.subr.mxu0 0.0
      %10035 = vmatpush2.msra.mxu0 %v9857
      %10036 = vmatprep.subr.mxu0 0.0
      %10037 = vmatpush2.msra.mxu0 %v9856
      %10038 = vmatprep.subr.mxu0 0.0
      %10039 = vmatpush2.msra.mxu0 %v9855
      %10040 = vmatprep.subr.mxu0 0.0
      %10041 = vmatpush2.msra.mxu0 %v9854
      %10042 = vmatprep.subr.mxu0 0.0
      %10043 = vmatpush2.msra.mxu0 %v9853
      %10044 = vmatprep.subr.mxu0 0.0
      %10045 = vmatpush2.msra.mxu0 %v9852
      %10046 = vmatprep.subr.mxu0 0.0
      %10047 = vmatpush2.msra.mxu0 %v9851
      %10048 = vmatprep.subr.mxu0 0.0
      %10049 = vmatpush2.msra.mxu0 %v9850
      %10050 = vmatprep.subr.mxu0 0.0
      %10051 = vmatpush2.msra.mxu0 %v9849
      %10052 = vmatprep.subr.mxu0 0.0
      %10053 = vmatpush2.msra.mxu0 %v9848
      %10054 = vmatprep.subr.mxu0 0.0
      %10055 = vmatpush2.msra.mxu0 %v9847
      %10056 = vmatprep.subr.mxu0 0.0
      %10057 = vmatpush2.msra.mxu0 %v9846
      %10058 = vmatprep.subr.mxu0 0.0
      %10059 = vmatpush2.msra.mxu0 %v9845
      %10060 = vmatprep.subr.mxu0 0.0
      %10061 = vmatpush2.msra.mxu0 %v9844
      %10062 = vmatprep.subr.mxu0 0.0
      %10063 = vmatpush2.msra.mxu0 %v9843
      %10064 = vmatprep.subr.mxu0 0.0
      %10065 = vmatpush2.msra.mxu0 %v9842
      %10066 = vmatprep.mubr.f32.mxu0 %v9757
      %10067 = vmatmul.mubr.f32.gmra.mxu0 %v9756
      %v10068 = vpop.f32.mrf.mxu0
      %v10069 = vadd.f32 %v9964, %v10068
      %v10070 = vpop.f32.mrf.mxu0
      %10071 = vmatprep.mubr.f32.mxu0 %v9762
      %10072 = vmatmul.mubr.f32.gmra.mxu0 %v9761
      %v10073 = vpop.f32.mrf.mxu0
      %v10074 = vadd.f32 %v9969, %v10073
      %v10075 = vpop.f32.mrf.mxu0
      %10076 = vmatprep.mubr.f32.mxu0 %v9767
      %10077 = vmatmul.mubr.f32.gmra.mxu0 %v9766
      %v10078 = vpop.f32.mrf.mxu0
      %v10079 = vadd.f32 %v9974, %v10078
      %v10080 = vpop.f32.mrf.mxu0
      %10081 = vmatprep.mubr.f32.mxu0 %v9772
      %10082 = vmatmul.mubr.f32.gmra.mxu0 %v9771
      %v10083 = vpop.f32.mrf.mxu0
      %v10084 = vadd.f32 %v9979, %v10083
      %v10085 = vpop.f32.mrf.mxu0
      %10086 = vmatprep.mubr.f32.mxu0 %v9777
      %10087 = vmatmul.mubr.f32.gmra.mxu0 %v9776
      %v10088 = vpop.f32.mrf.mxu0
      %v10089 = vadd.f32 %v9984, %v10088
      %v10090 = vpop.f32.mrf.mxu0
      %10091 = vmatprep.mubr.f32.mxu0 %v9782
      %10092 = vmatmul.mubr.f32.gmra.mxu0 %v9781
      %v10093 = vpop.f32.mrf.mxu0
      %v10094 = vadd.f32 %v9989, %v10093
      %v10095 = vpop.f32.mrf.mxu0
      %10096 = vmatprep.mubr.f32.mxu0 %v9787
      %10097 = vmatmul.mubr.f32.gmra.mxu0 %v9786
      %v10098 = vpop.f32.mrf.mxu0
      %v10099 = vadd.f32 %v9994, %v10098
      %v10100 = vpop.f32.mrf.mxu0
      %10101 = vmatprep.mubr.f32.mxu0 %v9792
      %10102 = vmatmul.mubr.f32.gmra.mxu0 %v9791
      %v10103 = vpop.f32.mrf.mxu0
      %v10104 = vadd.f32 %v9999, %v10103
      %v10105 = vpop.f32.mrf.mxu0
      %10106 = vdwg.mxu0
      %10107 = vmatprep.subr.mxu0 0.0
      %10108 = vmatpush1.msra.mxu0 0.0
      %10109 = vmatprep.subr.mxu0 0.0
      %10110 = vmatpush1.msra.mxu0 0.0
      %10111 = vmatprep.subr.mxu0 0.0
      %10112 = vmatpush1.msra.mxu0 0.0
      %10113 = vmatprep.subr.mxu0 0.0
      %10114 = vmatpush1.msra.mxu0 0.0
      %10115 = vmatprep.subr.mxu0 0.0
      %10116 = vmatpush1.msra.mxu0 0.0
      %10117 = vmatprep.subr.mxu0 0.0
      %10118 = vmatpush1.msra.mxu0 0.0
      %10119 = vmatprep.subr.mxu0 0.0
      %10120 = vmatpush1.msra.mxu0 0.0
      %10121 = vmatprep.subr.mxu0 0.0
      %10122 = vmatpush1.msra.mxu0 0.0
      %10123 = vmatprep.subr.mxu0 0.0
      %10124 = vmatpush1.msra.mxu0 %v9865
      %10125 = vmatprep.subr.mxu0 0.0
      %10126 = vmatpush1.msra.mxu0 %v9864
      %10127 = vmatprep.subr.mxu0 0.0
      %10128 = vmatpush1.msra.mxu0 %v9863
      %10129 = vmatprep.subr.mxu0 0.0
      %10130 = vmatpush1.msra.mxu0 %v9862
      %10131 = vmatprep.subr.mxu0 0.0
      %10132 = vmatpush1.msra.mxu0 %v9861
      %10133 = vmatprep.subr.mxu0 0.0
      %10134 = vmatpush1.msra.mxu0 %v9860
      %10135 = vmatprep.subr.mxu0 0.0
      %10136 = vmatpush1.msra.mxu0 %v9859
      %10137 = vmatprep.subr.mxu0 0.0
      %10138 = vmatpush1.msra.mxu0 %v9858
      %10139 = vmatprep.subr.mxu0 0.0
      %10140 = vmatpush2.msra.mxu0 0.0
      %10141 = vmatprep.subr.mxu0 0.0
      %10142 = vmatpush2.msra.mxu0 0.0
      %10143 = vmatprep.subr.mxu0 0.0
      %10144 = vmatpush2.msra.mxu0 0.0
      %10145 = vmatprep.subr.mxu0 0.0
      %10146 = vmatpush2.msra.mxu0 0.0
      %10147 = vmatprep.subr.mxu0 0.0
      %10148 = vmatpush2.msra.mxu0 0.0
      %10149 = vmatprep.subr.mxu0 0.0
      %10150 = vmatpush2.msra.mxu0 0.0
      %10151 = vmatprep.subr.mxu0 0.0
      %10152 = vmatpush2.msra.mxu0 0.0
      %10153 = vmatprep.subr.mxu0 0.0
      %10154 = vmatpush2.msra.mxu0 0.0
      %10155 = vmatprep.subr.mxu0 0.0
      %10156 = vmatpush2.msra.mxu0 0.0
      %10157 = vmatprep.subr.mxu0 0.0
      %10158 = vmatpush2.msra.mxu0 0.0
      %10159 = vmatprep.subr.mxu0 0.0
      %10160 = vmatpush2.msra.mxu0 0.0
      %10161 = vmatprep.subr.mxu0 0.0
      %10162 = vmatpush2.msra.mxu0 0.0
      %10163 = vmatprep.subr.mxu0 0.0
      %10164 = vmatpush2.msra.mxu0 0.0
      %10165 = vmatprep.subr.mxu0 0.0
      %10166 = vmatpush2.msra.mxu0 0.0
      %10167 = vmatprep.subr.mxu0 0.0
      %10168 = vmatpush2.msra.mxu0 0.0
      %10169 = vmatprep.subr.mxu0 0.0
      %10170 = vmatpush2.msra.mxu0 0.0
      %10171 = vmatprep.mubr.f32.mxu0 0.0
      %10172 = vmatmul.mubr.f32.gmra.mxu0 %v9874
      %v10173 = vpop.f32.mrf.mxu0
      %v10174 = vadd.f32 %v10069, %v10173
      %v10175 = vpop.f32.mrf.mxu0
      %10176 = vmatprep.mubr.f32.mxu0 0.0
      %10177 = vmatmul.mubr.f32.gmra.mxu0 %v9877
      %v10178 = vpop.f32.mrf.mxu0
      %v10179 = vadd.f32 %v10074, %v10178
      %v10180 = vpop.f32.mrf.mxu0
      %10181 = vmatprep.mubr.f32.mxu0 0.0
      %10182 = vmatmul.mubr.f32.gmra.mxu0 %v9880
      %v10183 = vpop.f32.mrf.mxu0
      %v10184 = vadd.f32 %v10079, %v10183
      %v10185 = vpop.f32.mrf.mxu0
      %10186 = vmatprep.mubr.f32.mxu0 0.0
      %10187 = vmatmul.mubr.f32.gmra.mxu0 %v9883
      %v10188 = vpop.f32.mrf.mxu0
      %v10189 = vadd.f32 %v10084, %v10188
      %v10190 = vpop.f32.mrf.mxu0
      %10191 = vmatprep.mubr.f32.mxu0 0.0
      %10192 = vmatmul.mubr.f32.gmra.mxu0 %v9886
      %v10193 = vpop.f32.mrf.mxu0
      %v10194 = vadd.f32 %v10089, %v10193
      %v10195 = vpop.f32.mrf.mxu0
      %10196 = vmatprep.mubr.f32.mxu0 0.0
      %10197 = vmatmul.mubr.f32.gmra.mxu0 %v9889
      %v10198 = vpop.f32.mrf.mxu0
      %v10199 = vadd.f32 %v10094, %v10198
      %v10200 = vpop.f32.mrf.mxu0
      %10201 = vmatprep.mubr.f32.mxu0 0.0
      %10202 = vmatmul.mubr.f32.gmra.mxu0 %v9892
      %v10203 = vpop.f32.mrf.mxu0
      %v10204 = vadd.f32 %v10099, %v10203
      %v10205 = vpop.f32.mrf.mxu0
      %10206 = vmatprep.mubr.f32.mxu0 0.0
      %10207 = vmatmul.mubr.f32.gmra.mxu0 %v9895
      %v10208 = vpop.f32.mrf.mxu0
      %v10209 = vadd.f32 %v10104, %v10208
      %v10210 = vpop.f32.mrf.mxu0
      %10211 = vdwg.mxu0
      %v10212 = vsub.f32 0.0, %v10174
      %v10213 = vsub.f32 0.0, %v10179
      %v10214 = vsub.f32 0.0, %v10184
      %v10215 = vsub.f32 0.0, %v10189
      %v10216 = vsub.f32 0.0, %v10194
      %v10217 = vsub.f32 0.0, %v10199
      %v10218 = vsub.f32 0.0, %v10204
      %v10219 = vsub.f32 0.0, %v10209
      %v10220 = vmul.f32 %v10212, 1.442695
      %v10221 = vpow.pop %v10220
      %v10222 = vmul.f32 %v10213, 1.442695
      %v10223 = vpow.pop %v10222
      %v10224 = vmul.f32 %v10214, 1.442695
      %v10225 = vpow.pop %v10224
      %v10226 = vmul.f32 %v10215, 1.442695
      %v10227 = vpow.pop %v10226
      %v10228 = vmul.f32 %v10216, 1.442695
      %v10229 = vpow.pop %v10228
      %v10230 = vmul.f32 %v10217, 1.442695
      %v10231 = vpow.pop %v10230
      %v10232 = vmul.f32 %v10218, 1.442695
      %v10233 = vpow.pop %v10232
      %v10234 = vmul.f32 %v10219, 1.442695
      %v10235 = vpow.pop %v10234
      %v10236 = vadd.f32 %v10221, 1.0
      %v10237 = vadd.f32 %v10223, 1.0
      %v10238 = vadd.f32 %v10225, 1.0
      %v10239 = vadd.f32 %v10227, 1.0
      %v10240 = vadd.f32 %v10229, 1.0
      %v10241 = vadd.f32 %v10231, 1.0
      %v10242 = vadd.f32 %v10233, 1.0
      %v10243 = vadd.f32 %v10235, 1.0
      %v10244 = vrcp.pop %v10236
      %v10245 = vrcp.pop %v10237
      %v10246 = vrcp.pop %v10238
      %v10247 = vrcp.pop %v10239
      %v10248 = vrcp.pop %v10240
      %v10249 = vrcp.pop %v10241
      %v10250 = vrcp.pop %v10242
      %v10251 = vrcp.pop %v10243
      %10252 = vst [vmem:[%s332 + $0xc0] sm:$0xff] %v10244
      %10253 = vst [vmem:[%s332 + $0xc8] sm:$0xff] %v10245
      %10254 = vst [vmem:[%s332 + $0xd0] sm:$0xff] %v10246
      %10255 = vst [vmem:[%s332 + $0xd8] sm:$0xff] %v10247
      %10256 = vst [vmem:[%s332 + $0xe0] sm:$0xff] %v10248
      %10257 = vst [vmem:[%s332 + $0xe8] sm:$0xff] %v10249
      %10258 = vst [vmem:[%s332 + $0xf0] sm:$0xff] %v10250
      %10259 = vst [vmem:[%s332 + $0xf8] sm:$0xff] %v10251
      %p10260 = scmp.lt.s32.totalorder %s20, 1
      %s10261 = scalar_select %p10260, %s20, 1
      %s10262 = smul.addr %s10261, 32
      %s10263 = smul.addr %s10262, 8
      %s10264 = scalar_lea.vmem %s9, %s10263
      // Predicated region
      $region57: #{denoising_cnn_forward.1} parent=55 // pred_check
        %p10265 = pneg %p232
      $region58: #{denoising_cnn_forward.1} parent=55 // pred_check_branch
        %10267 = sbr.rel (%p10265) target = $region60
      $region59: #{denoising_cnn_forward.1} parent=55 // pred_region
        _
      $region60: #{denoising_cnn_forward.1} parent=55 // pred_fallthru
        _
    $region56: #{denoising_cnn_forward.1} parent=5 // pred_fallthru
      _
    %p10268 = scmp.le.s32.totalorder 2, %s15
    // Predicated region
    $region61: #{denoising_cnn_forward.1} parent=5 // pred_check
      %p10269 = pneg %p10268
    $region62: #{denoising_cnn_forward.1} parent=5 // pred_check_branch
      %10271 = sbr.rel (%p10269) target = $region64
    $region63: #{denoising_cnn_forward.1} parent=5 // pred_region
      %s10272 = ssub.s32 %s15, 2
      // Predicated region
      $region65: #{denoising_cnn_forward.1} parent=63 // pred_check
        %p10273 = pneg %p238
      $region66: #{denoising_cnn_forward.1} parent=63 // pred_check_branch
        %10275 = sbr.rel (%p10273) target = $region68
      $region67: #{denoising_cnn_forward.1} parent=63 // pred_region
        %p10276 = scmp.lt.s32.totalorder %s21, 1
        %s10277 = scalar_select %p10276, %s21, 1
        %s10278 = smul.addr %s10277, 32
        %s10279 = smul.addr %s10278, 8
        %s10280 = scalar_lea.vmem %s9, %s10279
      $region68: #{denoising_cnn_forward.1} parent=63 // pred_fallthru
        _
    $region64: #{denoising_cnn_forward.1} parent=5 // pred_fallthru
      _
  $region6: #{denoising_cnn_forward.1} parent=0 // loop_footer
    %s19 = sadd.s32 1, %s15
  $region7: #{denoising_cnn_forward.1} parent=0 // loop_footer_branch
    %14 = sbr.rel target = $region3
  $region8: #{denoising_cnn_forward.1} parent=0 // loop_exit
    _

</llo_original>
